<compile_context>
chip_gen: v7x
topology: tpu7x:2x2x1
jax: 0.10.0
libtpu: 0.0.40
codegen_flags: <defaults>
</compile_context>

<pallas_src>
import functools

import jax
import jax.numpy as jnp
from jax import lax
from jax.experimental import pallas as pl
from jax.experimental.pallas import tpu as pltpu


# ----------------------------------------------------------------------------
# Kernel 1: VALID conv + bias + ReLU, one image per grid step.
#           In-kernel im2col: the inflated patch matrix never touches HBM.
# ----------------------------------------------------------------------------
def _conv_relu_kernel(x_ref, wt_ref, b_ref, o_ref, p_ref, *, KH, KW):
    """relu(conv_valid(x) + b) for ONE image.

    x_ref : (1, Cin, H, W)    f32   (Cin pre-padded to a multiple of 8)
    wt_ref: (Cout, K)         bf16  K = KH*KW*Cin, column order (kh, kw, cin)
    b_ref : (Cout, 1)         f32
    o_ref : (1, Cout, OH, OW) f32   (full per-image slab -> one contiguous DMA)
    p_ref : VMEM scratch (K, OW) f32 -- per-output-row im2col patch tile
    """
    _, Cin, H, W = x_ref.shape
    OH, OW = H - KH + 1, W - KW + 1
    w_bf16 = wt_ref[...]                                   # resident bf16 weight
    bias = b_ref[...]                                      # (Cout, 1) f32

    # TODO(synk): at 256x256 use a fori_loop over output-row bands instead of
    #             a fully unrolled per-row python loop.
    for oh in range(OH):
        # Build the (K, OW) im2col tile for this output row from 25 shifted
        # VMEM slices (fully static indices, 8-aligned sublane offsets).
        for kh in range(KH):
            row = x_ref[0, :, oh + kh, :]                  # (Cin, W) f32
            for kw in range(KW):
                r0 = (kh * KW + kw) * Cin
                p_ref[r0:r0 + Cin, :] = row[:, kw:kw + OW]
        # (Cout, OW) = W(Cout, K) @ P(K, OW): bf16 on the MXU, f32 accumulate.
        acc = jnp.dot(w_bf16, p_ref[...].astype(jnp.bfloat16),
                      preferred_element_type=jnp.float32)
        o_ref[0, :, oh, :] = jnp.maximum(acc + bias, 0.0)  # f32 epilogue


def conv2d_relu(x, w, b):
    """VALID conv + bias + ReLU.

    x: (N, Cin, H, W) f32 (NCHW), w: (KH, KW, Cin, Cout) HWIO, b: (Cout,).
    Returns (N, Cout, OH, OW) f32.
    """
    N, Cin, H, W = x.shape
    KH, KW, _, Cout = w.shape
    OH, OW = H - KH + 1, W - KW + 1

    # Pad Cin to a multiple of 8 so every patch-row block is sublane-aligned.
    Cp = -(-Cin // 8) * 8
    if Cp != Cin:
        x = jnp.pad(x, ((0, 0), (0, Cp - Cin), (0, 0), (0, 0)))
        w = jnp.pad(w, ((0, 0), (0, 0), (0, Cp - Cin), (0, 0)))
    K = KH * KW * Cp

    wt = jnp.transpose(w.reshape(K, Cout)).astype(jnp.bfloat16)   # (Cout, K) bf16
    b2 = b.reshape(Cout, 1).astype(jnp.float32)

    kern = functools.partial(_conv_relu_kernel, KH=KH, KW=KW)
    return pl.pallas_call(
        kern,
        out_shape=jax.ShapeDtypeStruct((N, Cout, OH, OW), jnp.float32),
        grid=(N,),
        in_specs=[
            pl.BlockSpec((1, Cp, H, W), lambda n: (n, 0, 0, 0)),
            pl.BlockSpec((Cout, K), lambda n: (0, 0)),
            pl.BlockSpec((Cout, 1), lambda n: (0, 0)),
        ],
        out_specs=pl.BlockSpec((1, Cout, OH, OW), lambda n: (n, 0, 0, 0)),
        scratch_shapes=[pltpu.VMEM((K, OW), jnp.float32)],
        compiler_params=pltpu.CompilerParams(
            dimension_semantics=("parallel",),
            vmem_limit_bytes=32 * 1024 * 1024),   # explicit budget (v7x-safe)
    )(x, wt, b2)


# ----------------------------------------------------------------------------
# 2x2 max-pool (stride 2): plain JAX, fused by XLA with the downstream flatten.
# ----------------------------------------------------------------------------
def maxpool2x2(y):
    """y: (N, C, H, W) -> (N, C, H//2, W//2).  (H, W assumed even.)"""
    N, C, H, W = y.shape
    return y.reshape(N, C, H // 2, 2, W // 2, 2).max(axis=(3, 5))


# ----------------------------------------------------------------------------
# Kernel 2: fused MLP head.  fc1 (K-streamed, bf16 weights) + ReLU + fc2 +
#           softmax, with a f32 VMEM accumulator and pl.when init/finalize.
# ----------------------------------------------------------------------------
def _mlp_head_kernel(x_ref, w1_ref, b1_ref, w2_ref, b2_ref, o_ref, acc_ref):
    k = pl.program_id(0)

    @pl.when(k == 0)
    def _init():
        acc_ref[...] = jnp.zeros_like(acc_ref)

    # bf16 on the MXU, f32 accumulation in VMEM scratch.
    acc_ref[...] += jnp.dot(x_ref[...].astype(jnp.bfloat16), w1_ref[...],
                            preferred_element_type=jnp.float32)

    @pl.when(k == pl.num_programs(0) - 1)
    def _finish():
        h = jnp.maximum(acc_ref[...] + b1_ref[...], 0.0)   # fc1 bias + ReLU (dropout = id)
        logits = jnp.dot(h, w2_ref[...],
                         preferred_element_type=jnp.float32) + b2_ref[...]
        m = jnp.max(logits, axis=1, keepdims=True)          # softmax over dim=1
        e = jnp.exp(logits - m)
        o_ref[...] = e / jnp.sum(e, axis=1, keepdims=True)


def mlp_head(feat, w1, b1, w2, b2, *, tk=1024):
    """softmax(relu(feat @ w1 + b1) @ w2 + b2), fc1 contraction streamed in
    tk-wide K tiles (scales to in_features=492032 without holding w1 in VMEM)."""
    N, F = feat.shape
    H1 = w1.shape[1]
    Co = w2.shape[1]
    tk = min(tk, F)
    grid_k = pl.cdiv(F, tk)
    Fp = grid_k * tk
    if Fp != F:                                   # zero-pad contraction dim
        feat = jnp.pad(feat, ((0, 0), (0, Fp - F)))
        w1 = jnp.pad(w1, ((0, Fp - F), (0, 0)))
    w1 = w1.astype(jnp.bfloat16)                  # halve streamed fc1 weight bytes
    b1 = b1.reshape(1, H1).astype(jnp.float32)
    w2 = w2.astype(jnp.float32)
    b2 = b2.reshape(1, Co).astype(jnp.float32)

    return pl.pallas_call(
        _mlp_head_kernel,
        out_shape=jax.ShapeDtypeStruct((N, Co), jnp.float32),
        grid=(grid_k,),
        in_specs=[
            pl.BlockSpec((N, tk), lambda k: (0, k)),
            pl.BlockSpec((tk, H1), lambda k: (k, 0)),
            pl.BlockSpec((1, H1), lambda k: (0, 0)),
            pl.BlockSpec((H1, Co), lambda k: (0, 0)),
            pl.BlockSpec((1, Co), lambda k: (0, 0)),
        ],
        out_specs=pl.BlockSpec((N, Co), lambda k: (0, 0)),
        scratch_shapes=[pltpu.VMEM((N, H1), jnp.float32)],
        compiler_params=pltpu.CompilerParams(
            dimension_semantics=("arbitrary",),   # K reduction carries the acc
            vmem_limit_bytes=32 * 1024 * 1024),
    )(feat, w1, b1, w2, b2)


# ----------------------------------------------------------------------------
# Full forward (wrapper glue is layout plumbing only: pad / reshape / pool)
# ----------------------------------------------------------------------------
def custom_forward(x_nchw, p):
    N = x_nchw.shape[0]
    y = conv2d_relu(x_nchw, p["conv1_w"], p["conv1_b"])     # conv1 + ReLU
    y = conv2d_relu(y, p["conv2_w"], p["conv2_b"])          # conv2 + ReLU
    y = maxpool2x2(y)                                       # 2x2 pool (XLA-fused)
    # dropout1 / dropout2: identity at inference
    feat = y.reshape(N, -1)                                 # torch NCHW flatten order
    return mlp_head(feat, p["fc1_w"], p["fc1_b"], p["fc2_w"], p["fc2_b"])


# ----------------------------------------------------------------------------
# Pure-JAX reference for correctness checks
# ----------------------------------------------------------------------------
def reference_forward(x, p):
    dn = ("NCHW", "HWIO", "NCHW")
    y = lax.conv_general_dilated(x, p["conv1_w"], (1, 1), "VALID",
                                 dimension_numbers=dn)
    y = jnp.maximum(y + p["conv1_b"][None, :, None, None], 0.0)
    y = lax.conv_general_dilated(y, p["conv2_w"], (1, 1), "VALID",
                                 dimension_numbers=dn)
    y = jnp.maximum(y + p["conv2_b"][None, :, None, None], 0.0)
    n, c, h, w = y.shape
    pooled = y.reshape(n, c, h // 2, 2, w // 2, 2).max(axis=(3, 5))
    feat = pooled.reshape(n, -1)
    h1 = jnp.maximum(feat @ p["fc1_w"] + p["fc1_b"], 0.0)
    logits = h1 @ p["fc2_w"] + p["fc2_b"]
    return jax.nn.softmax(logits, axis=1), pooled, feat


if __name__ == "__main__":
    N, C, H, W = 2, 3, 16, 16
    key = jax.random.PRNGKey(0)
    ks = jax.random.split(key, 11)

    PH, PW = (H - 8) // 2, (W - 8) // 2            # spatial after conv1, conv2, pool
    F = 32 * PH * PW                               # flattened feature size (512 here)

    params = {
        "conv1_w": 0.10 * jax.random.normal(ks[0], (5, 5, 3, 32), jnp.float32),
        "conv1_b": 0.10 * jax.random.normal(ks[1], (32,), jnp.float32),
        "conv2_w": 0.05 * jax.random.normal(ks[2], (5, 5, 32, 32), jnp.float32),
        "conv2_b": 0.05 * jax.random.normal(ks[3], (32,), jnp.float32),
        "fc1_w": 0.02 * jax.random.normal(ks[4], (F, 256), jnp.float32),
        "fc1_b": 0.02 * jax.random.normal(ks[5], (256,), jnp.float32),
        "fc2_w": 0.05 * jax.random.normal(ks[6], (256, 1), jnp.float32),
        "fc2_b": 0.05 * jax.random.normal(ks[7], (1,), jnp.float32),
    }
    x = jax.random.normal(ks[8], (N, C, H, W), jnp.float32)

    out = jax.block_until_ready(custom_forward(x, params))
    assert out.shape == (N, 1)

    ref_out, ref_pooled, ref_feat = reference_forward(x, params)

    # 1) conv1 -> conv2 -> pool path (the Pallas conv kernels).  Tolerances are
    #    loosened for the bf16 MXU operands (f32 accumulation).
    pooled = maxpool2x2(
        conv2d_relu(conv2d_relu(x, params["conv1_w"], params["conv1_b"]),
                    params["conv2_w"], params["conv2_b"]))
    assert jnp.allclose(pooled, ref_pooled, atol=3e-2, rtol=3e-2)

    # 2) the fused MLP-head kernel, exercised with a multi-class fc2 and a
    #    multi-step K stream (the module's real fc2 has a single unit, so its
    #    softmax output is identically 1.0 and carries no information).
    w2x = 0.05 * jax.random.normal(ks[9], (256, 8), jnp.float32)
    b2x = 0.05 * jax.random.normal(ks[10], (8,), jnp.float32)
    head = mlp_head(ref_feat, params["fc1_w"], params["fc1_b"], w2x, b2x, tk=128)
    h_ref = jnp.maximum(ref_feat @ params["fc1_w"] + params["fc1_b"], 0.0)
    head_ref = jax.nn.softmax(h_ref @ w2x + b2x, axis=1)
    assert jnp.allclose(head, head_ref, atol=2e-2, rtol=2e-2)

    # 3) end-to-end output (softmax over a single logit == 1.0, as in the module)
    assert jnp.allclose(out, ref_out, atol=1e-5, rtol=1e-5)

    print("KERNEL_OK")
</pallas_src>

<mosaic_0001>
module attributes {stable_mosaic.version = 11 : i64} {
  func.func @_conv_relu_kernel(%arg0: i32, %arg1: memref<1x8x16x16xf32, #tpu.memory_space<vmem>>, %arg2: memref<32x200xbf16, #tpu.memory_space<vmem>>, %arg3: memref<32x1xf32, #tpu.memory_space<vmem>>, %arg4: memref<1x32x12x12xf32, #tpu.memory_space<vmem>>, %arg5: memref<200x12xf32, #tpu.memory_space<vmem>>) attributes {dimension_semantics = [#tpu.dimension_semantics<parallel>], iteration_bounds = array<i64: 2>, scalar_prefetch = 0 : i64, scratch_operands = 1 : i64, tpu.core_type = #tpu.core_type<tc>, window_params = [{transform_indices = @transform_0, window_bounds = array<i64: 1, 8, 16, 16>}, {pipeline_mode = #tpu.pipeline_mode<synchronous>, transform_indices = @transform_1, window_bounds = array<i64: 32, 200>}, {pipeline_mode = #tpu.pipeline_mode<synchronous>, transform_indices = @transform_2, window_bounds = array<i64: 32, 1>}, {transform_indices = @transform_3, window_bounds = array<i64: 1, 32, 12, 12>}]} {
    %c0 = arith.constant 0 : index
    %c0_0 = arith.constant 0 : index
    %0 = vector.load %arg2[%c0, %c0_0] : memref<32x200xbf16, #tpu.memory_space<vmem>>, vector<32x200xbf16>
    %c0_1 = arith.constant 0 : index
    %c0_2 = arith.constant 0 : index
    %1 = vector.load %arg3[%c0_1, %c0_2] : memref<32x1xf32, #tpu.memory_space<vmem>>, vector<32x1xf32>
    %c0_3 = arith.constant 0 : index
    %c0_4 = arith.constant 0 : index
    %c0_5 = arith.constant 0 : index
    %c0_6 = arith.constant 0 : index
    %2 = vector.load %arg1[%c0_3, %c0_4, %c0_5, %c0_6] : memref<1x8x16x16xf32, #tpu.memory_space<vmem>>, vector<1x8x1x16xf32>
    %3 = vector.shape_cast %2 : vector<1x8x1x16xf32> to vector<8x16xf32>
    %4 = vector.extract_strided_slice %3 {offsets = [0, 0], sizes = [8, 12], strides = [1, 1]} : vector<8x16xf32> to vector<8x12xf32>
    %c0_7 = arith.constant 0 : index
    %c0_8 = arith.constant 0 : index
    %5 = vector.load %arg5[%c0_7, %c0_8] : memref<200x12xf32, #tpu.memory_space<vmem>>, vector<8x12xf32>
    tpu.vector_store %arg5[%c0_7, %c0_8], %4 {strides = array<i32>} : memref<200x12xf32, #tpu.memory_space<vmem>>, vector<8x12xf32>,
    %6 = vector.extract_strided_slice %3 {offsets = [0, 1], sizes = [8, 12], strides = [1, 1]} : vector<8x16xf32> to vector<8x12xf32>
    %c8 = arith.constant 8 : index
    %c0_9 = arith.constant 0 : index
    %7 = vector.load %arg5[%c8, %c0_9] : memref<200x12xf32, #tpu.memory_space<vmem>>, vector<8x12xf32>
    tpu.vector_store %arg5[%c8, %c0_9], %6 {strides = array<i32>} : memref<200x12xf32, #tpu.memory_space<vmem>>, vector<8x12xf32>,
    %8 = vector.extract_strided_slice %3 {offsets = [0, 2], sizes = [8, 12], strides = [1, 1]} : vector<8x16xf32> to vector<8x12xf32>
    %c16 = arith.constant 16 : index
    %c0_10 = arith.constant 0 : index
    %9 = vector.load %arg5[%c16, %c0_10] : memref<200x12xf32, #tpu.memory_space<vmem>>, vector<8x12xf32>
    tpu.vector_store %arg5[%c16, %c0_10], %8 {strides = array<i32>} : memref<200x12xf32, #tpu.memory_space<vmem>>, vector<8x12xf32>,
    %10 = vector.extract_strided_slice %3 {offsets = [0, 3], sizes = [8, 12], strides = [1, 1]} : vector<8x16xf32> to vector<8x12xf32>
    %c24 = arith.constant 24 : index
    %c0_11 = arith.constant 0 : index
    %11 = vector.load %arg5[%c24, %c0_11] : memref<200x12xf32, #tpu.memory_space<vmem>>, vector<8x12xf32>
    tpu.vector_store %arg5[%c24, %c0_11], %10 {strides = array<i32>} : memref<200x12xf32, #tpu.memory_space<vmem>>, vector<8x12xf32>,
    %12 = vector.extract_strided_slice %3 {offsets = [0, 4], sizes = [8, 12], strides = [1, 1]} : vector<8x16xf32> to vector<8x12xf32>
    %c32 = arith.constant 32 : index
    %c0_12 = arith.constant 0 : index
    %13 = vector.load %arg5[%c32, %c0_12] : memref<200x12xf32, #tpu.memory_space<vmem>>, vector<8x12xf32>
    tpu.vector_store %arg5[%c32, %c0_12], %12 {strides = array<i32>} : memref<200x12xf32, #tpu.memory_space<vmem>>, vector<8x12xf32>,
    %c0_13 = arith.constant 0 : index
    %c0_14 = arith.constant 0 : index
    %c1 = arith.constant 1 : index
    %c0_15 = arith.constant 0 : index
    %14 = vector.load %arg1[%c0_13, %c0_14, %c1, %c0_15] : memref<1x8x16x16xf32, #tpu.memory_space<vmem>>, vector<1x8x1x16xf32>
    %15 = vector.shape_cast %14 : vector<1x8x1x16xf32> to vector<8x16xf32>
    %16 = vector.extract_strided_slice %15 {offsets = [0, 0], sizes = [8, 12], strides = [1, 1]} : vector<8x16xf32> to vector<8x12xf32>
    %c40 = arith.constant 40 : index
    %c0_16 = arith.constant 0 : index
    %17 = vector.load %arg5[%c40, %c0_16] : memref<200x12xf32, #tpu.memory_space<vmem>>, vector<8x12xf32>
    tpu.vector_store %arg5[%c40, %c0_16], %16 {strides = array<i32>} : memref<200x12xf32, #tpu.memory_space<vmem>>, vector<8x12xf32>,
    %18 = vector.extract_strided_slice %15 {offsets = [0, 1], sizes = [8, 12], strides = [1, 1]} : vector<8x16xf32> to vector<8x12xf32>
    %c48 = arith.constant 48 : index
    %c0_17 = arith.constant 0 : index
    %19 = vector.load %arg5[%c48, %c0_17] : memref<200x12xf32, #tpu.memory_space<vmem>>, vector<8x12xf32>
    tpu.vector_store %arg5[%c48, %c0_17], %18 {strides = array<i32>} : memref<200x12xf32, #tpu.memory_space<vmem>>, vector<8x12xf32>,
    %20 = vector.extract_strided_slice %15 {offsets = [0, 2], sizes = [8, 12], strides = [1, 1]} : vector<8x16xf32> to vector<8x12xf32>
    %c56 = arith.constant 56 : index
    %c0_18 = arith.constant 0 : index
    %21 = vector.load %arg5[%c56, %c0_18] : memref<200x12xf32, #tpu.memory_space<vmem>>, vector<8x12xf32>
    tpu.vector_store %arg5[%c56, %c0_18], %20 {strides = array<i32>} : memref<200x12xf32, #tpu.memory_space<vmem>>, vector<8x12xf32>,
    %22 = vector.extract_strided_slice %15 {offsets = [0, 3], sizes = [8, 12], strides = [1, 1]} : vector<8x16xf32> to vector<8x12xf32>
    %c64 = arith.constant 64 : index
    %c0_19 = arith.constant 0 : index
    %23 = vector.load %arg5[%c64, %c0_19] : memref<200x12xf32, #tpu.memory_space<vmem>>, vector<8x12xf32>
    tpu.vector_store %arg5[%c64, %c0_19], %22 {strides = array<i32>} : memref<200x12xf32, #tpu.memory_space<vmem>>, vector<8x12xf32>,
    %24 = vector.extract_strided_slice %15 {offsets = [0, 4], sizes = [8, 12], strides = [1, 1]} : vector<8x16xf32> to vector<8x12xf32>
    %c72 = arith.constant 72 : index
    %c0_20 = arith.constant 0 : index
    %25 = vector.load %arg5[%c72, %c0_20] : memref<200x12xf32, #tpu.memory_space<vmem>>, vector<8x12xf32>
    tpu.vector_store %arg5[%c72, %c0_20], %24 {strides = array<i32>} : memref<200x12xf32, #tpu.memory_space<vmem>>, vector<8x12xf32>,
    %c0_21 = arith.constant 0 : index
    %c0_22 = arith.constant 0 : index
    %c2 = arith.constant 2 : index
    %c0_23 = arith.constant 0 : index
    %26 = vector.load %arg1[%c0_21, %c0_22, %c2, %c0_23] : memref<1x8x16x16xf32, #tpu.memory_space<vmem>>, vector<1x8x1x16xf32>
    %27 = vector.shape_cast %26 : vector<1x8x1x16xf32> to vector<8x16xf32>
    %28 = vector.extract_strided_slice %27 {offsets = [0, 0], sizes = [8, 12], strides = [1, 1]} : vector<8x16xf32> to vector<8x12xf32>
    %c80 = arith.constant 80 : index
    %c0_24 = arith.constant 0 : index
    %29 = vector.load %arg5[%c80, %c0_24] : memref<200x12xf32, #tpu.memory_space<vmem>>, vector<8x12xf32>
    tpu.vector_store %arg5[%c80, %c0_24], %28 {strides = array<i32>} : memref<200x12xf32, #tpu.memory_space<vmem>>, vector<8x12xf32>,
    %30 = vector.extract_strided_slice %27 {offsets = [0, 1], sizes = [8, 12], strides = [1, 1]} : vector<8x16xf32> to vector<8x12xf32>
    %c88 = arith.constant 88 : index
    %c0_25 = arith.constant 0 : index
    %31 = vector.load %arg5[%c88, %c0_25] : memref<200x12xf32, #tpu.memory_space<vmem>>, vector<8x12xf32>
    tpu.vector_store %arg5[%c88, %c0_25], %30 {strides = array<i32>} : memref<200x12xf32, #tpu.memory_space<vmem>>, vector<8x12xf32>,
    %32 = vector.extract_strided_slice %27 {offsets = [0, 2], sizes = [8, 12], strides = [1, 1]} : vector<8x16xf32> to vector<8x12xf32>
    %c96 = arith.constant 96 : index
    %c0_26 = arith.constant 0 : index
    %33 = vector.load %arg5[%c96, %c0_26] : memref<200x12xf32, #tpu.memory_space<vmem>>, vector<8x12xf32>
    tpu.vector_store %arg5[%c96, %c0_26], %32 {strides = array<i32>} : memref<200x12xf32, #tpu.memory_space<vmem>>, vector<8x12xf32>,
    %34 = vector.extract_strided_slice %27 {offsets = [0, 3], sizes = [8, 12], strides = [1, 1]} : vector<8x16xf32> to vector<8x12xf32>
    %c104 = arith.constant 104 : index
    %c0_27 = arith.constant 0 : index
    %35 = vector.load %arg5[%c104, %c0_27] : memref<200x12xf32, #tpu.memory_space<vmem>>, vector<8x12xf32>
    tpu.vector_store %arg5[%c104, %c0_27], %34 {strides = array<i32>} : memref<200x12xf32, #tpu.memory_space<vmem>>, vector<8x12xf32>,
    %36 = vector.extract_strided_slice %27 {offsets = [0, 4], sizes = [8, 12], strides = [1, 1]} : vector<8x16xf32> to vector<8x12xf32>
    %c112 = arith.constant 112 : index
    %c0_28 = arith.constant 0 : index
    %37 = vector.load %arg5[%c112, %c0_28] : memref<200x12xf32, #tpu.memory_space<vmem>>, vector<8x12xf32>
    tpu.vector_store %arg5[%c112, %c0_28], %36 {strides = array<i32>} : memref<200x12xf32, #tpu.memory_space<vmem>>, vector<8x12xf32>,
    %c0_29 = arith.constant 0 : index
    %c0_30 = arith.constant 0 : index
    %c3 = arith.constant 3 : index
    %c0_31 = arith.constant 0 : index
    %38 = vector.load %arg1[%c0_29, %c0_30, %c3, %c0_31] : memref<1x8x16x16xf32, #tpu.memory_space<vmem>>, vector<1x8x1x16xf32>
    %39 = vector.shape_cast %38 : vector<1x8x1x16xf32> to vector<8x16xf32>
    %40 = vector.extract_strided_slice %39 {offsets = [0, 0], sizes = [8, 12], strides = [1, 1]} : vector<8x16xf32> to vector<8x12xf32>
    %c120 = arith.constant 120 : index
    %c0_32 = arith.constant 0 : index
    %41 = vector.load %arg5[%c120, %c0_32] : memref<200x12xf32, #tpu.memory_space<vmem>>, vector<8x12xf32>
    tpu.vector_store %arg5[%c120, %c0_32], %40 {strides = array<i32>} : memref<200x12xf32, #tpu.memory_space<vmem>>, vector<8x12xf32>,
    %42 = vector.extract_strided_slice %39 {offsets = [0, 1], sizes = [8, 12], strides = [1, 1]} : vector<8x16xf32> to vector<8x12xf32>
    %c128 = arith.constant 128 : index
    %c0_33 = arith.constant 0 : index
    %43 = vector.load %arg5[%c128, %c0_33] : memref<200x12xf32, #tpu.memory_space<vmem>>, vector<8x12xf32>
    tpu.vector_store %arg5[%c128, %c0_33], %42 {strides = array<i32>} : memref<200x12xf32, #tpu.memory_space<vmem>>, vector<8x12xf32>,
    %44 = vector.extract_strided_slice %39 {offsets = [0, 2], sizes = [8, 12], strides = [1, 1]} : vector<8x16xf32> to vector<8x12xf32>
    %c136 = arith.constant 136 : index
    %c0_34 = arith.constant 0 : index
    %45 = vector.load %arg5[%c136, %c0_34] : memref<200x12xf32, #tpu.memory_space<vmem>>, vector<8x12xf32>
    tpu.vector_store %arg5[%c136, %c0_34], %44 {strides = array<i32>} : memref<200x12xf32, #tpu.memory_space<vmem>>, vector<8x12xf32>,
    %46 = vector.extract_strided_slice %39 {offsets = [0, 3], sizes = [8, 12], strides = [1, 1]} : vector<8x16xf32> to vector<8x12xf32>
    %c144 = arith.constant 144 : index
    %c0_35 = arith.constant 0 : index
    %47 = vector.load %arg5[%c144, %c0_35] : memref<200x12xf32, #tpu.memory_space<vmem>>, vector<8x12xf32>
    tpu.vector_store %arg5[%c144, %c0_35], %46 {strides = array<i32>} : memref<200x12xf32, #tpu.memory_space<vmem>>, vector<8x12xf32>,
    %48 = vector.extract_strided_slice %39 {offsets = [0, 4], sizes = [8, 12], strides = [1, 1]} : vector<8x16xf32> to vector<8x12xf32>
    %c152 = arith.constant 152 : index
    %c0_36 = arith.constant 0 : index
    %49 = vector.load %arg5[%c152, %c0_36] : memref<200x12xf32, #tpu.memory_space<vmem>>, vector<8x12xf32>
    tpu.vector_store %arg5[%c152, %c0_36], %48 {strides = array<i32>} : memref<200x12xf32, #tpu.memory_space<vmem>>, vector<8x12xf32>,
    %c0_37 = arith.constant 0 : index
    %c0_38 = arith.constant 0 : index
    %c4 = arith.constant 4 : index
    %c0_39 = arith.constant 0 : index
    %50 = vector.load %arg1[%c0_37, %c0_38, %c4, %c0_39] : memref<1x8x16x16xf32, #tpu.memory_space<vmem>>, vector<1x8x1x16xf32>
    %51 = vector.shape_cast %50 : vector<1x8x1x16xf32> to vector<8x16xf32>
    %52 = vector.extract_strided_slice %51 {offsets = [0, 0], sizes = [8, 12], strides = [1, 1]} : vector<8x16xf32> to vector<8x12xf32>
    %c160 = arith.constant 160 : index
    %c0_40 = arith.constant 0 : index
    %53 = vector.load %arg5[%c160, %c0_40] : memref<200x12xf32, #tpu.memory_space<vmem>>, vector<8x12xf32>
    tpu.vector_store %arg5[%c160, %c0_40], %52 {strides = array<i32>} : memref<200x12xf32, #tpu.memory_space<vmem>>, vector<8x12xf32>,
    %54 = vector.extract_strided_slice %51 {offsets = [0, 1], sizes = [8, 12], strides = [1, 1]} : vector<8x16xf32> to vector<8x12xf32>
    %c168 = arith.constant 168 : index
    %c0_41 = arith.constant 0 : index
    %55 = vector.load %arg5[%c168, %c0_41] : memref<200x12xf32, #tpu.memory_space<vmem>>, vector<8x12xf32>
    tpu.vector_store %arg5[%c168, %c0_41], %54 {strides = array<i32>} : memref<200x12xf32, #tpu.memory_space<vmem>>, vector<8x12xf32>,
    %56 = vector.extract_strided_slice %51 {offsets = [0, 2], sizes = [8, 12], strides = [1, 1]} : vector<8x16xf32> to vector<8x12xf32>
    %c176 = arith.constant 176 : index
    %c0_42 = arith.constant 0 : index
    %57 = vector.load %arg5[%c176, %c0_42] : memref<200x12xf32, #tpu.memory_space<vmem>>, vector<8x12xf32>
    tpu.vector_store %arg5[%c176, %c0_42], %56 {strides = array<i32>} : memref<200x12xf32, #tpu.memory_space<vmem>>, vector<8x12xf32>,
    %58 = vector.extract_strided_slice %51 {offsets = [0, 3], sizes = [8, 12], strides = [1, 1]} : vector<8x16xf32> to vector<8x12xf32>
    %c184 = arith.constant 184 : index
    %c0_43 = arith.constant 0 : index
    %59 = vector.load %arg5[%c184, %c0_43] : memref<200x12xf32, #tpu.memory_space<vmem>>, vector<8x12xf32>
    tpu.vector_store %arg5[%c184, %c0_43], %58 {strides = array<i32>} : memref<200x12xf32, #tpu.memory_space<vmem>>, vector<8x12xf32>,
    %60 = vector.extract_strided_slice %51 {offsets = [0, 4], sizes = [8, 12], strides = [1, 1]} : vector<8x16xf32> to vector<8x12xf32>
    %c192 = arith.constant 192 : index
    %c0_44 = arith.constant 0 : index
    %61 = vector.load %arg5[%c192, %c0_44] : memref<200x12xf32, #tpu.memory_space<vmem>>, vector<8x12xf32>
    tpu.vector_store %arg5[%c192, %c0_44], %60 {strides = array<i32>} : memref<200x12xf32, #tpu.memory_space<vmem>>, vector<8x12xf32>,
    %c0_45 = arith.constant 0 : index
    %c0_46 = arith.constant 0 : index
    %62 = vector.load %arg5[%c0_45, %c0_46] : memref<200x12xf32, #tpu.memory_space<vmem>>, vector<200x12xf32>
    %63 = arith.truncf %62 : vector<200x12xf32> to vector<200x12xbf16>
    %cst = arith.constant dense<0.000000e+00> : vector<32x12xf32>
    %64 = tpu.matmul %0, %63, %cst {dimension_numbers = #tpu.dot_dimension_numbers<[1], [0], [0], [1], [0, 0, 1, 1], [], []>} : vector<32x200xbf16>, vector<200x12xbf16>, vector<32x12xf32> -> vector<32x12xf32>
    %65 = vector.broadcast %1 : vector<32x1xf32> to vector<32x12xf32>
    %66 = arith.addf %64, %65 : vector<32x12xf32>
    %cst_47 = arith.constant 0.000000e+00 : f32
    %67 = vector.broadcast %cst_47 : f32 to vector<32x12xf32>
    %68 = arith.maximumf %66, %67 : vector<32x12xf32>
    %c0_48 = arith.constant 0 : index
    %c0_49 = arith.constant 0 : index
    %c0_50 = arith.constant 0 : index
    %c0_51 = arith.constant 0 : index
    %69 = vector.load %arg4[%c0_48, %c0_49, %c0_50, %c0_51] : memref<1x32x12x12xf32, #tpu.memory_space<vmem>>, vector<1x32x1x12xf32>
    %70 = vector.shape_cast %69 : vector<1x32x1x12xf32> to vector<32x12xf32>
    %71 = vector.shape_cast %68 : vector<32x12xf32> to vector<1x32x1x12xf32>
    tpu.vector_store %arg4[%c0_48, %c0_49, %c0_50, %c0_51], %71 {strides = array<i32>} : memref<1x32x12x12xf32, #tpu.memory_space<vmem>>, vector<1x32x1x12xf32>,
    %c0_52 = arith.constant 0 : index
    %c0_53 = arith.constant 0 : index
    %c1_54 = arith.constant 1 : index
    %c0_55 = arith.constant 0 : index
    %72 = vector.load %arg1[%c0_52, %c0_53, %c1_54, %c0_55] : memref<1x8x16x16xf32, #tpu.memory_space<vmem>>, vector<1x8x1x16xf32>
    %73 = vector.shape_cast %72 : vector<1x8x1x16xf32> to vector<8x16xf32>
    %74 = vector.extract_strided_slice %73 {offsets = [0, 0], sizes = [8, 12], strides = [1, 1]} : vector<8x16xf32> to vector<8x12xf32>
    %c0_56 = arith.constant 0 : index
    %c0_57 = arith.constant 0 : index
    %75 = vector.load %arg5[%c0_56, %c0_57] : memref<200x12xf32, #tpu.memory_space<vmem>>, vector<8x12xf32>
    tpu.vector_store %arg5[%c0_56, %c0_57], %74 {strides = array<i32>} : memref<200x12xf32, #tpu.memory_space<vmem>>, vector<8x12xf32>,
    %76 = vector.extract_strided_slice %73 {offsets = [0, 1], sizes = [8, 12], strides = [1, 1]} : vector<8x16xf32> to vector<8x12xf32>
    %c8_58 = arith.constant 8 : index
    %c0_59 = arith.constant 0 : index
    %77 = vector.load %arg5[%c8_58, %c0_59] : memref<200x12xf32, #tpu.memory_space<vmem>>, vector<8x12xf32>
    tpu.vector_store %arg5[%c8_58, %c0_59], %76 {strides = array<i32>} : memref<200x12xf32, #tpu.memory_space<vmem>>, vector<8x12xf32>,
    %78 = vector.extract_strided_slice %73 {offsets = [0, 2], sizes = [8, 12], strides = [1, 1]} : vector<8x16xf32> to vector<8x12xf32>
    %c16_60 = arith.constant 16 : index
    %c0_61 = arith.constant 0 : index
    %79 = vector.load %arg5[%c16_60, %c0_61] : memref<200x12xf32, #tpu.memory_space<vmem>>, vector<8x12xf32>
    tpu.vector_store %arg5[%c16_60, %c0_61], %78 {strides = array<i32>} : memref<200x12xf32, #tpu.memory_space<vmem>>, vector<8x12xf32>,
    %80 = vector.extract_strided_slice %73 {offsets = [0, 3], sizes = [8, 12], strides = [1, 1]} : vector<8x16xf32> to vector<8x12xf32>
    %c24_62 = arith.constant 24 : index
    %c0_63 = arith.constant 0 : index
    %81 = vector.load %arg5[%c24_62, %c0_63] : memref<200x12xf32, #tpu.memory_space<vmem>>, vector<8x12xf32>
    tpu.vector_store %arg5[%c24_62, %c0_63], %80 {strides = array<i32>} : memref<200x12xf32, #tpu.memory_space<vmem>>, vector<8x12xf32>,
    %82 = vector.extract_strided_slice %73 {offsets = [0, 4], sizes = [8, 12], strides = [1, 1]} : vector<8x16xf32> to vector<8x12xf32>
    %c32_64 = arith.constant 32 : index
    %c0_65 = arith.constant 0 : index
    %83 = vector.load %arg5[%c32_64, %c0_65] : memref<200x12xf32, #tpu.memory_space<vmem>>, vector<8x12xf32>
    tpu.vector_store %arg5[%c32_64, %c0_65], %82 {strides = array<i32>} : memref<200x12xf32, #tpu.memory_space<vmem>>, vector<8x12xf32>,
    %c0_66 = arith.constant 0 : index
    %c0_67 = arith.constant 0 : index
    %c2_68 = arith.constant 2 : index
    %c0_69 = arith.constant 0 : index
    %84 = vector.load %arg1[%c0_66, %c0_67, %c2_68, %c0_69] : memref<1x8x16x16xf32, #tpu.memory_space<vmem>>, vector<1x8x1x16xf32>
    %85 = vector.shape_cast %84 : vector<1x8x1x16xf32> to vector<8x16xf32>
    %86 = vector.extract_strided_slice %85 {offsets = [0, 0], sizes = [8, 12], strides = [1, 1]} : vector<8x16xf32> to vector<8x12xf32>
    %c40_70 = arith.constant 40 : index
    %c0_71 = arith.constant 0 : index
    %87 = vector.load %arg5[%c40_70, %c0_71] : memref<200x12xf32, #tpu.memory_space<vmem>>, vector<8x12xf32>
    tpu.vector_store %arg5[%c40_70, %c0_71], %86 {strides = array<i32>} : memref<200x12xf32, #tpu.memory_space<vmem>>, vector<8x12xf32>,
    %88 = vector.extract_strided_slice %85 {offsets = [0, 1], sizes = [8, 12], strides = [1, 1]} : vector<8x16xf32> to vector<8x12xf32>
    %c48_72 = arith.constant 48 : index
    %c0_73 = arith.constant 0 : index
    %89 = vector.load %arg5[%c48_72, %c0_73] : memref<200x12xf32, #tpu.memory_space<vmem>>, vector<8x12xf32>
    tpu.vector_store %arg5[%c48_72, %c0_73], %88 {strides = array<i32>} : memref<200x12xf32, #tpu.memory_space<vmem>>, vector<8x12xf32>,
    %90 = vector.extract_strided_slice %85 {offsets = [0, 2], sizes = [8, 12], strides = [1, 1]} : vector<8x16xf32> to vector<8x12xf32>
    %c56_74 = arith.constant 56 : index
    %c0_75 = arith.constant 0 : index
    %91 = vector.load %arg5[%c56_74, %c0_75] : memref<200x12xf32, #tpu.memory_space<vmem>>, vector<8x12xf32>
    tpu.vector_store %arg5[%c56_74, %c0_75], %90 {strides = array<i32>} : memref<200x12xf32, #tpu.memory_space<vmem>>, vector<8x12xf32>,
    %92 = vector.extract_strided_slice %85 {offsets = [0, 3], sizes = [8, 12], strides = [1, 1]} : vector<8x16xf32> to vector<8x12xf32>
    %c64_76 = arith.constant 64 : index
    %c0_77 = arith.constant 0 : index
    %93 = vector.load %arg5[%c64_76, %c0_77] : memref<200x12xf32, #tpu.memory_space<vmem>>, vector<8x12xf32>
    tpu.vector_store %arg5[%c64_76, %c0_77], %92 {strides = array<i32>} : memref<200x12xf32, #tpu.memory_space<vmem>>, vector<8x12xf32>,
    %94 = vector.extract_strided_slice %85 {offsets = [0, 4], sizes = [8, 12], strides = [1, 1]} : vector<8x16xf32> to vector<8x12xf32>
    %c72_78 = arith.constant 72 : index
    %c0_79 = arith.constant 0 : index
    %95 = vector.load %arg5[%c72_78, %c0_79] : memref<200x12xf32, #tpu.memory_space<vmem>>, vector<8x12xf32>
    tpu.vector_store %arg5[%c72_78, %c0_79], %94 {strides = array<i32>} : memref<200x12xf32, #tpu.memory_space<vmem>>, vector<8x12xf32>,
    %c0_80 = arith.constant 0 : index
    %c0_81 = arith.constant 0 : index
    %c3_82 = arith.constant 3 : index
    %c0_83 = arith.constant 0 : index
    %96 = vector.load %arg1[%c0_80, %c0_81, %c3_82, %c0_83] : memref<1x8x16x16xf32, #tpu.memory_space<vmem>>, vector<1x8x1x16xf32>
    %97 = vector.shape_cast %96 : vector<1x8x1x16xf32> to vector<8x16xf32>
    %98 = vector.extract_strided_slice %97 {offsets = [0, 0], sizes = [8, 12], strides = [1, 1]} : vector<8x16xf32> to vector<8x12xf32>
    %c80_84 = arith.constant 80 : index
    %c0_85 = arith.constant 0 : index
    %99 = vector.load %arg5[%c80_84, %c0_85] : memref<200x12xf32, #tpu.memory_space<vmem>>, vector<8x12xf32>
    tpu.vector_store %arg5[%c80_84, %c0_85], %98 {strides = array<i32>} : memref<200x12xf32, #tpu.memory_space<vmem>>, vector<8x12xf32>,
    %100 = vector.extract_strided_slice %97 {offsets = [0, 1], sizes = [8, 12], strides = [1, 1]} : vector<8x16xf32> to vector<8x12xf32>
    %c88_86 = arith.constant 88 : index
    %c0_87 = arith.constant 0 : index
    %101 = vector.load %arg5[%c88_86, %c0_87] : memref<200x12xf32, #tpu.memory_space<vmem>>, vector<8x12xf32>
    tpu.vector_store %arg5[%c88_86, %c0_87], %100 {strides = array<i32>} : memref<200x12xf32, #tpu.memory_space<vmem>>, vector<8x12xf32>,
    %102 = vector.extract_strided_slice %97 {offsets = [0, 2], sizes = [8, 12], strides = [1, 1]} : vector<8x16xf32> to vector<8x12xf32>
    %c96_88 = arith.constant 96 : index
    %c0_89 = arith.constant 0 : index
    %103 = vector.load %arg5[%c96_88, %c0_89] : memref<200x12xf32, #tpu.memory_space<vmem>>, vector<8x12xf32>
    tpu.vector_store %arg5[%c96_88, %c0_89], %102 {strides = array<i32>} : memref<200x12xf32, #tpu.memory_space<vmem>>, vector<8x12xf32>,
    %104 = vector.extract_strided_slice %97 {offsets = [0, 3], sizes = [8, 12], strides = [1, 1]} : vector<8x16xf32> to vector<8x12xf32>
    %c104_90 = arith.constant 104 : index
    %c0_91 = arith.constant 0 : index
    %105 = vector.load %arg5[%c104_90, %c0_91] : memref<200x12xf32, #tpu.memory_space<vmem>>, vector<8x12xf32>
    tpu.vector_store %arg5[%c104_90, %c0_91], %104 {strides = array<i32>} : memref<200x12xf32, #tpu.memory_space<vmem>>, vector<8x12xf32>,
    %106 = vector.extract_strided_slice %97 {offsets = [0, 4], sizes = [8, 12], strides = [1, 1]} : vector<8x16xf32> to vector<8x12xf32>
    %c112_92 = arith.constant 112 : index
    %c0_93 = arith.constant 0 : index
    %107 = vector.load %arg5[%c112_92, %c0_93] : memref<200x12xf32, #tpu.memory_space<vmem>>, vector<8x12xf32>
    tpu.vector_store %arg5[%c112_92, %c0_93], %106 {strides = array<i32>} : memref<200x12xf32, #tpu.memory_space<vmem>>, vector<8x12xf32>,
    %c0_94 = arith.constant 0 : index
    %c0_95 = arith.constant 0 : index
    %c4_96 = arith.constant 4 : index
    %c0_97 = arith.constant 0 : index
    %108 = vector.load %arg1[%c0_94, %c0_95, %c4_96, %c0_97] : memref<1x8x16x16xf32, #tpu.memory_space<vmem>>, vector<1x8x1x16xf32>
    %109 = vector.shape_cast %108 : vector<1x8x1x16xf32> to vector<8x16xf32>
    %110 = vector.extract_strided_slice %109 {offsets = [0, 0], sizes = [8, 12], strides = [1, 1]} : vector<8x16xf32> to vector<8x12xf32>
    %c120_98 = arith.constant 120 : index
    %c0_99 = arith.constant 0 : index
    %111 = vector.load %arg5[%c120_98, %c0_99] : memref<200x12xf32, #tpu.memory_space<vmem>>, vector<8x12xf32>
    tpu.vector_store %arg5[%c120_98, %c0_99], %110 {strides = array<i32>} : memref<200x12xf32, #tpu.memory_space<vmem>>, vector<8x12xf32>,
    %112 = vector.extract_strided_slice %109 {offsets = [0, 1], sizes = [8, 12], strides = [1, 1]} : vector<8x16xf32> to vector<8x12xf32>
    %c128_100 = arith.constant 128 : index
    %c0_101 = arith.constant 0 : index
    %113 = vector.load %arg5[%c128_100, %c0_101] : memref<200x12xf32, #tpu.memory_space<vmem>>, vector<8x12xf32>
    tpu.vector_store %arg5[%c128_100, %c0_101], %112 {strides = array<i32>} : memref<200x12xf32, #tpu.memory_space<vmem>>, vector<8x12xf32>,
    %114 = vector.extract_strided_slice %109 {offsets = [0, 2], sizes = [8, 12], strides = [1, 1]} : vector<8x16xf32> to vector<8x12xf32>
    %c136_102 = arith.constant 136 : index
    %c0_103 = arith.constant 0 : index
    %115 = vector.load %arg5[%c136_102, %c0_103] : memref<200x12xf32, #tpu.memory_space<vmem>>, vector<8x12xf32>
    tpu.vector_store %arg5[%c136_102, %c0_103], %114 {strides = array<i32>} : memref<200x12xf32, #tpu.memory_space<vmem>>, vector<8x12xf32>,
    %116 = vector.extract_strided_slice %109 {offsets = [0, 3], sizes = [8, 12], strides = [1, 1]} : vector<8x16xf32> to vector<8x12xf32>
    %c144_104 = arith.constant 144 : index
    %c0_105 = arith.constant 0 : index
    %117 = vector.load %arg5[%c144_104, %c0_105] : memref<200x12xf32, #tpu.memory_space<vmem>>, vector<8x12xf32>
    tpu.vector_store %arg5[%c144_104, %c0_105], %116 {strides = array<i32>} : memref<200x12xf32, #tpu.memory_space<vmem>>, vector<8x12xf32>,
    %118 = vector.extract_strided_slice %109 {offsets = [0, 4], sizes = [8, 12], strides = [1, 1]} : vector<8x16xf32> to vector<8x12xf32>
    %c152_106 = arith.constant 152 : index
    %c0_107 = arith.constant 0 : index
    %119 = vector.load %arg5[%c152_106, %c0_107] : memref<200x12xf32, #tpu.memory_space<vmem>>, vector<8x12xf32>
    tpu.vector_store %arg5[%c152_106, %c0_107], %118 {strides = array<i32>} : memref<200x12xf32, #tpu.memory_space<vmem>>, vector<8x12xf32>,
    %c0_108 = arith.constant 0 : index
    %c0_109 = arith.constant 0 : index
    %c5 = arith.constant 5 : index
    %c0_110 = arith.constant 0 : index
    %120 = vector.load %arg1[%c0_108, %c0_109, %c5, %c0_110] : memref<1x8x16x16xf32, #tpu.memory_space<vmem>>, vector<1x8x1x16xf32>
    %121 = vector.shape_cast %120 : vector<1x8x1x16xf32> to vector<8x16xf32>
    %122 = vector.extract_strided_slice %121 {offsets = [0, 0], sizes = [8, 12], strides = [1, 1]} : vector<8x16xf32> to vector<8x12xf32>
    %c160_111 = arith.constant 160 : index
    %c0_112 = arith.constant 0 : index
    %123 = vector.load %arg5[%c160_111, %c0_112] : memref<200x12xf32, #tpu.memory_space<vmem>>, vector<8x12xf32>
    tpu.vector_store %arg5[%c160_111, %c0_112], %122 {strides = array<i32>} : memref<200x12xf32, #tpu.memory_space<vmem>>, vector<8x12xf32>,
    %124 = vector.extract_strided_slice %121 {offsets = [0, 1], sizes = [8, 12], strides = [1, 1]} : vector<8x16xf32> to vector<8x12xf32>
    %c168_113 = arith.constant 168 : index
    %c0_114 = arith.constant 0 : index
    %125 = vector.load %arg5[%c168_113, %c0_114] : memref<200x12xf32, #tpu.memory_space<vmem>>, vector<8x12xf32>
    tpu.vector_store %arg5[%c168_113, %c0_114], %124 {strides = array<i32>} : memref<200x12xf32, #tpu.memory_space<vmem>>, vector<8x12xf32>,
    %126 = vector.extract_strided_slice %121 {offsets = [0, 2], sizes = [8, 12], strides = [1, 1]} : vector<8x16xf32> to vector<8x12xf32>
    %c176_115 = arith.constant 176 : index
    %c0_116 = arith.constant 0 : index
    %127 = vector.load %arg5[%c176_115, %c0_116] : memref<200x12xf32, #tpu.memory_space<vmem>>, vector<8x12xf32>
    tpu.vector_store %arg5[%c176_115, %c0_116], %126 {strides = array<i32>} : memref<200x12xf32, #tpu.memory_space<vmem>>, vector<8x12xf32>,
    %128 = vector.extract_strided_slice %121 {offsets = [0, 3], sizes = [8, 12], strides = [1, 1]} : vector<8x16xf32> to vector<8x12xf32>
    %c184_117 = arith.constant 184 : index
    %c0_118 = arith.constant 0 : index
    %129 = vector.load %arg5[%c184_117, %c0_118] : memref<200x12xf32, #tpu.memory_space<vmem>>, vector<8x12xf32>
    tpu.vector_store %arg5[%c184_117, %c0_118], %128 {strides = array<i32>} : memref<200x12xf32, #tpu.memory_space<vmem>>, vector<8x12xf32>,
    %130 = vector.extract_strided_slice %121 {offsets = [0, 4], sizes = [8, 12], strides = [1, 1]} : vector<8x16xf32> to vector<8x12xf32>
    %c192_119 = arith.constant 192 : index
    %c0_120 = arith.constant 0 : index
    %131 = vector.load %arg5[%c192_119, %c0_120] : memref<200x12xf32, #tpu.memory_space<vmem>>, vector<8x12xf32>
    tpu.vector_store %arg5[%c192_119, %c0_120], %130 {strides = array<i32>} : memref<200x12xf32, #tpu.memory_space<vmem>>, vector<8x12xf32>,
    %c0_121 = arith.constant 0 : index
    %c0_122 = arith.constant 0 : index
    %132 = vector.load %arg5[%c0_121, %c0_122] : memref<200x12xf32, #tpu.memory_space<vmem>>, vector<200x12xf32>
    %133 = arith.truncf %132 : vector<200x12xf32> to vector<200x12xbf16>
    %cst_123 = arith.constant dense<0.000000e+00> : vector<32x12xf32>
    %134 = tpu.matmul %0, %133, %cst_123 {dimension_numbers = #tpu.dot_dimension_numbers<[1], [0], [0], [1], [0, 0, 1, 1], [], []>} : vector<32x200xbf16>, vector<200x12xbf16>, vector<32x12xf32> -> vector<32x12xf32>
    %135 = vector.broadcast %1 : vector<32x1xf32> to vector<32x12xf32>
    %136 = arith.addf %134, %135 : vector<32x12xf32>
    %cst_124 = arith.constant 0.000000e+00 : f32
    %137 = vector.broadcast %cst_124 : f32 to vector<32x12xf32>
    %138 = arith.maximumf %136, %137 : vector<32x12xf32>
    %c0_125 = arith.constant 0 : index
    %c0_126 = arith.constant 0 : index
    %c1_127 = arith.constant 1 : index
    %c0_128 = arith.constant 0 : index
    %139 = vector.load %arg4[%c0_125, %c0_126, %c1_127, %c0_128] : memref<1x32x12x12xf32, #tpu.memory_space<vmem>>, vector<1x32x1x12xf32>
    %140 = vector.shape_cast %139 : vector<1x32x1x12xf32> to vector<32x12xf32>
    %141 = vector.shape_cast %138 : vector<32x12xf32> to vector<1x32x1x12xf32>
    tpu.vector_store %arg4[%c0_125, %c0_126, %c1_127, %c0_128], %141 {strides = array<i32>} : memref<1x32x12x12xf32, #tpu.memory_space<vmem>>, vector<1x32x1x12xf32>,
    %c0_129 = arith.constant 0 : index
    %c0_130 = arith.constant 0 : index
    %c2_131 = arith.constant 2 : index
    %c0_132 = arith.constant 0 : index
    %142 = vector.load %arg1[%c0_129, %c0_130, %c2_131, %c0_132] : memref<1x8x16x16xf32, #tpu.memory_space<vmem>>, vector<1x8x1x16xf32>
    %143 = vector.shape_cast %142 : vector<1x8x1x16xf32> to vector<8x16xf32>
    %144 = vector.extract_strided_slice %143 {offsets = [0, 0], sizes = [8, 12], strides = [1, 1]} : vector<8x16xf32> to vector<8x12xf32>
    %c0_133 = arith.constant 0 : index
    %c0_134 = arith.constant 0 : index
    %145 = vector.load %arg5[%c0_133, %c0_134] : memref<200x12xf32, #tpu.memory_space<vmem>>, vector<8x12xf32>
    tpu.vector_store %arg5[%c0_133, %c0_134], %144 {strides = array<i32>} : memref<200x12xf32, #tpu.memory_space<vmem>>, vector<8x12xf32>,
    %146 = vector.extract_strided_slice %143 {offsets = [0, 1], sizes = [8, 12], strides = [1, 1]} : vector<8x16xf32> to vector<8x12xf32>
    %c8_135 = arith.constant 8 : index
    %c0_136 = arith.constant 0 : index
    %147 = vector.load %arg5[%c8_135, %c0_136] : memref<200x12xf32, #tpu.memory_space<vmem>>, vector<8x12xf32>
    tpu.vector_store %arg5[%c8_135, %c0_136], %146 {strides = array<i32>} : memref<200x12xf32, #tpu.memory_space<vmem>>, vector<8x12xf32>,
    %148 = vector.extract_strided_slice %143 {offsets = [0, 2], sizes = [8, 12], strides = [1, 1]} : vector<8x16xf32> to vector<8x12xf32>
    %c16_137 = arith.constant 16 : index
    %c0_138 = arith.constant 0 : index
    %149 = vector.load %arg5[%c16_137, %c0_138] : memref<200x12xf32, #tpu.memory_space<vmem>>, vector<8x12xf32>
    tpu.vector_store %arg5[%c16_137, %c0_138], %148 {strides = array<i32>} : memref<200x12xf32, #tpu.memory_space<vmem>>, vector<8x12xf32>,
    %150 = vector.extract_strided_slice %143 {offsets = [0, 3], sizes = [8, 12], strides = [1, 1]} : vector<8x16xf32> to vector<8x12xf32>
    %c24_139 = arith.constant 24 : index
    %c0_140 = arith.constant 0 : index
    %151 = vector.load %arg5[%c24_139, %c0_140] : memref<200x12xf32, #tpu.memory_space<vmem>>, vector<8x12xf32>
    tpu.vector_store %arg5[%c24_139, %c0_140], %150 {strides = array<i32>} : memref<200x12xf32, #tpu.memory_space<vmem>>, vector<8x12xf32>,
    %152 = vector.extract_strided_slice %143 {offsets = [0, 4], sizes = [8, 12], strides = [1, 1]} : vector<8x16xf32> to vector<8x12xf32>
    %c32_141 = arith.constant 32 : index
    %c0_142 = arith.constant 0 : index
    %153 = vector.load %arg5[%c32_141, %c0_142] : memref<200x12xf32, #tpu.memory_space<vmem>>, vector<8x12xf32>
    tpu.vector_store %arg5[%c32_141, %c0_142], %152 {strides = array<i32>} : memref<200x12xf32, #tpu.memory_space<vmem>>, vector<8x12xf32>,
    %c0_143 = arith.constant 0 : index
    %c0_144 = arith.constant 0 : index
    %c3_145 = arith.constant 3 : index
    %c0_146 = arith.constant 0 : index
    %154 = vector.load %arg1[%c0_143, %c0_144, %c3_145, %c0_146] : memref<1x8x16x16xf32, #tpu.memory_space<vmem>>, vector<1x8x1x16xf32>
    %155 = vector.shape_cast %154 : vector<1x8x1x16xf32> to vector<8x16xf32>
    %156 = vector.extract_strided_slice %155 {offsets = [0, 0], sizes = [8, 12], strides = [1, 1]} : vector<8x16xf32> to vector<8x12xf32>
    %c40_147 = arith.constant 40 : index
    %c0_148 = arith.constant 0 : index
    %157 = vector.load %arg5[%c40_147, %c0_148] : memref<200x12xf32, #tpu.memory_space<vmem>>, vector<8x12xf32>
    tpu.vector_store %arg5[%c40_147, %c0_148], %156 {strides = array<i32>} : memref<200x12xf32, #tpu.memory_space<vmem>>, vector<8x12xf32>,
    %158 = vector.extract_strided_slice %155 {offsets = [0, 1], sizes = [8, 12], strides = [1, 1]} : vector<8x16xf32> to vector<8x12xf32>
    %c48_149 = arith.constant 48 : index
    %c0_150 = arith.constant 0 : index
    %159 = vector.load %arg5[%c48_149, %c0_150] : memref<200x12xf32, #tpu.memory_space<vmem>>, vector<8x12xf32>
    tpu.vector_store %arg5[%c48_149, %c0_150], %158 {strides = array<i32>} : memref<200x12xf32, #tpu.memory_space<vmem>>, vector<8x12xf32>,
    %160 = vector.extract_strided_slice %155 {offsets = [0, 2], sizes = [8, 12], strides = [1, 1]} : vector<8x16xf32> to vector<8x12xf32>
    %c56_151 = arith.constant 56 : index
    %c0_152 = arith.constant 0 : index
    %161 = vector.load %arg5[%c56_151, %c0_152] : memref<200x12xf32, #tpu.memory_space<vmem>>, vector<8x12xf32>
    tpu.vector_store %arg5[%c56_151, %c0_152], %160 {strides = array<i32>} : memref<200x12xf32, #tpu.memory_space<vmem>>, vector<8x12xf32>,
    %162 = vector.extract_strided_slice %155 {offsets = [0, 3], sizes = [8, 12], strides = [1, 1]} : vector<8x16xf32> to vector<8x12xf32>
    %c64_153 = arith.constant 64 : index
    %c0_154 = arith.constant 0 : index
    %163 = vector.load %arg5[%c64_153, %c0_154] : memref<200x12xf32, #tpu.memory_space<vmem>>, vector<8x12xf32>
    tpu.vector_store %arg5[%c64_153, %c0_154], %162 {strides = array<i32>} : memref<200x12xf32, #tpu.memory_space<vmem>>, vector<8x12xf32>,
    %164 = vector.extract_strided_slice %155 {offsets = [0, 4], sizes = [8, 12], strides = [1, 1]} : vector<8x16xf32> to vector<8x12xf32>
    %c72_155 = arith.constant 72 : index
    %c0_156 = arith.constant 0 : index
    %165 = vector.load %arg5[%c72_155, %c0_156] : memref<200x12xf32, #tpu.memory_space<vmem>>, vector<8x12xf32>
    tpu.vector_store %arg5[%c72_155, %c0_156], %164 {strides = array<i32>} : memref<200x12xf32, #tpu.memory_space<vmem>>, vector<8x12xf32>,
    %c0_157 = arith.constant 0 : index
    %c0_158 = arith.constant 0 : index
    %c4_159 = arith.constant 4 : index
    %c0_160 = arith.constant 0 : index
    %166 = vector.load %arg1[%c0_157, %c0_158, %c4_159, %c0_160] : memref<1x8x16x16xf32, #tpu.memory_space<vmem>>, vector<1x8x1x16xf32>
    %167 = vector.shape_cast %166 : vector<1x8x1x16xf32> to vector<8x16xf32>
    %168 = vector.extract_strided_slice %167 {offsets = [0, 0], sizes = [8, 12], strides = [1, 1]} : vector<8x16xf32> to vector<8x12xf32>
    %c80_161 = arith.constant 80 : index
    %c0_162 = arith.constant 0 : index
    %169 = vector.load %arg5[%c80_161, %c0_162] : memref<200x12xf32, #tpu.memory_space<vmem>>, vector<8x12xf32>
    tpu.vector_store %arg5[%c80_161, %c0_162], %168 {strides = array<i32>} : memref<200x12xf32, #tpu.memory_space<vmem>>, vector<8x12xf32>,
    %170 = vector.extract_strided_slice %167 {offsets = [0, 1], sizes = [8, 12], strides = [1, 1]} : vector<8x16xf32> to vector<8x12xf32>
    %c88_163 = arith.constant 88 : index
    %c0_164 = arith.constant 0 : index
    %171 = vector.load %arg5[%c88_163, %c0_164] : memref<200x12xf32, #tpu.memory_space<vmem>>, vector<8x12xf32>
    tpu.vector_store %arg5[%c88_163, %c0_164], %170 {strides = array<i32>} : memref<200x12xf32, #tpu.memory_space<vmem>>, vector<8x12xf32>,
    %172 = vector.extract_strided_slice %167 {offsets = [0, 2], sizes = [8, 12], strides = [1, 1]} : vector<8x16xf32> to vector<8x12xf32>
    %c96_165 = arith.constant 96 : index
    %c0_166 = arith.constant 0 : index
    %173 = vector.load %arg5[%c96_165, %c0_166] : memref<200x12xf32, #tpu.memory_space<vmem>>, vector<8x12xf32>
    tpu.vector_store %arg5[%c96_165, %c0_166], %172 {strides = array<i32>} : memref<200x12xf32, #tpu.memory_space<vmem>>, vector<8x12xf32>,
    %174 = vector.extract_strided_slice %167 {offsets = [0, 3], sizes = [8, 12], strides = [1, 1]} : vector<8x16xf32> to vector<8x12xf32>
    %c104_167 = arith.constant 104 : index
    %c0_168 = arith.constant 0 : index
    %175 = vector.load %arg5[%c104_167, %c0_168] : memref<200x12xf32, #tpu.memory_space<vmem>>, vector<8x12xf32>
    tpu.vector_store %arg5[%c104_167, %c0_168], %174 {strides = array<i32>} : memref<200x12xf32, #tpu.memory_space<vmem>>, vector<8x12xf32>,
    %176 = vector.extract_strided_slice %167 {offsets = [0, 4], sizes = [8, 12], strides = [1, 1]} : vector<8x16xf32> to vector<8x12xf32>
    %c112_169 = arith.constant 112 : index
    %c0_170 = arith.constant 0 : index
    %177 = vector.load %arg5[%c112_169, %c0_170] : memref<200x12xf32, #tpu.memory_space<vmem>>, vector<8x12xf32>
    tpu.vector_store %arg5[%c112_169, %c0_170], %176 {strides = array<i32>} : memref<200x12xf32, #tpu.memory_space<vmem>>, vector<8x12xf32>,
    %c0_171 = arith.constant 0 : index
    %c0_172 = arith.constant 0 : index
    %c5_173 = arith.constant 5 : index
    %c0_174 = arith.constant 0 : index
    %178 = vector.load %arg1[%c0_171, %c0_172, %c5_173, %c0_174] : memref<1x8x16x16xf32, #tpu.memory_space<vmem>>, vector<1x8x1x16xf32>
    %179 = vector.shape_cast %178 : vector<1x8x1x16xf32> to vector<8x16xf32>
    %180 = vector.extract_strided_slice %179 {offsets = [0, 0], sizes = [8, 12], strides = [1, 1]} : vector<8x16xf32> to vector<8x12xf32>
    %c120_175 = arith.constant 120 : index
    %c0_176 = arith.constant 0 : index
    %181 = vector.load %arg5[%c120_175, %c0_176] : memref<200x12xf32, #tpu.memory_space<vmem>>, vector<8x12xf32>
    tpu.vector_store %arg5[%c120_175, %c0_176], %180 {strides = array<i32>} : memref<200x12xf32, #tpu.memory_space<vmem>>, vector<8x12xf32>,
    %182 = vector.extract_strided_slice %179 {offsets = [0, 1], sizes = [8, 12], strides = [1, 1]} : vector<8x16xf32> to vector<8x12xf32>
    %c128_177 = arith.constant 128 : index
    %c0_178 = arith.constant 0 : index
    %183 = vector.load %arg5[%c128_177, %c0_178] : memref<200x12xf32, #tpu.memory_space<vmem>>, vector<8x12xf32>
    tpu.vector_store %arg5[%c128_177, %c0_178], %182 {strides = array<i32>} : memref<200x12xf32, #tpu.memory_space<vmem>>, vector<8x12xf32>,
    %184 = vector.extract_strided_slice %179 {offsets = [0, 2], sizes = [8, 12], strides = [1, 1]} : vector<8x16xf32> to vector<8x12xf32>
    %c136_179 = arith.constant 136 : index
    %c0_180 = arith.constant 0 : index
    %185 = vector.load %arg5[%c136_179, %c0_180] : memref<200x12xf32, #tpu.memory_space<vmem>>, vector<8x12xf32>
    tpu.vector_store %arg5[%c136_179, %c0_180], %184 {strides = array<i32>} : memref<200x12xf32, #tpu.memory_space<vmem>>, vector<8x12xf32>,
    %186 = vector.extract_strided_slice %179 {offsets = [0, 3], sizes = [8, 12], strides = [1, 1]} : vector<8x16xf32> to vector<8x12xf32>
    %c144_181 = arith.constant 144 : index
    %c0_182 = arith.constant 0 : index
    %187 = vector.load %arg5[%c144_181, %c0_182] : memref<200x12xf32, #tpu.memory_space<vmem>>, vector<8x12xf32>
    tpu.vector_store %arg5[%c144_181, %c0_182], %186 {strides = array<i32>} : memref<200x12xf32, #tpu.memory_space<vmem>>, vector<8x12xf32>,
    %188 = vector.extract_strided_slice %179 {offsets = [0, 4], sizes = [8, 12], strides = [1, 1]} : vector<8x16xf32> to vector<8x12xf32>
    %c152_183 = arith.constant 152 : index
    %c0_184 = arith.constant 0 : index
    %189 = vector.load %arg5[%c152_183, %c0_184] : memref<200x12xf32, #tpu.memory_space<vmem>>, vector<8x12xf32>
    tpu.vector_store %arg5[%c152_183, %c0_184], %188 {strides = array<i32>} : memref<200x12xf32, #tpu.memory_space<vmem>>, vector<8x12xf32>,
    %c0_185 = arith.constant 0 : index
    %c0_186 = arith.constant 0 : index
    %c6 = arith.constant 6 : index
    %c0_187 = arith.constant 0 : index
    %190 = vector.load %arg1[%c0_185, %c0_186, %c6, %c0_187] : memref<1x8x16x16xf32, #tpu.memory_space<vmem>>, vector<1x8x1x16xf32>
    %191 = vector.shape_cast %190 : vector<1x8x1x16xf32> to vector<8x16xf32>
    %192 = vector.extract_strided_slice %191 {offsets = [0, 0], sizes = [8, 12], strides = [1, 1]} : vector<8x16xf32> to vector<8x12xf32>
    %c160_188 = arith.constant 160 : index
    %c0_189 = arith.constant 0 : index
    %193 = vector.load %arg5[%c160_188, %c0_189] : memref<200x12xf32, #tpu.memory_space<vmem>>, vector<8x12xf32>
    tpu.vector_store %arg5[%c160_188, %c0_189], %192 {strides = array<i32>} : memref<200x12xf32, #tpu.memory_space<vmem>>, vector<8x12xf32>,
    %194 = vector.extract_strided_slice %191 {offsets = [0, 1], sizes = [8, 12], strides = [1, 1]} : vector<8x16xf32> to vector<8x12xf32>
    %c168_190 = arith.constant 168 : index
    %c0_191 = arith.constant 0 : index
    %195 = vector.load %arg5[%c168_190, %c0_191] : memref<200x12xf32, #tpu.memory_space<vmem>>, vector<8x12xf32>
    tpu.vector_store %arg5[%c168_190, %c0_191], %194 {strides = array<i32>} : memref<200x12xf32, #tpu.memory_space<vmem>>, vector<8x12xf32>,
    %196 = vector.extract_strided_slice %191 {offsets = [0, 2], sizes = [8, 12], strides = [1, 1]} : vector<8x16xf32> to vector<8x12xf32>
    %c176_192 = arith.constant 176 : index
    %c0_193 = arith.constant 0 : index
    %197 = vector.load %arg5[%c176_192, %c0_193] : memref<200x12xf32, #tpu.memory_space<vmem>>, vector<8x12xf32>
    tpu.vector_store %arg5[%c176_192, %c0_193], %196 {strides = array<i32>} : memref<200x12xf32, #tpu.memory_space<vmem>>, vector<8x12xf32>,
    %198 = vector.extract_strided_slice %191 {offsets = [0, 3], sizes = [8, 12], strides = [1, 1]} : vector<8x16xf32> to vector<8x12xf32>
    %c184_194 = arith.constant 184 : index
    %c0_195 = arith.constant 0 : index
    %199 = vector.load %arg5[%c184_194, %c0_195] : memref<200x12xf32, #tpu.memory_space<vmem>>, vector<8x12xf32>
    tpu.vector_store %arg5[%c184_194, %c0_195], %198 {strides = array<i32>} : memref<200x12xf32, #tpu.memory_space<vmem>>, vector<8x12xf32>,
    %200 = vector.extract_strided_slice %191 {offsets = [0, 4], sizes = [8, 12], strides = [1, 1]} : vector<8x16xf32> to vector<8x12xf32>
    %c192_196 = arith.constant 192 : index
    %c0_197 = arith.constant 0 : index
    %201 = vector.load %arg5[%c192_196, %c0_197] : memref<200x12xf32, #tpu.memory_space<vmem>>, vector<8x12xf32>
    tpu.vector_store %arg5[%c192_196, %c0_197], %200 {strides = array<i32>} : memref<200x12xf32, #tpu.memory_space<vmem>>, vector<8x12xf32>,
    %c0_198 = arith.constant 0 : index
    %c0_199 = arith.constant 0 : index
    %202 = vector.load %arg5[%c0_198, %c0_199] : memref<200x12xf32, #tpu.memory_space<vmem>>, vector<200x12xf32>
    %203 = arith.truncf %202 : vector<200x12xf32> to vector<200x12xbf16>
    %cst_200 = arith.constant dense<0.000000e+00> : vector<32x12xf32>
    %204 = tpu.matmul %0, %203, %cst_200 {dimension_numbers = #tpu.dot_dimension_numbers<[1], [0], [0], [1], [0, 0, 1, 1], [], []>} : vector<32x200xbf16>, vector<200x12xbf16>, vector<32x12xf32> -> vector<32x12xf32>
    %205 = vector.broadcast %1 : vector<32x1xf32> to vector<32x12xf32>
    %206 = arith.addf %204, %205 : vector<32x12xf32>
    %cst_201 = arith.constant 0.000000e+00 : f32
    %207 = vector.broadcast %cst_201 : f32 to vector<32x12xf32>
    %208 = arith.maximumf %206, %207 : vector<32x12xf32>
    %c0_202 = arith.constant 0 : index
    %c0_203 = arith.constant 0 : index
    %c2_204 = arith.constant 2 : index
    %c0_205 = arith.constant 0 : index
    %209 = vector.load %arg4[%c0_202, %c0_203, %c2_204, %c0_205] : memref<1x32x12x12xf32, #tpu.memory_space<vmem>>, vector<1x32x1x12xf32>
    %210 = vector.shape_cast %209 : vector<1x32x1x12xf32> to vector<32x12xf32>
    %211 = vector.shape_cast %208 : vector<32x12xf32> to vector<1x32x1x12xf32>
    tpu.vector_store %arg4[%c0_202, %c0_203, %c2_204, %c0_205], %211 {strides = array<i32>} : memref<1x32x12x12xf32, #tpu.memory_space<vmem>>, vector<1x32x1x12xf32>,
    %c0_206 = arith.constant 0 : index
    %c0_207 = arith.constant 0 : index
    %c3_208 = arith.constant 3 : index
    %c0_209 = arith.constant 0 : index
    %212 = vector.load %arg1[%c0_206, %c0_207, %c3_208, %c0_209] : memref<1x8x16x16xf32, #tpu.memory_space<vmem>>, vector<1x8x1x16xf32>
    %213 = vector.shape_cast %212 : vector<1x8x1x16xf32> to vector<8x16xf32>
    %214 = vector.extract_strided_slice %213 {offsets = [0, 0], sizes = [8, 12], strides = [1, 1]} : vector<8x16xf32> to vector<8x12xf32>
    %c0_210 = arith.constant 0 : index
    %c0_211 = arith.constant 0 : index
    %215 = vector.load %arg5[%c0_210, %c0_211] : memref<200x12xf32, #tpu.memory_space<vmem>>, vector<8x12xf32>
    tpu.vector_store %arg5[%c0_210, %c0_211], %214 {strides = array<i32>} : memref<200x12xf32, #tpu.memory_space<vmem>>, vector<8x12xf32>,
    %216 = vector.extract_strided_slice %213 {offsets = [0, 1], sizes = [8, 12], strides = [1, 1]} : vector<8x16xf32> to vector<8x12xf32>
    %c8_212 = arith.constant 8 : index
    %c0_213 = arith.constant 0 : index
    %217 = vector.load %arg5[%c8_212, %c0_213] : memref<200x12xf32, #tpu.memory_space<vmem>>, vector<8x12xf32>
    tpu.vector_store %arg5[%c8_212, %c0_213], %216 {strides = array<i32>} : memref<200x12xf32, #tpu.memory_space<vmem>>, vector<8x12xf32>,
    %218 = vector.extract_strided_slice %213 {offsets = [0, 2], sizes = [8, 12], strides = [1, 1]} : vector<8x16xf32> to vector<8x12xf32>
    %c16_214 = arith.constant 16 : index
    %c0_215 = arith.constant 0 : index
    %219 = vector.load %arg5[%c16_214, %c0_215] : memref<200x12xf32, #tpu.memory_space<vmem>>, vector<8x12xf32>
    tpu.vector_store %arg5[%c16_214, %c0_215], %218 {strides = array<i32>} : memref<200x12xf32, #tpu.memory_space<vmem>>, vector<8x12xf32>,
    %220 = vector.extract_strided_slice %213 {offsets = [0, 3], sizes = [8, 12], strides = [1, 1]} : vector<8x16xf32> to vector<8x12xf32>
    %c24_216 = arith.constant 24 : index
    %c0_217 = arith.constant 0 : index
    %221 = vector.load %arg5[%c24_216, %c0_217] : memref<200x12xf32, #tpu.memory_space<vmem>>, vector<8x12xf32>
    tpu.vector_store %arg5[%c24_216, %c0_217], %220 {strides = array<i32>} : memref<200x12xf32, #tpu.memory_space<vmem>>, vector<8x12xf32>,
    %222 = vector.extract_strided_slice %213 {offsets = [0, 4], sizes = [8, 12], strides = [1, 1]} : vector<8x16xf32> to vector<8x12xf32>
    %c32_218 = arith.constant 32 : index
    %c0_219 = arith.constant 0 : index
    %223 = vector.load %arg5[%c32_218, %c0_219] : memref<200x12xf32, #tpu.memory_space<vmem>>, vector<8x12xf32>
    tpu.vector_store %arg5[%c32_218, %c0_219], %222 {strides = array<i32>} : memref<200x12xf32, #tpu.memory_space<vmem>>, vector<8x12xf32>,
    %c0_220 = arith.constant 0 : index
    %c0_221 = arith.constant 0 : index
    %c4_222 = arith.constant 4 : index
    %c0_223 = arith.constant 0 : index
    %224 = vector.load %arg1[%c0_220, %c0_221, %c4_222, %c0_223] : memref<1x8x16x16xf32, #tpu.memory_space<vmem>>, vector<1x8x1x16xf32>
    %225 = vector.shape_cast %224 : vector<1x8x1x16xf32> to vector<8x16xf32>
    %226 = vector.extract_strided_slice %225 {offsets = [0, 0], sizes = [8, 12], strides = [1, 1]} : vector<8x16xf32> to vector<8x12xf32>
    %c40_224 = arith.constant 40 : index
    %c0_225 = arith.constant 0 : index
    %227 = vector.load %arg5[%c40_224, %c0_225] : memref<200x12xf32, #tpu.memory_space<vmem>>, vector<8x12xf32>
    tpu.vector_store %arg5[%c40_224, %c0_225], %226 {strides = array<i32>} : memref<200x12xf32, #tpu.memory_space<vmem>>, vector<8x12xf32>,
    %228 = vector.extract_strided_slice %225 {offsets = [0, 1], sizes = [8, 12], strides = [1, 1]} : vector<8x16xf32> to vector<8x12xf32>
    %c48_226 = arith.constant 48 : index
    %c0_227 = arith.constant 0 : index
    %229 = vector.load %arg5[%c48_226, %c0_227] : memref<200x12xf32, #tpu.memory_space<vmem>>, vector<8x12xf32>
    tpu.vector_store %arg5[%c48_226, %c0_227], %228 {strides = array<i32>} : memref<200x12xf32, #tpu.memory_space<vmem>>, vector<8x12xf32>,
    %230 = vector.extract_strided_slice %225 {offsets = [0, 2], sizes = [8, 12], strides = [1, 1]} : vector<8x16xf32> to vector<8x12xf32>
    %c56_228 = arith.constant 56 : index
    %c0_229 = arith.constant 0 : index
    %231 = vector.load %arg5[%c56_228, %c0_229] : memref<200x12xf32, #tpu.memory_space<vmem>>, vector<8x12xf32>
    tpu.vector_store %arg5[%c56_228, %c0_229], %230 {strides = array<i32>} : memref<200x12xf32, #tpu.memory_space<vmem>>, vector<8x12xf32>,
    %232 = vector.extract_strided_slice %225 {offsets = [0, 3], sizes = [8, 12], strides = [1, 1]} : vector<8x16xf32> to vector<8x12xf32>
    %c64_230 = arith.constant 64 : index
    %c0_231 = arith.constant 0 : index
    %233 = vector.load %arg5[%c64_230, %c0_231] : memref<200x12xf32, #tpu.memory_space<vmem>>, vector<8x12xf32>
    tpu.vector_store %arg5[%c64_230, %c0_231], %232 {strides = array<i32>} : memref<200x12xf32, #tpu.memory_space<vmem>>, vector<8x12xf32>,
    %234 = vector.extract_strided_slice %225 {offsets = [0, 4], sizes = [8, 12], strides = [1, 1]} : vector<8x16xf32> to vector<8x12xf32>
    %c72_232 = arith.constant 72 : index
    %c0_233 = arith.constant 0 : index
    %235 = vector.load %arg5[%c72_232, %c0_233] : memref<200x12xf32, #tpu.memory_space<vmem>>, vector<8x12xf32>
    tpu.vector_store %arg5[%c72_232, %c0_233], %234 {strides = array<i32>} : memref<200x12xf32, #tpu.memory_space<vmem>>, vector<8x12xf32>,
    %c0_234 = arith.constant 0 : index
    %c0_235 = arith.constant 0 : index
    %c5_236 = arith.constant 5 : index
    %c0_237 = arith.constant 0 : index
    %236 = vector.load %arg1[%c0_234, %c0_235, %c5_236, %c0_237] : memref<1x8x16x16xf32, #tpu.memory_space<vmem>>, vector<1x8x1x16xf32>
    %237 = vector.shape_cast %236 : vector<1x8x1x16xf32> to vector<8x16xf32>
    %238 = vector.extract_strided_slice %237 {offsets = [0, 0], sizes = [8, 12], strides = [1, 1]} : vector<8x16xf32> to vector<8x12xf32>
    %c80_238 = arith.constant 80 : index
    %c0_239 = arith.constant 0 : index
    %239 = vector.load %arg5[%c80_238, %c0_239] : memref<200x12xf32, #tpu.memory_space<vmem>>, vector<8x12xf32>
    tpu.vector_store %arg5[%c80_238, %c0_239], %238 {strides = array<i32>} : memref<200x12xf32, #tpu.memory_space<vmem>>, vector<8x12xf32>,
    %240 = vector.extract_strided_slice %237 {offsets = [0, 1], sizes = [8, 12], strides = [1, 1]} : vector<8x16xf32> to vector<8x12xf32>
    %c88_240 = arith.constant 88 : index
    %c0_241 = arith.constant 0 : index
    %241 = vector.load %arg5[%c88_240, %c0_241] : memref<200x12xf32, #tpu.memory_space<vmem>>, vector<8x12xf32>
    tpu.vector_store %arg5[%c88_240, %c0_241], %240 {strides = array<i32>} : memref<200x12xf32, #tpu.memory_space<vmem>>, vector<8x12xf32>,
    %242 = vector.extract_strided_slice %237 {offsets = [0, 2], sizes = [8, 12], strides = [1, 1]} : vector<8x16xf32> to vector<8x12xf32>
    %c96_242 = arith.constant 96 : index
    %c0_243 = arith.constant 0 : index
    %243 = vector.load %arg5[%c96_242, %c0_243] : memref<200x12xf32, #tpu.memory_space<vmem>>, vector<8x12xf32>
    tpu.vector_store %arg5[%c96_242, %c0_243], %242 {strides = array<i32>} : memref<200x12xf32, #tpu.memory_space<vmem>>, vector<8x12xf32>,
    %244 = vector.extract_strided_slice %237 {offsets = [0, 3], sizes = [8, 12], strides = [1, 1]} : vector<8x16xf32> to vector<8x12xf32>
    %c104_244 = arith.constant 104 : index
    %c0_245 = arith.constant 0 : index
    %245 = vector.load %arg5[%c104_244, %c0_245] : memref<200x12xf32, #tpu.memory_space<vmem>>, vector<8x12xf32>
    tpu.vector_store %arg5[%c104_244, %c0_245], %244 {strides = array<i32>} : memref<200x12xf32, #tpu.memory_space<vmem>>, vector<8x12xf32>,
    %246 = vector.extract_strided_slice %237 {offsets = [0, 4], sizes = [8, 12], strides = [1, 1]} : vector<8x16xf32> to vector<8x12xf32>
    %c112_246 = arith.constant 112 : index
    %c0_247 = arith.constant 0 : index
    %247 = vector.load %arg5[%c112_246, %c0_247] : memref<200x12xf32, #tpu.memory_space<vmem>>, vector<8x12xf32>
    tpu.vector_store %arg5[%c112_246, %c0_247], %246 {strides = array<i32>} : memref<200x12xf32, #tpu.memory_space<vmem>>, vector<8x12xf32>,
    %c0_248 = arith.constant 0 : index
    %c0_249 = arith.constant 0 : index
    %c6_250 = arith.constant 6 : index
    %c0_251 = arith.constant 0 : index
    %248 = vector.load %arg1[%c0_248, %c0_249, %c6_250, %c0_251] : memref<1x8x16x16xf32, #tpu.memory_space<vmem>>, vector<1x8x1x16xf32>
    %249 = vector.shape_cast %248 : vector<1x8x1x16xf32> to vector<8x16xf32>
    %250 = vector.extract_strided_slice %249 {offsets = [0, 0], sizes = [8, 12], strides = [1, 1]} : vector<8x16xf32> to vector<8x12xf32>
    %c120_252 = arith.constant 120 : index
    %c0_253 = arith.constant 0 : index
    %251 = vector.load %arg5[%c120_252, %c0_253] : memref<200x12xf32, #tpu.memory_space<vmem>>, vector<8x12xf32>
    tpu.vector_store %arg5[%c120_252, %c0_253], %250 {strides = array<i32>} : memref<200x12xf32, #tpu.memory_space<vmem>>, vector<8x12xf32>,
    %252 = vector.extract_strided_slice %249 {offsets = [0, 1], sizes = [8, 12], strides = [1, 1]} : vector<8x16xf32> to vector<8x12xf32>
    %c128_254 = arith.constant 128 : index
    %c0_255 = arith.constant 0 : index
    %253 = vector.load %arg5[%c128_254, %c0_255] : memref<200x12xf32, #tpu.memory_space<vmem>>, vector<8x12xf32>
    tpu.vector_store %arg5[%c128_254, %c0_255], %252 {strides = array<i32>} : memref<200x12xf32, #tpu.memory_space<vmem>>, vector<8x12xf32>,
    %254 = vector.extract_strided_slice %249 {offsets = [0, 2], sizes = [8, 12], strides = [1, 1]} : vector<8x16xf32> to vector<8x12xf32>
    %c136_256 = arith.constant 136 : index
    %c0_257 = arith.constant 0 : index
    %255 = vector.load %arg5[%c136_256, %c0_257] : memref<200x12xf32, #tpu.memory_space<vmem>>, vector<8x12xf32>
    tpu.vector_store %arg5[%c136_256, %c0_257], %254 {strides = array<i32>} : memref<200x12xf32, #tpu.memory_space<vmem>>, vector<8x12xf32>,
    %256 = vector.extract_strided_slice %249 {offsets = [0, 3], sizes = [8, 12], strides = [1, 1]} : vector<8x16xf32> to vector<8x12xf32>
    %c144_258 = arith.constant 144 : index
    %c0_259 = arith.constant 0 : index
    %257 = vector.load %arg5[%c144_258, %c0_259] : memref<200x12xf32, #tpu.memory_space<vmem>>, vector<8x12xf32>
    tpu.vector_store %arg5[%c144_258, %c0_259], %256 {strides = array<i32>} : memref<200x12xf32, #tpu.memory_space<vmem>>, vector<8x12xf32>,
    %258 = vector.extract_strided_slice %249 {offsets = [0, 4], sizes = [8, 12], strides = [1, 1]} : vector<8x16xf32> to vector<8x12xf32>
    %c152_260 = arith.constant 152 : index
    %c0_261 = arith.constant 0 : index
    %259 = vector.load %arg5[%c152_260, %c0_261] : memref<200x12xf32, #tpu.memory_space<vmem>>, vector<8x12xf32>
    tpu.vector_store %arg5[%c152_260, %c0_261], %258 {strides = array<i32>} : memref<200x12xf32, #tpu.memory_space<vmem>>, vector<8x12xf32>,
    %c0_262 = arith.constant 0 : index
    %c0_263 = arith.constant 0 : index
    %c7 = arith.constant 7 : index
    %c0_264 = arith.constant 0 : index
    %260 = vector.load %arg1[%c0_262, %c0_263, %c7, %c0_264] : memref<1x8x16x16xf32, #tpu.memory_space<vmem>>, vector<1x8x1x16xf32>
    %261 = vector.shape_cast %260 : vector<1x8x1x16xf32> to vector<8x16xf32>
    %262 = vector.extract_strided_slice %261 {offsets = [0, 0], sizes = [8, 12], strides = [1, 1]} : vector<8x16xf32> to vector<8x12xf32>
    %c160_265 = arith.constant 160 : index
    %c0_266 = arith.constant 0 : index
    %263 = vector.load %arg5[%c160_265, %c0_266] : memref<200x12xf32, #tpu.memory_space<vmem>>, vector<8x12xf32>
    tpu.vector_store %arg5[%c160_265, %c0_266], %262 {strides = array<i32>} : memref<200x12xf32, #tpu.memory_space<vmem>>, vector<8x12xf32>,
    %264 = vector.extract_strided_slice %261 {offsets = [0, 1], sizes = [8, 12], strides = [1, 1]} : vector<8x16xf32> to vector<8x12xf32>
    %c168_267 = arith.constant 168 : index
    %c0_268 = arith.constant 0 : index
    %265 = vector.load %arg5[%c168_267, %c0_268] : memref<200x12xf32, #tpu.memory_space<vmem>>, vector<8x12xf32>
    tpu.vector_store %arg5[%c168_267, %c0_268], %264 {strides = array<i32>} : memref<200x12xf32, #tpu.memory_space<vmem>>, vector<8x12xf32>,
    %266 = vector.extract_strided_slice %261 {offsets = [0, 2], sizes = [8, 12], strides = [1, 1]} : vector<8x16xf32> to vector<8x12xf32>
    %c176_269 = arith.constant 176 : index
    %c0_270 = arith.constant 0 : index
    %267 = vector.load %arg5[%c176_269, %c0_270] : memref<200x12xf32, #tpu.memory_space<vmem>>, vector<8x12xf32>
    tpu.vector_store %arg5[%c176_269, %c0_270], %266 {strides = array<i32>} : memref<200x12xf32, #tpu.memory_space<vmem>>, vector<8x12xf32>,
    %268 = vector.extract_strided_slice %261 {offsets = [0, 3], sizes = [8, 12], strides = [1, 1]} : vector<8x16xf32> to vector<8x12xf32>
    %c184_271 = arith.constant 184 : index
    %c0_272 = arith.constant 0 : index
    %269 = vector.load %arg5[%c184_271, %c0_272] : memref<200x12xf32, #tpu.memory_space<vmem>>, vector<8x12xf32>
    tpu.vector_store %arg5[%c184_271, %c0_272], %268 {strides = array<i32>} : memref<200x12xf32, #tpu.memory_space<vmem>>, vector<8x12xf32>,
    %270 = vector.extract_strided_slice %261 {offsets = [0, 4], sizes = [8, 12], strides = [1, 1]} : vector<8x16xf32> to vector<8x12xf32>
    %c192_273 = arith.constant 192 : index
    %c0_274 = arith.constant 0 : index
    %271 = vector.load %arg5[%c192_273, %c0_274] : memref<200x12xf32, #tpu.memory_space<vmem>>, vector<8x12xf32>
    tpu.vector_store %arg5[%c192_273, %c0_274], %270 {strides = array<i32>} : memref<200x12xf32, #tpu.memory_space<vmem>>, vector<8x12xf32>,
    %c0_275 = arith.constant 0 : index
    %c0_276 = arith.constant 0 : index
    %272 = vector.load %arg5[%c0_275, %c0_276] : memref<200x12xf32, #tpu.memory_space<vmem>>, vector<200x12xf32>
    %273 = arith.truncf %272 : vector<200x12xf32> to vector<200x12xbf16>
    %cst_277 = arith.constant dense<0.000000e+00> : vector<32x12xf32>
    %274 = tpu.matmul %0, %273, %cst_277 {dimension_numbers = #tpu.dot_dimension_numbers<[1], [0], [0], [1], [0, 0, 1, 1], [], []>} : vector<32x200xbf16>, vector<200x12xbf16>, vector<32x12xf32> -> vector<32x12xf32>
    %275 = vector.broadcast %1 : vector<32x1xf32> to vector<32x12xf32>
    %276 = arith.addf %274, %275 : vector<32x12xf32>
    %cst_278 = arith.constant 0.000000e+00 : f32
    %277 = vector.broadcast %cst_278 : f32 to vector<32x12xf32>
    %278 = arith.maximumf %276, %277 : vector<32x12xf32>
    %c0_279 = arith.constant 0 : index
    %c0_280 = arith.constant 0 : index
    %c3_281 = arith.constant 3 : index
    %c0_282 = arith.constant 0 : index
    %279 = vector.load %arg4[%c0_279, %c0_280, %c3_281, %c0_282] : memref<1x32x12x12xf32, #tpu.memory_space<vmem>>, vector<1x32x1x12xf32>
    %280 = vector.shape_cast %279 : vector<1x32x1x12xf32> to vector<32x12xf32>
    %281 = vector.shape_cast %278 : vector<32x12xf32> to vector<1x32x1x12xf32>
    tpu.vector_store %arg4[%c0_279, %c0_280, %c3_281, %c0_282], %281 {strides = array<i32>} : memref<1x32x12x12xf32, #tpu.memory_space<vmem>>, vector<1x32x1x12xf32>,
    %c0_283 = arith.constant 0 : index
    %c0_284 = arith.constant 0 : index
    %c4_285 = arith.constant 4 : index
    %c0_286 = arith.constant 0 : index
    %282 = vector.load %arg1[%c0_283, %c0_284, %c4_285, %c0_286] : memref<1x8x16x16xf32, #tpu.memory_space<vmem>>, vector<1x8x1x16xf32>
    %283 = vector.shape_cast %282 : vector<1x8x1x16xf32> to vector<8x16xf32>
    %284 = vector.extract_strided_slice %283 {offsets = [0, 0], sizes = [8, 12], strides = [1, 1]} : vector<8x16xf32> to vector<8x12xf32>
    %c0_287 = arith.constant 0 : index
    %c0_288 = arith.constant 0 : index
    %285 = vector.load %arg5[%c0_287, %c0_288] : memref<200x12xf32, #tpu.memory_space<vmem>>, vector<8x12xf32>
    tpu.vector_store %arg5[%c0_287, %c0_288], %284 {strides = array<i32>} : memref<200x12xf32, #tpu.memory_space<vmem>>, vector<8x12xf32>,
    %286 = vector.extract_strided_slice %283 {offsets = [0, 1], sizes = [8, 12], strides = [1, 1]} : vector<8x16xf32> to vector<8x12xf32>
    %c8_289 = arith.constant 8 : index
    %c0_290 = arith.constant 0 : index
    %287 = vector.load %arg5[%c8_289, %c0_290] : memref<200x12xf32, #tpu.memory_space<vmem>>, vector<8x12xf32>
    tpu.vector_store %arg5[%c8_289, %c0_290], %286 {strides = array<i32>} : memref<200x12xf32, #tpu.memory_space<vmem>>, vector<8x12xf32>,
    %288 = vector.extract_strided_slice %283 {offsets = [0, 2], sizes = [8, 12], strides = [1, 1]} : vector<8x16xf32> to vector<8x12xf32>
    %c16_291 = arith.constant 16 : index
    %c0_292 = arith.constant 0 : index
    %289 = vector.load %arg5[%c16_291, %c0_292] : memref<200x12xf32, #tpu.memory_space<vmem>>, vector<8x12xf32>
    tpu.vector_store %arg5[%c16_291, %c0_292], %288 {strides = array<i32>} : memref<200x12xf32, #tpu.memory_space<vmem>>, vector<8x12xf32>,
    %290 = vector.extract_strided_slice %283 {offsets = [0, 3], sizes = [8, 12], strides = [1, 1]} : vector<8x16xf32> to vector<8x12xf32>
    %c24_293 = arith.constant 24 : index
    %c0_294 = arith.constant 0 : index
    %291 = vector.load %arg5[%c24_293, %c0_294] : memref<200x12xf32, #tpu.memory_space<vmem>>, vector<8x12xf32>
    tpu.vector_store %arg5[%c24_293, %c0_294], %290 {strides = array<i32>} : memref<200x12xf32, #tpu.memory_space<vmem>>, vector<8x12xf32>,
    %292 = vector.extract_strided_slice %283 {offsets = [0, 4], sizes = [8, 12], strides = [1, 1]} : vector<8x16xf32> to vector<8x12xf32>
    %c32_295 = arith.constant 32 : index
    %c0_296 = arith.constant 0 : index
    %293 = vector.load %arg5[%c32_295, %c0_296] : memref<200x12xf32, #tpu.memory_space<vmem>>, vector<8x12xf32>
    tpu.vector_store %arg5[%c32_295, %c0_296], %292 {strides = array<i32>} : memref<200x12xf32, #tpu.memory_space<vmem>>, vector<8x12xf32>,
    %c0_297 = arith.constant 0 : index
    %c0_298 = arith.constant 0 : index
    %c5_299 = arith.constant 5 : index
    %c0_300 = arith.constant 0 : index
    %294 = vector.load %arg1[%c0_297, %c0_298, %c5_299, %c0_300] : memref<1x8x16x16xf32, #tpu.memory_space<vmem>>, vector<1x8x1x16xf32>
    %295 = vector.shape_cast %294 : vector<1x8x1x16xf32> to vector<8x16xf32>
    %296 = vector.extract_strided_slice %295 {offsets = [0, 0], sizes = [8, 12], strides = [1, 1]} : vector<8x16xf32> to vector<8x12xf32>
    %c40_301 = arith.constant 40 : index
    %c0_302 = arith.constant 0 : index
    %297 = vector.load %arg5[%c40_301, %c0_302] : memref<200x12xf32, #tpu.memory_space<vmem>>, vector<8x12xf32>
    tpu.vector_store %arg5[%c40_301, %c0_302], %296 {strides = array<i32>} : memref<200x12xf32, #tpu.memory_space<vmem>>, vector<8x12xf32>,
    %298 = vector.extract_strided_slice %295 {offsets = [0, 1], sizes = [8, 12], strides = [1, 1]} : vector<8x16xf32> to vector<8x12xf32>
    %c48_303 = arith.constant 48 : index
    %c0_304 = arith.constant 0 : index
    %299 = vector.load %arg5[%c48_303, %c0_304] : memref<200x12xf32, #tpu.memory_space<vmem>>, vector<8x12xf32>
    tpu.vector_store %arg5[%c48_303, %c0_304], %298 {strides = array<i32>} : memref<200x12xf32, #tpu.memory_space<vmem>>, vector<8x12xf32>,
    %300 = vector.extract_strided_slice %295 {offsets = [0, 2], sizes = [8, 12], strides = [1, 1]} : vector<8x16xf32> to vector<8x12xf32>
    %c56_305 = arith.constant 56 : index
    %c0_306 = arith.constant 0 : index
    %301 = vector.load %arg5[%c56_305, %c0_306] : memref<200x12xf32, #tpu.memory_space<vmem>>, vector<8x12xf32>
    tpu.vector_store %arg5[%c56_305, %c0_306], %300 {strides = array<i32>} : memref<200x12xf32, #tpu.memory_space<vmem>>, vector<8x12xf32>,
    %302 = vector.extract_strided_slice %295 {offsets = [0, 3], sizes = [8, 12], strides = [1, 1]} : vector<8x16xf32> to vector<8x12xf32>
    %c64_307 = arith.constant 64 : index
    %c0_308 = arith.constant 0 : index
    %303 = vector.load %arg5[%c64_307, %c0_308] : memref<200x12xf32, #tpu.memory_space<vmem>>, vector<8x12xf32>
    tpu.vector_store %arg5[%c64_307, %c0_308], %302 {strides = array<i32>} : memref<200x12xf32, #tpu.memory_space<vmem>>, vector<8x12xf32>,
    %304 = vector.extract_strided_slice %295 {offsets = [0, 4], sizes = [8, 12], strides = [1, 1]} : vector<8x16xf32> to vector<8x12xf32>
    %c72_309 = arith.constant 72 : index
    %c0_310 = arith.constant 0 : index
    %305 = vector.load %arg5[%c72_309, %c0_310] : memref<200x12xf32, #tpu.memory_space<vmem>>, vector<8x12xf32>
    tpu.vector_store %arg5[%c72_309, %c0_310], %304 {strides = array<i32>} : memref<200x12xf32, #tpu.memory_space<vmem>>, vector<8x12xf32>,
    %c0_311 = arith.constant 0 : index
    %c0_312 = arith.constant 0 : index
    %c6_313 = arith.constant 6 : index
    %c0_314 = arith.constant 0 : index
    %306 = vector.load %arg1[%c0_311, %c0_312, %c6_313, %c0_314] : memref<1x8x16x16xf32, #tpu.memory_space<vmem>>, vector<1x8x1x16xf32>
    %307 = vector.shape_cast %306 : vector<1x8x1x16xf32> to vector<8x16xf32>
    %308 = vector.extract_strided_slice %307 {offsets = [0, 0], sizes = [8, 12], strides = [1, 1]} : vector<8x16xf32> to vector<8x12xf32>
    %c80_315 = arith.constant 80 : index
    %c0_316 = arith.constant 0 : index
    %309 = vector.load %arg5[%c80_315, %c0_316] : memref<200x12xf32, #tpu.memory_space<vmem>>, vector<8x12xf32>
    tpu.vector_store %arg5[%c80_315, %c0_316], %308 {strides = array<i32>} : memref<200x12xf32, #tpu.memory_space<vmem>>, vector<8x12xf32>,
    %310 = vector.extract_strided_slice %307 {offsets = [0, 1], sizes = [8, 12], strides = [1, 1]} : vector<8x16xf32> to vector<8x12xf32>
    %c88_317 = arith.constant 88 : index
    %c0_318 = arith.constant 0 : index
    %311 = vector.load %arg5[%c88_317, %c0_318] : memref<200x12xf32, #tpu.memory_space<vmem>>, vector<8x12xf32>
    tpu.vector_store %arg5[%c88_317, %c0_318], %310 {strides = array<i32>} : memref<200x12xf32, #tpu.memory_space<vmem>>, vector<8x12xf32>,
    %312 = vector.extract_strided_slice %307 {offsets = [0, 2], sizes = [8, 12], strides = [1, 1]} : vector<8x16xf32> to vector<8x12xf32>
    %c96_319 = arith.constant 96 : index
    %c0_320 = arith.constant 0 : index
    %313 = vector.load %arg5[%c96_319, %c0_320] : memref<200x12xf32, #tpu.memory_space<vmem>>, vector<8x12xf32>
    tpu.vector_store %arg5[%c96_319, %c0_320], %312 {strides = array<i32>} : memref<200x12xf32, #tpu.memory_space<vmem>>, vector<8x12xf32>,
    %314 = vector.extract_strided_slice %307 {offsets = [0, 3], sizes = [8, 12], strides = [1, 1]} : vector<8x16xf32> to vector<8x12xf32>
    %c104_321 = arith.constant 104 : index
    %c0_322 = arith.constant 0 : index
    %315 = vector.load %arg5[%c104_321, %c0_322] : memref<200x12xf32, #tpu.memory_space<vmem>>, vector<8x12xf32>
    tpu.vector_store %arg5[%c104_321, %c0_322], %314 {strides = array<i32>} : memref<200x12xf32, #tpu.memory_space<vmem>>, vector<8x12xf32>,
    %316 = vector.extract_strided_slice %307 {offsets = [0, 4], sizes = [8, 12], strides = [1, 1]} : vector<8x16xf32> to vector<8x12xf32>
    %c112_323 = arith.constant 112 : index
    %c0_324 = arith.constant 0 : index
    %317 = vector.load %arg5[%c112_323, %c0_324] : memref<200x12xf32, #tpu.memory_space<vmem>>, vector<8x12xf32>
    tpu.vector_store %arg5[%c112_323, %c0_324], %316 {strides = array<i32>} : memref<200x12xf32, #tpu.memory_space<vmem>>, vector<8x12xf32>,
    %c0_325 = arith.constant 0 : index
    %c0_326 = arith.constant 0 : index
    %c7_327 = arith.constant 7 : index
    %c0_328 = arith.constant 0 : index
    %318 = vector.load %arg1[%c0_325, %c0_326, %c7_327, %c0_328] : memref<1x8x16x16xf32, #tpu.memory_space<vmem>>, vector<1x8x1x16xf32>
    %319 = vector.shape_cast %318 : vector<1x8x1x16xf32> to vector<8x16xf32>
    %320 = vector.extract_strided_slice %319 {offsets = [0, 0], sizes = [8, 12], strides = [1, 1]} : vector<8x16xf32> to vector<8x12xf32>
    %c120_329 = arith.constant 120 : index
    %c0_330 = arith.constant 0 : index
    %321 = vector.load %arg5[%c120_329, %c0_330] : memref<200x12xf32, #tpu.memory_space<vmem>>, vector<8x12xf32>
    tpu.vector_store %arg5[%c120_329, %c0_330], %320 {strides = array<i32>} : memref<200x12xf32, #tpu.memory_space<vmem>>, vector<8x12xf32>,
    %322 = vector.extract_strided_slice %319 {offsets = [0, 1], sizes = [8, 12], strides = [1, 1]} : vector<8x16xf32> to vector<8x12xf32>
    %c128_331 = arith.constant 128 : index
    %c0_332 = arith.constant 0 : index
    %323 = vector.load %arg5[%c128_331, %c0_332] : memref<200x12xf32, #tpu.memory_space<vmem>>, vector<8x12xf32>
    tpu.vector_store %arg5[%c128_331, %c0_332], %322 {strides = array<i32>} : memref<200x12xf32, #tpu.memory_space<vmem>>, vector<8x12xf32>,
    %324 = vector.extract_strided_slice %319 {offsets = [0, 2], sizes = [8, 12], strides = [1, 1]} : vector<8x16xf32> to vector<8x12xf32>
    %c136_333 = arith.constant 136 : index
    %c0_334 = arith.constant 0 : index
    %325 = vector.load %arg5[%c136_333, %c0_334] : memref<200x12xf32, #tpu.memory_space<vmem>>, vector<8x12xf32>
    tpu.vector_store %arg5[%c136_333, %c0_334], %324 {strides = array<i32>} : memref<200x12xf32, #tpu.memory_space<vmem>>, vector<8x12xf32>,
    %326 = vector.extract_strided_slice %319 {offsets = [0, 3], sizes = [8, 12], strides = [1, 1]} : vector<8x16xf32> to vector<8x12xf32>
    %c144_335 = arith.constant 144 : index
    %c0_336 = arith.constant 0 : index
    %327 = vector.load %arg5[%c144_335, %c0_336] : memref<200x12xf32, #tpu.memory_space<vmem>>, vector<8x12xf32>
    tpu.vector_store %arg5[%c144_335, %c0_336], %326 {strides = array<i32>} : memref<200x12xf32, #tpu.memory_space<vmem>>, vector<8x12xf32>,
    %328 = vector.extract_strided_slice %319 {offsets = [0, 4], sizes = [8, 12], strides = [1, 1]} : vector<8x16xf32> to vector<8x12xf32>
    %c152_337 = arith.constant 152 : index
    %c0_338 = arith.constant 0 : index
    %329 = vector.load %arg5[%c152_337, %c0_338] : memref<200x12xf32, #tpu.memory_space<vmem>>, vector<8x12xf32>
    tpu.vector_store %arg5[%c152_337, %c0_338], %328 {strides = array<i32>} : memref<200x12xf32, #tpu.memory_space<vmem>>, vector<8x12xf32>,
    %c0_339 = arith.constant 0 : index
    %c0_340 = arith.constant 0 : index
    %c8_341 = arith.constant 8 : index
    %c0_342 = arith.constant 0 : index
    %330 = vector.load %arg1[%c0_339, %c0_340, %c8_341, %c0_342] : memref<1x8x16x16xf32, #tpu.memory_space<vmem>>, vector<1x8x1x16xf32>
    %331 = vector.shape_cast %330 : vector<1x8x1x16xf32> to vector<8x16xf32>
    %332 = vector.extract_strided_slice %331 {offsets = [0, 0], sizes = [8, 12], strides = [1, 1]} : vector<8x16xf32> to vector<8x12xf32>
    %c160_343 = arith.constant 160 : index
    %c0_344 = arith.constant 0 : index
    %333 = vector.load %arg5[%c160_343, %c0_344] : memref<200x12xf32, #tpu.memory_space<vmem>>, vector<8x12xf32>
    tpu.vector_store %arg5[%c160_343, %c0_344], %332 {strides = array<i32>} : memref<200x12xf32, #tpu.memory_space<vmem>>, vector<8x12xf32>,
    %334 = vector.extract_strided_slice %331 {offsets = [0, 1], sizes = [8, 12], strides = [1, 1]} : vector<8x16xf32> to vector<8x12xf32>
    %c168_345 = arith.constant 168 : index
    %c0_346 = arith.constant 0 : index
    %335 = vector.load %arg5[%c168_345, %c0_346] : memref<200x12xf32, #tpu.memory_space<vmem>>, vector<8x12xf32>
    tpu.vector_store %arg5[%c168_345, %c0_346], %334 {strides = array<i32>} : memref<200x12xf32, #tpu.memory_space<vmem>>, vector<8x12xf32>,
    %336 = vector.extract_strided_slice %331 {offsets = [0, 2], sizes = [8, 12], strides = [1, 1]} : vector<8x16xf32> to vector<8x12xf32>
    %c176_347 = arith.constant 176 : index
    %c0_348 = arith.constant 0 : index
    %337 = vector.load %arg5[%c176_347, %c0_348] : memref<200x12xf32, #tpu.memory_space<vmem>>, vector<8x12xf32>
    tpu.vector_store %arg5[%c176_347, %c0_348], %336 {strides = array<i32>} : memref<200x12xf32, #tpu.memory_space<vmem>>, vector<8x12xf32>,
    %338 = vector.extract_strided_slice %331 {offsets = [0, 3], sizes = [8, 12], strides = [1, 1]} : vector<8x16xf32> to vector<8x12xf32>
    %c184_349 = arith.constant 184 : index
    %c0_350 = arith.constant 0 : index
    %339 = vector.load %arg5[%c184_349, %c0_350] : memref<200x12xf32, #tpu.memory_space<vmem>>, vector<8x12xf32>
    tpu.vector_store %arg5[%c184_349, %c0_350], %338 {strides = array<i32>} : memref<200x12xf32, #tpu.memory_space<vmem>>, vector<8x12xf32>,
    %340 = vector.extract_strided_slice %331 {offsets = [0, 4], sizes = [8, 12], strides = [1, 1]} : vector<8x16xf32> to vector<8x12xf32>
    %c192_351 = arith.constant 192 : index
    %c0_352 = arith.constant 0 : index
    %341 = vector.load %arg5[%c192_351, %c0_352] : memref<200x12xf32, #tpu.memory_space<vmem>>, vector<8x12xf32>
    tpu.vector_store %arg5[%c192_351, %c0_352], %340 {strides = array<i32>} : memref<200x12xf32, #tpu.memory_space<vmem>>, vector<8x12xf32>,
    %c0_353 = arith.constant 0 : index
    %c0_354 = arith.constant 0 : index
    %342 = vector.load %arg5[%c0_353, %c0_354] : memref<200x12xf32, #tpu.memory_space<vmem>>, vector<200x12xf32>
    %343 = arith.truncf %342 : vector<200x12xf32> to vector<200x12xbf16>
    %cst_355 = arith.constant dense<0.000000e+00> : vector<32x12xf32>
    %344 = tpu.matmul %0, %343, %cst_355 {dimension_numbers = #tpu.dot_dimension_numbers<[1], [0], [0], [1], [0, 0, 1, 1], [], []>} : vector<32x200xbf16>, vector<200x12xbf16>, vector<32x12xf32> -> vector<32x12xf32>
    %345 = vector.broadcast %1 : vector<32x1xf32> to vector<32x12xf32>
    %346 = arith.addf %344, %345 : vector<32x12xf32>
    %cst_356 = arith.constant 0.000000e+00 : f32
    %347 = vector.broadcast %cst_356 : f32 to vector<32x12xf32>
    %348 = arith.maximumf %346, %347 : vector<32x12xf32>
    %c0_357 = arith.constant 0 : index
    %c0_358 = arith.constant 0 : index
    %c4_359 = arith.constant 4 : index
    %c0_360 = arith.constant 0 : index
    %349 = vector.load %arg4[%c0_357, %c0_358, %c4_359, %c0_360] : memref<1x32x12x12xf32, #tpu.memory_space<vmem>>, vector<1x32x1x12xf32>
    %350 = vector.shape_cast %349 : vector<1x32x1x12xf32> to vector<32x12xf32>
    %351 = vector.shape_cast %348 : vector<32x12xf32> to vector<1x32x1x12xf32>
    tpu.vector_store %arg4[%c0_357, %c0_358, %c4_359, %c0_360], %351 {strides = array<i32>} : memref<1x32x12x12xf32, #tpu.memory_space<vmem>>, vector<1x32x1x12xf32>,
    %c0_361 = arith.constant 0 : index
    %c0_362 = arith.constant 0 : index
    %c5_363 = arith.constant 5 : index
    %c0_364 = arith.constant 0 : index
    %352 = vector.load %arg1[%c0_361, %c0_362, %c5_363, %c0_364] : memref<1x8x16x16xf32, #tpu.memory_space<vmem>>, vector<1x8x1x16xf32>
    %353 = vector.shape_cast %352 : vector<1x8x1x16xf32> to vector<8x16xf32>
    %354 = vector.extract_strided_slice %353 {offsets = [0, 0], sizes = [8, 12], strides = [1, 1]} : vector<8x16xf32> to vector<8x12xf32>
    %c0_365 = arith.constant 0 : index
    %c0_366 = arith.constant 0 : index
    %355 = vector.load %arg5[%c0_365, %c0_366] : memref<200x12xf32, #tpu.memory_space<vmem>>, vector<8x12xf32>
    tpu.vector_store %arg5[%c0_365, %c0_366], %354 {strides = array<i32>} : memref<200x12xf32, #tpu.memory_space<vmem>>, vector<8x12xf32>,
    %356 = vector.extract_strided_slice %353 {offsets = [0, 1], sizes = [8, 12], strides = [1, 1]} : vector<8x16xf32> to vector<8x12xf32>
    %c8_367 = arith.constant 8 : index
    %c0_368 = arith.constant 0 : index
    %357 = vector.load %arg5[%c8_367, %c0_368] : memref<200x12xf32, #tpu.memory_space<vmem>>, vector<8x12xf32>
    tpu.vector_store %arg5[%c8_367, %c0_368], %356 {strides = array<i32>} : memref<200x12xf32, #tpu.memory_space<vmem>>, vector<8x12xf32>,
    %358 = vector.extract_strided_slice %353 {offsets = [0, 2], sizes = [8, 12], strides = [1, 1]} : vector<8x16xf32> to vector<8x12xf32>
    %c16_369 = arith.constant 16 : index
    %c0_370 = arith.constant 0 : index
    %359 = vector.load %arg5[%c16_369, %c0_370] : memref<200x12xf32, #tpu.memory_space<vmem>>, vector<8x12xf32>
    tpu.vector_store %arg5[%c16_369, %c0_370], %358 {strides = array<i32>} : memref<200x12xf32, #tpu.memory_space<vmem>>, vector<8x12xf32>,
    %360 = vector.extract_strided_slice %353 {offsets = [0, 3], sizes = [8, 12], strides = [1, 1]} : vector<8x16xf32> to vector<8x12xf32>
    %c24_371 = arith.constant 24 : index
    %c0_372 = arith.constant 0 : index
    %361 = vector.load %arg5[%c24_371, %c0_372] : memref<200x12xf32, #tpu.memory_space<vmem>>, vector<8x12xf32>
    tpu.vector_store %arg5[%c24_371, %c0_372], %360 {strides = array<i32>} : memref<200x12xf32, #tpu.memory_space<vmem>>, vector<8x12xf32>,
    %362 = vector.extract_strided_slice %353 {offsets = [0, 4], sizes = [8, 12], strides = [1, 1]} : vector<8x16xf32> to vector<8x12xf32>
    %c32_373 = arith.constant 32 : index
    %c0_374 = arith.constant 0 : index
    %363 = vector.load %arg5[%c32_373, %c0_374] : memref<200x12xf32, #tpu.memory_space<vmem>>, vector<8x12xf32>
    tpu.vector_store %arg5[%c32_373, %c0_374], %362 {strides = array<i32>} : memref<200x12xf32, #tpu.memory_space<vmem>>, vector<8x12xf32>,
    %c0_375 = arith.constant 0 : index
    %c0_376 = arith.constant 0 : index
    %c6_377 = arith.constant 6 : index
    %c0_378 = arith.constant 0 : index
    %364 = vector.load %arg1[%c0_375, %c0_376, %c6_377, %c0_378] : memref<1x8x16x16xf32, #tpu.memory_space<vmem>>, vector<1x8x1x16xf32>
    %365 = vector.shape_cast %364 : vector<1x8x1x16xf32> to vector<8x16xf32>
    %366 = vector.extract_strided_slice %365 {offsets = [0, 0], sizes = [8, 12], strides = [1, 1]} : vector<8x16xf32> to vector<8x12xf32>
    %c40_379 = arith.constant 40 : index
    %c0_380 = arith.constant 0 : index
    %367 = vector.load %arg5[%c40_379, %c0_380] : memref<200x12xf32, #tpu.memory_space<vmem>>, vector<8x12xf32>
    tpu.vector_store %arg5[%c40_379, %c0_380], %366 {strides = array<i32>} : memref<200x12xf32, #tpu.memory_space<vmem>>, vector<8x12xf32>,
    %368 = vector.extract_strided_slice %365 {offsets = [0, 1], sizes = [8, 12], strides = [1, 1]} : vector<8x16xf32> to vector<8x12xf32>
    %c48_381 = arith.constant 48 : index
    %c0_382 = arith.constant 0 : index
    %369 = vector.load %arg5[%c48_381, %c0_382] : memref<200x12xf32, #tpu.memory_space<vmem>>, vector<8x12xf32>
    tpu.vector_store %arg5[%c48_381, %c0_382], %368 {strides = array<i32>} : memref<200x12xf32, #tpu.memory_space<vmem>>, vector<8x12xf32>,
    %370 = vector.extract_strided_slice %365 {offsets = [0, 2], sizes = [8, 12], strides = [1, 1]} : vector<8x16xf32> to vector<8x12xf32>
    %c56_383 = arith.constant 56 : index
    %c0_384 = arith.constant 0 : index
    %371 = vector.load %arg5[%c56_383, %c0_384] : memref<200x12xf32, #tpu.memory_space<vmem>>, vector<8x12xf32>
    tpu.vector_store %arg5[%c56_383, %c0_384], %370 {strides = array<i32>} : memref<200x12xf32, #tpu.memory_space<vmem>>, vector<8x12xf32>,
    %372 = vector.extract_strided_slice %365 {offsets = [0, 3], sizes = [8, 12], strides = [1, 1]} : vector<8x16xf32> to vector<8x12xf32>
    %c64_385 = arith.constant 64 : index
    %c0_386 = arith.constant 0 : index
    %373 = vector.load %arg5[%c64_385, %c0_386] : memref<200x12xf32, #tpu.memory_space<vmem>>, vector<8x12xf32>
    tpu.vector_store %arg5[%c64_385, %c0_386], %372 {strides = array<i32>} : memref<200x12xf32, #tpu.memory_space<vmem>>, vector<8x12xf32>,
    %374 = vector.extract_strided_slice %365 {offsets = [0, 4], sizes = [8, 12], strides = [1, 1]} : vector<8x16xf32> to vector<8x12xf32>
    %c72_387 = arith.constant 72 : index
    %c0_388 = arith.constant 0 : index
    %375 = vector.load %arg5[%c72_387, %c0_388] : memref<200x12xf32, #tpu.memory_space<vmem>>, vector<8x12xf32>
    tpu.vector_store %arg5[%c72_387, %c0_388], %374 {strides = array<i32>} : memref<200x12xf32, #tpu.memory_space<vmem>>, vector<8x12xf32>,
    %c0_389 = arith.constant 0 : index
    %c0_390 = arith.constant 0 : index
    %c7_391 = arith.constant 7 : index
    %c0_392 = arith.constant 0 : index
    %376 = vector.load %arg1[%c0_389, %c0_390, %c7_391, %c0_392] : memref<1x8x16x16xf32, #tpu.memory_space<vmem>>, vector<1x8x1x16xf32>
    %377 = vector.shape_cast %376 : vector<1x8x1x16xf32> to vector<8x16xf32>
    %378 = vector.extract_strided_slice %377 {offsets = [0, 0], sizes = [8, 12], strides = [1, 1]} : vector<8x16xf32> to vector<8x12xf32>
    %c80_393 = arith.constant 80 : index
    %c0_394 = arith.constant 0 : index
    %379 = vector.load %arg5[%c80_393, %c0_394] : memref<200x12xf32, #tpu.memory_space<vmem>>, vector<8x12xf32>
    tpu.vector_store %arg5[%c80_393, %c0_394], %378 {strides = array<i32>} : memref<200x12xf32, #tpu.memory_space<vmem>>, vector<8x12xf32>,
    %380 = vector.extract_strided_slice %377 {offsets = [0, 1], sizes = [8, 12], strides = [1, 1]} : vector<8x16xf32> to vector<8x12xf32>
    %c88_395 = arith.constant 88 : index
    %c0_396 = arith.constant 0 : index
    %381 = vector.load %arg5[%c88_395, %c0_396] : memref<200x12xf32, #tpu.memory_space<vmem>>, vector<8x12xf32>
    tpu.vector_store %arg5[%c88_395, %c0_396], %380 {strides = array<i32>} : memref<200x12xf32, #tpu.memory_space<vmem>>, vector<8x12xf32>,
    %382 = vector.extract_strided_slice %377 {offsets = [0, 2], sizes = [8, 12], strides = [1, 1]} : vector<8x16xf32> to vector<8x12xf32>
    %c96_397 = arith.constant 96 : index
    %c0_398 = arith.constant 0 : index
    %383 = vector.load %arg5[%c96_397, %c0_398] : memref<200x12xf32, #tpu.memory_space<vmem>>, vector<8x12xf32>
    tpu.vector_store %arg5[%c96_397, %c0_398], %382 {strides = array<i32>} : memref<200x12xf32, #tpu.memory_space<vmem>>, vector<8x12xf32>,
    %384 = vector.extract_strided_slice %377 {offsets = [0, 3], sizes = [8, 12], strides = [1, 1]} : vector<8x16xf32> to vector<8x12xf32>
    %c104_399 = arith.constant 104 : index
    %c0_400 = arith.constant 0 : index
    %385 = vector.load %arg5[%c104_399, %c0_400] : memref<200x12xf32, #tpu.memory_space<vmem>>, vector<8x12xf32>
    tpu.vector_store %arg5[%c104_399, %c0_400], %384 {strides = array<i32>} : memref<200x12xf32, #tpu.memory_space<vmem>>, vector<8x12xf32>,
    %386 = vector.extract_strided_slice %377 {offsets = [0, 4], sizes = [8, 12], strides = [1, 1]} : vector<8x16xf32> to vector<8x12xf32>
    %c112_401 = arith.constant 112 : index
    %c0_402 = arith.constant 0 : index
    %387 = vector.load %arg5[%c112_401, %c0_402] : memref<200x12xf32, #tpu.memory_space<vmem>>, vector<8x12xf32>
    tpu.vector_store %arg5[%c112_401, %c0_402], %386 {strides = array<i32>} : memref<200x12xf32, #tpu.memory_space<vmem>>, vector<8x12xf32>,
    %c0_403 = arith.constant 0 : index
    %c0_404 = arith.constant 0 : index
    %c8_405 = arith.constant 8 : index
    %c0_406 = arith.constant 0 : index
    %388 = vector.load %arg1[%c0_403, %c0_404, %c8_405, %c0_406] : memref<1x8x16x16xf32, #tpu.memory_space<vmem>>, vector<1x8x1x16xf32>
    %389 = vector.shape_cast %388 : vector<1x8x1x16xf32> to vector<8x16xf32>
    %390 = vector.extract_strided_slice %389 {offsets = [0, 0], sizes = [8, 12], strides = [1, 1]} : vector<8x16xf32> to vector<8x12xf32>
    %c120_407 = arith.constant 120 : index
    %c0_408 = arith.constant 0 : index
    %391 = vector.load %arg5[%c120_407, %c0_408] : memref<200x12xf32, #tpu.memory_space<vmem>>, vector<8x12xf32>
    tpu.vector_store %arg5[%c120_407, %c0_408], %390 {strides = array<i32>} : memref<200x12xf32, #tpu.memory_space<vmem>>, vector<8x12xf32>,
    %392 = vector.extract_strided_slice %389 {offsets = [0, 1], sizes = [8, 12], strides = [1, 1]} : vector<8x16xf32> to vector<8x12xf32>
    %c128_409 = arith.constant 128 : index
    %c0_410 = arith.constant 0 : index
    %393 = vector.load %arg5[%c128_409, %c0_410] : memref<200x12xf32, #tpu.memory_space<vmem>>, vector<8x12xf32>
    tpu.vector_store %arg5[%c128_409, %c0_410], %392 {strides = array<i32>} : memref<200x12xf32, #tpu.memory_space<vmem>>, vector<8x12xf32>,
    %394 = vector.extract_strided_slice %389 {offsets = [0, 2], sizes = [8, 12], strides = [1, 1]} : vector<8x16xf32> to vector<8x12xf32>
    %c136_411 = arith.constant 136 : index
    %c0_412 = arith.constant 0 : index
    %395 = vector.load %arg5[%c136_411, %c0_412] : memref<200x12xf32, #tpu.memory_space<vmem>>, vector<8x12xf32>
    tpu.vector_store %arg5[%c136_411, %c0_412], %394 {strides = array<i32>} : memref<200x12xf32, #tpu.memory_space<vmem>>, vector<8x12xf32>,
    %396 = vector.extract_strided_slice %389 {offsets = [0, 3], sizes = [8, 12], strides = [1, 1]} : vector<8x16xf32> to vector<8x12xf32>
    %c144_413 = arith.constant 144 : index
    %c0_414 = arith.constant 0 : index
    %397 = vector.load %arg5[%c144_413, %c0_414] : memref<200x12xf32, #tpu.memory_space<vmem>>, vector<8x12xf32>
    tpu.vector_store %arg5[%c144_413, %c0_414], %396 {strides = array<i32>} : memref<200x12xf32, #tpu.memory_space<vmem>>, vector<8x12xf32>,
    %398 = vector.extract_strided_slice %389 {offsets = [0, 4], sizes = [8, 12], strides = [1, 1]} : vector<8x16xf32> to vector<8x12xf32>
    %c152_415 = arith.constant 152 : index
    %c0_416 = arith.constant 0 : index
    %399 = vector.load %arg5[%c152_415, %c0_416] : memref<200x12xf32, #tpu.memory_space<vmem>>, vector<8x12xf32>
    tpu.vector_store %arg5[%c152_415, %c0_416], %398 {strides = array<i32>} : memref<200x12xf32, #tpu.memory_space<vmem>>, vector<8x12xf32>,
    %c0_417 = arith.constant 0 : index
    %c0_418 = arith.constant 0 : index
    %c9 = arith.constant 9 : index
    %c0_419 = arith.constant 0 : index
    %400 = vector.load %arg1[%c0_417, %c0_418, %c9, %c0_419] : memref<1x8x16x16xf32, #tpu.memory_space<vmem>>, vector<1x8x1x16xf32>
    %401 = vector.shape_cast %400 : vector<1x8x1x16xf32> to vector<8x16xf32>
    %402 = vector.extract_strided_slice %401 {offsets = [0, 0], sizes = [8, 12], strides = [1, 1]} : vector<8x16xf32> to vector<8x12xf32>
    %c160_420 = arith.constant 160 : index
    %c0_421 = arith.constant 0 : index
    %403 = vector.load %arg5[%c160_420, %c0_421] : memref<200x12xf32, #tpu.memory_space<vmem>>, vector<8x12xf32>
    tpu.vector_store %arg5[%c160_420, %c0_421], %402 {strides = array<i32>} : memref<200x12xf32, #tpu.memory_space<vmem>>, vector<8x12xf32>,
    %404 = vector.extract_strided_slice %401 {offsets = [0, 1], sizes = [8, 12], strides = [1, 1]} : vector<8x16xf32> to vector<8x12xf32>
    %c168_422 = arith.constant 168 : index
    %c0_423 = arith.constant 0 : index
    %405 = vector.load %arg5[%c168_422, %c0_423] : memref<200x12xf32, #tpu.memory_space<vmem>>, vector<8x12xf32>
    tpu.vector_store %arg5[%c168_422, %c0_423], %404 {strides = array<i32>} : memref<200x12xf32, #tpu.memory_space<vmem>>, vector<8x12xf32>,
    %406 = vector.extract_strided_slice %401 {offsets = [0, 2], sizes = [8, 12], strides = [1, 1]} : vector<8x16xf32> to vector<8x12xf32>
    %c176_424 = arith.constant 176 : index
    %c0_425 = arith.constant 0 : index
    %407 = vector.load %arg5[%c176_424, %c0_425] : memref<200x12xf32, #tpu.memory_space<vmem>>, vector<8x12xf32>
    tpu.vector_store %arg5[%c176_424, %c0_425], %406 {strides = array<i32>} : memref<200x12xf32, #tpu.memory_space<vmem>>, vector<8x12xf32>,
    %408 = vector.extract_strided_slice %401 {offsets = [0, 3], sizes = [8, 12], strides = [1, 1]} : vector<8x16xf32> to vector<8x12xf32>
    %c184_426 = arith.constant 184 : index
    %c0_427 = arith.constant 0 : index
    %409 = vector.load %arg5[%c184_426, %c0_427] : memref<200x12xf32, #tpu.memory_space<vmem>>, vector<8x12xf32>
    tpu.vector_store %arg5[%c184_426, %c0_427], %408 {strides = array<i32>} : memref<200x12xf32, #tpu.memory_space<vmem>>, vector<8x12xf32>,
    %410 = vector.extract_strided_slice %401 {offsets = [0, 4], sizes = [8, 12], strides = [1, 1]} : vector<8x16xf32> to vector<8x12xf32>
    %c192_428 = arith.constant 192 : index
    %c0_429 = arith.constant 0 : index
    %411 = vector.load %arg5[%c192_428, %c0_429] : memref<200x12xf32, #tpu.memory_space<vmem>>, vector<8x12xf32>
    tpu.vector_store %arg5[%c192_428, %c0_429], %410 {strides = array<i32>} : memref<200x12xf32, #tpu.memory_space<vmem>>, vector<8x12xf32>,
    %c0_430 = arith.constant 0 : index
    %c0_431 = arith.constant 0 : index
    %412 = vector.load %arg5[%c0_430, %c0_431] : memref<200x12xf32, #tpu.memory_space<vmem>>, vector<200x12xf32>
    %413 = arith.truncf %412 : vector<200x12xf32> to vector<200x12xbf16>
    %cst_432 = arith.constant dense<0.000000e+00> : vector<32x12xf32>
    %414 = tpu.matmul %0, %413, %cst_432 {dimension_numbers = #tpu.dot_dimension_numbers<[1], [0], [0], [1], [0, 0, 1, 1], [], []>} : vector<32x200xbf16>, vector<200x12xbf16>, vector<32x12xf32> -> vector<32x12xf32>
    %415 = vector.broadcast %1 : vector<32x1xf32> to vector<32x12xf32>
    %416 = arith.addf %414, %415 : vector<32x12xf32>
    %cst_433 = arith.constant 0.000000e+00 : f32
    %417 = vector.broadcast %cst_433 : f32 to vector<32x12xf32>
    %418 = arith.maximumf %416, %417 : vector<32x12xf32>
    %c0_434 = arith.constant 0 : index
    %c0_435 = arith.constant 0 : index
    %c5_436 = arith.constant 5 : index
    %c0_437 = arith.constant 0 : index
    %419 = vector.load %arg4[%c0_434, %c0_435, %c5_436, %c0_437] : memref<1x32x12x12xf32, #tpu.memory_space<vmem>>, vector<1x32x1x12xf32>
    %420 = vector.shape_cast %419 : vector<1x32x1x12xf32> to vector<32x12xf32>
    %421 = vector.shape_cast %418 : vector<32x12xf32> to vector<1x32x1x12xf32>
    tpu.vector_store %arg4[%c0_434, %c0_435, %c5_436, %c0_437], %421 {strides = array<i32>} : memref<1x32x12x12xf32, #tpu.memory_space<vmem>>, vector<1x32x1x12xf32>,
    %c0_438 = arith.constant 0 : index
    %c0_439 = arith.constant 0 : index
    %c6_440 = arith.constant 6 : index
    %c0_441 = arith.constant 0 : index
    %422 = vector.load %arg1[%c0_438, %c0_439, %c6_440, %c0_441] : memref<1x8x16x16xf32, #tpu.memory_space<vmem>>, vector<1x8x1x16xf32>
    %423 = vector.shape_cast %422 : vector<1x8x1x16xf32> to vector<8x16xf32>
    %424 = vector.extract_strided_slice %423 {offsets = [0, 0], sizes = [8, 12], strides = [1, 1]} : vector<8x16xf32> to vector<8x12xf32>
    %c0_442 = arith.constant 0 : index
    %c0_443 = arith.constant 0 : index
    %425 = vector.load %arg5[%c0_442, %c0_443] : memref<200x12xf32, #tpu.memory_space<vmem>>, vector<8x12xf32>
    tpu.vector_store %arg5[%c0_442, %c0_443], %424 {strides = array<i32>} : memref<200x12xf32, #tpu.memory_space<vmem>>, vector<8x12xf32>,
    %426 = vector.extract_strided_slice %423 {offsets = [0, 1], sizes = [8, 12], strides = [1, 1]} : vector<8x16xf32> to vector<8x12xf32>
    %c8_444 = arith.constant 8 : index
    %c0_445 = arith.constant 0 : index
    %427 = vector.load %arg5[%c8_444, %c0_445] : memref<200x12xf32, #tpu.memory_space<vmem>>, vector<8x12xf32>
    tpu.vector_store %arg5[%c8_444, %c0_445], %426 {strides = array<i32>} : memref<200x12xf32, #tpu.memory_space<vmem>>, vector<8x12xf32>,
    %428 = vector.extract_strided_slice %423 {offsets = [0, 2], sizes = [8, 12], strides = [1, 1]} : vector<8x16xf32> to vector<8x12xf32>
    %c16_446 = arith.constant 16 : index
    %c0_447 = arith.constant 0 : index
    %429 = vector.load %arg5[%c16_446, %c0_447] : memref<200x12xf32, #tpu.memory_space<vmem>>, vector<8x12xf32>
    tpu.vector_store %arg5[%c16_446, %c0_447], %428 {strides = array<i32>} : memref<200x12xf32, #tpu.memory_space<vmem>>, vector<8x12xf32>,
    %430 = vector.extract_strided_slice %423 {offsets = [0, 3], sizes = [8, 12], strides = [1, 1]} : vector<8x16xf32> to vector<8x12xf32>
    %c24_448 = arith.constant 24 : index
    %c0_449 = arith.constant 0 : index
    %431 = vector.load %arg5[%c24_448, %c0_449] : memref<200x12xf32, #tpu.memory_space<vmem>>, vector<8x12xf32>
    tpu.vector_store %arg5[%c24_448, %c0_449], %430 {strides = array<i32>} : memref<200x12xf32, #tpu.memory_space<vmem>>, vector<8x12xf32>,
    %432 = vector.extract_strided_slice %423 {offsets = [0, 4], sizes = [8, 12], strides = [1, 1]} : vector<8x16xf32> to vector<8x12xf32>
    %c32_450 = arith.constant 32 : index
    %c0_451 = arith.constant 0 : index
    %433 = vector.load %arg5[%c32_450, %c0_451] : memref<200x12xf32, #tpu.memory_space<vmem>>, vector<8x12xf32>
    tpu.vector_store %arg5[%c32_450, %c0_451], %432 {strides = array<i32>} : memref<200x12xf32, #tpu.memory_space<vmem>>, vector<8x12xf32>,
    %c0_452 = arith.constant 0 : index
    %c0_453 = arith.constant 0 : index
    %c7_454 = arith.constant 7 : index
    %c0_455 = arith.constant 0 : index
    %434 = vector.load %arg1[%c0_452, %c0_453, %c7_454, %c0_455] : memref<1x8x16x16xf32, #tpu.memory_space<vmem>>, vector<1x8x1x16xf32>
    %435 = vector.shape_cast %434 : vector<1x8x1x16xf32> to vector<8x16xf32>
    %436 = vector.extract_strided_slice %435 {offsets = [0, 0], sizes = [8, 12], strides = [1, 1]} : vector<8x16xf32> to vector<8x12xf32>
    %c40_456 = arith.constant 40 : index
    %c0_457 = arith.constant 0 : index
    %437 = vector.load %arg5[%c40_456, %c0_457] : memref<200x12xf32, #tpu.memory_space<vmem>>, vector<8x12xf32>
    tpu.vector_store %arg5[%c40_456, %c0_457], %436 {strides = array<i32>} : memref<200x12xf32, #tpu.memory_space<vmem>>, vector<8x12xf32>,
    %438 = vector.extract_strided_slice %435 {offsets = [0, 1], sizes = [8, 12], strides = [1, 1]} : vector<8x16xf32> to vector<8x12xf32>
    %c48_458 = arith.constant 48 : index
    %c0_459 = arith.constant 0 : index
    %439 = vector.load %arg5[%c48_458, %c0_459] : memref<200x12xf32, #tpu.memory_space<vmem>>, vector<8x12xf32>
    tpu.vector_store %arg5[%c48_458, %c0_459], %438 {strides = array<i32>} : memref<200x12xf32, #tpu.memory_space<vmem>>, vector<8x12xf32>,
    %440 = vector.extract_strided_slice %435 {offsets = [0, 2], sizes = [8, 12], strides = [1, 1]} : vector<8x16xf32> to vector<8x12xf32>
    %c56_460 = arith.constant 56 : index
    %c0_461 = arith.constant 0 : index
    %441 = vector.load %arg5[%c56_460, %c0_461] : memref<200x12xf32, #tpu.memory_space<vmem>>, vector<8x12xf32>
    tpu.vector_store %arg5[%c56_460, %c0_461], %440 {strides = array<i32>} : memref<200x12xf32, #tpu.memory_space<vmem>>, vector<8x12xf32>,
    %442 = vector.extract_strided_slice %435 {offsets = [0, 3], sizes = [8, 12], strides = [1, 1]} : vector<8x16xf32> to vector<8x12xf32>
    %c64_462 = arith.constant 64 : index
    %c0_463 = arith.constant 0 : index
    %443 = vector.load %arg5[%c64_462, %c0_463] : memref<200x12xf32, #tpu.memory_space<vmem>>, vector<8x12xf32>
    tpu.vector_store %arg5[%c64_462, %c0_463], %442 {strides = array<i32>} : memref<200x12xf32, #tpu.memory_space<vmem>>, vector<8x12xf32>,
    %444 = vector.extract_strided_slice %435 {offsets = [0, 4], sizes = [8, 12], strides = [1, 1]} : vector<8x16xf32> to vector<8x12xf32>
    %c72_464 = arith.constant 72 : index
    %c0_465 = arith.constant 0 : index
    %445 = vector.load %arg5[%c72_464, %c0_465] : memref<200x12xf32, #tpu.memory_space<vmem>>, vector<8x12xf32>
    tpu.vector_store %arg5[%c72_464, %c0_465], %444 {strides = array<i32>} : memref<200x12xf32, #tpu.memory_space<vmem>>, vector<8x12xf32>,
    %c0_466 = arith.constant 0 : index
    %c0_467 = arith.constant 0 : index
    %c8_468 = arith.constant 8 : index
    %c0_469 = arith.constant 0 : index
    %446 = vector.load %arg1[%c0_466, %c0_467, %c8_468, %c0_469] : memref<1x8x16x16xf32, #tpu.memory_space<vmem>>, vector<1x8x1x16xf32>
    %447 = vector.shape_cast %446 : vector<1x8x1x16xf32> to vector<8x16xf32>
    %448 = vector.extract_strided_slice %447 {offsets = [0, 0], sizes = [8, 12], strides = [1, 1]} : vector<8x16xf32> to vector<8x12xf32>
    %c80_470 = arith.constant 80 : index
    %c0_471 = arith.constant 0 : index
    %449 = vector.load %arg5[%c80_470, %c0_471] : memref<200x12xf32, #tpu.memory_space<vmem>>, vector<8x12xf32>
    tpu.vector_store %arg5[%c80_470, %c0_471], %448 {strides = array<i32>} : memref<200x12xf32, #tpu.memory_space<vmem>>, vector<8x12xf32>,
    %450 = vector.extract_strided_slice %447 {offsets = [0, 1], sizes = [8, 12], strides = [1, 1]} : vector<8x16xf32> to vector<8x12xf32>
    %c88_472 = arith.constant 88 : index
    %c0_473 = arith.constant 0 : index
    %451 = vector.load %arg5[%c88_472, %c0_473] : memref<200x12xf32, #tpu.memory_space<vmem>>, vector<8x12xf32>
    tpu.vector_store %arg5[%c88_472, %c0_473], %450 {strides = array<i32>} : memref<200x12xf32, #tpu.memory_space<vmem>>, vector<8x12xf32>,
    %452 = vector.extract_strided_slice %447 {offsets = [0, 2], sizes = [8, 12], strides = [1, 1]} : vector<8x16xf32> to vector<8x12xf32>
    %c96_474 = arith.constant 96 : index
    %c0_475 = arith.constant 0 : index
    %453 = vector.load %arg5[%c96_474, %c0_475] : memref<200x12xf32, #tpu.memory_space<vmem>>, vector<8x12xf32>
    tpu.vector_store %arg5[%c96_474, %c0_475], %452 {strides = array<i32>} : memref<200x12xf32, #tpu.memory_space<vmem>>, vector<8x12xf32>,
    %454 = vector.extract_strided_slice %447 {offsets = [0, 3], sizes = [8, 12], strides = [1, 1]} : vector<8x16xf32> to vector<8x12xf32>
    %c104_476 = arith.constant 104 : index
    %c0_477 = arith.constant 0 : index
    %455 = vector.load %arg5[%c104_476, %c0_477] : memref<200x12xf32, #tpu.memory_space<vmem>>, vector<8x12xf32>
    tpu.vector_store %arg5[%c104_476, %c0_477], %454 {strides = array<i32>} : memref<200x12xf32, #tpu.memory_space<vmem>>, vector<8x12xf32>,
    %456 = vector.extract_strided_slice %447 {offsets = [0, 4], sizes = [8, 12], strides = [1, 1]} : vector<8x16xf32> to vector<8x12xf32>
    %c112_478 = arith.constant 112 : index
    %c0_479 = arith.constant 0 : index
    %457 = vector.load %arg5[%c112_478, %c0_479] : memref<200x12xf32, #tpu.memory_space<vmem>>, vector<8x12xf32>
    tpu.vector_store %arg5[%c112_478, %c0_479], %456 {strides = array<i32>} : memref<200x12xf32, #tpu.memory_space<vmem>>, vector<8x12xf32>,
    %c0_480 = arith.constant 0 : index
    %c0_481 = arith.constant 0 : index
    %c9_482 = arith.constant 9 : index
    %c0_483 = arith.constant 0 : index
    %458 = vector.load %arg1[%c0_480, %c0_481, %c9_482, %c0_483] : memref<1x8x16x16xf32, #tpu.memory_space<vmem>>, vector<1x8x1x16xf32>
    %459 = vector.shape_cast %458 : vector<1x8x1x16xf32> to vector<8x16xf32>
    %460 = vector.extract_strided_slice %459 {offsets = [0, 0], sizes = [8, 12], strides = [1, 1]} : vector<8x16xf32> to vector<8x12xf32>
    %c120_484 = arith.constant 120 : index
    %c0_485 = arith.constant 0 : index
    %461 = vector.load %arg5[%c120_484, %c0_485] : memref<200x12xf32, #tpu.memory_space<vmem>>, vector<8x12xf32>
    tpu.vector_store %arg5[%c120_484, %c0_485], %460 {strides = array<i32>} : memref<200x12xf32, #tpu.memory_space<vmem>>, vector<8x12xf32>,
    %462 = vector.extract_strided_slice %459 {offsets = [0, 1], sizes = [8, 12], strides = [1, 1]} : vector<8x16xf32> to vector<8x12xf32>
    %c128_486 = arith.constant 128 : index
    %c0_487 = arith.constant 0 : index
    %463 = vector.load %arg5[%c128_486, %c0_487] : memref<200x12xf32, #tpu.memory_space<vmem>>, vector<8x12xf32>
    tpu.vector_store %arg5[%c128_486, %c0_487], %462 {strides = array<i32>} : memref<200x12xf32, #tpu.memory_space<vmem>>, vector<8x12xf32>,
    %464 = vector.extract_strided_slice %459 {offsets = [0, 2], sizes = [8, 12], strides = [1, 1]} : vector<8x16xf32> to vector<8x12xf32>
    %c136_488 = arith.constant 136 : index
    %c0_489 = arith.constant 0 : index
    %465 = vector.load %arg5[%c136_488, %c0_489] : memref<200x12xf32, #tpu.memory_space<vmem>>, vector<8x12xf32>
    tpu.vector_store %arg5[%c136_488, %c0_489], %464 {strides = array<i32>} : memref<200x12xf32, #tpu.memory_space<vmem>>, vector<8x12xf32>,
    %466 = vector.extract_strided_slice %459 {offsets = [0, 3], sizes = [8, 12], strides = [1, 1]} : vector<8x16xf32> to vector<8x12xf32>
    %c144_490 = arith.constant 144 : index
    %c0_491 = arith.constant 0 : index
    %467 = vector.load %arg5[%c144_490, %c0_491] : memref<200x12xf32, #tpu.memory_space<vmem>>, vector<8x12xf32>
    tpu.vector_store %arg5[%c144_490, %c0_491], %466 {strides = array<i32>} : memref<200x12xf32, #tpu.memory_space<vmem>>, vector<8x12xf32>,
    %468 = vector.extract_strided_slice %459 {offsets = [0, 4], sizes = [8, 12], strides = [1, 1]} : vector<8x16xf32> to vector<8x12xf32>
    %c152_492 = arith.constant 152 : index
    %c0_493 = arith.constant 0 : index
    %469 = vector.load %arg5[%c152_492, %c0_493] : memref<200x12xf32, #tpu.memory_space<vmem>>, vector<8x12xf32>
    tpu.vector_store %arg5[%c152_492, %c0_493], %468 {strides = array<i32>} : memref<200x12xf32, #tpu.memory_space<vmem>>, vector<8x12xf32>,
    %c0_494 = arith.constant 0 : index
    %c0_495 = arith.constant 0 : index
    %c10 = arith.constant 10 : index
    %c0_496 = arith.constant 0 : index
    %470 = vector.load %arg1[%c0_494, %c0_495, %c10, %c0_496] : memref<1x8x16x16xf32, #tpu.memory_space<vmem>>, vector<1x8x1x16xf32>
    %471 = vector.shape_cast %470 : vector<1x8x1x16xf32> to vector<8x16xf32>
    %472 = vector.extract_strided_slice %471 {offsets = [0, 0], sizes = [8, 12], strides = [1, 1]} : vector<8x16xf32> to vector<8x12xf32>
    %c160_497 = arith.constant 160 : index
    %c0_498 = arith.constant 0 : index
    %473 = vector.load %arg5[%c160_497, %c0_498] : memref<200x12xf32, #tpu.memory_space<vmem>>, vector<8x12xf32>
    tpu.vector_store %arg5[%c160_497, %c0_498], %472 {strides = array<i32>} : memref<200x12xf32, #tpu.memory_space<vmem>>, vector<8x12xf32>,
    %474 = vector.extract_strided_slice %471 {offsets = [0, 1], sizes = [8, 12], strides = [1, 1]} : vector<8x16xf32> to vector<8x12xf32>
    %c168_499 = arith.constant 168 : index
    %c0_500 = arith.constant 0 : index
    %475 = vector.load %arg5[%c168_499, %c0_500] : memref<200x12xf32, #tpu.memory_space<vmem>>, vector<8x12xf32>
    tpu.vector_store %arg5[%c168_499, %c0_500], %474 {strides = array<i32>} : memref<200x12xf32, #tpu.memory_space<vmem>>, vector<8x12xf32>,
    %476 = vector.extract_strided_slice %471 {offsets = [0, 2], sizes = [8, 12], strides = [1, 1]} : vector<8x16xf32> to vector<8x12xf32>
    %c176_501 = arith.constant 176 : index
    %c0_502 = arith.constant 0 : index
    %477 = vector.load %arg5[%c176_501, %c0_502] : memref<200x12xf32, #tpu.memory_space<vmem>>, vector<8x12xf32>
    tpu.vector_store %arg5[%c176_501, %c0_502], %476 {strides = array<i32>} : memref<200x12xf32, #tpu.memory_space<vmem>>, vector<8x12xf32>,
    %478 = vector.extract_strided_slice %471 {offsets = [0, 3], sizes = [8, 12], strides = [1, 1]} : vector<8x16xf32> to vector<8x12xf32>
    %c184_503 = arith.constant 184 : index
    %c0_504 = arith.constant 0 : index
    %479 = vector.load %arg5[%c184_503, %c0_504] : memref<200x12xf32, #tpu.memory_space<vmem>>, vector<8x12xf32>
    tpu.vector_store %arg5[%c184_503, %c0_504], %478 {strides = array<i32>} : memref<200x12xf32, #tpu.memory_space<vmem>>, vector<8x12xf32>,
    %480 = vector.extract_strided_slice %471 {offsets = [0, 4], sizes = [8, 12], strides = [1, 1]} : vector<8x16xf32> to vector<8x12xf32>
    %c192_505 = arith.constant 192 : index
    %c0_506 = arith.constant 0 : index
    %481 = vector.load %arg5[%c192_505, %c0_506] : memref<200x12xf32, #tpu.memory_space<vmem>>, vector<8x12xf32>
    tpu.vector_store %arg5[%c192_505, %c0_506], %480 {strides = array<i32>} : memref<200x12xf32, #tpu.memory_space<vmem>>, vector<8x12xf32>,
    %c0_507 = arith.constant 0 : index
    %c0_508 = arith.constant 0 : index
    %482 = vector.load %arg5[%c0_507, %c0_508] : memref<200x12xf32, #tpu.memory_space<vmem>>, vector<200x12xf32>
    %483 = arith.truncf %482 : vector<200x12xf32> to vector<200x12xbf16>
    %cst_509 = arith.constant dense<0.000000e+00> : vector<32x12xf32>
    %484 = tpu.matmul %0, %483, %cst_509 {dimension_numbers = #tpu.dot_dimension_numbers<[1], [0], [0], [1], [0, 0, 1, 1], [], []>} : vector<32x200xbf16>, vector<200x12xbf16>, vector<32x12xf32> -> vector<32x12xf32>
    %485 = vector.broadcast %1 : vector<32x1xf32> to vector<32x12xf32>
    %486 = arith.addf %484, %485 : vector<32x12xf32>
    %cst_510 = arith.constant 0.000000e+00 : f32
    %487 = vector.broadcast %cst_510 : f32 to vector<32x12xf32>
    %488 = arith.maximumf %486, %487 : vector<32x12xf32>
    %c0_511 = arith.constant 0 : index
    %c0_512 = arith.constant 0 : index
    %c6_513 = arith.constant 6 : index
    %c0_514 = arith.constant 0 : index
    %489 = vector.load %arg4[%c0_511, %c0_512, %c6_513, %c0_514] : memref<1x32x12x12xf32, #tpu.memory_space<vmem>>, vector<1x32x1x12xf32>
    %490 = vector.shape_cast %489 : vector<1x32x1x12xf32> to vector<32x12xf32>
    %491 = vector.shape_cast %488 : vector<32x12xf32> to vector<1x32x1x12xf32>
    tpu.vector_store %arg4[%c0_511, %c0_512, %c6_513, %c0_514], %491 {strides = array<i32>} : memref<1x32x12x12xf32, #tpu.memory_space<vmem>>, vector<1x32x1x12xf32>,
    %c0_515 = arith.constant 0 : index
    %c0_516 = arith.constant 0 : index
    %c7_517 = arith.constant 7 : index
    %c0_518 = arith.constant 0 : index
    %492 = vector.load %arg1[%c0_515, %c0_516, %c7_517, %c0_518] : memref<1x8x16x16xf32, #tpu.memory_space<vmem>>, vector<1x8x1x16xf32>
    %493 = vector.shape_cast %492 : vector<1x8x1x16xf32> to vector<8x16xf32>
    %494 = vector.extract_strided_slice %493 {offsets = [0, 0], sizes = [8, 12], strides = [1, 1]} : vector<8x16xf32> to vector<8x12xf32>
    %c0_519 = arith.constant 0 : index
    %c0_520 = arith.constant 0 : index
    %495 = vector.load %arg5[%c0_519, %c0_520] : memref<200x12xf32, #tpu.memory_space<vmem>>, vector<8x12xf32>
    tpu.vector_store %arg5[%c0_519, %c0_520], %494 {strides = array<i32>} : memref<200x12xf32, #tpu.memory_space<vmem>>, vector<8x12xf32>,
    %496 = vector.extract_strided_slice %493 {offsets = [0, 1], sizes = [8, 12], strides = [1, 1]} : vector<8x16xf32> to vector<8x12xf32>
    %c8_521 = arith.constant 8 : index
    %c0_522 = arith.constant 0 : index
    %497 = vector.load %arg5[%c8_521, %c0_522] : memref<200x12xf32, #tpu.memory_space<vmem>>, vector<8x12xf32>
    tpu.vector_store %arg5[%c8_521, %c0_522], %496 {strides = array<i32>} : memref<200x12xf32, #tpu.memory_space<vmem>>, vector<8x12xf32>,
    %498 = vector.extract_strided_slice %493 {offsets = [0, 2], sizes = [8, 12], strides = [1, 1]} : vector<8x16xf32> to vector<8x12xf32>
    %c16_523 = arith.constant 16 : index
    %c0_524 = arith.constant 0 : index
    %499 = vector.load %arg5[%c16_523, %c0_524] : memref<200x12xf32, #tpu.memory_space<vmem>>, vector<8x12xf32>
    tpu.vector_store %arg5[%c16_523, %c0_524], %498 {strides = array<i32>} : memref<200x12xf32, #tpu.memory_space<vmem>>, vector<8x12xf32>,
    %500 = vector.extract_strided_slice %493 {offsets = [0, 3], sizes = [8, 12], strides = [1, 1]} : vector<8x16xf32> to vector<8x12xf32>
    %c24_525 = arith.constant 24 : index
    %c0_526 = arith.constant 0 : index
    %501 = vector.load %arg5[%c24_525, %c0_526] : memref<200x12xf32, #tpu.memory_space<vmem>>, vector<8x12xf32>
    tpu.vector_store %arg5[%c24_525, %c0_526], %500 {strides = array<i32>} : memref<200x12xf32, #tpu.memory_space<vmem>>, vector<8x12xf32>,
    %502 = vector.extract_strided_slice %493 {offsets = [0, 4], sizes = [8, 12], strides = [1, 1]} : vector<8x16xf32> to vector<8x12xf32>
    %c32_527 = arith.constant 32 : index
    %c0_528 = arith.constant 0 : index
    %503 = vector.load %arg5[%c32_527, %c0_528] : memref<200x12xf32, #tpu.memory_space<vmem>>, vector<8x12xf32>
    tpu.vector_store %arg5[%c32_527, %c0_528], %502 {strides = array<i32>} : memref<200x12xf32, #tpu.memory_space<vmem>>, vector<8x12xf32>,
    %c0_529 = arith.constant 0 : index
    %c0_530 = arith.constant 0 : index
    %c8_531 = arith.constant 8 : index
    %c0_532 = arith.constant 0 : index
    %504 = vector.load %arg1[%c0_529, %c0_530, %c8_531, %c0_532] : memref<1x8x16x16xf32, #tpu.memory_space<vmem>>, vector<1x8x1x16xf32>
    %505 = vector.shape_cast %504 : vector<1x8x1x16xf32> to vector<8x16xf32>
    %506 = vector.extract_strided_slice %505 {offsets = [0, 0], sizes = [8, 12], strides = [1, 1]} : vector<8x16xf32> to vector<8x12xf32>
    %c40_533 = arith.constant 40 : index
    %c0_534 = arith.constant 0 : index
    %507 = vector.load %arg5[%c40_533, %c0_534] : memref<200x12xf32, #tpu.memory_space<vmem>>, vector<8x12xf32>
    tpu.vector_store %arg5[%c40_533, %c0_534], %506 {strides = array<i32>} : memref<200x12xf32, #tpu.memory_space<vmem>>, vector<8x12xf32>,
    %508 = vector.extract_strided_slice %505 {offsets = [0, 1], sizes = [8, 12], strides = [1, 1]} : vector<8x16xf32> to vector<8x12xf32>
    %c48_535 = arith.constant 48 : index
    %c0_536 = arith.constant 0 : index
    %509 = vector.load %arg5[%c48_535, %c0_536] : memref<200x12xf32, #tpu.memory_space<vmem>>, vector<8x12xf32>
    tpu.vector_store %arg5[%c48_535, %c0_536], %508 {strides = array<i32>} : memref<200x12xf32, #tpu.memory_space<vmem>>, vector<8x12xf32>,
    %510 = vector.extract_strided_slice %505 {offsets = [0, 2], sizes = [8, 12], strides = [1, 1]} : vector<8x16xf32> to vector<8x12xf32>
    %c56_537 = arith.constant 56 : index
    %c0_538 = arith.constant 0 : index
    %511 = vector.load %arg5[%c56_537, %c0_538] : memref<200x12xf32, #tpu.memory_space<vmem>>, vector<8x12xf32>
    tpu.vector_store %arg5[%c56_537, %c0_538], %510 {strides = array<i32>} : memref<200x12xf32, #tpu.memory_space<vmem>>, vector<8x12xf32>,
    %512 = vector.extract_strided_slice %505 {offsets = [0, 3], sizes = [8, 12], strides = [1, 1]} : vector<8x16xf32> to vector<8x12xf32>
    %c64_539 = arith.constant 64 : index
    %c0_540 = arith.constant 0 : index
    %513 = vector.load %arg5[%c64_539, %c0_540] : memref<200x12xf32, #tpu.memory_space<vmem>>, vector<8x12xf32>
    tpu.vector_store %arg5[%c64_539, %c0_540], %512 {strides = array<i32>} : memref<200x12xf32, #tpu.memory_space<vmem>>, vector<8x12xf32>,
    %514 = vector.extract_strided_slice %505 {offsets = [0, 4], sizes = [8, 12], strides = [1, 1]} : vector<8x16xf32> to vector<8x12xf32>
    %c72_541 = arith.constant 72 : index
    %c0_542 = arith.constant 0 : index
    %515 = vector.load %arg5[%c72_541, %c0_542] : memref<200x12xf32, #tpu.memory_space<vmem>>, vector<8x12xf32>
    tpu.vector_store %arg5[%c72_541, %c0_542], %514 {strides = array<i32>} : memref<200x12xf32, #tpu.memory_space<vmem>>, vector<8x12xf32>,
    %c0_543 = arith.constant 0 : index
    %c0_544 = arith.constant 0 : index
    %c9_545 = arith.constant 9 : index
    %c0_546 = arith.constant 0 : index
    %516 = vector.load %arg1[%c0_543, %c0_544, %c9_545, %c0_546] : memref<1x8x16x16xf32, #tpu.memory_space<vmem>>, vector<1x8x1x16xf32>
    %517 = vector.shape_cast %516 : vector<1x8x1x16xf32> to vector<8x16xf32>
    %518 = vector.extract_strided_slice %517 {offsets = [0, 0], sizes = [8, 12], strides = [1, 1]} : vector<8x16xf32> to vector<8x12xf32>
    %c80_547 = arith.constant 80 : index
    %c0_548 = arith.constant 0 : index
    %519 = vector.load %arg5[%c80_547, %c0_548] : memref<200x12xf32, #tpu.memory_space<vmem>>, vector<8x12xf32>
    tpu.vector_store %arg5[%c80_547, %c0_548], %518 {strides = array<i32>} : memref<200x12xf32, #tpu.memory_space<vmem>>, vector<8x12xf32>,
    %520 = vector.extract_strided_slice %517 {offsets = [0, 1], sizes = [8, 12], strides = [1, 1]} : vector<8x16xf32> to vector<8x12xf32>
    %c88_549 = arith.constant 88 : index
    %c0_550 = arith.constant 0 : index
    %521 = vector.load %arg5[%c88_549, %c0_550] : memref<200x12xf32, #tpu.memory_space<vmem>>, vector<8x12xf32>
    tpu.vector_store %arg5[%c88_549, %c0_550], %520 {strides = array<i32>} : memref<200x12xf32, #tpu.memory_space<vmem>>, vector<8x12xf32>,
    %522 = vector.extract_strided_slice %517 {offsets = [0, 2], sizes = [8, 12], strides = [1, 1]} : vector<8x16xf32> to vector<8x12xf32>
    %c96_551 = arith.constant 96 : index
    %c0_552 = arith.constant 0 : index
    %523 = vector.load %arg5[%c96_551, %c0_552] : memref<200x12xf32, #tpu.memory_space<vmem>>, vector<8x12xf32>
    tpu.vector_store %arg5[%c96_551, %c0_552], %522 {strides = array<i32>} : memref<200x12xf32, #tpu.memory_space<vmem>>, vector<8x12xf32>,
    %524 = vector.extract_strided_slice %517 {offsets = [0, 3], sizes = [8, 12], strides = [1, 1]} : vector<8x16xf32> to vector<8x12xf32>
    %c104_553 = arith.constant 104 : index
    %c0_554 = arith.constant 0 : index
    %525 = vector.load %arg5[%c104_553, %c0_554] : memref<200x12xf32, #tpu.memory_space<vmem>>, vector<8x12xf32>
    tpu.vector_store %arg5[%c104_553, %c0_554], %524 {strides = array<i32>} : memref<200x12xf32, #tpu.memory_space<vmem>>, vector<8x12xf32>,
    %526 = vector.extract_strided_slice %517 {offsets = [0, 4], sizes = [8, 12], strides = [1, 1]} : vector<8x16xf32> to vector<8x12xf32>
    %c112_555 = arith.constant 112 : index
    %c0_556 = arith.constant 0 : index
    %527 = vector.load %arg5[%c112_555, %c0_556] : memref<200x12xf32, #tpu.memory_space<vmem>>, vector<8x12xf32>
    tpu.vector_store %arg5[%c112_555, %c0_556], %526 {strides = array<i32>} : memref<200x12xf32, #tpu.memory_space<vmem>>, vector<8x12xf32>,
    %c0_557 = arith.constant 0 : index
    %c0_558 = arith.constant 0 : index
    %c10_559 = arith.constant 10 : index
    %c0_560 = arith.constant 0 : index
    %528 = vector.load %arg1[%c0_557, %c0_558, %c10_559, %c0_560] : memref<1x8x16x16xf32, #tpu.memory_space<vmem>>, vector<1x8x1x16xf32>
    %529 = vector.shape_cast %528 : vector<1x8x1x16xf32> to vector<8x16xf32>
    %530 = vector.extract_strided_slice %529 {offsets = [0, 0], sizes = [8, 12], strides = [1, 1]} : vector<8x16xf32> to vector<8x12xf32>
    %c120_561 = arith.constant 120 : index
    %c0_562 = arith.constant 0 : index
    %531 = vector.load %arg5[%c120_561, %c0_562] : memref<200x12xf32, #tpu.memory_space<vmem>>, vector<8x12xf32>
    tpu.vector_store %arg5[%c120_561, %c0_562], %530 {strides = array<i32>} : memref<200x12xf32, #tpu.memory_space<vmem>>, vector<8x12xf32>,
    %532 = vector.extract_strided_slice %529 {offsets = [0, 1], sizes = [8, 12], strides = [1, 1]} : vector<8x16xf32> to vector<8x12xf32>
    %c128_563 = arith.constant 128 : index
    %c0_564 = arith.constant 0 : index
    %533 = vector.load %arg5[%c128_563, %c0_564] : memref<200x12xf32, #tpu.memory_space<vmem>>, vector<8x12xf32>
    tpu.vector_store %arg5[%c128_563, %c0_564], %532 {strides = array<i32>} : memref<200x12xf32, #tpu.memory_space<vmem>>, vector<8x12xf32>,
    %534 = vector.extract_strided_slice %529 {offsets = [0, 2], sizes = [8, 12], strides = [1, 1]} : vector<8x16xf32> to vector<8x12xf32>
    %c136_565 = arith.constant 136 : index
    %c0_566 = arith.constant 0 : index
    %535 = vector.load %arg5[%c136_565, %c0_566] : memref<200x12xf32, #tpu.memory_space<vmem>>, vector<8x12xf32>
    tpu.vector_store %arg5[%c136_565, %c0_566], %534 {strides = array<i32>} : memref<200x12xf32, #tpu.memory_space<vmem>>, vector<8x12xf32>,
    %536 = vector.extract_strided_slice %529 {offsets = [0, 3], sizes = [8, 12], strides = [1, 1]} : vector<8x16xf32> to vector<8x12xf32>
    %c144_567 = arith.constant 144 : index
    %c0_568 = arith.constant 0 : index
    %537 = vector.load %arg5[%c144_567, %c0_568] : memref<200x12xf32, #tpu.memory_space<vmem>>, vector<8x12xf32>
    tpu.vector_store %arg5[%c144_567, %c0_568], %536 {strides = array<i32>} : memref<200x12xf32, #tpu.memory_space<vmem>>, vector<8x12xf32>,
    %538 = vector.extract_strided_slice %529 {offsets = [0, 4], sizes = [8, 12], strides = [1, 1]} : vector<8x16xf32> to vector<8x12xf32>
    %c152_569 = arith.constant 152 : index
    %c0_570 = arith.constant 0 : index
    %539 = vector.load %arg5[%c152_569, %c0_570] : memref<200x12xf32, #tpu.memory_space<vmem>>, vector<8x12xf32>
    tpu.vector_store %arg5[%c152_569, %c0_570], %538 {strides = array<i32>} : memref<200x12xf32, #tpu.memory_space<vmem>>, vector<8x12xf32>,
    %c0_571 = arith.constant 0 : index
    %c0_572 = arith.constant 0 : index
    %c11 = arith.constant 11 : index
    %c0_573 = arith.constant 0 : index
    %540 = vector.load %arg1[%c0_571, %c0_572, %c11, %c0_573] : memref<1x8x16x16xf32, #tpu.memory_space<vmem>>, vector<1x8x1x16xf32>
    %541 = vector.shape_cast %540 : vector<1x8x1x16xf32> to vector<8x16xf32>
    %542 = vector.extract_strided_slice %541 {offsets = [0, 0], sizes = [8, 12], strides = [1, 1]} : vector<8x16xf32> to vector<8x12xf32>
    %c160_574 = arith.constant 160 : index
    %c0_575 = arith.constant 0 : index
    %543 = vector.load %arg5[%c160_574, %c0_575] : memref<200x12xf32, #tpu.memory_space<vmem>>, vector<8x12xf32>
    tpu.vector_store %arg5[%c160_574, %c0_575], %542 {strides = array<i32>} : memref<200x12xf32, #tpu.memory_space<vmem>>, vector<8x12xf32>,
    %544 = vector.extract_strided_slice %541 {offsets = [0, 1], sizes = [8, 12], strides = [1, 1]} : vector<8x16xf32> to vector<8x12xf32>
    %c168_576 = arith.constant 168 : index
    %c0_577 = arith.constant 0 : index
    %545 = vector.load %arg5[%c168_576, %c0_577] : memref<200x12xf32, #tpu.memory_space<vmem>>, vector<8x12xf32>
    tpu.vector_store %arg5[%c168_576, %c0_577], %544 {strides = array<i32>} : memref<200x12xf32, #tpu.memory_space<vmem>>, vector<8x12xf32>,
    %546 = vector.extract_strided_slice %541 {offsets = [0, 2], sizes = [8, 12], strides = [1, 1]} : vector<8x16xf32> to vector<8x12xf32>
    %c176_578 = arith.constant 176 : index
    %c0_579 = arith.constant 0 : index
    %547 = vector.load %arg5[%c176_578, %c0_579] : memref<200x12xf32, #tpu.memory_space<vmem>>, vector<8x12xf32>
    tpu.vector_store %arg5[%c176_578, %c0_579], %546 {strides = array<i32>} : memref<200x12xf32, #tpu.memory_space<vmem>>, vector<8x12xf32>,
    %548 = vector.extract_strided_slice %541 {offsets = [0, 3], sizes = [8, 12], strides = [1, 1]} : vector<8x16xf32> to vector<8x12xf32>
    %c184_580 = arith.constant 184 : index
    %c0_581 = arith.constant 0 : index
    %549 = vector.load %arg5[%c184_580, %c0_581] : memref<200x12xf32, #tpu.memory_space<vmem>>, vector<8x12xf32>
    tpu.vector_store %arg5[%c184_580, %c0_581], %548 {strides = array<i32>} : memref<200x12xf32, #tpu.memory_space<vmem>>, vector<8x12xf32>,
    %550 = vector.extract_strided_slice %541 {offsets = [0, 4], sizes = [8, 12], strides = [1, 1]} : vector<8x16xf32> to vector<8x12xf32>
    %c192_582 = arith.constant 192 : index
    %c0_583 = arith.constant 0 : index
    %551 = vector.load %arg5[%c192_582, %c0_583] : memref<200x12xf32, #tpu.memory_space<vmem>>, vector<8x12xf32>
    tpu.vector_store %arg5[%c192_582, %c0_583], %550 {strides = array<i32>} : memref<200x12xf32, #tpu.memory_space<vmem>>, vector<8x12xf32>,
    %c0_584 = arith.constant 0 : index
    %c0_585 = arith.constant 0 : index
    %552 = vector.load %arg5[%c0_584, %c0_585] : memref<200x12xf32, #tpu.memory_space<vmem>>, vector<200x12xf32>
    %553 = arith.truncf %552 : vector<200x12xf32> to vector<200x12xbf16>
    %cst_586 = arith.constant dense<0.000000e+00> : vector<32x12xf32>
    %554 = tpu.matmul %0, %553, %cst_586 {dimension_numbers = #tpu.dot_dimension_numbers<[1], [0], [0], [1], [0, 0, 1, 1], [], []>} : vector<32x200xbf16>, vector<200x12xbf16>, vector<32x12xf32> -> vector<32x12xf32>
    %555 = vector.broadcast %1 : vector<32x1xf32> to vector<32x12xf32>
    %556 = arith.addf %554, %555 : vector<32x12xf32>
    %cst_587 = arith.constant 0.000000e+00 : f32
    %557 = vector.broadcast %cst_587 : f32 to vector<32x12xf32>
    %558 = arith.maximumf %556, %557 : vector<32x12xf32>
    %c0_588 = arith.constant 0 : index
    %c0_589 = arith.constant 0 : index
    %c7_590 = arith.constant 7 : index
    %c0_591 = arith.constant 0 : index
    %559 = vector.load %arg4[%c0_588, %c0_589, %c7_590, %c0_591] : memref<1x32x12x12xf32, #tpu.memory_space<vmem>>, vector<1x32x1x12xf32>
    %560 = vector.shape_cast %559 : vector<1x32x1x12xf32> to vector<32x12xf32>
    %561 = vector.shape_cast %558 : vector<32x12xf32> to vector<1x32x1x12xf32>
    tpu.vector_store %arg4[%c0_588, %c0_589, %c7_590, %c0_591], %561 {strides = array<i32>} : memref<1x32x12x12xf32, #tpu.memory_space<vmem>>, vector<1x32x1x12xf32>,
    %c0_592 = arith.constant 0 : index
    %c0_593 = arith.constant 0 : index
    %c8_594 = arith.constant 8 : index
    %c0_595 = arith.constant 0 : index
    %562 = vector.load %arg1[%c0_592, %c0_593, %c8_594, %c0_595] : memref<1x8x16x16xf32, #tpu.memory_space<vmem>>, vector<1x8x1x16xf32>
    %563 = vector.shape_cast %562 : vector<1x8x1x16xf32> to vector<8x16xf32>
    %564 = vector.extract_strided_slice %563 {offsets = [0, 0], sizes = [8, 12], strides = [1, 1]} : vector<8x16xf32> to vector<8x12xf32>
    %c0_596 = arith.constant 0 : index
    %c0_597 = arith.constant 0 : index
    %565 = vector.load %arg5[%c0_596, %c0_597] : memref<200x12xf32, #tpu.memory_space<vmem>>, vector<8x12xf32>
    tpu.vector_store %arg5[%c0_596, %c0_597], %564 {strides = array<i32>} : memref<200x12xf32, #tpu.memory_space<vmem>>, vector<8x12xf32>,
    %566 = vector.extract_strided_slice %563 {offsets = [0, 1], sizes = [8, 12], strides = [1, 1]} : vector<8x16xf32> to vector<8x12xf32>
    %c8_598 = arith.constant 8 : index
    %c0_599 = arith.constant 0 : index
    %567 = vector.load %arg5[%c8_598, %c0_599] : memref<200x12xf32, #tpu.memory_space<vmem>>, vector<8x12xf32>
    tpu.vector_store %arg5[%c8_598, %c0_599], %566 {strides = array<i32>} : memref<200x12xf32, #tpu.memory_space<vmem>>, vector<8x12xf32>,
    %568 = vector.extract_strided_slice %563 {offsets = [0, 2], sizes = [8, 12], strides = [1, 1]} : vector<8x16xf32> to vector<8x12xf32>
    %c16_600 = arith.constant 16 : index
    %c0_601 = arith.constant 0 : index
    %569 = vector.load %arg5[%c16_600, %c0_601] : memref<200x12xf32, #tpu.memory_space<vmem>>, vector<8x12xf32>
    tpu.vector_store %arg5[%c16_600, %c0_601], %568 {strides = array<i32>} : memref<200x12xf32, #tpu.memory_space<vmem>>, vector<8x12xf32>,
    %570 = vector.extract_strided_slice %563 {offsets = [0, 3], sizes = [8, 12], strides = [1, 1]} : vector<8x16xf32> to vector<8x12xf32>
    %c24_602 = arith.constant 24 : index
    %c0_603 = arith.constant 0 : index
    %571 = vector.load %arg5[%c24_602, %c0_603] : memref<200x12xf32, #tpu.memory_space<vmem>>, vector<8x12xf32>
    tpu.vector_store %arg5[%c24_602, %c0_603], %570 {strides = array<i32>} : memref<200x12xf32, #tpu.memory_space<vmem>>, vector<8x12xf32>,
    %572 = vector.extract_strided_slice %563 {offsets = [0, 4], sizes = [8, 12], strides = [1, 1]} : vector<8x16xf32> to vector<8x12xf32>
    %c32_604 = arith.constant 32 : index
    %c0_605 = arith.constant 0 : index
    %573 = vector.load %arg5[%c32_604, %c0_605] : memref<200x12xf32, #tpu.memory_space<vmem>>, vector<8x12xf32>
    tpu.vector_store %arg5[%c32_604, %c0_605], %572 {strides = array<i32>} : memref<200x12xf32, #tpu.memory_space<vmem>>, vector<8x12xf32>,
    %c0_606 = arith.constant 0 : index
    %c0_607 = arith.constant 0 : index
    %c9_608 = arith.constant 9 : index
    %c0_609 = arith.constant 0 : index
    %574 = vector.load %arg1[%c0_606, %c0_607, %c9_608, %c0_609] : memref<1x8x16x16xf32, #tpu.memory_space<vmem>>, vector<1x8x1x16xf32>
    %575 = vector.shape_cast %574 : vector<1x8x1x16xf32> to vector<8x16xf32>
    %576 = vector.extract_strided_slice %575 {offsets = [0, 0], sizes = [8, 12], strides = [1, 1]} : vector<8x16xf32> to vector<8x12xf32>
    %c40_610 = arith.constant 40 : index
    %c0_611 = arith.constant 0 : index
    %577 = vector.load %arg5[%c40_610, %c0_611] : memref<200x12xf32, #tpu.memory_space<vmem>>, vector<8x12xf32>
    tpu.vector_store %arg5[%c40_610, %c0_611], %576 {strides = array<i32>} : memref<200x12xf32, #tpu.memory_space<vmem>>, vector<8x12xf32>,
    %578 = vector.extract_strided_slice %575 {offsets = [0, 1], sizes = [8, 12], strides = [1, 1]} : vector<8x16xf32> to vector<8x12xf32>
    %c48_612 = arith.constant 48 : index
    %c0_613 = arith.constant 0 : index
    %579 = vector.load %arg5[%c48_612, %c0_613] : memref<200x12xf32, #tpu.memory_space<vmem>>, vector<8x12xf32>
    tpu.vector_store %arg5[%c48_612, %c0_613], %578 {strides = array<i32>} : memref<200x12xf32, #tpu.memory_space<vmem>>, vector<8x12xf32>,
    %580 = vector.extract_strided_slice %575 {offsets = [0, 2], sizes = [8, 12], strides = [1, 1]} : vector<8x16xf32> to vector<8x12xf32>
    %c56_614 = arith.constant 56 : index
    %c0_615 = arith.constant 0 : index
    %581 = vector.load %arg5[%c56_614, %c0_615] : memref<200x12xf32, #tpu.memory_space<vmem>>, vector<8x12xf32>
    tpu.vector_store %arg5[%c56_614, %c0_615], %580 {strides = array<i32>} : memref<200x12xf32, #tpu.memory_space<vmem>>, vector<8x12xf32>,
    %582 = vector.extract_strided_slice %575 {offsets = [0, 3], sizes = [8, 12], strides = [1, 1]} : vector<8x16xf32> to vector<8x12xf32>
    %c64_616 = arith.constant 64 : index
    %c0_617 = arith.constant 0 : index
    %583 = vector.load %arg5[%c64_616, %c0_617] : memref<200x12xf32, #tpu.memory_space<vmem>>, vector<8x12xf32>
    tpu.vector_store %arg5[%c64_616, %c0_617], %582 {strides = array<i32>} : memref<200x12xf32, #tpu.memory_space<vmem>>, vector<8x12xf32>,
    %584 = vector.extract_strided_slice %575 {offsets = [0, 4], sizes = [8, 12], strides = [1, 1]} : vector<8x16xf32> to vector<8x12xf32>
    %c72_618 = arith.constant 72 : index
    %c0_619 = arith.constant 0 : index
    %585 = vector.load %arg5[%c72_618, %c0_619] : memref<200x12xf32, #tpu.memory_space<vmem>>, vector<8x12xf32>
    tpu.vector_store %arg5[%c72_618, %c0_619], %584 {strides = array<i32>} : memref<200x12xf32, #tpu.memory_space<vmem>>, vector<8x12xf32>,
    %c0_620 = arith.constant 0 : index
    %c0_621 = arith.constant 0 : index
    %c10_622 = arith.constant 10 : index
    %c0_623 = arith.constant 0 : index
    %586 = vector.load %arg1[%c0_620, %c0_621, %c10_622, %c0_623] : memref<1x8x16x16xf32, #tpu.memory_space<vmem>>, vector<1x8x1x16xf32>
    %587 = vector.shape_cast %586 : vector<1x8x1x16xf32> to vector<8x16xf32>
    %588 = vector.extract_strided_slice %587 {offsets = [0, 0], sizes = [8, 12], strides = [1, 1]} : vector<8x16xf32> to vector<8x12xf32>
    %c80_624 = arith.constant 80 : index
    %c0_625 = arith.constant 0 : index
    %589 = vector.load %arg5[%c80_624, %c0_625] : memref<200x12xf32, #tpu.memory_space<vmem>>, vector<8x12xf32>
    tpu.vector_store %arg5[%c80_624, %c0_625], %588 {strides = array<i32>} : memref<200x12xf32, #tpu.memory_space<vmem>>, vector<8x12xf32>,
    %590 = vector.extract_strided_slice %587 {offsets = [0, 1], sizes = [8, 12], strides = [1, 1]} : vector<8x16xf32> to vector<8x12xf32>
    %c88_626 = arith.constant 88 : index
    %c0_627 = arith.constant 0 : index
    %591 = vector.load %arg5[%c88_626, %c0_627] : memref<200x12xf32, #tpu.memory_space<vmem>>, vector<8x12xf32>
    tpu.vector_store %arg5[%c88_626, %c0_627], %590 {strides = array<i32>} : memref<200x12xf32, #tpu.memory_space<vmem>>, vector<8x12xf32>,
    %592 = vector.extract_strided_slice %587 {offsets = [0, 2], sizes = [8, 12], strides = [1, 1]} : vector<8x16xf32> to vector<8x12xf32>
    %c96_628 = arith.constant 96 : index
    %c0_629 = arith.constant 0 : index
    %593 = vector.load %arg5[%c96_628, %c0_629] : memref<200x12xf32, #tpu.memory_space<vmem>>, vector<8x12xf32>
    tpu.vector_store %arg5[%c96_628, %c0_629], %592 {strides = array<i32>} : memref<200x12xf32, #tpu.memory_space<vmem>>, vector<8x12xf32>,
    %594 = vector.extract_strided_slice %587 {offsets = [0, 3], sizes = [8, 12], strides = [1, 1]} : vector<8x16xf32> to vector<8x12xf32>
    %c104_630 = arith.constant 104 : index
    %c0_631 = arith.constant 0 : index
    %595 = vector.load %arg5[%c104_630, %c0_631] : memref<200x12xf32, #tpu.memory_space<vmem>>, vector<8x12xf32>
    tpu.vector_store %arg5[%c104_630, %c0_631], %594 {strides = array<i32>} : memref<200x12xf32, #tpu.memory_space<vmem>>, vector<8x12xf32>,
    %596 = vector.extract_strided_slice %587 {offsets = [0, 4], sizes = [8, 12], strides = [1, 1]} : vector<8x16xf32> to vector<8x12xf32>
    %c112_632 = arith.constant 112 : index
    %c0_633 = arith.constant 0 : index
    %597 = vector.load %arg5[%c112_632, %c0_633] : memref<200x12xf32, #tpu.memory_space<vmem>>, vector<8x12xf32>
    tpu.vector_store %arg5[%c112_632, %c0_633], %596 {strides = array<i32>} : memref<200x12xf32, #tpu.memory_space<vmem>>, vector<8x12xf32>,
    %c0_634 = arith.constant 0 : index
    %c0_635 = arith.constant 0 : index
    %c11_636 = arith.constant 11 : index
    %c0_637 = arith.constant 0 : index
    %598 = vector.load %arg1[%c0_634, %c0_635, %c11_636, %c0_637] : memref<1x8x16x16xf32, #tpu.memory_space<vmem>>, vector<1x8x1x16xf32>
    %599 = vector.shape_cast %598 : vector<1x8x1x16xf32> to vector<8x16xf32>
    %600 = vector.extract_strided_slice %599 {offsets = [0, 0], sizes = [8, 12], strides = [1, 1]} : vector<8x16xf32> to vector<8x12xf32>
    %c120_638 = arith.constant 120 : index
    %c0_639 = arith.constant 0 : index
    %601 = vector.load %arg5[%c120_638, %c0_639] : memref<200x12xf32, #tpu.memory_space<vmem>>, vector<8x12xf32>
    tpu.vector_store %arg5[%c120_638, %c0_639], %600 {strides = array<i32>} : memref<200x12xf32, #tpu.memory_space<vmem>>, vector<8x12xf32>,
    %602 = vector.extract_strided_slice %599 {offsets = [0, 1], sizes = [8, 12], strides = [1, 1]} : vector<8x16xf32> to vector<8x12xf32>
    %c128_640 = arith.constant 128 : index
    %c0_641 = arith.constant 0 : index
    %603 = vector.load %arg5[%c128_640, %c0_641] : memref<200x12xf32, #tpu.memory_space<vmem>>, vector<8x12xf32>
    tpu.vector_store %arg5[%c128_640, %c0_641], %602 {strides = array<i32>} : memref<200x12xf32, #tpu.memory_space<vmem>>, vector<8x12xf32>,
    %604 = vector.extract_strided_slice %599 {offsets = [0, 2], sizes = [8, 12], strides = [1, 1]} : vector<8x16xf32> to vector<8x12xf32>
    %c136_642 = arith.constant 136 : index
    %c0_643 = arith.constant 0 : index
    %605 = vector.load %arg5[%c136_642, %c0_643] : memref<200x12xf32, #tpu.memory_space<vmem>>, vector<8x12xf32>
    tpu.vector_store %arg5[%c136_642, %c0_643], %604 {strides = array<i32>} : memref<200x12xf32, #tpu.memory_space<vmem>>, vector<8x12xf32>,
    %606 = vector.extract_strided_slice %599 {offsets = [0, 3], sizes = [8, 12], strides = [1, 1]} : vector<8x16xf32> to vector<8x12xf32>
    %c144_644 = arith.constant 144 : index
    %c0_645 = arith.constant 0 : index
    %607 = vector.load %arg5[%c144_644, %c0_645] : memref<200x12xf32, #tpu.memory_space<vmem>>, vector<8x12xf32>
    tpu.vector_store %arg5[%c144_644, %c0_645], %606 {strides = array<i32>} : memref<200x12xf32, #tpu.memory_space<vmem>>, vector<8x12xf32>,
    %608 = vector.extract_strided_slice %599 {offsets = [0, 4], sizes = [8, 12], strides = [1, 1]} : vector<8x16xf32> to vector<8x12xf32>
    %c152_646 = arith.constant 152 : index
    %c0_647 = arith.constant 0 : index
    %609 = vector.load %arg5[%c152_646, %c0_647] : memref<200x12xf32, #tpu.memory_space<vmem>>, vector<8x12xf32>
    tpu.vector_store %arg5[%c152_646, %c0_647], %608 {strides = array<i32>} : memref<200x12xf32, #tpu.memory_space<vmem>>, vector<8x12xf32>,
    %c0_648 = arith.constant 0 : index
    %c0_649 = arith.constant 0 : index
    %c12 = arith.constant 12 : index
    %c0_650 = arith.constant 0 : index
    %610 = vector.load %arg1[%c0_648, %c0_649, %c12, %c0_650] : memref<1x8x16x16xf32, #tpu.memory_space<vmem>>, vector<1x8x1x16xf32>
    %611 = vector.shape_cast %610 : vector<1x8x1x16xf32> to vector<8x16xf32>
    %612 = vector.extract_strided_slice %611 {offsets = [0, 0], sizes = [8, 12], strides = [1, 1]} : vector<8x16xf32> to vector<8x12xf32>
    %c160_651 = arith.constant 160 : index
    %c0_652 = arith.constant 0 : index
    %613 = vector.load %arg5[%c160_651, %c0_652] : memref<200x12xf32, #tpu.memory_space<vmem>>, vector<8x12xf32>
    tpu.vector_store %arg5[%c160_651, %c0_652], %612 {strides = array<i32>} : memref<200x12xf32, #tpu.memory_space<vmem>>, vector<8x12xf32>,
    %614 = vector.extract_strided_slice %611 {offsets = [0, 1], sizes = [8, 12], strides = [1, 1]} : vector<8x16xf32> to vector<8x12xf32>
    %c168_653 = arith.constant 168 : index
    %c0_654 = arith.constant 0 : index
    %615 = vector.load %arg5[%c168_653, %c0_654] : memref<200x12xf32, #tpu.memory_space<vmem>>, vector<8x12xf32>
    tpu.vector_store %arg5[%c168_653, %c0_654], %614 {strides = array<i32>} : memref<200x12xf32, #tpu.memory_space<vmem>>, vector<8x12xf32>,
    %616 = vector.extract_strided_slice %611 {offsets = [0, 2], sizes = [8, 12], strides = [1, 1]} : vector<8x16xf32> to vector<8x12xf32>
    %c176_655 = arith.constant 176 : index
    %c0_656 = arith.constant 0 : index
    %617 = vector.load %arg5[%c176_655, %c0_656] : memref<200x12xf32, #tpu.memory_space<vmem>>, vector<8x12xf32>
    tpu.vector_store %arg5[%c176_655, %c0_656], %616 {strides = array<i32>} : memref<200x12xf32, #tpu.memory_space<vmem>>, vector<8x12xf32>,
    %618 = vector.extract_strided_slice %611 {offsets = [0, 3], sizes = [8, 12], strides = [1, 1]} : vector<8x16xf32> to vector<8x12xf32>
    %c184_657 = arith.constant 184 : index
    %c0_658 = arith.constant 0 : index
    %619 = vector.load %arg5[%c184_657, %c0_658] : memref<200x12xf32, #tpu.memory_space<vmem>>, vector<8x12xf32>
    tpu.vector_store %arg5[%c184_657, %c0_658], %618 {strides = array<i32>} : memref<200x12xf32, #tpu.memory_space<vmem>>, vector<8x12xf32>,
    %620 = vector.extract_strided_slice %611 {offsets = [0, 4], sizes = [8, 12], strides = [1, 1]} : vector<8x16xf32> to vector<8x12xf32>
    %c192_659 = arith.constant 192 : index
    %c0_660 = arith.constant 0 : index
    %621 = vector.load %arg5[%c192_659, %c0_660] : memref<200x12xf32, #tpu.memory_space<vmem>>, vector<8x12xf32>
    tpu.vector_store %arg5[%c192_659, %c0_660], %620 {strides = array<i32>} : memref<200x12xf32, #tpu.memory_space<vmem>>, vector<8x12xf32>,
    %c0_661 = arith.constant 0 : index
    %c0_662 = arith.constant 0 : index
    %622 = vector.load %arg5[%c0_661, %c0_662] : memref<200x12xf32, #tpu.memory_space<vmem>>, vector<200x12xf32>
    %623 = arith.truncf %622 : vector<200x12xf32> to vector<200x12xbf16>
    %cst_663 = arith.constant dense<0.000000e+00> : vector<32x12xf32>
    %624 = tpu.matmul %0, %623, %cst_663 {dimension_numbers = #tpu.dot_dimension_numbers<[1], [0], [0], [1], [0, 0, 1, 1], [], []>} : vector<32x200xbf16>, vector<200x12xbf16>, vector<32x12xf32> -> vector<32x12xf32>
    %625 = vector.broadcast %1 : vector<32x1xf32> to vector<32x12xf32>
    %626 = arith.addf %624, %625 : vector<32x12xf32>
    %cst_664 = arith.constant 0.000000e+00 : f32
    %627 = vector.broadcast %cst_664 : f32 to vector<32x12xf32>
    %628 = arith.maximumf %626, %627 : vector<32x12xf32>
    %c0_665 = arith.constant 0 : index
    %c0_666 = arith.constant 0 : index
    %c8_667 = arith.constant 8 : index
    %c0_668 = arith.constant 0 : index
    %629 = vector.load %arg4[%c0_665, %c0_666, %c8_667, %c0_668] : memref<1x32x12x12xf32, #tpu.memory_space<vmem>>, vector<1x32x1x12xf32>
    %630 = vector.shape_cast %629 : vector<1x32x1x12xf32> to vector<32x12xf32>
    %631 = vector.shape_cast %628 : vector<32x12xf32> to vector<1x32x1x12xf32>
    tpu.vector_store %arg4[%c0_665, %c0_666, %c8_667, %c0_668], %631 {strides = array<i32>} : memref<1x32x12x12xf32, #tpu.memory_space<vmem>>, vector<1x32x1x12xf32>,
    %c0_669 = arith.constant 0 : index
    %c0_670 = arith.constant 0 : index
    %c9_671 = arith.constant 9 : index
    %c0_672 = arith.constant 0 : index
    %632 = vector.load %arg1[%c0_669, %c0_670, %c9_671, %c0_672] : memref<1x8x16x16xf32, #tpu.memory_space<vmem>>, vector<1x8x1x16xf32>
    %633 = vector.shape_cast %632 : vector<1x8x1x16xf32> to vector<8x16xf32>
    %634 = vector.extract_strided_slice %633 {offsets = [0, 0], sizes = [8, 12], strides = [1, 1]} : vector<8x16xf32> to vector<8x12xf32>
    %c0_673 = arith.constant 0 : index
    %c0_674 = arith.constant 0 : index
    %635 = vector.load %arg5[%c0_673, %c0_674] : memref<200x12xf32, #tpu.memory_space<vmem>>, vector<8x12xf32>
    tpu.vector_store %arg5[%c0_673, %c0_674], %634 {strides = array<i32>} : memref<200x12xf32, #tpu.memory_space<vmem>>, vector<8x12xf32>,
    %636 = vector.extract_strided_slice %633 {offsets = [0, 1], sizes = [8, 12], strides = [1, 1]} : vector<8x16xf32> to vector<8x12xf32>
    %c8_675 = arith.constant 8 : index
    %c0_676 = arith.constant 0 : index
    %637 = vector.load %arg5[%c8_675, %c0_676] : memref<200x12xf32, #tpu.memory_space<vmem>>, vector<8x12xf32>
    tpu.vector_store %arg5[%c8_675, %c0_676], %636 {strides = array<i32>} : memref<200x12xf32, #tpu.memory_space<vmem>>, vector<8x12xf32>,
    %638 = vector.extract_strided_slice %633 {offsets = [0, 2], sizes = [8, 12], strides = [1, 1]} : vector<8x16xf32> to vector<8x12xf32>
    %c16_677 = arith.constant 16 : index
    %c0_678 = arith.constant 0 : index
    %639 = vector.load %arg5[%c16_677, %c0_678] : memref<200x12xf32, #tpu.memory_space<vmem>>, vector<8x12xf32>
    tpu.vector_store %arg5[%c16_677, %c0_678], %638 {strides = array<i32>} : memref<200x12xf32, #tpu.memory_space<vmem>>, vector<8x12xf32>,
    %640 = vector.extract_strided_slice %633 {offsets = [0, 3], sizes = [8, 12], strides = [1, 1]} : vector<8x16xf32> to vector<8x12xf32>
    %c24_679 = arith.constant 24 : index
    %c0_680 = arith.constant 0 : index
    %641 = vector.load %arg5[%c24_679, %c0_680] : memref<200x12xf32, #tpu.memory_space<vmem>>, vector<8x12xf32>
    tpu.vector_store %arg5[%c24_679, %c0_680], %640 {strides = array<i32>} : memref<200x12xf32, #tpu.memory_space<vmem>>, vector<8x12xf32>,
    %642 = vector.extract_strided_slice %633 {offsets = [0, 4], sizes = [8, 12], strides = [1, 1]} : vector<8x16xf32> to vector<8x12xf32>
    %c32_681 = arith.constant 32 : index
    %c0_682 = arith.constant 0 : index
    %643 = vector.load %arg5[%c32_681, %c0_682] : memref<200x12xf32, #tpu.memory_space<vmem>>, vector<8x12xf32>
    tpu.vector_store %arg5[%c32_681, %c0_682], %642 {strides = array<i32>} : memref<200x12xf32, #tpu.memory_space<vmem>>, vector<8x12xf32>,
    %c0_683 = arith.constant 0 : index
    %c0_684 = arith.constant 0 : index
    %c10_685 = arith.constant 10 : index
    %c0_686 = arith.constant 0 : index
    %644 = vector.load %arg1[%c0_683, %c0_684, %c10_685, %c0_686] : memref<1x8x16x16xf32, #tpu.memory_space<vmem>>, vector<1x8x1x16xf32>
    %645 = vector.shape_cast %644 : vector<1x8x1x16xf32> to vector<8x16xf32>
    %646 = vector.extract_strided_slice %645 {offsets = [0, 0], sizes = [8, 12], strides = [1, 1]} : vector<8x16xf32> to vector<8x12xf32>
    %c40_687 = arith.constant 40 : index
    %c0_688 = arith.constant 0 : index
    %647 = vector.load %arg5[%c40_687, %c0_688] : memref<200x12xf32, #tpu.memory_space<vmem>>, vector<8x12xf32>
    tpu.vector_store %arg5[%c40_687, %c0_688], %646 {strides = array<i32>} : memref<200x12xf32, #tpu.memory_space<vmem>>, vector<8x12xf32>,
    %648 = vector.extract_strided_slice %645 {offsets = [0, 1], sizes = [8, 12], strides = [1, 1]} : vector<8x16xf32> to vector<8x12xf32>
    %c48_689 = arith.constant 48 : index
    %c0_690 = arith.constant 0 : index
    %649 = vector.load %arg5[%c48_689, %c0_690] : memref<200x12xf32, #tpu.memory_space<vmem>>, vector<8x12xf32>
    tpu.vector_store %arg5[%c48_689, %c0_690], %648 {strides = array<i32>} : memref<200x12xf32, #tpu.memory_space<vmem>>, vector<8x12xf32>,
    %650 = vector.extract_strided_slice %645 {offsets = [0, 2], sizes = [8, 12], strides = [1, 1]} : vector<8x16xf32> to vector<8x12xf32>
    %c56_691 = arith.constant 56 : index
    %c0_692 = arith.constant 0 : index
    %651 = vector.load %arg5[%c56_691, %c0_692] : memref<200x12xf32, #tpu.memory_space<vmem>>, vector<8x12xf32>
    tpu.vector_store %arg5[%c56_691, %c0_692], %650 {strides = array<i32>} : memref<200x12xf32, #tpu.memory_space<vmem>>, vector<8x12xf32>,
    %652 = vector.extract_strided_slice %645 {offsets = [0, 3], sizes = [8, 12], strides = [1, 1]} : vector<8x16xf32> to vector<8x12xf32>
    %c64_693 = arith.constant 64 : index
    %c0_694 = arith.constant 0 : index
    %653 = vector.load %arg5[%c64_693, %c0_694] : memref<200x12xf32, #tpu.memory_space<vmem>>, vector<8x12xf32>
    tpu.vector_store %arg5[%c64_693, %c0_694], %652 {strides = array<i32>} : memref<200x12xf32, #tpu.memory_space<vmem>>, vector<8x12xf32>,
    %654 = vector.extract_strided_slice %645 {offsets = [0, 4], sizes = [8, 12], strides = [1, 1]} : vector<8x16xf32> to vector<8x12xf32>
    %c72_695 = arith.constant 72 : index
    %c0_696 = arith.constant 0 : index
    %655 = vector.load %arg5[%c72_695, %c0_696] : memref<200x12xf32, #tpu.memory_space<vmem>>, vector<8x12xf32>
    tpu.vector_store %arg5[%c72_695, %c0_696], %654 {strides = array<i32>} : memref<200x12xf32, #tpu.memory_space<vmem>>, vector<8x12xf32>,
    %c0_697 = arith.constant 0 : index
    %c0_698 = arith.constant 0 : index
    %c11_699 = arith.constant 11 : index
    %c0_700 = arith.constant 0 : index
    %656 = vector.load %arg1[%c0_697, %c0_698, %c11_699, %c0_700] : memref<1x8x16x16xf32, #tpu.memory_space<vmem>>, vector<1x8x1x16xf32>
    %657 = vector.shape_cast %656 : vector<1x8x1x16xf32> to vector<8x16xf32>
    %658 = vector.extract_strided_slice %657 {offsets = [0, 0], sizes = [8, 12], strides = [1, 1]} : vector<8x16xf32> to vector<8x12xf32>
    %c80_701 = arith.constant 80 : index
    %c0_702 = arith.constant 0 : index
    %659 = vector.load %arg5[%c80_701, %c0_702] : memref<200x12xf32, #tpu.memory_space<vmem>>, vector<8x12xf32>
    tpu.vector_store %arg5[%c80_701, %c0_702], %658 {strides = array<i32>} : memref<200x12xf32, #tpu.memory_space<vmem>>, vector<8x12xf32>,
    %660 = vector.extract_strided_slice %657 {offsets = [0, 1], sizes = [8, 12], strides = [1, 1]} : vector<8x16xf32> to vector<8x12xf32>
    %c88_703 = arith.constant 88 : index
    %c0_704 = arith.constant 0 : index
    %661 = vector.load %arg5[%c88_703, %c0_704] : memref<200x12xf32, #tpu.memory_space<vmem>>, vector<8x12xf32>
    tpu.vector_store %arg5[%c88_703, %c0_704], %660 {strides = array<i32>} : memref<200x12xf32, #tpu.memory_space<vmem>>, vector<8x12xf32>,
    %662 = vector.extract_strided_slice %657 {offsets = [0, 2], sizes = [8, 12], strides = [1, 1]} : vector<8x16xf32> to vector<8x12xf32>
    %c96_705 = arith.constant 96 : index
    %c0_706 = arith.constant 0 : index
    %663 = vector.load %arg5[%c96_705, %c0_706] : memref<200x12xf32, #tpu.memory_space<vmem>>, vector<8x12xf32>
    tpu.vector_store %arg5[%c96_705, %c0_706], %662 {strides = array<i32>} : memref<200x12xf32, #tpu.memory_space<vmem>>, vector<8x12xf32>,
    %664 = vector.extract_strided_slice %657 {offsets = [0, 3], sizes = [8, 12], strides = [1, 1]} : vector<8x16xf32> to vector<8x12xf32>
    %c104_707 = arith.constant 104 : index
    %c0_708 = arith.constant 0 : index
    %665 = vector.load %arg5[%c104_707, %c0_708] : memref<200x12xf32, #tpu.memory_space<vmem>>, vector<8x12xf32>
    tpu.vector_store %arg5[%c104_707, %c0_708], %664 {strides = array<i32>} : memref<200x12xf32, #tpu.memory_space<vmem>>, vector<8x12xf32>,
    %666 = vector.extract_strided_slice %657 {offsets = [0, 4], sizes = [8, 12], strides = [1, 1]} : vector<8x16xf32> to vector<8x12xf32>
    %c112_709 = arith.constant 112 : index
    %c0_710 = arith.constant 0 : index
    %667 = vector.load %arg5[%c112_709, %c0_710] : memref<200x12xf32, #tpu.memory_space<vmem>>, vector<8x12xf32>
    tpu.vector_store %arg5[%c112_709, %c0_710], %666 {strides = array<i32>} : memref<200x12xf32, #tpu.memory_space<vmem>>, vector<8x12xf32>,
    %c0_711 = arith.constant 0 : index
    %c0_712 = arith.constant 0 : index
    %c12_713 = arith.constant 12 : index
    %c0_714 = arith.constant 0 : index
    %668 = vector.load %arg1[%c0_711, %c0_712, %c12_713, %c0_714] : memref<1x8x16x16xf32, #tpu.memory_space<vmem>>, vector<1x8x1x16xf32>
    %669 = vector.shape_cast %668 : vector<1x8x1x16xf32> to vector<8x16xf32>
    %670 = vector.extract_strided_slice %669 {offsets = [0, 0], sizes = [8, 12], strides = [1, 1]} : vector<8x16xf32> to vector<8x12xf32>
    %c120_715 = arith.constant 120 : index
    %c0_716 = arith.constant 0 : index
    %671 = vector.load %arg5[%c120_715, %c0_716] : memref<200x12xf32, #tpu.memory_space<vmem>>, vector<8x12xf32>
    tpu.vector_store %arg5[%c120_715, %c0_716], %670 {strides = array<i32>} : memref<200x12xf32, #tpu.memory_space<vmem>>, vector<8x12xf32>,
    %672 = vector.extract_strided_slice %669 {offsets = [0, 1], sizes = [8, 12], strides = [1, 1]} : vector<8x16xf32> to vector<8x12xf32>
    %c128_717 = arith.constant 128 : index
    %c0_718 = arith.constant 0 : index
    %673 = vector.load %arg5[%c128_717, %c0_718] : memref<200x12xf32, #tpu.memory_space<vmem>>, vector<8x12xf32>
    tpu.vector_store %arg5[%c128_717, %c0_718], %672 {strides = array<i32>} : memref<200x12xf32, #tpu.memory_space<vmem>>, vector<8x12xf32>,
    %674 = vector.extract_strided_slice %669 {offsets = [0, 2], sizes = [8, 12], strides = [1, 1]} : vector<8x16xf32> to vector<8x12xf32>
    %c136_719 = arith.constant 136 : index
    %c0_720 = arith.constant 0 : index
    %675 = vector.load %arg5[%c136_719, %c0_720] : memref<200x12xf32, #tpu.memory_space<vmem>>, vector<8x12xf32>
    tpu.vector_store %arg5[%c136_719, %c0_720], %674 {strides = array<i32>} : memref<200x12xf32, #tpu.memory_space<vmem>>, vector<8x12xf32>,
    %676 = vector.extract_strided_slice %669 {offsets = [0, 3], sizes = [8, 12], strides = [1, 1]} : vector<8x16xf32> to vector<8x12xf32>
    %c144_721 = arith.constant 144 : index
    %c0_722 = arith.constant 0 : index
    %677 = vector.load %arg5[%c144_721, %c0_722] : memref<200x12xf32, #tpu.memory_space<vmem>>, vector<8x12xf32>
    tpu.vector_store %arg5[%c144_721, %c0_722], %676 {strides = array<i32>} : memref<200x12xf32, #tpu.memory_space<vmem>>, vector<8x12xf32>,
    %678 = vector.extract_strided_slice %669 {offsets = [0, 4], sizes = [8, 12], strides = [1, 1]} : vector<8x16xf32> to vector<8x12xf32>
    %c152_723 = arith.constant 152 : index
    %c0_724 = arith.constant 0 : index
    %679 = vector.load %arg5[%c152_723, %c0_724] : memref<200x12xf32, #tpu.memory_space<vmem>>, vector<8x12xf32>
    tpu.vector_store %arg5[%c152_723, %c0_724], %678 {strides = array<i32>} : memref<200x12xf32, #tpu.memory_space<vmem>>, vector<8x12xf32>,
    %c0_725 = arith.constant 0 : index
    %c0_726 = arith.constant 0 : index
    %c13 = arith.constant 13 : index
    %c0_727 = arith.constant 0 : index
    %680 = vector.load %arg1[%c0_725, %c0_726, %c13, %c0_727] : memref<1x8x16x16xf32, #tpu.memory_space<vmem>>, vector<1x8x1x16xf32>
    %681 = vector.shape_cast %680 : vector<1x8x1x16xf32> to vector<8x16xf32>
    %682 = vector.extract_strided_slice %681 {offsets = [0, 0], sizes = [8, 12], strides = [1, 1]} : vector<8x16xf32> to vector<8x12xf32>
    %c160_728 = arith.constant 160 : index
    %c0_729 = arith.constant 0 : index
    %683 = vector.load %arg5[%c160_728, %c0_729] : memref<200x12xf32, #tpu.memory_space<vmem>>, vector<8x12xf32>
    tpu.vector_store %arg5[%c160_728, %c0_729], %682 {strides = array<i32>} : memref<200x12xf32, #tpu.memory_space<vmem>>, vector<8x12xf32>,
    %684 = vector.extract_strided_slice %681 {offsets = [0, 1], sizes = [8, 12], strides = [1, 1]} : vector<8x16xf32> to vector<8x12xf32>
    %c168_730 = arith.constant 168 : index
    %c0_731 = arith.constant 0 : index
    %685 = vector.load %arg5[%c168_730, %c0_731] : memref<200x12xf32, #tpu.memory_space<vmem>>, vector<8x12xf32>
    tpu.vector_store %arg5[%c168_730, %c0_731], %684 {strides = array<i32>} : memref<200x12xf32, #tpu.memory_space<vmem>>, vector<8x12xf32>,
    %686 = vector.extract_strided_slice %681 {offsets = [0, 2], sizes = [8, 12], strides = [1, 1]} : vector<8x16xf32> to vector<8x12xf32>
    %c176_732 = arith.constant 176 : index
    %c0_733 = arith.constant 0 : index
    %687 = vector.load %arg5[%c176_732, %c0_733] : memref<200x12xf32, #tpu.memory_space<vmem>>, vector<8x12xf32>
    tpu.vector_store %arg5[%c176_732, %c0_733], %686 {strides = array<i32>} : memref<200x12xf32, #tpu.memory_space<vmem>>, vector<8x12xf32>,
    %688 = vector.extract_strided_slice %681 {offsets = [0, 3], sizes = [8, 12], strides = [1, 1]} : vector<8x16xf32> to vector<8x12xf32>
    %c184_734 = arith.constant 184 : index
    %c0_735 = arith.constant 0 : index
    %689 = vector.load %arg5[%c184_734, %c0_735] : memref<200x12xf32, #tpu.memory_space<vmem>>, vector<8x12xf32>
    tpu.vector_store %arg5[%c184_734, %c0_735], %688 {strides = array<i32>} : memref<200x12xf32, #tpu.memory_space<vmem>>, vector<8x12xf32>,
    %690 = vector.extract_strided_slice %681 {offsets = [0, 4], sizes = [8, 12], strides = [1, 1]} : vector<8x16xf32> to vector<8x12xf32>
    %c192_736 = arith.constant 192 : index
    %c0_737 = arith.constant 0 : index
    %691 = vector.load %arg5[%c192_736, %c0_737] : memref<200x12xf32, #tpu.memory_space<vmem>>, vector<8x12xf32>
    tpu.vector_store %arg5[%c192_736, %c0_737], %690 {strides = array<i32>} : memref<200x12xf32, #tpu.memory_space<vmem>>, vector<8x12xf32>,
    %c0_738 = arith.constant 0 : index
    %c0_739 = arith.constant 0 : index
    %692 = vector.load %arg5[%c0_738, %c0_739] : memref<200x12xf32, #tpu.memory_space<vmem>>, vector<200x12xf32>
    %693 = arith.truncf %692 : vector<200x12xf32> to vector<200x12xbf16>
    %cst_740 = arith.constant dense<0.000000e+00> : vector<32x12xf32>
    %694 = tpu.matmul %0, %693, %cst_740 {dimension_numbers = #tpu.dot_dimension_numbers<[1], [0], [0], [1], [0, 0, 1, 1], [], []>} : vector<32x200xbf16>, vector<200x12xbf16>, vector<32x12xf32> -> vector<32x12xf32>
    %695 = vector.broadcast %1 : vector<32x1xf32> to vector<32x12xf32>
    %696 = arith.addf %694, %695 : vector<32x12xf32>
    %cst_741 = arith.constant 0.000000e+00 : f32
    %697 = vector.broadcast %cst_741 : f32 to vector<32x12xf32>
    %698 = arith.maximumf %696, %697 : vector<32x12xf32>
    %c0_742 = arith.constant 0 : index
    %c0_743 = arith.constant 0 : index
    %c9_744 = arith.constant 9 : index
    %c0_745 = arith.constant 0 : index
    %699 = vector.load %arg4[%c0_742, %c0_743, %c9_744, %c0_745] : memref<1x32x12x12xf32, #tpu.memory_space<vmem>>, vector<1x32x1x12xf32>
    %700 = vector.shape_cast %699 : vector<1x32x1x12xf32> to vector<32x12xf32>
    %701 = vector.shape_cast %698 : vector<32x12xf32> to vector<1x32x1x12xf32>
    tpu.vector_store %arg4[%c0_742, %c0_743, %c9_744, %c0_745], %701 {strides = array<i32>} : memref<1x32x12x12xf32, #tpu.memory_space<vmem>>, vector<1x32x1x12xf32>,
    %c0_746 = arith.constant 0 : index
    %c0_747 = arith.constant 0 : index
    %c10_748 = arith.constant 10 : index
    %c0_749 = arith.constant 0 : index
    %702 = vector.load %arg1[%c0_746, %c0_747, %c10_748, %c0_749] : memref<1x8x16x16xf32, #tpu.memory_space<vmem>>, vector<1x8x1x16xf32>
    %703 = vector.shape_cast %702 : vector<1x8x1x16xf32> to vector<8x16xf32>
    %704 = vector.extract_strided_slice %703 {offsets = [0, 0], sizes = [8, 12], strides = [1, 1]} : vector<8x16xf32> to vector<8x12xf32>
    %c0_750 = arith.constant 0 : index
    %c0_751 = arith.constant 0 : index
    %705 = vector.load %arg5[%c0_750, %c0_751] : memref<200x12xf32, #tpu.memory_space<vmem>>, vector<8x12xf32>
    tpu.vector_store %arg5[%c0_750, %c0_751], %704 {strides = array<i32>} : memref<200x12xf32, #tpu.memory_space<vmem>>, vector<8x12xf32>,
    %706 = vector.extract_strided_slice %703 {offsets = [0, 1], sizes = [8, 12], strides = [1, 1]} : vector<8x16xf32> to vector<8x12xf32>
    %c8_752 = arith.constant 8 : index
    %c0_753 = arith.constant 0 : index
    %707 = vector.load %arg5[%c8_752, %c0_753] : memref<200x12xf32, #tpu.memory_space<vmem>>, vector<8x12xf32>
    tpu.vector_store %arg5[%c8_752, %c0_753], %706 {strides = array<i32>} : memref<200x12xf32, #tpu.memory_space<vmem>>, vector<8x12xf32>,
    %708 = vector.extract_strided_slice %703 {offsets = [0, 2], sizes = [8, 12], strides = [1, 1]} : vector<8x16xf32> to vector<8x12xf32>
    %c16_754 = arith.constant 16 : index
    %c0_755 = arith.constant 0 : index
    %709 = vector.load %arg5[%c16_754, %c0_755] : memref<200x12xf32, #tpu.memory_space<vmem>>, vector<8x12xf32>
    tpu.vector_store %arg5[%c16_754, %c0_755], %708 {strides = array<i32>} : memref<200x12xf32, #tpu.memory_space<vmem>>, vector<8x12xf32>,
    %710 = vector.extract_strided_slice %703 {offsets = [0, 3], sizes = [8, 12], strides = [1, 1]} : vector<8x16xf32> to vector<8x12xf32>
    %c24_756 = arith.constant 24 : index
    %c0_757 = arith.constant 0 : index
    %711 = vector.load %arg5[%c24_756, %c0_757] : memref<200x12xf32, #tpu.memory_space<vmem>>, vector<8x12xf32>
    tpu.vector_store %arg5[%c24_756, %c0_757], %710 {strides = array<i32>} : memref<200x12xf32, #tpu.memory_space<vmem>>, vector<8x12xf32>,
    %712 = vector.extract_strided_slice %703 {offsets = [0, 4], sizes = [8, 12], strides = [1, 1]} : vector<8x16xf32> to vector<8x12xf32>
    %c32_758 = arith.constant 32 : index
    %c0_759 = arith.constant 0 : index
    %713 = vector.load %arg5[%c32_758, %c0_759] : memref<200x12xf32, #tpu.memory_space<vmem>>, vector<8x12xf32>
    tpu.vector_store %arg5[%c32_758, %c0_759], %712 {strides = array<i32>} : memref<200x12xf32, #tpu.memory_space<vmem>>, vector<8x12xf32>,
    %c0_760 = arith.constant 0 : index
    %c0_761 = arith.constant 0 : index
    %c11_762 = arith.constant 11 : index
    %c0_763 = arith.constant 0 : index
    %714 = vector.load %arg1[%c0_760, %c0_761, %c11_762, %c0_763] : memref<1x8x16x16xf32, #tpu.memory_space<vmem>>, vector<1x8x1x16xf32>
    %715 = vector.shape_cast %714 : vector<1x8x1x16xf32> to vector<8x16xf32>
    %716 = vector.extract_strided_slice %715 {offsets = [0, 0], sizes = [8, 12], strides = [1, 1]} : vector<8x16xf32> to vector<8x12xf32>
    %c40_764 = arith.constant 40 : index
    %c0_765 = arith.constant 0 : index
    %717 = vector.load %arg5[%c40_764, %c0_765] : memref<200x12xf32, #tpu.memory_space<vmem>>, vector<8x12xf32>
    tpu.vector_store %arg5[%c40_764, %c0_765], %716 {strides = array<i32>} : memref<200x12xf32, #tpu.memory_space<vmem>>, vector<8x12xf32>,
    %718 = vector.extract_strided_slice %715 {offsets = [0, 1], sizes = [8, 12], strides = [1, 1]} : vector<8x16xf32> to vector<8x12xf32>
    %c48_766 = arith.constant 48 : index
    %c0_767 = arith.constant 0 : index
    %719 = vector.load %arg5[%c48_766, %c0_767] : memref<200x12xf32, #tpu.memory_space<vmem>>, vector<8x12xf32>
    tpu.vector_store %arg5[%c48_766, %c0_767], %718 {strides = array<i32>} : memref<200x12xf32, #tpu.memory_space<vmem>>, vector<8x12xf32>,
    %720 = vector.extract_strided_slice %715 {offsets = [0, 2], sizes = [8, 12], strides = [1, 1]} : vector<8x16xf32> to vector<8x12xf32>
    %c56_768 = arith.constant 56 : index
    %c0_769 = arith.constant 0 : index
    %721 = vector.load %arg5[%c56_768, %c0_769] : memref<200x12xf32, #tpu.memory_space<vmem>>, vector<8x12xf32>
    tpu.vector_store %arg5[%c56_768, %c0_769], %720 {strides = array<i32>} : memref<200x12xf32, #tpu.memory_space<vmem>>, vector<8x12xf32>,
    %722 = vector.extract_strided_slice %715 {offsets = [0, 3], sizes = [8, 12], strides = [1, 1]} : vector<8x16xf32> to vector<8x12xf32>
    %c64_770 = arith.constant 64 : index
    %c0_771 = arith.constant 0 : index
    %723 = vector.load %arg5[%c64_770, %c0_771] : memref<200x12xf32, #tpu.memory_space<vmem>>, vector<8x12xf32>
    tpu.vector_store %arg5[%c64_770, %c0_771], %722 {strides = array<i32>} : memref<200x12xf32, #tpu.memory_space<vmem>>, vector<8x12xf32>,
    %724 = vector.extract_strided_slice %715 {offsets = [0, 4], sizes = [8, 12], strides = [1, 1]} : vector<8x16xf32> to vector<8x12xf32>
    %c72_772 = arith.constant 72 : index
    %c0_773 = arith.constant 0 : index
    %725 = vector.load %arg5[%c72_772, %c0_773] : memref<200x12xf32, #tpu.memory_space<vmem>>, vector<8x12xf32>
    tpu.vector_store %arg5[%c72_772, %c0_773], %724 {strides = array<i32>} : memref<200x12xf32, #tpu.memory_space<vmem>>, vector<8x12xf32>,
    %c0_774 = arith.constant 0 : index
    %c0_775 = arith.constant 0 : index
    %c12_776 = arith.constant 12 : index
    %c0_777 = arith.constant 0 : index
    %726 = vector.load %arg1[%c0_774, %c0_775, %c12_776, %c0_777] : memref<1x8x16x16xf32, #tpu.memory_space<vmem>>, vector<1x8x1x16xf32>
    %727 = vector.shape_cast %726 : vector<1x8x1x16xf32> to vector<8x16xf32>
    %728 = vector.extract_strided_slice %727 {offsets = [0, 0], sizes = [8, 12], strides = [1, 1]} : vector<8x16xf32> to vector<8x12xf32>
    %c80_778 = arith.constant 80 : index
    %c0_779 = arith.constant 0 : index
    %729 = vector.load %arg5[%c80_778, %c0_779] : memref<200x12xf32, #tpu.memory_space<vmem>>, vector<8x12xf32>
    tpu.vector_store %arg5[%c80_778, %c0_779], %728 {strides = array<i32>} : memref<200x12xf32, #tpu.memory_space<vmem>>, vector<8x12xf32>,
    %730 = vector.extract_strided_slice %727 {offsets = [0, 1], sizes = [8, 12], strides = [1, 1]} : vector<8x16xf32> to vector<8x12xf32>
    %c88_780 = arith.constant 88 : index
    %c0_781 = arith.constant 0 : index
    %731 = vector.load %arg5[%c88_780, %c0_781] : memref<200x12xf32, #tpu.memory_space<vmem>>, vector<8x12xf32>
    tpu.vector_store %arg5[%c88_780, %c0_781], %730 {strides = array<i32>} : memref<200x12xf32, #tpu.memory_space<vmem>>, vector<8x12xf32>,
    %732 = vector.extract_strided_slice %727 {offsets = [0, 2], sizes = [8, 12], strides = [1, 1]} : vector<8x16xf32> to vector<8x12xf32>
    %c96_782 = arith.constant 96 : index
    %c0_783 = arith.constant 0 : index
    %733 = vector.load %arg5[%c96_782, %c0_783] : memref<200x12xf32, #tpu.memory_space<vmem>>, vector<8x12xf32>
    tpu.vector_store %arg5[%c96_782, %c0_783], %732 {strides = array<i32>} : memref<200x12xf32, #tpu.memory_space<vmem>>, vector<8x12xf32>,
    %734 = vector.extract_strided_slice %727 {offsets = [0, 3], sizes = [8, 12], strides = [1, 1]} : vector<8x16xf32> to vector<8x12xf32>
    %c104_784 = arith.constant 104 : index
    %c0_785 = arith.constant 0 : index
    %735 = vector.load %arg5[%c104_784, %c0_785] : memref<200x12xf32, #tpu.memory_space<vmem>>, vector<8x12xf32>
    tpu.vector_store %arg5[%c104_784, %c0_785], %734 {strides = array<i32>} : memref<200x12xf32, #tpu.memory_space<vmem>>, vector<8x12xf32>,
    %736 = vector.extract_strided_slice %727 {offsets = [0, 4], sizes = [8, 12], strides = [1, 1]} : vector<8x16xf32> to vector<8x12xf32>
    %c112_786 = arith.constant 112 : index
    %c0_787 = arith.constant 0 : index
    %737 = vector.load %arg5[%c112_786, %c0_787] : memref<200x12xf32, #tpu.memory_space<vmem>>, vector<8x12xf32>
    tpu.vector_store %arg5[%c112_786, %c0_787], %736 {strides = array<i32>} : memref<200x12xf32, #tpu.memory_space<vmem>>, vector<8x12xf32>,
    %c0_788 = arith.constant 0 : index
    %c0_789 = arith.constant 0 : index
    %c13_790 = arith.constant 13 : index
    %c0_791 = arith.constant 0 : index
    %738 = vector.load %arg1[%c0_788, %c0_789, %c13_790, %c0_791] : memref<1x8x16x16xf32, #tpu.memory_space<vmem>>, vector<1x8x1x16xf32>
    %739 = vector.shape_cast %738 : vector<1x8x1x16xf32> to vector<8x16xf32>
    %740 = vector.extract_strided_slice %739 {offsets = [0, 0], sizes = [8, 12], strides = [1, 1]} : vector<8x16xf32> to vector<8x12xf32>
    %c120_792 = arith.constant 120 : index
    %c0_793 = arith.constant 0 : index
    %741 = vector.load %arg5[%c120_792, %c0_793] : memref<200x12xf32, #tpu.memory_space<vmem>>, vector<8x12xf32>
    tpu.vector_store %arg5[%c120_792, %c0_793], %740 {strides = array<i32>} : memref<200x12xf32, #tpu.memory_space<vmem>>, vector<8x12xf32>,
    %742 = vector.extract_strided_slice %739 {offsets = [0, 1], sizes = [8, 12], strides = [1, 1]} : vector<8x16xf32> to vector<8x12xf32>
    %c128_794 = arith.constant 128 : index
    %c0_795 = arith.constant 0 : index
    %743 = vector.load %arg5[%c128_794, %c0_795] : memref<200x12xf32, #tpu.memory_space<vmem>>, vector<8x12xf32>
    tpu.vector_store %arg5[%c128_794, %c0_795], %742 {strides = array<i32>} : memref<200x12xf32, #tpu.memory_space<vmem>>, vector<8x12xf32>,
    %744 = vector.extract_strided_slice %739 {offsets = [0, 2], sizes = [8, 12], strides = [1, 1]} : vector<8x16xf32> to vector<8x12xf32>
    %c136_796 = arith.constant 136 : index
    %c0_797 = arith.constant 0 : index
    %745 = vector.load %arg5[%c136_796, %c0_797] : memref<200x12xf32, #tpu.memory_space<vmem>>, vector<8x12xf32>
    tpu.vector_store %arg5[%c136_796, %c0_797], %744 {strides = array<i32>} : memref<200x12xf32, #tpu.memory_space<vmem>>, vector<8x12xf32>,
    %746 = vector.extract_strided_slice %739 {offsets = [0, 3], sizes = [8, 12], strides = [1, 1]} : vector<8x16xf32> to vector<8x12xf32>
    %c144_798 = arith.constant 144 : index
    %c0_799 = arith.constant 0 : index
    %747 = vector.load %arg5[%c144_798, %c0_799] : memref<200x12xf32, #tpu.memory_space<vmem>>, vector<8x12xf32>
    tpu.vector_store %arg5[%c144_798, %c0_799], %746 {strides = array<i32>} : memref<200x12xf32, #tpu.memory_space<vmem>>, vector<8x12xf32>,
    %748 = vector.extract_strided_slice %739 {offsets = [0, 4], sizes = [8, 12], strides = [1, 1]} : vector<8x16xf32> to vector<8x12xf32>
    %c152_800 = arith.constant 152 : index
    %c0_801 = arith.constant 0 : index
    %749 = vector.load %arg5[%c152_800, %c0_801] : memref<200x12xf32, #tpu.memory_space<vmem>>, vector<8x12xf32>
    tpu.vector_store %arg5[%c152_800, %c0_801], %748 {strides = array<i32>} : memref<200x12xf32, #tpu.memory_space<vmem>>, vector<8x12xf32>,
    %c0_802 = arith.constant 0 : index
    %c0_803 = arith.constant 0 : index
    %c14 = arith.constant 14 : index
    %c0_804 = arith.constant 0 : index
    %750 = vector.load %arg1[%c0_802, %c0_803, %c14, %c0_804] : memref<1x8x16x16xf32, #tpu.memory_space<vmem>>, vector<1x8x1x16xf32>
    %751 = vector.shape_cast %750 : vector<1x8x1x16xf32> to vector<8x16xf32>
    %752 = vector.extract_strided_slice %751 {offsets = [0, 0], sizes = [8, 12], strides = [1, 1]} : vector<8x16xf32> to vector<8x12xf32>
    %c160_805 = arith.constant 160 : index
    %c0_806 = arith.constant 0 : index
    %753 = vector.load %arg5[%c160_805, %c0_806] : memref<200x12xf32, #tpu.memory_space<vmem>>, vector<8x12xf32>
    tpu.vector_store %arg5[%c160_805, %c0_806], %752 {strides = array<i32>} : memref<200x12xf32, #tpu.memory_space<vmem>>, vector<8x12xf32>,
    %754 = vector.extract_strided_slice %751 {offsets = [0, 1], sizes = [8, 12], strides = [1, 1]} : vector<8x16xf32> to vector<8x12xf32>
    %c168_807 = arith.constant 168 : index
    %c0_808 = arith.constant 0 : index
    %755 = vector.load %arg5[%c168_807, %c0_808] : memref<200x12xf32, #tpu.memory_space<vmem>>, vector<8x12xf32>
    tpu.vector_store %arg5[%c168_807, %c0_808], %754 {strides = array<i32>} : memref<200x12xf32, #tpu.memory_space<vmem>>, vector<8x12xf32>,
    %756 = vector.extract_strided_slice %751 {offsets = [0, 2], sizes = [8, 12], strides = [1, 1]} : vector<8x16xf32> to vector<8x12xf32>
    %c176_809 = arith.constant 176 : index
    %c0_810 = arith.constant 0 : index
    %757 = vector.load %arg5[%c176_809, %c0_810] : memref<200x12xf32, #tpu.memory_space<vmem>>, vector<8x12xf32>
    tpu.vector_store %arg5[%c176_809, %c0_810], %756 {strides = array<i32>} : memref<200x12xf32, #tpu.memory_space<vmem>>, vector<8x12xf32>,
    %758 = vector.extract_strided_slice %751 {offsets = [0, 3], sizes = [8, 12], strides = [1, 1]} : vector<8x16xf32> to vector<8x12xf32>
    %c184_811 = arith.constant 184 : index
    %c0_812 = arith.constant 0 : index
    %759 = vector.load %arg5[%c184_811, %c0_812] : memref<200x12xf32, #tpu.memory_space<vmem>>, vector<8x12xf32>
    tpu.vector_store %arg5[%c184_811, %c0_812], %758 {strides = array<i32>} : memref<200x12xf32, #tpu.memory_space<vmem>>, vector<8x12xf32>,
    %760 = vector.extract_strided_slice %751 {offsets = [0, 4], sizes = [8, 12], strides = [1, 1]} : vector<8x16xf32> to vector<8x12xf32>
    %c192_813 = arith.constant 192 : index
    %c0_814 = arith.constant 0 : index
    %761 = vector.load %arg5[%c192_813, %c0_814] : memref<200x12xf32, #tpu.memory_space<vmem>>, vector<8x12xf32>
    tpu.vector_store %arg5[%c192_813, %c0_814], %760 {strides = array<i32>} : memref<200x12xf32, #tpu.memory_space<vmem>>, vector<8x12xf32>,
    %c0_815 = arith.constant 0 : index
    %c0_816 = arith.constant 0 : index
    %762 = vector.load %arg5[%c0_815, %c0_816] : memref<200x12xf32, #tpu.memory_space<vmem>>, vector<200x12xf32>
    %763 = arith.truncf %762 : vector<200x12xf32> to vector<200x12xbf16>
    %cst_817 = arith.constant dense<0.000000e+00> : vector<32x12xf32>
    %764 = tpu.matmul %0, %763, %cst_817 {dimension_numbers = #tpu.dot_dimension_numbers<[1], [0], [0], [1], [0, 0, 1, 1], [], []>} : vector<32x200xbf16>, vector<200x12xbf16>, vector<32x12xf32> -> vector<32x12xf32>
    %765 = vector.broadcast %1 : vector<32x1xf32> to vector<32x12xf32>
    %766 = arith.addf %764, %765 : vector<32x12xf32>
    %cst_818 = arith.constant 0.000000e+00 : f32
    %767 = vector.broadcast %cst_818 : f32 to vector<32x12xf32>
    %768 = arith.maximumf %766, %767 : vector<32x12xf32>
    %c0_819 = arith.constant 0 : index
    %c0_820 = arith.constant 0 : index
    %c10_821 = arith.constant 10 : index
    %c0_822 = arith.constant 0 : index
    %769 = vector.load %arg4[%c0_819, %c0_820, %c10_821, %c0_822] : memref<1x32x12x12xf32, #tpu.memory_space<vmem>>, vector<1x32x1x12xf32>
    %770 = vector.shape_cast %769 : vector<1x32x1x12xf32> to vector<32x12xf32>
    %771 = vector.shape_cast %768 : vector<32x12xf32> to vector<1x32x1x12xf32>
    tpu.vector_store %arg4[%c0_819, %c0_820, %c10_821, %c0_822], %771 {strides = array<i32>} : memref<1x32x12x12xf32, #tpu.memory_space<vmem>>, vector<1x32x1x12xf32>,
    %c0_823 = arith.constant 0 : index
    %c0_824 = arith.constant 0 : index
    %c11_825 = arith.constant 11 : index
    %c0_826 = arith.constant 0 : index
    %772 = vector.load %arg1[%c0_823, %c0_824, %c11_825, %c0_826] : memref<1x8x16x16xf32, #tpu.memory_space<vmem>>, vector<1x8x1x16xf32>
    %773 = vector.shape_cast %772 : vector<1x8x1x16xf32> to vector<8x16xf32>
    %774 = vector.extract_strided_slice %773 {offsets = [0, 0], sizes = [8, 12], strides = [1, 1]} : vector<8x16xf32> to vector<8x12xf32>
    %c0_827 = arith.constant 0 : index
    %c0_828 = arith.constant 0 : index
    %775 = vector.load %arg5[%c0_827, %c0_828] : memref<200x12xf32, #tpu.memory_space<vmem>>, vector<8x12xf32>
    tpu.vector_store %arg5[%c0_827, %c0_828], %774 {strides = array<i32>} : memref<200x12xf32, #tpu.memory_space<vmem>>, vector<8x12xf32>,
    %776 = vector.extract_strided_slice %773 {offsets = [0, 1], sizes = [8, 12], strides = [1, 1]} : vector<8x16xf32> to vector<8x12xf32>
    %c8_829 = arith.constant 8 : index
    %c0_830 = arith.constant 0 : index
    %777 = vector.load %arg5[%c8_829, %c0_830] : memref<200x12xf32, #tpu.memory_space<vmem>>, vector<8x12xf32>
    tpu.vector_store %arg5[%c8_829, %c0_830], %776 {strides = array<i32>} : memref<200x12xf32, #tpu.memory_space<vmem>>, vector<8x12xf32>,
    %778 = vector.extract_strided_slice %773 {offsets = [0, 2], sizes = [8, 12], strides = [1, 1]} : vector<8x16xf32> to vector<8x12xf32>
    %c16_831 = arith.constant 16 : index
    %c0_832 = arith.constant 0 : index
    %779 = vector.load %arg5[%c16_831, %c0_832] : memref<200x12xf32, #tpu.memory_space<vmem>>, vector<8x12xf32>
    tpu.vector_store %arg5[%c16_831, %c0_832], %778 {strides = array<i32>} : memref<200x12xf32, #tpu.memory_space<vmem>>, vector<8x12xf32>,
    %780 = vector.extract_strided_slice %773 {offsets = [0, 3], sizes = [8, 12], strides = [1, 1]} : vector<8x16xf32> to vector<8x12xf32>
    %c24_833 = arith.constant 24 : index
    %c0_834 = arith.constant 0 : index
    %781 = vector.load %arg5[%c24_833, %c0_834] : memref<200x12xf32, #tpu.memory_space<vmem>>, vector<8x12xf32>
    tpu.vector_store %arg5[%c24_833, %c0_834], %780 {strides = array<i32>} : memref<200x12xf32, #tpu.memory_space<vmem>>, vector<8x12xf32>,
    %782 = vector.extract_strided_slice %773 {offsets = [0, 4], sizes = [8, 12], strides = [1, 1]} : vector<8x16xf32> to vector<8x12xf32>
    %c32_835 = arith.constant 32 : index
    %c0_836 = arith.constant 0 : index
    %783 = vector.load %arg5[%c32_835, %c0_836] : memref<200x12xf32, #tpu.memory_space<vmem>>, vector<8x12xf32>
    tpu.vector_store %arg5[%c32_835, %c0_836], %782 {strides = array<i32>} : memref<200x12xf32, #tpu.memory_space<vmem>>, vector<8x12xf32>,
    %c0_837 = arith.constant 0 : index
    %c0_838 = arith.constant 0 : index
    %c12_839 = arith.constant 12 : index
    %c0_840 = arith.constant 0 : index
    %784 = vector.load %arg1[%c0_837, %c0_838, %c12_839, %c0_840] : memref<1x8x16x16xf32, #tpu.memory_space<vmem>>, vector<1x8x1x16xf32>
    %785 = vector.shape_cast %784 : vector<1x8x1x16xf32> to vector<8x16xf32>
    %786 = vector.extract_strided_slice %785 {offsets = [0, 0], sizes = [8, 12], strides = [1, 1]} : vector<8x16xf32> to vector<8x12xf32>
    %c40_841 = arith.constant 40 : index
    %c0_842 = arith.constant 0 : index
    %787 = vector.load %arg5[%c40_841, %c0_842] : memref<200x12xf32, #tpu.memory_space<vmem>>, vector<8x12xf32>
    tpu.vector_store %arg5[%c40_841, %c0_842], %786 {strides = array<i32>} : memref<200x12xf32, #tpu.memory_space<vmem>>, vector<8x12xf32>,
    %788 = vector.extract_strided_slice %785 {offsets = [0, 1], sizes = [8, 12], strides = [1, 1]} : vector<8x16xf32> to vector<8x12xf32>
    %c48_843 = arith.constant 48 : index
    %c0_844 = arith.constant 0 : index
    %789 = vector.load %arg5[%c48_843, %c0_844] : memref<200x12xf32, #tpu.memory_space<vmem>>, vector<8x12xf32>
    tpu.vector_store %arg5[%c48_843, %c0_844], %788 {strides = array<i32>} : memref<200x12xf32, #tpu.memory_space<vmem>>, vector<8x12xf32>,
    %790 = vector.extract_strided_slice %785 {offsets = [0, 2], sizes = [8, 12], strides = [1, 1]} : vector<8x16xf32> to vector<8x12xf32>
    %c56_845 = arith.constant 56 : index
    %c0_846 = arith.constant 0 : index
    %791 = vector.load %arg5[%c56_845, %c0_846] : memref<200x12xf32, #tpu.memory_space<vmem>>, vector<8x12xf32>
    tpu.vector_store %arg5[%c56_845, %c0_846], %790 {strides = array<i32>} : memref<200x12xf32, #tpu.memory_space<vmem>>, vector<8x12xf32>,
    %792 = vector.extract_strided_slice %785 {offsets = [0, 3], sizes = [8, 12], strides = [1, 1]} : vector<8x16xf32> to vector<8x12xf32>
    %c64_847 = arith.constant 64 : index
    %c0_848 = arith.constant 0 : index
    %793 = vector.load %arg5[%c64_847, %c0_848] : memref<200x12xf32, #tpu.memory_space<vmem>>, vector<8x12xf32>
    tpu.vector_store %arg5[%c64_847, %c0_848], %792 {strides = array<i32>} : memref<200x12xf32, #tpu.memory_space<vmem>>, vector<8x12xf32>,
    %794 = vector.extract_strided_slice %785 {offsets = [0, 4], sizes = [8, 12], strides = [1, 1]} : vector<8x16xf32> to vector<8x12xf32>
    %c72_849 = arith.constant 72 : index
    %c0_850 = arith.constant 0 : index
    %795 = vector.load %arg5[%c72_849, %c0_850] : memref<200x12xf32, #tpu.memory_space<vmem>>, vector<8x12xf32>
    tpu.vector_store %arg5[%c72_849, %c0_850], %794 {strides = array<i32>} : memref<200x12xf32, #tpu.memory_space<vmem>>, vector<8x12xf32>,
    %c0_851 = arith.constant 0 : index
    %c0_852 = arith.constant 0 : index
    %c13_853 = arith.constant 13 : index
    %c0_854 = arith.constant 0 : index
    %796 = vector.load %arg1[%c0_851, %c0_852, %c13_853, %c0_854] : memref<1x8x16x16xf32, #tpu.memory_space<vmem>>, vector<1x8x1x16xf32>
    %797 = vector.shape_cast %796 : vector<1x8x1x16xf32> to vector<8x16xf32>
    %798 = vector.extract_strided_slice %797 {offsets = [0, 0], sizes = [8, 12], strides = [1, 1]} : vector<8x16xf32> to vector<8x12xf32>
    %c80_855 = arith.constant 80 : index
    %c0_856 = arith.constant 0 : index
    %799 = vector.load %arg5[%c80_855, %c0_856] : memref<200x12xf32, #tpu.memory_space<vmem>>, vector<8x12xf32>
    tpu.vector_store %arg5[%c80_855, %c0_856], %798 {strides = array<i32>} : memref<200x12xf32, #tpu.memory_space<vmem>>, vector<8x12xf32>,
    %800 = vector.extract_strided_slice %797 {offsets = [0, 1], sizes = [8, 12], strides = [1, 1]} : vector<8x16xf32> to vector<8x12xf32>
    %c88_857 = arith.constant 88 : index
    %c0_858 = arith.constant 0 : index
    %801 = vector.load %arg5[%c88_857, %c0_858] : memref<200x12xf32, #tpu.memory_space<vmem>>, vector<8x12xf32>
    tpu.vector_store %arg5[%c88_857, %c0_858], %800 {strides = array<i32>} : memref<200x12xf32, #tpu.memory_space<vmem>>, vector<8x12xf32>,
    %802 = vector.extract_strided_slice %797 {offsets = [0, 2], sizes = [8, 12], strides = [1, 1]} : vector<8x16xf32> to vector<8x12xf32>
    %c96_859 = arith.constant 96 : index
    %c0_860 = arith.constant 0 : index
    %803 = vector.load %arg5[%c96_859, %c0_860] : memref<200x12xf32, #tpu.memory_space<vmem>>, vector<8x12xf32>
    tpu.vector_store %arg5[%c96_859, %c0_860], %802 {strides = array<i32>} : memref<200x12xf32, #tpu.memory_space<vmem>>, vector<8x12xf32>,
    %804 = vector.extract_strided_slice %797 {offsets = [0, 3], sizes = [8, 12], strides = [1, 1]} : vector<8x16xf32> to vector<8x12xf32>
    %c104_861 = arith.constant 104 : index
    %c0_862 = arith.constant 0 : index
    %805 = vector.load %arg5[%c104_861, %c0_862] : memref<200x12xf32, #tpu.memory_space<vmem>>, vector<8x12xf32>
    tpu.vector_store %arg5[%c104_861, %c0_862], %804 {strides = array<i32>} : memref<200x12xf32, #tpu.memory_space<vmem>>, vector<8x12xf32>,
    %806 = vector.extract_strided_slice %797 {offsets = [0, 4], sizes = [8, 12], strides = [1, 1]} : vector<8x16xf32> to vector<8x12xf32>
    %c112_863 = arith.constant 112 : index
    %c0_864 = arith.constant 0 : index
    %807 = vector.load %arg5[%c112_863, %c0_864] : memref<200x12xf32, #tpu.memory_space<vmem>>, vector<8x12xf32>
    tpu.vector_store %arg5[%c112_863, %c0_864], %806 {strides = array<i32>} : memref<200x12xf32, #tpu.memory_space<vmem>>, vector<8x12xf32>,
    %c0_865 = arith.constant 0 : index
    %c0_866 = arith.constant 0 : index
    %c14_867 = arith.constant 14 : index
    %c0_868 = arith.constant 0 : index
    %808 = vector.load %arg1[%c0_865, %c0_866, %c14_867, %c0_868] : memref<1x8x16x16xf32, #tpu.memory_space<vmem>>, vector<1x8x1x16xf32>
    %809 = vector.shape_cast %808 : vector<1x8x1x16xf32> to vector<8x16xf32>
    %810 = vector.extract_strided_slice %809 {offsets = [0, 0], sizes = [8, 12], strides = [1, 1]} : vector<8x16xf32> to vector<8x12xf32>
    %c120_869 = arith.constant 120 : index
    %c0_870 = arith.constant 0 : index
    %811 = vector.load %arg5[%c120_869, %c0_870] : memref<200x12xf32, #tpu.memory_space<vmem>>, vector<8x12xf32>
    tpu.vector_store %arg5[%c120_869, %c0_870], %810 {strides = array<i32>} : memref<200x12xf32, #tpu.memory_space<vmem>>, vector<8x12xf32>,
    %812 = vector.extract_strided_slice %809 {offsets = [0, 1], sizes = [8, 12], strides = [1, 1]} : vector<8x16xf32> to vector<8x12xf32>
    %c128_871 = arith.constant 128 : index
    %c0_872 = arith.constant 0 : index
    %813 = vector.load %arg5[%c128_871, %c0_872] : memref<200x12xf32, #tpu.memory_space<vmem>>, vector<8x12xf32>
    tpu.vector_store %arg5[%c128_871, %c0_872], %812 {strides = array<i32>} : memref<200x12xf32, #tpu.memory_space<vmem>>, vector<8x12xf32>,
    %814 = vector.extract_strided_slice %809 {offsets = [0, 2], sizes = [8, 12], strides = [1, 1]} : vector<8x16xf32> to vector<8x12xf32>
    %c136_873 = arith.constant 136 : index
    %c0_874 = arith.constant 0 : index
    %815 = vector.load %arg5[%c136_873, %c0_874] : memref<200x12xf32, #tpu.memory_space<vmem>>, vector<8x12xf32>
    tpu.vector_store %arg5[%c136_873, %c0_874], %814 {strides = array<i32>} : memref<200x12xf32, #tpu.memory_space<vmem>>, vector<8x12xf32>,
    %816 = vector.extract_strided_slice %809 {offsets = [0, 3], sizes = [8, 12], strides = [1, 1]} : vector<8x16xf32> to vector<8x12xf32>
    %c144_875 = arith.constant 144 : index
    %c0_876 = arith.constant 0 : index
    %817 = vector.load %arg5[%c144_875, %c0_876] : memref<200x12xf32, #tpu.memory_space<vmem>>, vector<8x12xf32>
    tpu.vector_store %arg5[%c144_875, %c0_876], %816 {strides = array<i32>} : memref<200x12xf32, #tpu.memory_space<vmem>>, vector<8x12xf32>,
    %818 = vector.extract_strided_slice %809 {offsets = [0, 4], sizes = [8, 12], strides = [1, 1]} : vector<8x16xf32> to vector<8x12xf32>
    %c152_877 = arith.constant 152 : index
    %c0_878 = arith.constant 0 : index
    %819 = vector.load %arg5[%c152_877, %c0_878] : memref<200x12xf32, #tpu.memory_space<vmem>>, vector<8x12xf32>
    tpu.vector_store %arg5[%c152_877, %c0_878], %818 {strides = array<i32>} : memref<200x12xf32, #tpu.memory_space<vmem>>, vector<8x12xf32>,
    %c0_879 = arith.constant 0 : index
    %c0_880 = arith.constant 0 : index
    %c15 = arith.constant 15 : index
    %c0_881 = arith.constant 0 : index
    %820 = vector.load %arg1[%c0_879, %c0_880, %c15, %c0_881] : memref<1x8x16x16xf32, #tpu.memory_space<vmem>>, vector<1x8x1x16xf32>
    %821 = vector.shape_cast %820 : vector<1x8x1x16xf32> to vector<8x16xf32>
    %822 = vector.extract_strided_slice %821 {offsets = [0, 0], sizes = [8, 12], strides = [1, 1]} : vector<8x16xf32> to vector<8x12xf32>
    %c160_882 = arith.constant 160 : index
    %c0_883 = arith.constant 0 : index
    %823 = vector.load %arg5[%c160_882, %c0_883] : memref<200x12xf32, #tpu.memory_space<vmem>>, vector<8x12xf32>
    tpu.vector_store %arg5[%c160_882, %c0_883], %822 {strides = array<i32>} : memref<200x12xf32, #tpu.memory_space<vmem>>, vector<8x12xf32>,
    %824 = vector.extract_strided_slice %821 {offsets = [0, 1], sizes = [8, 12], strides = [1, 1]} : vector<8x16xf32> to vector<8x12xf32>
    %c168_884 = arith.constant 168 : index
    %c0_885 = arith.constant 0 : index
    %825 = vector.load %arg5[%c168_884, %c0_885] : memref<200x12xf32, #tpu.memory_space<vmem>>, vector<8x12xf32>
    tpu.vector_store %arg5[%c168_884, %c0_885], %824 {strides = array<i32>} : memref<200x12xf32, #tpu.memory_space<vmem>>, vector<8x12xf32>,
    %826 = vector.extract_strided_slice %821 {offsets = [0, 2], sizes = [8, 12], strides = [1, 1]} : vector<8x16xf32> to vector<8x12xf32>
    %c176_886 = arith.constant 176 : index
    %c0_887 = arith.constant 0 : index
    %827 = vector.load %arg5[%c176_886, %c0_887] : memref<200x12xf32, #tpu.memory_space<vmem>>, vector<8x12xf32>
    tpu.vector_store %arg5[%c176_886, %c0_887], %826 {strides = array<i32>} : memref<200x12xf32, #tpu.memory_space<vmem>>, vector<8x12xf32>,
    %828 = vector.extract_strided_slice %821 {offsets = [0, 3], sizes = [8, 12], strides = [1, 1]} : vector<8x16xf32> to vector<8x12xf32>
    %c184_888 = arith.constant 184 : index
    %c0_889 = arith.constant 0 : index
    %829 = vector.load %arg5[%c184_888, %c0_889] : memref<200x12xf32, #tpu.memory_space<vmem>>, vector<8x12xf32>
    tpu.vector_store %arg5[%c184_888, %c0_889], %828 {strides = array<i32>} : memref<200x12xf32, #tpu.memory_space<vmem>>, vector<8x12xf32>,
    %830 = vector.extract_strided_slice %821 {offsets = [0, 4], sizes = [8, 12], strides = [1, 1]} : vector<8x16xf32> to vector<8x12xf32>
    %c192_890 = arith.constant 192 : index
    %c0_891 = arith.constant 0 : index
    %831 = vector.load %arg5[%c192_890, %c0_891] : memref<200x12xf32, #tpu.memory_space<vmem>>, vector<8x12xf32>
    tpu.vector_store %arg5[%c192_890, %c0_891], %830 {strides = array<i32>} : memref<200x12xf32, #tpu.memory_space<vmem>>, vector<8x12xf32>,
    %c0_892 = arith.constant 0 : index
    %c0_893 = arith.constant 0 : index
    %832 = vector.load %arg5[%c0_892, %c0_893] : memref<200x12xf32, #tpu.memory_space<vmem>>, vector<200x12xf32>
    %833 = arith.truncf %832 : vector<200x12xf32> to vector<200x12xbf16>
    %cst_894 = arith.constant dense<0.000000e+00> : vector<32x12xf32>
    %834 = tpu.matmul %0, %833, %cst_894 {dimension_numbers = #tpu.dot_dimension_numbers<[1], [0], [0], [1], [0, 0, 1, 1], [], []>} : vector<32x200xbf16>, vector<200x12xbf16>, vector<32x12xf32> -> vector<32x12xf32>
    %835 = vector.broadcast %1 : vector<32x1xf32> to vector<32x12xf32>
    %836 = arith.addf %834, %835 : vector<32x12xf32>
    %cst_895 = arith.constant 0.000000e+00 : f32
    %837 = vector.broadcast %cst_895 : f32 to vector<32x12xf32>
    %838 = arith.maximumf %836, %837 : vector<32x12xf32>
    %c0_896 = arith.constant 0 : index
    %c0_897 = arith.constant 0 : index
    %c11_898 = arith.constant 11 : index
    %c0_899 = arith.constant 0 : index
    %839 = vector.load %arg4[%c0_896, %c0_897, %c11_898, %c0_899] : memref<1x32x12x12xf32, #tpu.memory_space<vmem>>, vector<1x32x1x12xf32>
    %840 = vector.shape_cast %839 : vector<1x32x1x12xf32> to vector<32x12xf32>
    %841 = vector.shape_cast %838 : vector<32x12xf32> to vector<1x32x1x12xf32>
    tpu.vector_store %arg4[%c0_896, %c0_897, %c11_898, %c0_899], %841 {strides = array<i32>} : memref<1x32x12x12xf32, #tpu.memory_space<vmem>>, vector<1x32x1x12xf32>,
    return
  }
  func.func @transform_0(%arg0: i32) -> (i32, i32, i32, i32) {
    %c0_i32 = arith.constant 0 : i32
    %c0_i32_0 = arith.constant 0 : i32
    %c0_i32_1 = arith.constant 0 : i32
    %c0_i32_2 = arith.constant 0 : i32
    return %arg0, %c0_i32, %c0_i32_0, %c0_i32_1 : i32, i32, i32, i32
  }
  func.func @transform_1(%arg0: i32) -> (i32, i32) {
    %c0_i32 = arith.constant 0 : i32
    %c0_i32_0 = arith.constant 0 : i32
    %c0_i32_1 = arith.constant 0 : i32
    return %c0_i32, %c0_i32_0 : i32, i32
  }
  func.func @transform_2(%arg0: i32) -> (i32, i32) {
    %c0_i32 = arith.constant 0 : i32
    %c0_i32_0 = arith.constant 0 : i32
    %c0_i32_1 = arith.constant 0 : i32
    return %c0_i32, %c0_i32_0 : i32, i32
  }
  func.func @transform_3(%arg0: i32) -> (i32, i32, i32, i32) {
    %c0_i32 = arith.constant 0 : i32
    %c0_i32_0 = arith.constant 0 : i32
    %c0_i32_1 = arith.constant 0 : i32
    %c0_i32_2 = arith.constant 0 : i32
    return %arg0, %c0_i32, %c0_i32_0, %c0_i32_1 : i32, i32, i32, i32
  }
}

</mosaic_0001>

<llo_original>
// kernel: tpu_custom_call.1
$region0: #{tpu_custom_call.1}
  #allocation0 [shape = 'u32[]', space=smem, size = 0x4, offset = 0x4, fixed_abs, tag = 'smem constant byte address 0x4 - core index']
  #allocation1 [shape = 'u32[144,128]{1,0:T(1,128)}', space=vmem, size = 0x12000, scoped, tag = 'internal scratch']
  #allocation2 [shape = 'f32[200,12]{1,0:T(8,128)}', space=vmem, size = 0x19000, scoped, tag = 'scratch operand']
  %s0 = inlined_call_operand.hbm [shape: f32[2,8,16,16], index: 0, kind: input, shape index: {}]
  %s1 = inlined_call_operand.vmem [shape: bf16[32,200], index: 1, kind: input, shape index: {}]
  %s2 = inlined_call_operand.vmem [shape: f32[32,1], index: 2, kind: input, shape index: {}]
  %s3 = inlined_call_operand.vmem [shape: f32[2,32,12,12], index: 3, kind: output, shape index: {}]
  %s4 = sld [smem:[#allocation0]]
  $region49: #{tpu_custom_call.1} parent=0
    _
  %s6 = ssub.s32 1, %s4
  %s7 = scalar_select 0, %s6, %s4
  $region1: #{tpu_custom_call.1} parent=0
    #allocation3 [shape = 'u8[131072]{0}', space=vmem, size = 0x20000, scoped, tag = 'input window, operand 0']
    #allocation4 [shape = 's32[2]{0}', space=sflag, size = 0x8, scoped, tag = 'scoped memory for tpu_custom_call.1']
    %8 = vsyncpa [#allocation4], 0
    %s9 = scalar_lea.sflag [#allocation4], 1
    %10 = vsyncpa %s9, 0
    loop: start=0, step=1, limit=4
    $region2: #{tpu_custom_call.1} parent=1 // loop_pre_header
      _
    $region3: #{tpu_custom_call.1} parent=1 // loop_header
      %s12 = sphi 0, %s16
      %p13 = scmp.ge.s32.totalorder %s12, 4
      %s22 = sphi 0, %s24
      %s25 = sphi 0, %s22
      %s26 = sphi 0, %s25
      %s42 = sphi 0, %s26
      %s46 = sphi 0, %s46
      %s48 = sphi 0, %s46
      %s49 = sphi 0, %s48
      %s63 = sphi 0, %s49
      %s67 = sphi 0, %s67
      %s69 = sphi 0, %s67
      %s70 = sphi 0, %s69
      %s84 = sphi 0, %s70
      %s90 = sphi 0, %s92
      %s93 = sphi 0, %s90
      %s94 = sphi 0, %s93
      %s110 = sphi 0, %s94
    $region4: #{tpu_custom_call.1} parent=1 // loop_header_branch
      %15 = sbr.rel (%p13) target = $region8
    $region5: #{tpu_custom_call.1} parent=1 // loop_body
      %s17 = ssub.s32 %s12, 1
      %s18 = ssub.s32 %s12, 2
      %s19 = sadd.s32 %s12, 1
      %s20 = ssub.s32 %s12, %s19
      %p21 = scmp.eq.s32.totalorder %s20, 0
      %s23 = sadd.s32 %s22, 1
      %s24 = scalar_select %p21, %s22, %s23
      %p27 = pneg %p21
      %p28 = scmp.eq.s32.totalorder %s12, 1
      %p29 = por %p27, %p28
      %p30 = scmp.ne.s32.totalorder %s22, %s25
      %p31 = scmp.eq.s32.totalorder %s12, 0
      %p32 = por %p30, %p31
      %p33 = scmp.ne.s32.totalorder %s22, %s25
      %p34 = scmp.eq.s32.totalorder %s17, 1
      %p35 = por %p33, %p34
      %p36 = scmp.ne.s32.totalorder %s25, %s26
      %p37 = scmp.eq.s32.totalorder %s17, 0
      %p38 = por %p36, %p37
      %p39 = scmp.ne.s32.totalorder %s25, %s26
      %p40 = scmp.eq.s32.totalorder %s18, 1
      %p41 = por %p39, %p40
      %p43 = scmp.ne.s32.totalorder %s26, %s42
      %p44 = scmp.eq.s32.totalorder %s18, 0
      %p45 = por %p43, %p44
      %s47 = sadd.s32 %s46, 1
      %p50 = scmp.eq.s32.totalorder %s12, 1
      %p51 = scmp.ne.s32.totalorder %s46, %s48
      %p52 = scmp.eq.s32.totalorder %s12, 0
      %p53 = por %p51, %p52
      %p54 = scmp.ne.s32.totalorder %s46, %s48
      %p55 = scmp.eq.s32.totalorder %s17, 1
      %p56 = por %p54, %p55
      %p57 = scmp.ne.s32.totalorder %s48, %s49
      %p58 = scmp.eq.s32.totalorder %s17, 0
      %p59 = por %p57, %p58
      %p60 = scmp.ne.s32.totalorder %s48, %s49
      %p61 = scmp.eq.s32.totalorder %s18, 1
      %p62 = por %p60, %p61
      %p64 = scmp.ne.s32.totalorder %s49, %s63
      %p65 = scmp.eq.s32.totalorder %s18, 0
      %p66 = por %p64, %p65
      %s68 = sadd.s32 %s67, 1
      %p71 = scmp.eq.s32.totalorder %s12, 1
      %p72 = scmp.ne.s32.totalorder %s67, %s69
      %p73 = scmp.eq.s32.totalorder %s12, 0
      %p74 = por %p72, %p73
      %p75 = scmp.ne.s32.totalorder %s67, %s69
      %p76 = scmp.eq.s32.totalorder %s17, 1
      %p77 = por %p75, %p76
      %p78 = scmp.ne.s32.totalorder %s69, %s70
      %p79 = scmp.eq.s32.totalorder %s17, 0
      %p80 = por %p78, %p79
      %p81 = scmp.ne.s32.totalorder %s69, %s70
      %p82 = scmp.eq.s32.totalorder %s18, 1
      %p83 = por %p81, %p82
      %p85 = scmp.ne.s32.totalorder %s70, %s84
      %p86 = scmp.eq.s32.totalorder %s18, 0
      %p87 = por %p85, %p86
      %s88 = ssub.s32 %s12, %s19
      %p89 = scmp.eq.s32.totalorder %s88, 0
      %s91 = sadd.s32 %s90, 1
      %s92 = scalar_select %p89, %s90, %s91
      %p95 = pneg %p89
      %p96 = scmp.eq.s32.totalorder %s12, 1
      %p97 = por %p95, %p96
      %p98 = scmp.ne.s32.totalorder %s90, %s93
      %p99 = scmp.eq.s32.totalorder %s12, 0
      %p100 = por %p98, %p99
      %p101 = scmp.ne.s32.totalorder %s90, %s93
      %p102 = scmp.eq.s32.totalorder %s17, 1
      %p103 = por %p101, %p102
      %p104 = scmp.ne.s32.totalorder %s93, %s94
      %p105 = scmp.eq.s32.totalorder %s17, 0
      %p106 = por %p104, %p105
      %p107 = scmp.ne.s32.totalorder %s93, %s94
      %p108 = scmp.eq.s32.totalorder %s18, 1
      %p109 = por %p107, %p108
      %p111 = scmp.ne.s32.totalorder %s94, %s110
      %p112 = scmp.eq.s32.totalorder %s18, 0
      %p113 = por %p111, %p112
      %p114 = scmp.le.s32.totalorder 1, %s12
      %p115 = scmp.lt.s32.totalorder %s12, 3
      %p116 = pnand %p114, %p115
      %p117 = pneg %p116
      // Predicated region
      $region9: #{tpu_custom_call.1} parent=5 // pred_check
        _
      $region10: #{tpu_custom_call.1} parent=5 // pred_check_branch
        %119 = sbr.rel (%p116) target = $region12
      $region11: #{tpu_custom_call.1} parent=5 // pred_region
        %s120 = ssub.s32 %s12, 1
        // Predicated region
        $region13: #{tpu_custom_call.1} parent=11 // pred_check
          %p121 = pneg %p59
        $region14: #{tpu_custom_call.1} parent=11 // pred_check_branch
          %123 = sbr.rel (%p121) target = $region16
        $region15: #{tpu_custom_call.1} parent=11 // pred_region
          _
        $region16: #{tpu_custom_call.1} parent=11 // pred_fallthru
          _
        // Predicated region
        $region17: #{tpu_custom_call.1} parent=11 // pred_check
          %p124 = pneg %p80
        $region18: #{tpu_custom_call.1} parent=11 // pred_check_branch
          %126 = sbr.rel (%p124) target = $region20
        $region19: #{tpu_custom_call.1} parent=11 // pred_region
          _
        $region20: #{tpu_custom_call.1} parent=11 // pred_fallthru
          _
      $region12: #{tpu_custom_call.1} parent=5 // pred_fallthru
        _
      %p127 = scmp.lt.s32.totalorder %s12, 2
      // Predicated region
      $region21: #{tpu_custom_call.1} parent=5 // pred_check
        %p128 = pneg %p127
      $region22: #{tpu_custom_call.1} parent=5 // pred_check_branch
        %130 = sbr.rel (%p128) target = $region24
      $region23: #{tpu_custom_call.1} parent=5 // pred_region
        // Predicated region
        $region25: #{tpu_custom_call.1} parent=23 // pred_check
          %p131 = pneg %p32
        $region26: #{tpu_custom_call.1} parent=23 // pred_check_branch
          %133 = sbr.rel (%p131) target = $region28
        $region27: #{tpu_custom_call.1} parent=23 // pred_region
          %s134 = sand.u32 %s22, 1
          %s135 = scalar_lea.sflag [#allocation4], %s134
          %s136 = sand.u32 %s22, 1
          %s137 = smul.addr %s136, 128
          %s138 = scalar_lea.vmem [#allocation3], %s137
          %s140 = ssub.s32 2048, 2048
          %141 = vsyncadd %s135, %s140
          %s142 = smul.addr %s12, 16
          %s143 = smul.addr %s142, 128
          %s144 = scalar_lea.hbm %s0, %s143
          %s145 = sshll.u32 %s138, 4
          %s146 = int_to_ptr.vmem [resolvable:$true] %s145
          %151 = dma.hbm_to_vmem [thread:$0]  %s144, 2048, %s146, %s135, 128, 128, 8
        $region28: #{tpu_custom_call.1} parent=23 // pred_fallthru
          _
      $region24: #{tpu_custom_call.1} parent=5 // pred_fallthru
        _
      %p152 = scmp.le.s32.totalorder 1, %s12
      %p153 = scmp.lt.s32.totalorder %s12, 3
      %p154 = pnand %p152, %p153
      %p155 = pneg %p154
      // Predicated region
      $region29: #{tpu_custom_call.1} parent=5 // pred_check
        _
      $region30: #{tpu_custom_call.1} parent=5 // pred_check_branch
        %157 = sbr.rel (%p154) target = $region32
      $region31: #{tpu_custom_call.1} parent=5 // pred_region
        %s158 = ssub.s32 %s12, 1
        %s159 = sand.u32 %s25, 1
        %s160 = scalar_lea.sflag [#allocation4], %s159
        %s161 = sand.u32 %s25, 1
        %s162 = smul.addr %s161, 128
        %s163 = scalar_lea.vmem [#allocation3], %s162
        // Predicated region
        $region33: #{tpu_custom_call.1} parent=31 // pred_check
          %p164 = pneg %p38
        $region34: #{tpu_custom_call.1} parent=31 // pred_check_branch
          %166 = sbr.rel (%p164) target = $region36
        $region35: #{tpu_custom_call.1} parent=31 // pred_region
          %167 = dma.done %s160, 2048
        $region36: #{tpu_custom_call.1} parent=31 // pred_fallthru
          _
        %s168 = sand.u32 %s25, 1
        %s169 = scalar_lea.sflag [#allocation4], %s168
        %s170 = sand.u32 %s25, 1
        %s171 = smul.addr %s170, 128
        %s172 = scalar_lea.vmem [#allocation3], %s171
        %p173 = pneg %p38
        %p174 = pneg %p35
        %p175 = pneg %p59
        %p176 = pneg %p56
        %p177 = pneg %p80
        %p178 = pneg %p77
        %p179 = pneg %p106
        %p180 = pneg %p103
        %p181 = scmp.lt.s32.totalorder %s17, 1
        %s182 = scalar_select %p181, %s17, 1
        %s183 = smul.addr %s182, 64
        %s184 = smul.addr %s183, 8
        %s185 = scalar_lea.vmem %s3, %s184
        %p186 = scmp.lt.s32.totalorder %s17, 1
        %s187 = scalar_select %p186, %s17, 1
        %s188 = smul.addr %s187, 64
        %s189 = smul.addr %s188, 8
        %s190 = scalar_lea.vmem %s3, %s189
        %v192 = vld [vmem:[%s1] sm:$0xff]
        %v193 = vld [vmem:[%s1 + $0x8] sm:$0xff]
        %v194 = vld [vmem:[%s1 + $0x10] sm:$0xff]
        %v195 = vld [vmem:[%s1 + $0x18] sm:$0xff]
        %v196 = vld [vmem:[%s2] sm:$0xff]
        %v197 = vld [vmem:[%s2 + $0x8] sm:$0xff]
        %v198 = vld [vmem:[%s2 + $0x10] sm:$0xff]
        %v199 = vld [vmem:[%s2 + $0x18] sm:$0xff]
        %v200 = vld [vmem:[%s163] sm:$0x1]
        %v201 = vld [vmem:[%s163 + $0x10] sm:$0x1]
        %v202 = vld [vmem:[%s163 + $0x20] sm:$0x1]
        %v203 = vld [vmem:[%s163 + $0x30] sm:$0x1]
        %v204 = vld [vmem:[%s163 + $0x40] sm:$0x1]
        %v205 = vld [vmem:[%s163 + $0x50] sm:$0x1]
        %v206 = vld [vmem:[%s163 + $0x60] sm:$0x1]
        %v207 = vld [vmem:[%s163 + $0x70] sm:$0x1]
        %v216 = vrot.slane %v201, 7
        %vm217 = vcmask 1041409
        %v218 = vsel %vm217, %v216, %v200
        %v219 = vrot.slane %v202, 6
        %vm220 = vcmask 1042434
        %v221 = vsel %vm220, %v219, %v218
        %v222 = vrot.slane %v203, 5
        %vm223 = vcmask 1043459
        %v224 = vsel %vm223, %v222, %v221
        %v225 = vrot.slane %v204, 4
        %vm226 = vcmask 1044484
        %v227 = vsel %vm226, %v225, %v224
        %v228 = vrot.slane %v205, 3
        %vm229 = vcmask 1045509
        %v230 = vsel %vm229, %v228, %v227
        %v231 = vrot.slane %v206, 2
        %vm232 = vcmask 1046534
        %v233 = vsel %vm232, %v231, %v230
        %v234 = vrot.slane %v207, 1
        %vm235 = vcmask 1047559
        %v236 = vsel %vm235, %v234, %v233
        %vm238 = vcmask 97280
        %239 = vst.msk [vmem:[#allocation2] sm:$0xff] %vm238, %v236
        %240 = vrot.lane.b32.xlu0 %v236, 127
        %v241 = vpop.permute.xlu0 %240
        %243 = vst.msk [vmem:[#allocation2 + $0x8] sm:$0xff] %vm238, %v241
        %244 = vrot.lane.b32.xlu0 %v236, 126
        %v245 = vpop.permute.xlu0 %244
        %247 = vst.msk [vmem:[#allocation2 + $0x10] sm:$0xff] %vm238, %v245
        %248 = vrot.lane.b32.xlu0 %v236, 125
        %v249 = vpop.permute.xlu0 %248
        %251 = vst.msk [vmem:[#allocation2 + $0x18] sm:$0xff] %vm238, %v249
        %252 = vrot.lane.b32.xlu0 %v236, 124
        %v253 = vpop.permute.xlu0 %252
        %255 = vst.msk [vmem:[#allocation2 + $0x20] sm:$0xff] %vm238, %v253
        %v256 = vld [vmem:[%s163 + $0x1] sm:$0x1]
        %v257 = vld [vmem:[%s163 + $0x11] sm:$0x1]
        %v258 = vld [vmem:[%s163 + $0x21] sm:$0x1]
        %v259 = vld [vmem:[%s163 + $0x31] sm:$0x1]
        %v260 = vld [vmem:[%s163 + $0x41] sm:$0x1]
        %v261 = vld [vmem:[%s163 + $0x51] sm:$0x1]
        %v262 = vld [vmem:[%s163 + $0x61] sm:$0x1]
        %v263 = vld [vmem:[%s163 + $0x71] sm:$0x1]
        %v272 = vrot.slane %v257, 7
        %v273 = vsel %vm217, %v272, %v256
        %v274 = vrot.slane %v258, 6
        %v275 = vsel %vm220, %v274, %v273
        %v276 = vrot.slane %v259, 5
        %v277 = vsel %vm223, %v276, %v275
        %v278 = vrot.slane %v260, 4
        %v279 = vsel %vm226, %v278, %v277
        %v280 = vrot.slane %v261, 3
        %v281 = vsel %vm229, %v280, %v279
        %v282 = vrot.slane %v262, 2
        %v283 = vsel %vm232, %v282, %v281
        %v284 = vrot.slane %v263, 1
        %v285 = vsel %vm235, %v284, %v283
        %287 = vst.msk [vmem:[#allocation2 + $0x28] sm:$0xff] %vm238, %v285
        %288 = vrot.lane.b32.xlu0 %v285, 127
        %v289 = vpop.permute.xlu0 %288
        %291 = vst.msk [vmem:[#allocation2 + $0x30] sm:$0xff] %vm238, %v289
        %292 = vrot.lane.b32.xlu0 %v285, 126
        %v293 = vpop.permute.xlu0 %292
        %295 = vst.msk [vmem:[#allocation2 + $0x38] sm:$0xff] %vm238, %v293
        %296 = vrot.lane.b32.xlu0 %v285, 125
        %v297 = vpop.permute.xlu0 %296
        %299 = vst.msk [vmem:[#allocation2 + $0x40] sm:$0xff] %vm238, %v297
        %300 = vrot.lane.b32.xlu0 %v285, 124
        %v301 = vpop.permute.xlu0 %300
        %303 = vst.msk [vmem:[#allocation2 + $0x48] sm:$0xff] %vm238, %v301
        %v304 = vld [vmem:[%s163 + $0x2] sm:$0x1]
        %v305 = vld [vmem:[%s163 + $0x12] sm:$0x1]
        %v306 = vld [vmem:[%s163 + $0x22] sm:$0x1]
        %v307 = vld [vmem:[%s163 + $0x32] sm:$0x1]
        %v308 = vld [vmem:[%s163 + $0x42] sm:$0x1]
        %v309 = vld [vmem:[%s163 + $0x52] sm:$0x1]
        %v310 = vld [vmem:[%s163 + $0x62] sm:$0x1]
        %v311 = vld [vmem:[%s163 + $0x72] sm:$0x1]
        %v320 = vrot.slane %v305, 7
        %v321 = vsel %vm217, %v320, %v304
        %v322 = vrot.slane %v306, 6
        %v323 = vsel %vm220, %v322, %v321
        %v324 = vrot.slane %v307, 5
        %v325 = vsel %vm223, %v324, %v323
        %v326 = vrot.slane %v308, 4
        %v327 = vsel %vm226, %v326, %v325
        %v328 = vrot.slane %v309, 3
        %v329 = vsel %vm229, %v328, %v327
        %v330 = vrot.slane %v310, 2
        %v331 = vsel %vm232, %v330, %v329
        %v332 = vrot.slane %v311, 1
        %v333 = vsel %vm235, %v332, %v331
        %335 = vst.msk [vmem:[#allocation2 + $0x50] sm:$0xff] %vm238, %v333
        %336 = vrot.lane.b32.xlu0 %v333, 127
        %v337 = vpop.permute.xlu0 %336
        %339 = vst.msk [vmem:[#allocation2 + $0x58] sm:$0xff] %vm238, %v337
        %340 = vrot.lane.b32.xlu0 %v333, 126
        %v341 = vpop.permute.xlu0 %340
        %343 = vst.msk [vmem:[#allocation2 + $0x60] sm:$0xff] %vm238, %v341
        %344 = vrot.lane.b32.xlu0 %v333, 125
        %v345 = vpop.permute.xlu0 %344
        %347 = vst.msk [vmem:[#allocation2 + $0x68] sm:$0xff] %vm238, %v345
        %348 = vrot.lane.b32.xlu0 %v333, 124
        %v349 = vpop.permute.xlu0 %348
        %351 = vst.msk [vmem:[#allocation2 + $0x70] sm:$0xff] %vm238, %v349
        %v352 = vld [vmem:[%s163 + $0x3] sm:$0x1]
        %v353 = vld [vmem:[%s163 + $0x13] sm:$0x1]
        %v354 = vld [vmem:[%s163 + $0x23] sm:$0x1]
        %v355 = vld [vmem:[%s163 + $0x33] sm:$0x1]
        %v356 = vld [vmem:[%s163 + $0x43] sm:$0x1]
        %v357 = vld [vmem:[%s163 + $0x53] sm:$0x1]
        %v358 = vld [vmem:[%s163 + $0x63] sm:$0x1]
        %v359 = vld [vmem:[%s163 + $0x73] sm:$0x1]
        %v368 = vrot.slane %v353, 7
        %v369 = vsel %vm217, %v368, %v352
        %v370 = vrot.slane %v354, 6
        %v371 = vsel %vm220, %v370, %v369
        %v372 = vrot.slane %v355, 5
        %v373 = vsel %vm223, %v372, %v371
        %v374 = vrot.slane %v356, 4
        %v375 = vsel %vm226, %v374, %v373
        %v376 = vrot.slane %v357, 3
        %v377 = vsel %vm229, %v376, %v375
        %v378 = vrot.slane %v358, 2
        %v379 = vsel %vm232, %v378, %v377
        %v380 = vrot.slane %v359, 1
        %v381 = vsel %vm235, %v380, %v379
        %383 = vst.msk [vmem:[#allocation2 + $0x78] sm:$0xff] %vm238, %v381
        %384 = vrot.lane.b32.xlu0 %v381, 127
        %v385 = vpop.permute.xlu0 %384
        %387 = vst.msk [vmem:[#allocation2 + $0x80] sm:$0xff] %vm238, %v385
        %388 = vrot.lane.b32.xlu0 %v381, 126
        %v389 = vpop.permute.xlu0 %388
        %391 = vst.msk [vmem:[#allocation2 + $0x88] sm:$0xff] %vm238, %v389
        %392 = vrot.lane.b32.xlu0 %v381, 125
        %v393 = vpop.permute.xlu0 %392
        %395 = vst.msk [vmem:[#allocation2 + $0x90] sm:$0xff] %vm238, %v393
        %396 = vrot.lane.b32.xlu0 %v381, 124
        %v397 = vpop.permute.xlu0 %396
        %399 = vst.msk [vmem:[#allocation2 + $0x98] sm:$0xff] %vm238, %v397
        %v400 = vld [vmem:[%s163 + $0x4] sm:$0x1]
        %v401 = vld [vmem:[%s163 + $0x14] sm:$0x1]
        %v402 = vld [vmem:[%s163 + $0x24] sm:$0x1]
        %v403 = vld [vmem:[%s163 + $0x34] sm:$0x1]
        %v404 = vld [vmem:[%s163 + $0x44] sm:$0x1]
        %v405 = vld [vmem:[%s163 + $0x54] sm:$0x1]
        %v406 = vld [vmem:[%s163 + $0x64] sm:$0x1]
        %v407 = vld [vmem:[%s163 + $0x74] sm:$0x1]
        %v416 = vrot.slane %v401, 7
        %v417 = vsel %vm217, %v416, %v400
        %v418 = vrot.slane %v402, 6
        %v419 = vsel %vm220, %v418, %v417
        %v420 = vrot.slane %v403, 5
        %v421 = vsel %vm223, %v420, %v419
        %v422 = vrot.slane %v404, 4
        %v423 = vsel %vm226, %v422, %v421
        %v424 = vrot.slane %v405, 3
        %v425 = vsel %vm229, %v424, %v423
        %v426 = vrot.slane %v406, 2
        %v427 = vsel %vm232, %v426, %v425
        %v428 = vrot.slane %v407, 1
        %v429 = vsel %vm235, %v428, %v427
        %431 = vst.msk [vmem:[#allocation2 + $0xa0] sm:$0xff] %vm238, %v429
        %432 = vrot.lane.b32.xlu0 %v429, 127
        %v433 = vpop.permute.xlu0 %432
        %435 = vst.msk [vmem:[#allocation2 + $0xa8] sm:$0xff] %vm238, %v433
        %436 = vrot.lane.b32.xlu0 %v429, 126
        %v437 = vpop.permute.xlu0 %436
        %439 = vst.msk [vmem:[#allocation2 + $0xb0] sm:$0xff] %vm238, %v437
        %440 = vrot.lane.b32.xlu0 %v429, 125
        %v441 = vpop.permute.xlu0 %440
        %443 = vst.msk [vmem:[#allocation2 + $0xb8] sm:$0xff] %vm238, %v441
        %444 = vrot.lane.b32.xlu0 %v429, 124
        %v445 = vpop.permute.xlu0 %444
        %447 = vst.msk [vmem:[#allocation2 + $0xc0] sm:$0xff] %vm238, %v445
        %v448 = vld [vmem:[#allocation2] sm:$0xff]
        %v449 = vld [vmem:[#allocation2 + $0x8] sm:$0xff]
        %v450 = vld [vmem:[#allocation2 + $0x10] sm:$0xff]
        %v451 = vld [vmem:[#allocation2 + $0x18] sm:$0xff]
        %v452 = vld [vmem:[#allocation2 + $0x20] sm:$0xff]
        %v453 = vld [vmem:[#allocation2 + $0x28] sm:$0xff]
        %v454 = vld [vmem:[#allocation2 + $0x30] sm:$0xff]
        %v455 = vld [vmem:[#allocation2 + $0x38] sm:$0xff]
        %v456 = vld [vmem:[#allocation2 + $0x40] sm:$0xff]
        %v457 = vld [vmem:[#allocation2 + $0x48] sm:$0xff]
        %v458 = vld [vmem:[#allocation2 + $0x50] sm:$0xff]
        %v459 = vld [vmem:[#allocation2 + $0x58] sm:$0xff]
        %v460 = vld [vmem:[#allocation2 + $0x60] sm:$0xff]
        %v461 = vld [vmem:[#allocation2 + $0x68] sm:$0xff]
        %v462 = vld [vmem:[#allocation2 + $0x70] sm:$0xff]
        %v463 = vld [vmem:[#allocation2 + $0x78] sm:$0xff]
        %v464 = vld [vmem:[#allocation2 + $0x80] sm:$0xff]
        %v465 = vld [vmem:[#allocation2 + $0x88] sm:$0xff]
        %v466 = vld [vmem:[#allocation2 + $0x90] sm:$0xff]
        %v467 = vld [vmem:[#allocation2 + $0x98] sm:$0xff]
        %v468 = vld [vmem:[#allocation2 + $0xa0] sm:$0xff]
        %v469 = vld [vmem:[#allocation2 + $0xa8] sm:$0xff]
        %v470 = vld [vmem:[#allocation2 + $0xb0] sm:$0xff]
        %v471 = vld [vmem:[#allocation2 + $0xb8] sm:$0xff]
        %v472 = vld [vmem:[#allocation2 + $0xc0] sm:$0xff]
        %v473 = vpack.c.bf16 %v449, %v448
        %v474 = vpack.c.bf16 %v451, %v450
        %v475 = vpack.c.bf16 %v453, %v452
        %v476 = vpack.c.bf16 %v455, %v454
        %v477 = vpack.c.bf16 %v457, %v456
        %v478 = vpack.c.bf16 %v459, %v458
        %v479 = vpack.c.bf16 %v461, %v460
        %v480 = vpack.c.bf16 %v463, %v462
        %v481 = vpack.c.bf16 %v465, %v464
        %v482 = vpack.c.bf16 %v467, %v466
        %v483 = vpack.c.bf16 %v469, %v468
        %v484 = vpack.c.bf16 %v471, %v470
        %v485 = vpack.c.bf16 %v472, %v472
        %487 = vset.pattern.permute.xlu0 0
        %488 = vperm.xlu0 %487, %v196
        %v489 = vpop.permute.xlu0 %488
        %492 = vset.pattern.permute.xlu0 0
        %493 = vperm.xlu0 %492, %v197
        %v494 = vpop.permute.xlu0 %493
        %497 = vset.pattern.permute.xlu0 0
        %498 = vperm.xlu0 %497, %v198
        %v499 = vpop.permute.xlu0 %498
        %502 = vset.pattern.permute.xlu0 0
        %503 = vperm.xlu0 %502, %v199
        %v504 = vpop.permute.xlu0 %503
        %v510 = vunpack.c.l.b16 %v192
        %v511 = vunpack.c.h.b16 %v192
        %v512 = vunpack.c.l.b16 %v193
        %v513 = vunpack.c.h.b16 %v193
        %v514 = vunpack.c.l.b16 %v194
        %v515 = vunpack.c.h.b16 %v194
        %v516 = vunpack.c.l.b16 %v195
        %v517 = vunpack.c.h.b16 %v195
        %v518 = vpack.c.b16 %v512, %v510
        %v519 = vpack.c.b16 %v513, %v511
        %v520 = vpack.c.b16 %v516, %v514
        %v521 = vpack.c.b16 %v517, %v515
        %vm524 = vcmask 588800
        %v526 = vsel %vm524, %v519, 0
        %v529 = vsel %vm524, %v521, 0
        %vm531 = vcmask 1043456
        %v533 = vsel %vm531, %v485, 0
        %535 = vmatprep.subr.bf16.mxu0 0
        %536 = vmatpush1.bf16.msra.mxu0 %v473
        %537 = vmatprep.subr.bf16.mxu0 0
        %538 = vmatpush1.bf16.msra.mxu0 %v474
        %539 = vmatprep.subr.bf16.mxu0 0
        %540 = vmatpush1.bf16.msra.mxu0 %v475
        %541 = vmatprep.subr.bf16.mxu0 0
        %542 = vmatpush1.bf16.msra.mxu0 %v476
        %543 = vmatprep.subr.bf16.mxu0 0
        %544 = vmatpush1.bf16.msra.mxu0 %v477
        %545 = vmatprep.subr.bf16.mxu0 0
        %546 = vmatpush1.bf16.msra.mxu0 %v478
        %547 = vmatprep.subr.bf16.mxu0 0
        %548 = vmatpush1.bf16.msra.mxu0 %v479
        %549 = vmatprep.subr.bf16.mxu0 0
        %550 = vmatpush1.bf16.msra.mxu0 %v480
        %551 = vmatprep.subr.bf16.mxu0 0
        %552 = vmatpush1.bf16.msra.mxu0 %v481
        %553 = vmatprep.subr.bf16.mxu0 0
        %554 = vmatpush1.bf16.msra.mxu0 %v482
        %555 = vmatprep.subr.bf16.mxu0 0
        %556 = vmatpush1.bf16.msra.mxu0 %v483
        %557 = vmatprep.subr.bf16.mxu0 0
        %558 = vmatpush1.bf16.msra.mxu0 %v484
        %559 = vmatprep.subr.bf16.mxu0 0
        %560 = vmatpush1.bf16.msra.mxu0 %v533
        %561 = vmatprep.subr.bf16.mxu0 0
        %562 = vmatpush1.bf16.msra.mxu0 0
        %563 = vmatprep.subr.bf16.mxu0 0
        %564 = vmatpush1.bf16.msra.mxu0 0
        %565 = vmatprep.subr.bf16.mxu0 0
        %566 = vmatpush1.bf16.msra.mxu0 0
        %567 = vmatprep.mubr.bf16.mxu0 %v526
        %568 = vmatmul.mubr.bf16.gmra.mrb[0].mxu0 %v518
        %v569 = vpop.f32.mrb[0].mxu0
        %v570 = vadd.f32 %v489, %v569
        %v571 = vpop.f32.mrb[0].mxu0
        %v572 = vpop.f32.mrb[0].mxu0
        %v573 = vadd.f32 %v494, %v572
        %v574 = vpop.f32.mrb[0].mxu0
        %575 = vmatprep.mubr.bf16.mxu0 %v529
        %576 = vmatmul.mubr.bf16.gmra.mrb[0].mxu0 %v520
        %v577 = vpop.f32.mrb[0].mxu0
        %v578 = vadd.f32 %v499, %v577
        %v579 = vpop.f32.mrb[0].mxu0
        %v580 = vpop.f32.mrb[0].mxu0
        %v581 = vadd.f32 %v504, %v580
        %v582 = vpop.f32.mrb[0].mxu0
        %583 = vdwg.mxu0
        %v584 = vmax.f32 %v570, 0.0
        %v585 = vmax.f32 %v573, 0.0
        %v586 = vmax.f32 %v578, 0.0
        %v587 = vmax.f32 %v581, 0.0
        %v592 = vcombine.high %v584, %v584
        %v594 = vunpack.c.l.s4 1966171168
        %v595 = vunpack.c.0.s8 %v594
        %v596 = vlaneseq
        %v597 = vshrl.u32 %v596, 7
        %v598 = vsub.s32 %v595, %v597
        %v599 = vrot.slane %v584, %v598
        %v601 = vunpack.c.l.s4 1966171168
        %v602 = vunpack.c.0.s8 %v601
        %v603 = vlaneseq
        %v604 = vshrl.u32 %v603, 7
        %v605 = vsub.s32 %v602, %v604
        %v606 = vrot.slane %v592, %v605
        %v607 = vcombine.high %v599, %v599
        %v608 = vcombine.high %v606, %v606
        %v610 = vunpack.c.l.s4 1966171168
        %v611 = vunpack.c.0.s8 %v610
        %v612 = vlaneseq
        %v613 = vshrl.u32 %v612, 7
        %v614 = vsub.s32 %v611, %v613
        %v615 = vrot.slane %v599, %v614
        %v617 = vunpack.c.l.s4 1966171168
        %v618 = vunpack.c.0.s8 %v617
        %v619 = vlaneseq
        %v620 = vshrl.u32 %v619, 7
        %v621 = vsub.s32 %v618, %v620
        %v622 = vrot.slane %v606, %v621
        %v624 = vunpack.c.l.s4 1966171168
        %v625 = vunpack.c.0.s8 %v624
        %v626 = vlaneseq
        %v627 = vshrl.u32 %v626, 7
        %v628 = vsub.s32 %v625, %v627
        %v629 = vrot.slane %v607, %v628
        %v631 = vunpack.c.l.s4 1966171168
        %v632 = vunpack.c.0.s8 %v631
        %v633 = vlaneseq
        %v634 = vshrl.u32 %v633, 7
        %v635 = vsub.s32 %v632, %v634
        %v636 = vrot.slane %v608, %v635
        %v637 = vcombine.high %v615, %v615
        %v638 = vcombine.high %v622, %v622
        %v639 = vcombine.high %v629, %v629
        %v640 = vcombine.high %v636, %v636
        %v641 = vcombine.high %v585, %v585
        %v643 = vunpack.c.l.s4 1966171168
        %v644 = vunpack.c.0.s8 %v643
        %v645 = vlaneseq
        %v646 = vshrl.u32 %v645, 7
        %v647 = vsub.s32 %v644, %v646
        %v648 = vrot.slane %v585, %v647
        %v650 = vunpack.c.l.s4 1966171168
        %v651 = vunpack.c.0.s8 %v650
        %v652 = vlaneseq
        %v653 = vshrl.u32 %v652, 7
        %v654 = vsub.s32 %v651, %v653
        %v655 = vrot.slane %v641, %v654
        %v656 = vcombine.high %v648, %v648
        %v657 = vcombine.high %v655, %v655
        %v659 = vunpack.c.l.s4 1966171168
        %v660 = vunpack.c.0.s8 %v659
        %v661 = vlaneseq
        %v662 = vshrl.u32 %v661, 7
        %v663 = vsub.s32 %v660, %v662
        %v664 = vrot.slane %v648, %v663
        %v666 = vunpack.c.l.s4 1966171168
        %v667 = vunpack.c.0.s8 %v666
        %v668 = vlaneseq
        %v669 = vshrl.u32 %v668, 7
        %v670 = vsub.s32 %v667, %v669
        %v671 = vrot.slane %v655, %v670
        %v673 = vunpack.c.l.s4 1966171168
        %v674 = vunpack.c.0.s8 %v673
        %v675 = vlaneseq
        %v676 = vshrl.u32 %v675, 7
        %v677 = vsub.s32 %v674, %v676
        %v678 = vrot.slane %v656, %v677
        %v680 = vunpack.c.l.s4 1966171168
        %v681 = vunpack.c.0.s8 %v680
        %v682 = vlaneseq
        %v683 = vshrl.u32 %v682, 7
        %v684 = vsub.s32 %v681, %v683
        %v685 = vrot.slane %v657, %v684
        %v686 = vcombine.high %v664, %v664
        %v687 = vcombine.high %v671, %v671
        %v688 = vcombine.high %v678, %v678
        %v689 = vcombine.high %v685, %v685
        %v690 = vcombine.high %v586, %v586
        %v692 = vunpack.c.l.s4 1966171168
        %v693 = vunpack.c.0.s8 %v692
        %v694 = vlaneseq
        %v695 = vshrl.u32 %v694, 7
        %v696 = vsub.s32 %v693, %v695
        %v697 = vrot.slane %v586, %v696
        %v699 = vunpack.c.l.s4 1966171168
        %v700 = vunpack.c.0.s8 %v699
        %v701 = vlaneseq
        %v702 = vshrl.u32 %v701, 7
        %v703 = vsub.s32 %v700, %v702
        %v704 = vrot.slane %v690, %v703
        %v705 = vcombine.high %v697, %v697
        %v706 = vcombine.high %v704, %v704
        %v708 = vunpack.c.l.s4 1966171168
        %v709 = vunpack.c.0.s8 %v708
        %v710 = vlaneseq
        %v711 = vshrl.u32 %v710, 7
        %v712 = vsub.s32 %v709, %v711
        %v713 = vrot.slane %v697, %v712
        %v715 = vunpack.c.l.s4 1966171168
        %v716 = vunpack.c.0.s8 %v715
        %v717 = vlaneseq
        %v718 = vshrl.u32 %v717, 7
        %v719 = vsub.s32 %v716, %v718
        %v720 = vrot.slane %v704, %v719
        %v722 = vunpack.c.l.s4 1966171168
        %v723 = vunpack.c.0.s8 %v722
        %v724 = vlaneseq
        %v725 = vshrl.u32 %v724, 7
        %v726 = vsub.s32 %v723, %v725
        %v727 = vrot.slane %v705, %v726
        %v729 = vunpack.c.l.s4 1966171168
        %v730 = vunpack.c.0.s8 %v729
        %v731 = vlaneseq
        %v732 = vshrl.u32 %v731, 7
        %v733 = vsub.s32 %v730, %v732
        %v734 = vrot.slane %v706, %v733
        %v735 = vcombine.high %v713, %v713
        %v736 = vcombine.high %v720, %v720
        %v737 = vcombine.high %v727, %v727
        %v738 = vcombine.high %v734, %v734
        %v739 = vcombine.high %v587, %v587
        %v741 = vunpack.c.l.s4 1966171168
        %v742 = vunpack.c.0.s8 %v741
        %v743 = vlaneseq
        %v744 = vshrl.u32 %v743, 7
        %v745 = vsub.s32 %v742, %v744
        %v746 = vrot.slane %v587, %v745
        %v748 = vunpack.c.l.s4 1966171168
        %v749 = vunpack.c.0.s8 %v748
        %v750 = vlaneseq
        %v751 = vshrl.u32 %v750, 7
        %v752 = vsub.s32 %v749, %v751
        %v753 = vrot.slane %v739, %v752
        %v754 = vcombine.high %v746, %v746
        %v755 = vcombine.high %v753, %v753
        %v757 = vunpack.c.l.s4 1966171168
        %v758 = vunpack.c.0.s8 %v757
        %v759 = vlaneseq
        %v760 = vshrl.u32 %v759, 7
        %v761 = vsub.s32 %v758, %v760
        %v762 = vrot.slane %v746, %v761
        %v764 = vunpack.c.l.s4 1966171168
        %v765 = vunpack.c.0.s8 %v764
        %v766 = vlaneseq
        %v767 = vshrl.u32 %v766, 7
        %v768 = vsub.s32 %v765, %v767
        %v769 = vrot.slane %v753, %v768
        %v771 = vunpack.c.l.s4 1966171168
        %v772 = vunpack.c.0.s8 %v771
        %v773 = vlaneseq
        %v774 = vshrl.u32 %v773, 7
        %v775 = vsub.s32 %v772, %v774
        %v776 = vrot.slane %v754, %v775
        %v778 = vunpack.c.l.s4 1966171168
        %v779 = vunpack.c.0.s8 %v778
        %v780 = vlaneseq
        %v781 = vshrl.u32 %v780, 7
        %v782 = vsub.s32 %v779, %v781
        %v783 = vrot.slane %v755, %v782
        %v784 = vcombine.high %v762, %v762
        %v785 = vcombine.high %v769, %v769
        %v786 = vcombine.high %v776, %v776
        %v787 = vcombine.high %v783, %v783
        %vm820 = vcmask 90112
        %821 = vst.msk [vmem:[%s190] sm:$0x1] %vm820, %v615
        %822 = vst.msk [vmem:[%s190 + $0x10] sm:$0x1] %vm820, %v629
        %823 = vst.msk [vmem:[%s190 + $0x20] sm:$0x1] %vm820, %v637
        %824 = vst.msk [vmem:[%s190 + $0x30] sm:$0x1] %vm820, %v639
        %825 = vst.msk [vmem:[%s190 + $0x40] sm:$0x1] %vm820, %v622
        %826 = vst.msk [vmem:[%s190 + $0x50] sm:$0x1] %vm820, %v636
        %827 = vst.msk [vmem:[%s190 + $0x60] sm:$0x1] %vm820, %v638
        %828 = vst.msk [vmem:[%s190 + $0x70] sm:$0x1] %vm820, %v640
        %829 = vst.msk [vmem:[%s190 + $0x80] sm:$0x1] %vm820, %v664
        %830 = vst.msk [vmem:[%s190 + $0x90] sm:$0x1] %vm820, %v678
        %831 = vst.msk [vmem:[%s190 + $0xa0] sm:$0x1] %vm820, %v686
        %832 = vst.msk [vmem:[%s190 + $0xb0] sm:$0x1] %vm820, %v688
        %833 = vst.msk [vmem:[%s190 + $0xc0] sm:$0x1] %vm820, %v671
        %834 = vst.msk [vmem:[%s190 + $0xd0] sm:$0x1] %vm820, %v685
        %835 = vst.msk [vmem:[%s190 + $0xe0] sm:$0x1] %vm820, %v687
        %836 = vst.msk [vmem:[%s190 + $0xf0] sm:$0x1] %vm820, %v689
        %837 = vst.msk [vmem:[%s190 + $0x100] sm:$0x1] %vm820, %v713
        %838 = vst.msk [vmem:[%s190 + $0x110] sm:$0x1] %vm820, %v727
        %839 = vst.msk [vmem:[%s190 + $0x120] sm:$0x1] %vm820, %v735
        %840 = vst.msk [vmem:[%s190 + $0x130] sm:$0x1] %vm820, %v737
        %841 = vst.msk [vmem:[%s190 + $0x140] sm:$0x1] %vm820, %v720
        %842 = vst.msk [vmem:[%s190 + $0x150] sm:$0x1] %vm820, %v734
        %843 = vst.msk [vmem:[%s190 + $0x160] sm:$0x1] %vm820, %v736
        %844 = vst.msk [vmem:[%s190 + $0x170] sm:$0x1] %vm820, %v738
        %845 = vst.msk [vmem:[%s190 + $0x180] sm:$0x1] %vm820, %v762
        %846 = vst.msk [vmem:[%s190 + $0x190] sm:$0x1] %vm820, %v776
        %847 = vst.msk [vmem:[%s190 + $0x1a0] sm:$0x1] %vm820, %v784
        %848 = vst.msk [vmem:[%s190 + $0x1b0] sm:$0x1] %vm820, %v786
        %849 = vst.msk [vmem:[%s190 + $0x1c0] sm:$0x1] %vm820, %v769
        %850 = vst.msk [vmem:[%s190 + $0x1d0] sm:$0x1] %vm820, %v783
        %851 = vst.msk [vmem:[%s190 + $0x1e0] sm:$0x1] %vm820, %v785
        %852 = vst.msk [vmem:[%s190 + $0x1f0] sm:$0x1] %vm820, %v787
        %v853 = vld [vmem:[%s163 + $0x1] sm:$0x1]
        %v854 = vld [vmem:[%s163 + $0x11] sm:$0x1]
        %v855 = vld [vmem:[%s163 + $0x21] sm:$0x1]
        %v856 = vld [vmem:[%s163 + $0x31] sm:$0x1]
        %v857 = vld [vmem:[%s163 + $0x41] sm:$0x1]
        %v858 = vld [vmem:[%s163 + $0x51] sm:$0x1]
        %v859 = vld [vmem:[%s163 + $0x61] sm:$0x1]
        %v860 = vld [vmem:[%s163 + $0x71] sm:$0x1]
        %v869 = vrot.slane %v854, 7
        %v870 = vsel %vm217, %v869, %v853
        %v871 = vrot.slane %v855, 6
        %v872 = vsel %vm220, %v871, %v870
        %v873 = vrot.slane %v856, 5
        %v874 = vsel %vm223, %v873, %v872
        %v875 = vrot.slane %v857, 4
        %v876 = vsel %vm226, %v875, %v874
        %v877 = vrot.slane %v858, 3
        %v878 = vsel %vm229, %v877, %v876
        %v879 = vrot.slane %v859, 2
        %v880 = vsel %vm232, %v879, %v878
        %v881 = vrot.slane %v860, 1
        %v882 = vsel %vm235, %v881, %v880
        %884 = vst.msk [vmem:[#allocation2] sm:$0xff] %vm238, %v882
        %885 = vrot.lane.b32.xlu0 %v882, 127
        %v886 = vpop.permute.xlu0 %885
        %888 = vst.msk [vmem:[#allocation2 + $0x8] sm:$0xff] %vm238, %v886
        %889 = vrot.lane.b32.xlu0 %v882, 126
        %v890 = vpop.permute.xlu0 %889
        %892 = vst.msk [vmem:[#allocation2 + $0x10] sm:$0xff] %vm238, %v890
        %893 = vrot.lane.b32.xlu0 %v882, 125
        %v894 = vpop.permute.xlu0 %893
        %896 = vst.msk [vmem:[#allocation2 + $0x18] sm:$0xff] %vm238, %v894
        %897 = vrot.lane.b32.xlu0 %v882, 124
        %v898 = vpop.permute.xlu0 %897
        %900 = vst.msk [vmem:[#allocation2 + $0x20] sm:$0xff] %vm238, %v898
        %v901 = vld [vmem:[%s163 + $0x2] sm:$0x1]
        %v902 = vld [vmem:[%s163 + $0x12] sm:$0x1]
        %v903 = vld [vmem:[%s163 + $0x22] sm:$0x1]
        %v904 = vld [vmem:[%s163 + $0x32] sm:$0x1]
        %v905 = vld [vmem:[%s163 + $0x42] sm:$0x1]
        %v906 = vld [vmem:[%s163 + $0x52] sm:$0x1]
        %v907 = vld [vmem:[%s163 + $0x62] sm:$0x1]
        %v908 = vld [vmem:[%s163 + $0x72] sm:$0x1]
        %v917 = vrot.slane %v902, 7
        %v918 = vsel %vm217, %v917, %v901
        %v919 = vrot.slane %v903, 6
        %v920 = vsel %vm220, %v919, %v918
        %v921 = vrot.slane %v904, 5
        %v922 = vsel %vm223, %v921, %v920
        %v923 = vrot.slane %v905, 4
        %v924 = vsel %vm226, %v923, %v922
        %v925 = vrot.slane %v906, 3
        %v926 = vsel %vm229, %v925, %v924
        %v927 = vrot.slane %v907, 2
        %v928 = vsel %vm232, %v927, %v926
        %v929 = vrot.slane %v908, 1
        %v930 = vsel %vm235, %v929, %v928
        %932 = vst.msk [vmem:[#allocation2 + $0x28] sm:$0xff] %vm238, %v930
        %933 = vrot.lane.b32.xlu0 %v930, 127
        %v934 = vpop.permute.xlu0 %933
        %936 = vst.msk [vmem:[#allocation2 + $0x30] sm:$0xff] %vm238, %v934
        %937 = vrot.lane.b32.xlu0 %v930, 126
        %v938 = vpop.permute.xlu0 %937
        %940 = vst.msk [vmem:[#allocation2 + $0x38] sm:$0xff] %vm238, %v938
        %941 = vrot.lane.b32.xlu0 %v930, 125
        %v942 = vpop.permute.xlu0 %941
        %944 = vst.msk [vmem:[#allocation2 + $0x40] sm:$0xff] %vm238, %v942
        %945 = vrot.lane.b32.xlu0 %v930, 124
        %v946 = vpop.permute.xlu0 %945
        %948 = vst.msk [vmem:[#allocation2 + $0x48] sm:$0xff] %vm238, %v946
        %v949 = vld [vmem:[%s163 + $0x3] sm:$0x1]
        %v950 = vld [vmem:[%s163 + $0x13] sm:$0x1]
        %v951 = vld [vmem:[%s163 + $0x23] sm:$0x1]
        %v952 = vld [vmem:[%s163 + $0x33] sm:$0x1]
        %v953 = vld [vmem:[%s163 + $0x43] sm:$0x1]
        %v954 = vld [vmem:[%s163 + $0x53] sm:$0x1]
        %v955 = vld [vmem:[%s163 + $0x63] sm:$0x1]
        %v956 = vld [vmem:[%s163 + $0x73] sm:$0x1]
        %v965 = vrot.slane %v950, 7
        %v966 = vsel %vm217, %v965, %v949
        %v967 = vrot.slane %v951, 6
        %v968 = vsel %vm220, %v967, %v966
        %v969 = vrot.slane %v952, 5
        %v970 = vsel %vm223, %v969, %v968
        %v971 = vrot.slane %v953, 4
        %v972 = vsel %vm226, %v971, %v970
        %v973 = vrot.slane %v954, 3
        %v974 = vsel %vm229, %v973, %v972
        %v975 = vrot.slane %v955, 2
        %v976 = vsel %vm232, %v975, %v974
        %v977 = vrot.slane %v956, 1
        %v978 = vsel %vm235, %v977, %v976
        %980 = vst.msk [vmem:[#allocation2 + $0x50] sm:$0xff] %vm238, %v978
        %981 = vrot.lane.b32.xlu0 %v978, 127
        %v982 = vpop.permute.xlu0 %981
        %984 = vst.msk [vmem:[#allocation2 + $0x58] sm:$0xff] %vm238, %v982
        %985 = vrot.lane.b32.xlu0 %v978, 126
        %v986 = vpop.permute.xlu0 %985
        %988 = vst.msk [vmem:[#allocation2 + $0x60] sm:$0xff] %vm238, %v986
        %989 = vrot.lane.b32.xlu0 %v978, 125
        %v990 = vpop.permute.xlu0 %989
        %992 = vst.msk [vmem:[#allocation2 + $0x68] sm:$0xff] %vm238, %v990
        %993 = vrot.lane.b32.xlu0 %v978, 124
        %v994 = vpop.permute.xlu0 %993
        %996 = vst.msk [vmem:[#allocation2 + $0x70] sm:$0xff] %vm238, %v994
        %v997 = vld [vmem:[%s163 + $0x4] sm:$0x1]
        %v998 = vld [vmem:[%s163 + $0x14] sm:$0x1]
        %v999 = vld [vmem:[%s163 + $0x24] sm:$0x1]
        %v1000 = vld [vmem:[%s163 + $0x34] sm:$0x1]
        %v1001 = vld [vmem:[%s163 + $0x44] sm:$0x1]
        %v1002 = vld [vmem:[%s163 + $0x54] sm:$0x1]
        %v1003 = vld [vmem:[%s163 + $0x64] sm:$0x1]
        %v1004 = vld [vmem:[%s163 + $0x74] sm:$0x1]
        %v1013 = vrot.slane %v998, 7
        %v1014 = vsel %vm217, %v1013, %v997
        %v1015 = vrot.slane %v999, 6
        %v1016 = vsel %vm220, %v1015, %v1014
        %v1017 = vrot.slane %v1000, 5
        %v1018 = vsel %vm223, %v1017, %v1016
        %v1019 = vrot.slane %v1001, 4
        %v1020 = vsel %vm226, %v1019, %v1018
        %v1021 = vrot.slane %v1002, 3
        %v1022 = vsel %vm229, %v1021, %v1020
        %v1023 = vrot.slane %v1003, 2
        %v1024 = vsel %vm232, %v1023, %v1022
        %v1025 = vrot.slane %v1004, 1
        %v1026 = vsel %vm235, %v1025, %v1024
        %1028 = vst.msk [vmem:[#allocation2 + $0x78] sm:$0xff] %vm238, %v1026
        %1029 = vrot.lane.b32.xlu0 %v1026, 127
        %v1030 = vpop.permute.xlu0 %1029
        %1032 = vst.msk [vmem:[#allocation2 + $0x80] sm:$0xff] %vm238, %v1030
        %1033 = vrot.lane.b32.xlu0 %v1026, 126
        %v1034 = vpop.permute.xlu0 %1033
        %1036 = vst.msk [vmem:[#allocation2 + $0x88] sm:$0xff] %vm238, %v1034
        %1037 = vrot.lane.b32.xlu0 %v1026, 125
        %v1038 = vpop.permute.xlu0 %1037
        %1040 = vst.msk [vmem:[#allocation2 + $0x90] sm:$0xff] %vm238, %v1038
        %1041 = vrot.lane.b32.xlu0 %v1026, 124
        %v1042 = vpop.permute.xlu0 %1041
        %1044 = vst.msk [vmem:[#allocation2 + $0x98] sm:$0xff] %vm238, %v1042
        %v1045 = vld [vmem:[%s163 + $0x5] sm:$0x1]
        %v1046 = vld [vmem:[%s163 + $0x15] sm:$0x1]
        %v1047 = vld [vmem:[%s163 + $0x25] sm:$0x1]
        %v1048 = vld [vmem:[%s163 + $0x35] sm:$0x1]
        %v1049 = vld [vmem:[%s163 + $0x45] sm:$0x1]
        %v1050 = vld [vmem:[%s163 + $0x55] sm:$0x1]
        %v1051 = vld [vmem:[%s163 + $0x65] sm:$0x1]
        %v1052 = vld [vmem:[%s163 + $0x75] sm:$0x1]
        %v1061 = vrot.slane %v1046, 7
        %v1062 = vsel %vm217, %v1061, %v1045
        %v1063 = vrot.slane %v1047, 6
        %v1064 = vsel %vm220, %v1063, %v1062
        %v1065 = vrot.slane %v1048, 5
        %v1066 = vsel %vm223, %v1065, %v1064
        %v1067 = vrot.slane %v1049, 4
        %v1068 = vsel %vm226, %v1067, %v1066
        %v1069 = vrot.slane %v1050, 3
        %v1070 = vsel %vm229, %v1069, %v1068
        %v1071 = vrot.slane %v1051, 2
        %v1072 = vsel %vm232, %v1071, %v1070
        %v1073 = vrot.slane %v1052, 1
        %v1074 = vsel %vm235, %v1073, %v1072
        %1076 = vst.msk [vmem:[#allocation2 + $0xa0] sm:$0xff] %vm238, %v1074
        %1077 = vrot.lane.b32.xlu0 %v1074, 127
        %v1078 = vpop.permute.xlu0 %1077
        %1080 = vst.msk [vmem:[#allocation2 + $0xa8] sm:$0xff] %vm238, %v1078
        %1081 = vrot.lane.b32.xlu0 %v1074, 126
        %v1082 = vpop.permute.xlu0 %1081
        %1084 = vst.msk [vmem:[#allocation2 + $0xb0] sm:$0xff] %vm238, %v1082
        %1085 = vrot.lane.b32.xlu0 %v1074, 125
        %v1086 = vpop.permute.xlu0 %1085
        %1088 = vst.msk [vmem:[#allocation2 + $0xb8] sm:$0xff] %vm238, %v1086
        %1089 = vrot.lane.b32.xlu0 %v1074, 124
        %v1090 = vpop.permute.xlu0 %1089
        %1092 = vst.msk [vmem:[#allocation2 + $0xc0] sm:$0xff] %vm238, %v1090
        %v1093 = vld [vmem:[#allocation2] sm:$0xff]
        %v1094 = vld [vmem:[#allocation2 + $0x8] sm:$0xff]
        %v1095 = vld [vmem:[#allocation2 + $0x10] sm:$0xff]
        %v1096 = vld [vmem:[#allocation2 + $0x18] sm:$0xff]
        %v1097 = vld [vmem:[#allocation2 + $0x20] sm:$0xff]
        %v1098 = vld [vmem:[#allocation2 + $0x28] sm:$0xff]
        %v1099 = vld [vmem:[#allocation2 + $0x30] sm:$0xff]
        %v1100 = vld [vmem:[#allocation2 + $0x38] sm:$0xff]
        %v1101 = vld [vmem:[#allocation2 + $0x40] sm:$0xff]
        %v1102 = vld [vmem:[#allocation2 + $0x48] sm:$0xff]
        %v1103 = vld [vmem:[#allocation2 + $0x50] sm:$0xff]
        %v1104 = vld [vmem:[#allocation2 + $0x58] sm:$0xff]
        %v1105 = vld [vmem:[#allocation2 + $0x60] sm:$0xff]
        %v1106 = vld [vmem:[#allocation2 + $0x68] sm:$0xff]
        %v1107 = vld [vmem:[#allocation2 + $0x70] sm:$0xff]
        %v1108 = vld [vmem:[#allocation2 + $0x78] sm:$0xff]
        %v1109 = vld [vmem:[#allocation2 + $0x80] sm:$0xff]
        %v1110 = vld [vmem:[#allocation2 + $0x88] sm:$0xff]
        %v1111 = vld [vmem:[#allocation2 + $0x90] sm:$0xff]
        %v1112 = vld [vmem:[#allocation2 + $0x98] sm:$0xff]
        %v1113 = vld [vmem:[#allocation2 + $0xa0] sm:$0xff]
        %v1114 = vld [vmem:[#allocation2 + $0xa8] sm:$0xff]
        %v1115 = vld [vmem:[#allocation2 + $0xb0] sm:$0xff]
        %v1116 = vld [vmem:[#allocation2 + $0xb8] sm:$0xff]
        %v1117 = vld [vmem:[#allocation2 + $0xc0] sm:$0xff]
        %v1118 = vpack.c.bf16 %v1094, %v1093
        %v1119 = vpack.c.bf16 %v1096, %v1095
        %v1120 = vpack.c.bf16 %v1098, %v1097
        %v1121 = vpack.c.bf16 %v1100, %v1099
        %v1122 = vpack.c.bf16 %v1102, %v1101
        %v1123 = vpack.c.bf16 %v1104, %v1103
        %v1124 = vpack.c.bf16 %v1106, %v1105
        %v1125 = vpack.c.bf16 %v1108, %v1107
        %v1126 = vpack.c.bf16 %v1110, %v1109
        %v1127 = vpack.c.bf16 %v1112, %v1111
        %v1128 = vpack.c.bf16 %v1114, %v1113
        %v1129 = vpack.c.bf16 %v1116, %v1115
        %v1130 = vpack.c.bf16 %v1117, %v1117
        %v1132 = vsel %vm531, %v1130, 0
        %1134 = vmatprep.subr.bf16.mxu0 0
        %1135 = vmatpush1.bf16.msra.mxu0 %v1118
        %1136 = vmatprep.subr.bf16.mxu0 0
        %1137 = vmatpush1.bf16.msra.mxu0 %v1119
        %1138 = vmatprep.subr.bf16.mxu0 0
        %1139 = vmatpush1.bf16.msra.mxu0 %v1120
        %1140 = vmatprep.subr.bf16.mxu0 0
        %1141 = vmatpush1.bf16.msra.mxu0 %v1121
        %1142 = vmatprep.subr.bf16.mxu0 0
        %1143 = vmatpush1.bf16.msra.mxu0 %v1122
        %1144 = vmatprep.subr.bf16.mxu0 0
        %1145 = vmatpush1.bf16.msra.mxu0 %v1123
        %1146 = vmatprep.subr.bf16.mxu0 0
        %1147 = vmatpush1.bf16.msra.mxu0 %v1124
        %1148 = vmatprep.subr.bf16.mxu0 0
        %1149 = vmatpush1.bf16.msra.mxu0 %v1125
        %1150 = vmatprep.subr.bf16.mxu0 0
        %1151 = vmatpush1.bf16.msra.mxu0 %v1126
        %1152 = vmatprep.subr.bf16.mxu0 0
        %1153 = vmatpush1.bf16.msra.mxu0 %v1127
        %1154 = vmatprep.subr.bf16.mxu0 0
        %1155 = vmatpush1.bf16.msra.mxu0 %v1128
        %1156 = vmatprep.subr.bf16.mxu0 0
        %1157 = vmatpush1.bf16.msra.mxu0 %v1129
        %1158 = vmatprep.subr.bf16.mxu0 0
        %1159 = vmatpush1.bf16.msra.mxu0 %v1132
        %1160 = vmatprep.subr.bf16.mxu0 0
        %1161 = vmatpush1.bf16.msra.mxu0 0
        %1162 = vmatprep.subr.bf16.mxu0 0
        %1163 = vmatpush1.bf16.msra.mxu0 0
        %1164 = vmatprep.subr.bf16.mxu0 0
        %1165 = vmatpush1.bf16.msra.mxu0 0
        %1166 = vmatprep.mubr.bf16.mxu0 %v526
        %1167 = vmatmul.mubr.bf16.gmra.mrb[0].mxu0 %v518
        %v1168 = vpop.f32.mrb[0].mxu0
        %v1169 = vadd.f32 %v489, %v1168
        %v1170 = vpop.f32.mrb[0].mxu0
        %v1171 = vpop.f32.mrb[0].mxu0
        %v1172 = vadd.f32 %v494, %v1171
        %v1173 = vpop.f32.mrb[0].mxu0
        %1174 = vmatprep.mubr.bf16.mxu0 %v529
        %1175 = vmatmul.mubr.bf16.gmra.mrb[0].mxu0 %v520
        %v1176 = vpop.f32.mrb[0].mxu0
        %v1177 = vadd.f32 %v499, %v1176
        %v1178 = vpop.f32.mrb[0].mxu0
        %v1179 = vpop.f32.mrb[0].mxu0
        %v1180 = vadd.f32 %v504, %v1179
        %v1181 = vpop.f32.mrb[0].mxu0
        %1182 = vdwg.mxu0
        %v1183 = vmax.f32 %v1169, 0.0
        %v1184 = vmax.f32 %v1172, 0.0
        %v1185 = vmax.f32 %v1177, 0.0
        %v1186 = vmax.f32 %v1180, 0.0
        %v1191 = vcombine.high %v1183, %v1183
        %v1193 = vunpack.c.l.s4 1966171168
        %v1194 = vunpack.c.0.s8 %v1193
        %v1195 = vlaneseq
        %v1196 = vshrl.u32 %v1195, 7
        %v1197 = vsub.s32 %v1194, %v1196
        %v1198 = vrot.slane %v1183, %v1197
        %v1200 = vunpack.c.l.s4 1966171168
        %v1201 = vunpack.c.0.s8 %v1200
        %v1202 = vlaneseq
        %v1203 = vshrl.u32 %v1202, 7
        %v1204 = vsub.s32 %v1201, %v1203
        %v1205 = vrot.slane %v1191, %v1204
        %v1206 = vcombine.high %v1198, %v1198
        %v1207 = vcombine.high %v1205, %v1205
        %v1209 = vunpack.c.l.s4 1966171168
        %v1210 = vunpack.c.0.s8 %v1209
        %v1211 = vlaneseq
        %v1212 = vshrl.u32 %v1211, 7
        %v1213 = vsub.s32 %v1210, %v1212
        %v1214 = vrot.slane %v1198, %v1213
        %v1216 = vunpack.c.l.s4 1966171168
        %v1217 = vunpack.c.0.s8 %v1216
        %v1218 = vlaneseq
        %v1219 = vshrl.u32 %v1218, 7
        %v1220 = vsub.s32 %v1217, %v1219
        %v1221 = vrot.slane %v1205, %v1220
        %v1223 = vunpack.c.l.s4 1966171168
        %v1224 = vunpack.c.0.s8 %v1223
        %v1225 = vlaneseq
        %v1226 = vshrl.u32 %v1225, 7
        %v1227 = vsub.s32 %v1224, %v1226
        %v1228 = vrot.slane %v1206, %v1227
        %v1230 = vunpack.c.l.s4 1966171168
        %v1231 = vunpack.c.0.s8 %v1230
        %v1232 = vlaneseq
        %v1233 = vshrl.u32 %v1232, 7
        %v1234 = vsub.s32 %v1231, %v1233
        %v1235 = vrot.slane %v1207, %v1234
        %v1236 = vcombine.high %v1214, %v1214
        %v1237 = vcombine.high %v1221, %v1221
        %v1238 = vcombine.high %v1228, %v1228
        %v1239 = vcombine.high %v1235, %v1235
        %v1240 = vcombine.high %v1184, %v1184
        %v1242 = vunpack.c.l.s4 1966171168
        %v1243 = vunpack.c.0.s8 %v1242
        %v1244 = vlaneseq
        %v1245 = vshrl.u32 %v1244, 7
        %v1246 = vsub.s32 %v1243, %v1245
        %v1247 = vrot.slane %v1184, %v1246
        %v1249 = vunpack.c.l.s4 1966171168
        %v1250 = vunpack.c.0.s8 %v1249
        %v1251 = vlaneseq
        %v1252 = vshrl.u32 %v1251, 7
        %v1253 = vsub.s32 %v1250, %v1252
        %v1254 = vrot.slane %v1240, %v1253
        %v1255 = vcombine.high %v1247, %v1247
        %v1256 = vcombine.high %v1254, %v1254
        %v1258 = vunpack.c.l.s4 1966171168
        %v1259 = vunpack.c.0.s8 %v1258
        %v1260 = vlaneseq
        %v1261 = vshrl.u32 %v1260, 7
        %v1262 = vsub.s32 %v1259, %v1261
        %v1263 = vrot.slane %v1247, %v1262
        %v1265 = vunpack.c.l.s4 1966171168
        %v1266 = vunpack.c.0.s8 %v1265
        %v1267 = vlaneseq
        %v1268 = vshrl.u32 %v1267, 7
        %v1269 = vsub.s32 %v1266, %v1268
        %v1270 = vrot.slane %v1254, %v1269
        %v1272 = vunpack.c.l.s4 1966171168
        %v1273 = vunpack.c.0.s8 %v1272
        %v1274 = vlaneseq
        %v1275 = vshrl.u32 %v1274, 7
        %v1276 = vsub.s32 %v1273, %v1275
        %v1277 = vrot.slane %v1255, %v1276
        %v1279 = vunpack.c.l.s4 1966171168
        %v1280 = vunpack.c.0.s8 %v1279
        %v1281 = vlaneseq
        %v1282 = vshrl.u32 %v1281, 7
        %v1283 = vsub.s32 %v1280, %v1282
        %v1284 = vrot.slane %v1256, %v1283
        %v1285 = vcombine.high %v1263, %v1263
        %v1286 = vcombine.high %v1270, %v1270
        %v1287 = vcombine.high %v1277, %v1277
        %v1288 = vcombine.high %v1284, %v1284
        %v1289 = vcombine.high %v1185, %v1185
        %v1291 = vunpack.c.l.s4 1966171168
        %v1292 = vunpack.c.0.s8 %v1291
        %v1293 = vlaneseq
        %v1294 = vshrl.u32 %v1293, 7
        %v1295 = vsub.s32 %v1292, %v1294
        %v1296 = vrot.slane %v1185, %v1295
        %v1298 = vunpack.c.l.s4 1966171168
        %v1299 = vunpack.c.0.s8 %v1298
        %v1300 = vlaneseq
        %v1301 = vshrl.u32 %v1300, 7
        %v1302 = vsub.s32 %v1299, %v1301
        %v1303 = vrot.slane %v1289, %v1302
        %v1304 = vcombine.high %v1296, %v1296
        %v1305 = vcombine.high %v1303, %v1303
        %v1307 = vunpack.c.l.s4 1966171168
        %v1308 = vunpack.c.0.s8 %v1307
        %v1309 = vlaneseq
        %v1310 = vshrl.u32 %v1309, 7
        %v1311 = vsub.s32 %v1308, %v1310
        %v1312 = vrot.slane %v1296, %v1311
        %v1314 = vunpack.c.l.s4 1966171168
        %v1315 = vunpack.c.0.s8 %v1314
        %v1316 = vlaneseq
        %v1317 = vshrl.u32 %v1316, 7
        %v1318 = vsub.s32 %v1315, %v1317
        %v1319 = vrot.slane %v1303, %v1318
        %v1321 = vunpack.c.l.s4 1966171168
        %v1322 = vunpack.c.0.s8 %v1321
        %v1323 = vlaneseq
        %v1324 = vshrl.u32 %v1323, 7
        %v1325 = vsub.s32 %v1322, %v1324
        %v1326 = vrot.slane %v1304, %v1325
        %v1328 = vunpack.c.l.s4 1966171168
        %v1329 = vunpack.c.0.s8 %v1328
        %v1330 = vlaneseq
        %v1331 = vshrl.u32 %v1330, 7
        %v1332 = vsub.s32 %v1329, %v1331
        %v1333 = vrot.slane %v1305, %v1332
        %v1334 = vcombine.high %v1312, %v1312
        %v1335 = vcombine.high %v1319, %v1319
        %v1336 = vcombine.high %v1326, %v1326
        %v1337 = vcombine.high %v1333, %v1333
        %v1338 = vcombine.high %v1186, %v1186
        %v1340 = vunpack.c.l.s4 1966171168
        %v1341 = vunpack.c.0.s8 %v1340
        %v1342 = vlaneseq
        %v1343 = vshrl.u32 %v1342, 7
        %v1344 = vsub.s32 %v1341, %v1343
        %v1345 = vrot.slane %v1186, %v1344
        %v1347 = vunpack.c.l.s4 1966171168
        %v1348 = vunpack.c.0.s8 %v1347
        %v1349 = vlaneseq
        %v1350 = vshrl.u32 %v1349, 7
        %v1351 = vsub.s32 %v1348, %v1350
        %v1352 = vrot.slane %v1338, %v1351
        %v1353 = vcombine.high %v1345, %v1345
        %v1354 = vcombine.high %v1352, %v1352
        %v1356 = vunpack.c.l.s4 1966171168
        %v1357 = vunpack.c.0.s8 %v1356
        %v1358 = vlaneseq
        %v1359 = vshrl.u32 %v1358, 7
        %v1360 = vsub.s32 %v1357, %v1359
        %v1361 = vrot.slane %v1345, %v1360
        %v1363 = vunpack.c.l.s4 1966171168
        %v1364 = vunpack.c.0.s8 %v1363
        %v1365 = vlaneseq
        %v1366 = vshrl.u32 %v1365, 7
        %v1367 = vsub.s32 %v1364, %v1366
        %v1368 = vrot.slane %v1352, %v1367
        %v1370 = vunpack.c.l.s4 1966171168
        %v1371 = vunpack.c.0.s8 %v1370
        %v1372 = vlaneseq
        %v1373 = vshrl.u32 %v1372, 7
        %v1374 = vsub.s32 %v1371, %v1373
        %v1375 = vrot.slane %v1353, %v1374
        %v1377 = vunpack.c.l.s4 1966171168
        %v1378 = vunpack.c.0.s8 %v1377
        %v1379 = vlaneseq
        %v1380 = vshrl.u32 %v1379, 7
        %v1381 = vsub.s32 %v1378, %v1380
        %v1382 = vrot.slane %v1354, %v1381
        %v1383 = vcombine.high %v1361, %v1361
        %v1384 = vcombine.high %v1368, %v1368
        %v1385 = vcombine.high %v1375, %v1375
        %v1386 = vcombine.high %v1382, %v1382
        %1419 = vst.msk [vmem:[%s190 + $0x1] sm:$0x1] %vm820, %v1214
        %1420 = vst.msk [vmem:[%s190 + $0x11] sm:$0x1] %vm820, %v1228
        %1421 = vst.msk [vmem:[%s190 + $0x21] sm:$0x1] %vm820, %v1236
        %1422 = vst.msk [vmem:[%s190 + $0x31] sm:$0x1] %vm820, %v1238
        %1423 = vst.msk [vmem:[%s190 + $0x41] sm:$0x1] %vm820, %v1221
        %1424 = vst.msk [vmem:[%s190 + $0x51] sm:$0x1] %vm820, %v1235
        %1425 = vst.msk [vmem:[%s190 + $0x61] sm:$0x1] %vm820, %v1237
        %1426 = vst.msk [vmem:[%s190 + $0x71] sm:$0x1] %vm820, %v1239
        %1427 = vst.msk [vmem:[%s190 + $0x81] sm:$0x1] %vm820, %v1263
        %1428 = vst.msk [vmem:[%s190 + $0x91] sm:$0x1] %vm820, %v1277
        %1429 = vst.msk [vmem:[%s190 + $0xa1] sm:$0x1] %vm820, %v1285
        %1430 = vst.msk [vmem:[%s190 + $0xb1] sm:$0x1] %vm820, %v1287
        %1431 = vst.msk [vmem:[%s190 + $0xc1] sm:$0x1] %vm820, %v1270
        %1432 = vst.msk [vmem:[%s190 + $0xd1] sm:$0x1] %vm820, %v1284
        %1433 = vst.msk [vmem:[%s190 + $0xe1] sm:$0x1] %vm820, %v1286
        %1434 = vst.msk [vmem:[%s190 + $0xf1] sm:$0x1] %vm820, %v1288
        %1435 = vst.msk [vmem:[%s190 + $0x101] sm:$0x1] %vm820, %v1312
        %1436 = vst.msk [vmem:[%s190 + $0x111] sm:$0x1] %vm820, %v1326
        %1437 = vst.msk [vmem:[%s190 + $0x121] sm:$0x1] %vm820, %v1334
        %1438 = vst.msk [vmem:[%s190 + $0x131] sm:$0x1] %vm820, %v1336
        %1439 = vst.msk [vmem:[%s190 + $0x141] sm:$0x1] %vm820, %v1319
        %1440 = vst.msk [vmem:[%s190 + $0x151] sm:$0x1] %vm820, %v1333
        %1441 = vst.msk [vmem:[%s190 + $0x161] sm:$0x1] %vm820, %v1335
        %1442 = vst.msk [vmem:[%s190 + $0x171] sm:$0x1] %vm820, %v1337
        %1443 = vst.msk [vmem:[%s190 + $0x181] sm:$0x1] %vm820, %v1361
        %1444 = vst.msk [vmem:[%s190 + $0x191] sm:$0x1] %vm820, %v1375
        %1445 = vst.msk [vmem:[%s190 + $0x1a1] sm:$0x1] %vm820, %v1383
        %1446 = vst.msk [vmem:[%s190 + $0x1b1] sm:$0x1] %vm820, %v1385
        %1447 = vst.msk [vmem:[%s190 + $0x1c1] sm:$0x1] %vm820, %v1368
        %1448 = vst.msk [vmem:[%s190 + $0x1d1] sm:$0x1] %vm820, %v1382
        %1449 = vst.msk [vmem:[%s190 + $0x1e1] sm:$0x1] %vm820, %v1384
        %1450 = vst.msk [vmem:[%s190 + $0x1f1] sm:$0x1] %vm820, %v1386
        %v1451 = vld [vmem:[%s163 + $0x2] sm:$0x1]
        %v1452 = vld [vmem:[%s163 + $0x12] sm:$0x1]
        %v1453 = vld [vmem:[%s163 + $0x22] sm:$0x1]
        %v1454 = vld [vmem:[%s163 + $0x32] sm:$0x1]
        %v1455 = vld [vmem:[%s163 + $0x42] sm:$0x1]
        %v1456 = vld [vmem:[%s163 + $0x52] sm:$0x1]
        %v1457 = vld [vmem:[%s163 + $0x62] sm:$0x1]
        %v1458 = vld [vmem:[%s163 + $0x72] sm:$0x1]
        %v1467 = vrot.slane %v1452, 7
        %v1468 = vsel %vm217, %v1467, %v1451
        %v1469 = vrot.slane %v1453, 6
        %v1470 = vsel %vm220, %v1469, %v1468
        %v1471 = vrot.slane %v1454, 5
        %v1472 = vsel %vm223, %v1471, %v1470
        %v1473 = vrot.slane %v1455, 4
        %v1474 = vsel %vm226, %v1473, %v1472
        %v1475 = vrot.slane %v1456, 3
        %v1476 = vsel %vm229, %v1475, %v1474
        %v1477 = vrot.slane %v1457, 2
        %v1478 = vsel %vm232, %v1477, %v1476
        %v1479 = vrot.slane %v1458, 1
        %v1480 = vsel %vm235, %v1479, %v1478
        %1482 = vst.msk [vmem:[#allocation2] sm:$0xff] %vm238, %v1480
        %1483 = vrot.lane.b32.xlu0 %v1480, 127
        %v1484 = vpop.permute.xlu0 %1483
        %1486 = vst.msk [vmem:[#allocation2 + $0x8] sm:$0xff] %vm238, %v1484
        %1487 = vrot.lane.b32.xlu0 %v1480, 126
        %v1488 = vpop.permute.xlu0 %1487
        %1490 = vst.msk [vmem:[#allocation2 + $0x10] sm:$0xff] %vm238, %v1488
        %1491 = vrot.lane.b32.xlu0 %v1480, 125
        %v1492 = vpop.permute.xlu0 %1491
        %1494 = vst.msk [vmem:[#allocation2 + $0x18] sm:$0xff] %vm238, %v1492
        %1495 = vrot.lane.b32.xlu0 %v1480, 124
        %v1496 = vpop.permute.xlu0 %1495
        %1498 = vst.msk [vmem:[#allocation2 + $0x20] sm:$0xff] %vm238, %v1496
        %v1499 = vld [vmem:[%s163 + $0x3] sm:$0x1]
        %v1500 = vld [vmem:[%s163 + $0x13] sm:$0x1]
        %v1501 = vld [vmem:[%s163 + $0x23] sm:$0x1]
        %v1502 = vld [vmem:[%s163 + $0x33] sm:$0x1]
        %v1503 = vld [vmem:[%s163 + $0x43] sm:$0x1]
        %v1504 = vld [vmem:[%s163 + $0x53] sm:$0x1]
        %v1505 = vld [vmem:[%s163 + $0x63] sm:$0x1]
        %v1506 = vld [vmem:[%s163 + $0x73] sm:$0x1]
        %v1515 = vrot.slane %v1500, 7
        %v1516 = vsel %vm217, %v1515, %v1499
        %v1517 = vrot.slane %v1501, 6
        %v1518 = vsel %vm220, %v1517, %v1516
        %v1519 = vrot.slane %v1502, 5
        %v1520 = vsel %vm223, %v1519, %v1518
        %v1521 = vrot.slane %v1503, 4
        %v1522 = vsel %vm226, %v1521, %v1520
        %v1523 = vrot.slane %v1504, 3
        %v1524 = vsel %vm229, %v1523, %v1522
        %v1525 = vrot.slane %v1505, 2
        %v1526 = vsel %vm232, %v1525, %v1524
        %v1527 = vrot.slane %v1506, 1
        %v1528 = vsel %vm235, %v1527, %v1526
        %1530 = vst.msk [vmem:[#allocation2 + $0x28] sm:$0xff] %vm238, %v1528
        %1531 = vrot.lane.b32.xlu0 %v1528, 127
        %v1532 = vpop.permute.xlu0 %1531
        %1534 = vst.msk [vmem:[#allocation2 + $0x30] sm:$0xff] %vm238, %v1532
        %1535 = vrot.lane.b32.xlu0 %v1528, 126
        %v1536 = vpop.permute.xlu0 %1535
        %1538 = vst.msk [vmem:[#allocation2 + $0x38] sm:$0xff] %vm238, %v1536
        %1539 = vrot.lane.b32.xlu0 %v1528, 125
        %v1540 = vpop.permute.xlu0 %1539
        %1542 = vst.msk [vmem:[#allocation2 + $0x40] sm:$0xff] %vm238, %v1540
        %1543 = vrot.lane.b32.xlu0 %v1528, 124
        %v1544 = vpop.permute.xlu0 %1543
        %1546 = vst.msk [vmem:[#allocation2 + $0x48] sm:$0xff] %vm238, %v1544
        %v1547 = vld [vmem:[%s163 + $0x4] sm:$0x1]
        %v1548 = vld [vmem:[%s163 + $0x14] sm:$0x1]
        %v1549 = vld [vmem:[%s163 + $0x24] sm:$0x1]
        %v1550 = vld [vmem:[%s163 + $0x34] sm:$0x1]
        %v1551 = vld [vmem:[%s163 + $0x44] sm:$0x1]
        %v1552 = vld [vmem:[%s163 + $0x54] sm:$0x1]
        %v1553 = vld [vmem:[%s163 + $0x64] sm:$0x1]
        %v1554 = vld [vmem:[%s163 + $0x74] sm:$0x1]
        %v1563 = vrot.slane %v1548, 7
        %v1564 = vsel %vm217, %v1563, %v1547
        %v1565 = vrot.slane %v1549, 6
        %v1566 = vsel %vm220, %v1565, %v1564
        %v1567 = vrot.slane %v1550, 5
        %v1568 = vsel %vm223, %v1567, %v1566
        %v1569 = vrot.slane %v1551, 4
        %v1570 = vsel %vm226, %v1569, %v1568
        %v1571 = vrot.slane %v1552, 3
        %v1572 = vsel %vm229, %v1571, %v1570
        %v1573 = vrot.slane %v1553, 2
        %v1574 = vsel %vm232, %v1573, %v1572
        %v1575 = vrot.slane %v1554, 1
        %v1576 = vsel %vm235, %v1575, %v1574
        %1578 = vst.msk [vmem:[#allocation2 + $0x50] sm:$0xff] %vm238, %v1576
        %1579 = vrot.lane.b32.xlu0 %v1576, 127
        %v1580 = vpop.permute.xlu0 %1579
        %1582 = vst.msk [vmem:[#allocation2 + $0x58] sm:$0xff] %vm238, %v1580
        %1583 = vrot.lane.b32.xlu0 %v1576, 126
        %v1584 = vpop.permute.xlu0 %1583
        %1586 = vst.msk [vmem:[#allocation2 + $0x60] sm:$0xff] %vm238, %v1584
        %1587 = vrot.lane.b32.xlu0 %v1576, 125
        %v1588 = vpop.permute.xlu0 %1587
        %1590 = vst.msk [vmem:[#allocation2 + $0x68] sm:$0xff] %vm238, %v1588
        %1591 = vrot.lane.b32.xlu0 %v1576, 124
        %v1592 = vpop.permute.xlu0 %1591
        %1594 = vst.msk [vmem:[#allocation2 + $0x70] sm:$0xff] %vm238, %v1592
        %v1595 = vld [vmem:[%s163 + $0x5] sm:$0x1]
        %v1596 = vld [vmem:[%s163 + $0x15] sm:$0x1]
        %v1597 = vld [vmem:[%s163 + $0x25] sm:$0x1]
        %v1598 = vld [vmem:[%s163 + $0x35] sm:$0x1]
        %v1599 = vld [vmem:[%s163 + $0x45] sm:$0x1]
        %v1600 = vld [vmem:[%s163 + $0x55] sm:$0x1]
        %v1601 = vld [vmem:[%s163 + $0x65] sm:$0x1]
        %v1602 = vld [vmem:[%s163 + $0x75] sm:$0x1]
        %v1611 = vrot.slane %v1596, 7
        %v1612 = vsel %vm217, %v1611, %v1595
        %v1613 = vrot.slane %v1597, 6
        %v1614 = vsel %vm220, %v1613, %v1612
        %v1615 = vrot.slane %v1598, 5
        %v1616 = vsel %vm223, %v1615, %v1614
        %v1617 = vrot.slane %v1599, 4
        %v1618 = vsel %vm226, %v1617, %v1616
        %v1619 = vrot.slane %v1600, 3
        %v1620 = vsel %vm229, %v1619, %v1618
        %v1621 = vrot.slane %v1601, 2
        %v1622 = vsel %vm232, %v1621, %v1620
        %v1623 = vrot.slane %v1602, 1
        %v1624 = vsel %vm235, %v1623, %v1622
        %1626 = vst.msk [vmem:[#allocation2 + $0x78] sm:$0xff] %vm238, %v1624
        %1627 = vrot.lane.b32.xlu0 %v1624, 127
        %v1628 = vpop.permute.xlu0 %1627
        %1630 = vst.msk [vmem:[#allocation2 + $0x80] sm:$0xff] %vm238, %v1628
        %1631 = vrot.lane.b32.xlu0 %v1624, 126
        %v1632 = vpop.permute.xlu0 %1631
        %1634 = vst.msk [vmem:[#allocation2 + $0x88] sm:$0xff] %vm238, %v1632
        %1635 = vrot.lane.b32.xlu0 %v1624, 125
        %v1636 = vpop.permute.xlu0 %1635
        %1638 = vst.msk [vmem:[#allocation2 + $0x90] sm:$0xff] %vm238, %v1636
        %1639 = vrot.lane.b32.xlu0 %v1624, 124
        %v1640 = vpop.permute.xlu0 %1639
        %1642 = vst.msk [vmem:[#allocation2 + $0x98] sm:$0xff] %vm238, %v1640
        %v1643 = vld [vmem:[%s163 + $0x6] sm:$0x1]
        %v1644 = vld [vmem:[%s163 + $0x16] sm:$0x1]
        %v1645 = vld [vmem:[%s163 + $0x26] sm:$0x1]
        %v1646 = vld [vmem:[%s163 + $0x36] sm:$0x1]
        %v1647 = vld [vmem:[%s163 + $0x46] sm:$0x1]
        %v1648 = vld [vmem:[%s163 + $0x56] sm:$0x1]
        %v1649 = vld [vmem:[%s163 + $0x66] sm:$0x1]
        %v1650 = vld [vmem:[%s163 + $0x76] sm:$0x1]
        %v1659 = vrot.slane %v1644, 7
        %v1660 = vsel %vm217, %v1659, %v1643
        %v1661 = vrot.slane %v1645, 6
        %v1662 = vsel %vm220, %v1661, %v1660
        %v1663 = vrot.slane %v1646, 5
        %v1664 = vsel %vm223, %v1663, %v1662
        %v1665 = vrot.slane %v1647, 4
        %v1666 = vsel %vm226, %v1665, %v1664
        %v1667 = vrot.slane %v1648, 3
        %v1668 = vsel %vm229, %v1667, %v1666
        %v1669 = vrot.slane %v1649, 2
        %v1670 = vsel %vm232, %v1669, %v1668
        %v1671 = vrot.slane %v1650, 1
        %v1672 = vsel %vm235, %v1671, %v1670
        %1674 = vst.msk [vmem:[#allocation2 + $0xa0] sm:$0xff] %vm238, %v1672
        %1675 = vrot.lane.b32.xlu0 %v1672, 127
        %v1676 = vpop.permute.xlu0 %1675
        %1678 = vst.msk [vmem:[#allocation2 + $0xa8] sm:$0xff] %vm238, %v1676
        %1679 = vrot.lane.b32.xlu0 %v1672, 126
        %v1680 = vpop.permute.xlu0 %1679
        %1682 = vst.msk [vmem:[#allocation2 + $0xb0] sm:$0xff] %vm238, %v1680
        %1683 = vrot.lane.b32.xlu0 %v1672, 125
        %v1684 = vpop.permute.xlu0 %1683
        %1686 = vst.msk [vmem:[#allocation2 + $0xb8] sm:$0xff] %vm238, %v1684
        %1687 = vrot.lane.b32.xlu0 %v1672, 124
        %v1688 = vpop.permute.xlu0 %1687
        %1690 = vst.msk [vmem:[#allocation2 + $0xc0] sm:$0xff] %vm238, %v1688
        %v1691 = vld [vmem:[#allocation2] sm:$0xff]
        %v1692 = vld [vmem:[#allocation2 + $0x8] sm:$0xff]
        %v1693 = vld [vmem:[#allocation2 + $0x10] sm:$0xff]
        %v1694 = vld [vmem:[#allocation2 + $0x18] sm:$0xff]
        %v1695 = vld [vmem:[#allocation2 + $0x20] sm:$0xff]
        %v1696 = vld [vmem:[#allocation2 + $0x28] sm:$0xff]
        %v1697 = vld [vmem:[#allocation2 + $0x30] sm:$0xff]
        %v1698 = vld [vmem:[#allocation2 + $0x38] sm:$0xff]
        %v1699 = vld [vmem:[#allocation2 + $0x40] sm:$0xff]
        %v1700 = vld [vmem:[#allocation2 + $0x48] sm:$0xff]
        %v1701 = vld [vmem:[#allocation2 + $0x50] sm:$0xff]
        %v1702 = vld [vmem:[#allocation2 + $0x58] sm:$0xff]
        %v1703 = vld [vmem:[#allocation2 + $0x60] sm:$0xff]
        %v1704 = vld [vmem:[#allocation2 + $0x68] sm:$0xff]
        %v1705 = vld [vmem:[#allocation2 + $0x70] sm:$0xff]
        %v1706 = vld [vmem:[#allocation2 + $0x78] sm:$0xff]
        %v1707 = vld [vmem:[#allocation2 + $0x80] sm:$0xff]
        %v1708 = vld [vmem:[#allocation2 + $0x88] sm:$0xff]
        %v1709 = vld [vmem:[#allocation2 + $0x90] sm:$0xff]
        %v1710 = vld [vmem:[#allocation2 + $0x98] sm:$0xff]
        %v1711 = vld [vmem:[#allocation2 + $0xa0] sm:$0xff]
        %v1712 = vld [vmem:[#allocation2 + $0xa8] sm:$0xff]
        %v1713 = vld [vmem:[#allocation2 + $0xb0] sm:$0xff]
        %v1714 = vld [vmem:[#allocation2 + $0xb8] sm:$0xff]
        %v1715 = vld [vmem:[#allocation2 + $0xc0] sm:$0xff]
        %v1716 = vpack.c.bf16 %v1692, %v1691
        %v1717 = vpack.c.bf16 %v1694, %v1693
        %v1718 = vpack.c.bf16 %v1696, %v1695
        %v1719 = vpack.c.bf16 %v1698, %v1697
        %v1720 = vpack.c.bf16 %v1700, %v1699
        %v1721 = vpack.c.bf16 %v1702, %v1701
        %v1722 = vpack.c.bf16 %v1704, %v1703
        %v1723 = vpack.c.bf16 %v1706, %v1705
        %v1724 = vpack.c.bf16 %v1708, %v1707
        %v1725 = vpack.c.bf16 %v1710, %v1709
        %v1726 = vpack.c.bf16 %v1712, %v1711
        %v1727 = vpack.c.bf16 %v1714, %v1713
        %v1728 = vpack.c.bf16 %v1715, %v1715
        %v1730 = vsel %vm531, %v1728, 0
        %1732 = vmatprep.subr.bf16.mxu0 0
        %1733 = vmatpush1.bf16.msra.mxu0 %v1716
        %1734 = vmatprep.subr.bf16.mxu0 0
        %1735 = vmatpush1.bf16.msra.mxu0 %v1717
        %1736 = vmatprep.subr.bf16.mxu0 0
        %1737 = vmatpush1.bf16.msra.mxu0 %v1718
        %1738 = vmatprep.subr.bf16.mxu0 0
        %1739 = vmatpush1.bf16.msra.mxu0 %v1719
        %1740 = vmatprep.subr.bf16.mxu0 0
        %1741 = vmatpush1.bf16.msra.mxu0 %v1720
        %1742 = vmatprep.subr.bf16.mxu0 0
        %1743 = vmatpush1.bf16.msra.mxu0 %v1721
        %1744 = vmatprep.subr.bf16.mxu0 0
        %1745 = vmatpush1.bf16.msra.mxu0 %v1722
        %1746 = vmatprep.subr.bf16.mxu0 0
        %1747 = vmatpush1.bf16.msra.mxu0 %v1723
        %1748 = vmatprep.subr.bf16.mxu0 0
        %1749 = vmatpush1.bf16.msra.mxu0 %v1724
        %1750 = vmatprep.subr.bf16.mxu0 0
        %1751 = vmatpush1.bf16.msra.mxu0 %v1725
        %1752 = vmatprep.subr.bf16.mxu0 0
        %1753 = vmatpush1.bf16.msra.mxu0 %v1726
        %1754 = vmatprep.subr.bf16.mxu0 0
        %1755 = vmatpush1.bf16.msra.mxu0 %v1727
        %1756 = vmatprep.subr.bf16.mxu0 0
        %1757 = vmatpush1.bf16.msra.mxu0 %v1730
        %1758 = vmatprep.subr.bf16.mxu0 0
        %1759 = vmatpush1.bf16.msra.mxu0 0
        %1760 = vmatprep.subr.bf16.mxu0 0
        %1761 = vmatpush1.bf16.msra.mxu0 0
        %1762 = vmatprep.subr.bf16.mxu0 0
        %1763 = vmatpush1.bf16.msra.mxu0 0
        %1764 = vmatprep.mubr.bf16.mxu0 %v526
        %1765 = vmatmul.mubr.bf16.gmra.mrb[0].mxu0 %v518
        %v1766 = vpop.f32.mrb[0].mxu0
        %v1767 = vadd.f32 %v489, %v1766
        %v1768 = vpop.f32.mrb[0].mxu0
        %v1769 = vpop.f32.mrb[0].mxu0
        %v1770 = vadd.f32 %v494, %v1769
        %v1771 = vpop.f32.mrb[0].mxu0
        %1772 = vmatprep.mubr.bf16.mxu0 %v529
        %1773 = vmatmul.mubr.bf16.gmra.mrb[0].mxu0 %v520
        %v1774 = vpop.f32.mrb[0].mxu0
        %v1775 = vadd.f32 %v499, %v1774
        %v1776 = vpop.f32.mrb[0].mxu0
        %v1777 = vpop.f32.mrb[0].mxu0
        %v1778 = vadd.f32 %v504, %v1777
        %v1779 = vpop.f32.mrb[0].mxu0
        %1780 = vdwg.mxu0
        %v1781 = vmax.f32 %v1767, 0.0
        %v1782 = vmax.f32 %v1770, 0.0
        %v1783 = vmax.f32 %v1775, 0.0
        %v1784 = vmax.f32 %v1778, 0.0
        %v1789 = vcombine.high %v1781, %v1781
        %v1791 = vunpack.c.l.s4 1966171168
        %v1792 = vunpack.c.0.s8 %v1791
        %v1793 = vlaneseq
        %v1794 = vshrl.u32 %v1793, 7
        %v1795 = vsub.s32 %v1792, %v1794
        %v1796 = vrot.slane %v1781, %v1795
        %v1798 = vunpack.c.l.s4 1966171168
        %v1799 = vunpack.c.0.s8 %v1798
        %v1800 = vlaneseq
        %v1801 = vshrl.u32 %v1800, 7
        %v1802 = vsub.s32 %v1799, %v1801
        %v1803 = vrot.slane %v1789, %v1802
        %v1804 = vcombine.high %v1796, %v1796
        %v1805 = vcombine.high %v1803, %v1803
        %v1807 = vunpack.c.l.s4 1966171168
        %v1808 = vunpack.c.0.s8 %v1807
        %v1809 = vlaneseq
        %v1810 = vshrl.u32 %v1809, 7
        %v1811 = vsub.s32 %v1808, %v1810
        %v1812 = vrot.slane %v1796, %v1811
        %v1814 = vunpack.c.l.s4 1966171168
        %v1815 = vunpack.c.0.s8 %v1814
        %v1816 = vlaneseq
        %v1817 = vshrl.u32 %v1816, 7
        %v1818 = vsub.s32 %v1815, %v1817
        %v1819 = vrot.slane %v1803, %v1818
        %v1821 = vunpack.c.l.s4 1966171168
        %v1822 = vunpack.c.0.s8 %v1821
        %v1823 = vlaneseq
        %v1824 = vshrl.u32 %v1823, 7
        %v1825 = vsub.s32 %v1822, %v1824
        %v1826 = vrot.slane %v1804, %v1825
        %v1828 = vunpack.c.l.s4 1966171168
        %v1829 = vunpack.c.0.s8 %v1828
        %v1830 = vlaneseq
        %v1831 = vshrl.u32 %v1830, 7
        %v1832 = vsub.s32 %v1829, %v1831
        %v1833 = vrot.slane %v1805, %v1832
        %v1834 = vcombine.high %v1812, %v1812
        %v1835 = vcombine.high %v1819, %v1819
        %v1836 = vcombine.high %v1826, %v1826
        %v1837 = vcombine.high %v1833, %v1833
        %v1838 = vcombine.high %v1782, %v1782
        %v1840 = vunpack.c.l.s4 1966171168
        %v1841 = vunpack.c.0.s8 %v1840
        %v1842 = vlaneseq
        %v1843 = vshrl.u32 %v1842, 7
        %v1844 = vsub.s32 %v1841, %v1843
        %v1845 = vrot.slane %v1782, %v1844
        %v1847 = vunpack.c.l.s4 1966171168
        %v1848 = vunpack.c.0.s8 %v1847
        %v1849 = vlaneseq
        %v1850 = vshrl.u32 %v1849, 7
        %v1851 = vsub.s32 %v1848, %v1850
        %v1852 = vrot.slane %v1838, %v1851
        %v1853 = vcombine.high %v1845, %v1845
        %v1854 = vcombine.high %v1852, %v1852
        %v1856 = vunpack.c.l.s4 1966171168
        %v1857 = vunpack.c.0.s8 %v1856
        %v1858 = vlaneseq
        %v1859 = vshrl.u32 %v1858, 7
        %v1860 = vsub.s32 %v1857, %v1859
        %v1861 = vrot.slane %v1845, %v1860
        %v1863 = vunpack.c.l.s4 1966171168
        %v1864 = vunpack.c.0.s8 %v1863
        %v1865 = vlaneseq
        %v1866 = vshrl.u32 %v1865, 7
        %v1867 = vsub.s32 %v1864, %v1866
        %v1868 = vrot.slane %v1852, %v1867
        %v1870 = vunpack.c.l.s4 1966171168
        %v1871 = vunpack.c.0.s8 %v1870
        %v1872 = vlaneseq
        %v1873 = vshrl.u32 %v1872, 7
        %v1874 = vsub.s32 %v1871, %v1873
        %v1875 = vrot.slane %v1853, %v1874
        %v1877 = vunpack.c.l.s4 1966171168
        %v1878 = vunpack.c.0.s8 %v1877
        %v1879 = vlaneseq
        %v1880 = vshrl.u32 %v1879, 7
        %v1881 = vsub.s32 %v1878, %v1880
        %v1882 = vrot.slane %v1854, %v1881
        %v1883 = vcombine.high %v1861, %v1861
        %v1884 = vcombine.high %v1868, %v1868
        %v1885 = vcombine.high %v1875, %v1875
        %v1886 = vcombine.high %v1882, %v1882
        %v1887 = vcombine.high %v1783, %v1783
        %v1889 = vunpack.c.l.s4 1966171168
        %v1890 = vunpack.c.0.s8 %v1889
        %v1891 = vlaneseq
        %v1892 = vshrl.u32 %v1891, 7
        %v1893 = vsub.s32 %v1890, %v1892
        %v1894 = vrot.slane %v1783, %v1893
        %v1896 = vunpack.c.l.s4 1966171168
        %v1897 = vunpack.c.0.s8 %v1896
        %v1898 = vlaneseq
        %v1899 = vshrl.u32 %v1898, 7
        %v1900 = vsub.s32 %v1897, %v1899
        %v1901 = vrot.slane %v1887, %v1900
        %v1902 = vcombine.high %v1894, %v1894
        %v1903 = vcombine.high %v1901, %v1901
        %v1905 = vunpack.c.l.s4 1966171168
        %v1906 = vunpack.c.0.s8 %v1905
        %v1907 = vlaneseq
        %v1908 = vshrl.u32 %v1907, 7
        %v1909 = vsub.s32 %v1906, %v1908
        %v1910 = vrot.slane %v1894, %v1909
        %v1912 = vunpack.c.l.s4 1966171168
        %v1913 = vunpack.c.0.s8 %v1912
        %v1914 = vlaneseq
        %v1915 = vshrl.u32 %v1914, 7
        %v1916 = vsub.s32 %v1913, %v1915
        %v1917 = vrot.slane %v1901, %v1916
        %v1919 = vunpack.c.l.s4 1966171168
        %v1920 = vunpack.c.0.s8 %v1919
        %v1921 = vlaneseq
        %v1922 = vshrl.u32 %v1921, 7
        %v1923 = vsub.s32 %v1920, %v1922
        %v1924 = vrot.slane %v1902, %v1923
        %v1926 = vunpack.c.l.s4 1966171168
        %v1927 = vunpack.c.0.s8 %v1926
        %v1928 = vlaneseq
        %v1929 = vshrl.u32 %v1928, 7
        %v1930 = vsub.s32 %v1927, %v1929
        %v1931 = vrot.slane %v1903, %v1930
        %v1932 = vcombine.high %v1910, %v1910
        %v1933 = vcombine.high %v1917, %v1917
        %v1934 = vcombine.high %v1924, %v1924
        %v1935 = vcombine.high %v1931, %v1931
        %v1936 = vcombine.high %v1784, %v1784
        %v1938 = vunpack.c.l.s4 1966171168
        %v1939 = vunpack.c.0.s8 %v1938
        %v1940 = vlaneseq
        %v1941 = vshrl.u32 %v1940, 7
        %v1942 = vsub.s32 %v1939, %v1941
        %v1943 = vrot.slane %v1784, %v1942
        %v1945 = vunpack.c.l.s4 1966171168
        %v1946 = vunpack.c.0.s8 %v1945
        %v1947 = vlaneseq
        %v1948 = vshrl.u32 %v1947, 7
        %v1949 = vsub.s32 %v1946, %v1948
        %v1950 = vrot.slane %v1936, %v1949
        %v1951 = vcombine.high %v1943, %v1943
        %v1952 = vcombine.high %v1950, %v1950
        %v1954 = vunpack.c.l.s4 1966171168
        %v1955 = vunpack.c.0.s8 %v1954
        %v1956 = vlaneseq
        %v1957 = vshrl.u32 %v1956, 7
        %v1958 = vsub.s32 %v1955, %v1957
        %v1959 = vrot.slane %v1943, %v1958
        %v1961 = vunpack.c.l.s4 1966171168
        %v1962 = vunpack.c.0.s8 %v1961
        %v1963 = vlaneseq
        %v1964 = vshrl.u32 %v1963, 7
        %v1965 = vsub.s32 %v1962, %v1964
        %v1966 = vrot.slane %v1950, %v1965
        %v1968 = vunpack.c.l.s4 1966171168
        %v1969 = vunpack.c.0.s8 %v1968
        %v1970 = vlaneseq
        %v1971 = vshrl.u32 %v1970, 7
        %v1972 = vsub.s32 %v1969, %v1971
        %v1973 = vrot.slane %v1951, %v1972
        %v1975 = vunpack.c.l.s4 1966171168
        %v1976 = vunpack.c.0.s8 %v1975
        %v1977 = vlaneseq
        %v1978 = vshrl.u32 %v1977, 7
        %v1979 = vsub.s32 %v1976, %v1978
        %v1980 = vrot.slane %v1952, %v1979
        %v1981 = vcombine.high %v1959, %v1959
        %v1982 = vcombine.high %v1966, %v1966
        %v1983 = vcombine.high %v1973, %v1973
        %v1984 = vcombine.high %v1980, %v1980
        %2017 = vst.msk [vmem:[%s190 + $0x2] sm:$0x1] %vm820, %v1812
        %2018 = vst.msk [vmem:[%s190 + $0x12] sm:$0x1] %vm820, %v1826
        %2019 = vst.msk [vmem:[%s190 + $0x22] sm:$0x1] %vm820, %v1834
        %2020 = vst.msk [vmem:[%s190 + $0x32] sm:$0x1] %vm820, %v1836
        %2021 = vst.msk [vmem:[%s190 + $0x42] sm:$0x1] %vm820, %v1819
        %2022 = vst.msk [vmem:[%s190 + $0x52] sm:$0x1] %vm820, %v1833
        %2023 = vst.msk [vmem:[%s190 + $0x62] sm:$0x1] %vm820, %v1835
        %2024 = vst.msk [vmem:[%s190 + $0x72] sm:$0x1] %vm820, %v1837
        %2025 = vst.msk [vmem:[%s190 + $0x82] sm:$0x1] %vm820, %v1861
        %2026 = vst.msk [vmem:[%s190 + $0x92] sm:$0x1] %vm820, %v1875
        %2027 = vst.msk [vmem:[%s190 + $0xa2] sm:$0x1] %vm820, %v1883
        %2028 = vst.msk [vmem:[%s190 + $0xb2] sm:$0x1] %vm820, %v1885
        %2029 = vst.msk [vmem:[%s190 + $0xc2] sm:$0x1] %vm820, %v1868
        %2030 = vst.msk [vmem:[%s190 + $0xd2] sm:$0x1] %vm820, %v1882
        %2031 = vst.msk [vmem:[%s190 + $0xe2] sm:$0x1] %vm820, %v1884
        %2032 = vst.msk [vmem:[%s190 + $0xf2] sm:$0x1] %vm820, %v1886
        %2033 = vst.msk [vmem:[%s190 + $0x102] sm:$0x1] %vm820, %v1910
        %2034 = vst.msk [vmem:[%s190 + $0x112] sm:$0x1] %vm820, %v1924
        %2035 = vst.msk [vmem:[%s190 + $0x122] sm:$0x1] %vm820, %v1932
        %2036 = vst.msk [vmem:[%s190 + $0x132] sm:$0x1] %vm820, %v1934
        %2037 = vst.msk [vmem:[%s190 + $0x142] sm:$0x1] %vm820, %v1917
        %2038 = vst.msk [vmem:[%s190 + $0x152] sm:$0x1] %vm820, %v1931
        %2039 = vst.msk [vmem:[%s190 + $0x162] sm:$0x1] %vm820, %v1933
        %2040 = vst.msk [vmem:[%s190 + $0x172] sm:$0x1] %vm820, %v1935
        %2041 = vst.msk [vmem:[%s190 + $0x182] sm:$0x1] %vm820, %v1959
        %2042 = vst.msk [vmem:[%s190 + $0x192] sm:$0x1] %vm820, %v1973
        %2043 = vst.msk [vmem:[%s190 + $0x1a2] sm:$0x1] %vm820, %v1981
        %2044 = vst.msk [vmem:[%s190 + $0x1b2] sm:$0x1] %vm820, %v1983
        %2045 = vst.msk [vmem:[%s190 + $0x1c2] sm:$0x1] %vm820, %v1966
        %2046 = vst.msk [vmem:[%s190 + $0x1d2] sm:$0x1] %vm820, %v1980
        %2047 = vst.msk [vmem:[%s190 + $0x1e2] sm:$0x1] %vm820, %v1982
        %2048 = vst.msk [vmem:[%s190 + $0x1f2] sm:$0x1] %vm820, %v1984
        %v2049 = vld [vmem:[%s163 + $0x3] sm:$0x1]
        %v2050 = vld [vmem:[%s163 + $0x13] sm:$0x1]
        %v2051 = vld [vmem:[%s163 + $0x23] sm:$0x1]
        %v2052 = vld [vmem:[%s163 + $0x33] sm:$0x1]
        %v2053 = vld [vmem:[%s163 + $0x43] sm:$0x1]
        %v2054 = vld [vmem:[%s163 + $0x53] sm:$0x1]
        %v2055 = vld [vmem:[%s163 + $0x63] sm:$0x1]
        %v2056 = vld [vmem:[%s163 + $0x73] sm:$0x1]
        %v2065 = vrot.slane %v2050, 7
        %v2066 = vsel %vm217, %v2065, %v2049
        %v2067 = vrot.slane %v2051, 6
        %v2068 = vsel %vm220, %v2067, %v2066
        %v2069 = vrot.slane %v2052, 5
        %v2070 = vsel %vm223, %v2069, %v2068
        %v2071 = vrot.slane %v2053, 4
        %v2072 = vsel %vm226, %v2071, %v2070
        %v2073 = vrot.slane %v2054, 3
        %v2074 = vsel %vm229, %v2073, %v2072
        %v2075 = vrot.slane %v2055, 2
        %v2076 = vsel %vm232, %v2075, %v2074
        %v2077 = vrot.slane %v2056, 1
        %v2078 = vsel %vm235, %v2077, %v2076
        %2080 = vst.msk [vmem:[#allocation2] sm:$0xff] %vm238, %v2078
        %2081 = vrot.lane.b32.xlu0 %v2078, 127
        %v2082 = vpop.permute.xlu0 %2081
        %2084 = vst.msk [vmem:[#allocation2 + $0x8] sm:$0xff] %vm238, %v2082
        %2085 = vrot.lane.b32.xlu0 %v2078, 126
        %v2086 = vpop.permute.xlu0 %2085
        %2088 = vst.msk [vmem:[#allocation2 + $0x10] sm:$0xff] %vm238, %v2086
        %2089 = vrot.lane.b32.xlu0 %v2078, 125
        %v2090 = vpop.permute.xlu0 %2089
        %2092 = vst.msk [vmem:[#allocation2 + $0x18] sm:$0xff] %vm238, %v2090
        %2093 = vrot.lane.b32.xlu0 %v2078, 124
        %v2094 = vpop.permute.xlu0 %2093
        %2096 = vst.msk [vmem:[#allocation2 + $0x20] sm:$0xff] %vm238, %v2094
        %v2097 = vld [vmem:[%s163 + $0x4] sm:$0x1]
        %v2098 = vld [vmem:[%s163 + $0x14] sm:$0x1]
        %v2099 = vld [vmem:[%s163 + $0x24] sm:$0x1]
        %v2100 = vld [vmem:[%s163 + $0x34] sm:$0x1]
        %v2101 = vld [vmem:[%s163 + $0x44] sm:$0x1]
        %v2102 = vld [vmem:[%s163 + $0x54] sm:$0x1]
        %v2103 = vld [vmem:[%s163 + $0x64] sm:$0x1]
        %v2104 = vld [vmem:[%s163 + $0x74] sm:$0x1]
        %v2113 = vrot.slane %v2098, 7
        %v2114 = vsel %vm217, %v2113, %v2097
        %v2115 = vrot.slane %v2099, 6
        %v2116 = vsel %vm220, %v2115, %v2114
        %v2117 = vrot.slane %v2100, 5
        %v2118 = vsel %vm223, %v2117, %v2116
        %v2119 = vrot.slane %v2101, 4
        %v2120 = vsel %vm226, %v2119, %v2118
        %v2121 = vrot.slane %v2102, 3
        %v2122 = vsel %vm229, %v2121, %v2120
        %v2123 = vrot.slane %v2103, 2
        %v2124 = vsel %vm232, %v2123, %v2122
        %v2125 = vrot.slane %v2104, 1
        %v2126 = vsel %vm235, %v2125, %v2124
        %2128 = vst.msk [vmem:[#allocation2 + $0x28] sm:$0xff] %vm238, %v2126
        %2129 = vrot.lane.b32.xlu0 %v2126, 127
        %v2130 = vpop.permute.xlu0 %2129
        %2132 = vst.msk [vmem:[#allocation2 + $0x30] sm:$0xff] %vm238, %v2130
        %2133 = vrot.lane.b32.xlu0 %v2126, 126
        %v2134 = vpop.permute.xlu0 %2133
        %2136 = vst.msk [vmem:[#allocation2 + $0x38] sm:$0xff] %vm238, %v2134
        %2137 = vrot.lane.b32.xlu0 %v2126, 125
        %v2138 = vpop.permute.xlu0 %2137
        %2140 = vst.msk [vmem:[#allocation2 + $0x40] sm:$0xff] %vm238, %v2138
        %2141 = vrot.lane.b32.xlu0 %v2126, 124
        %v2142 = vpop.permute.xlu0 %2141
        %2144 = vst.msk [vmem:[#allocation2 + $0x48] sm:$0xff] %vm238, %v2142
        %v2145 = vld [vmem:[%s163 + $0x5] sm:$0x1]
        %v2146 = vld [vmem:[%s163 + $0x15] sm:$0x1]
        %v2147 = vld [vmem:[%s163 + $0x25] sm:$0x1]
        %v2148 = vld [vmem:[%s163 + $0x35] sm:$0x1]
        %v2149 = vld [vmem:[%s163 + $0x45] sm:$0x1]
        %v2150 = vld [vmem:[%s163 + $0x55] sm:$0x1]
        %v2151 = vld [vmem:[%s163 + $0x65] sm:$0x1]
        %v2152 = vld [vmem:[%s163 + $0x75] sm:$0x1]
        %v2161 = vrot.slane %v2146, 7
        %v2162 = vsel %vm217, %v2161, %v2145
        %v2163 = vrot.slane %v2147, 6
        %v2164 = vsel %vm220, %v2163, %v2162
        %v2165 = vrot.slane %v2148, 5
        %v2166 = vsel %vm223, %v2165, %v2164
        %v2167 = vrot.slane %v2149, 4
        %v2168 = vsel %vm226, %v2167, %v2166
        %v2169 = vrot.slane %v2150, 3
        %v2170 = vsel %vm229, %v2169, %v2168
        %v2171 = vrot.slane %v2151, 2
        %v2172 = vsel %vm232, %v2171, %v2170
        %v2173 = vrot.slane %v2152, 1
        %v2174 = vsel %vm235, %v2173, %v2172
        %2176 = vst.msk [vmem:[#allocation2 + $0x50] sm:$0xff] %vm238, %v2174
        %2177 = vrot.lane.b32.xlu0 %v2174, 127
        %v2178 = vpop.permute.xlu0 %2177
        %2180 = vst.msk [vmem:[#allocation2 + $0x58] sm:$0xff] %vm238, %v2178
        %2181 = vrot.lane.b32.xlu0 %v2174, 126
        %v2182 = vpop.permute.xlu0 %2181
        %2184 = vst.msk [vmem:[#allocation2 + $0x60] sm:$0xff] %vm238, %v2182
        %2185 = vrot.lane.b32.xlu0 %v2174, 125
        %v2186 = vpop.permute.xlu0 %2185
        %2188 = vst.msk [vmem:[#allocation2 + $0x68] sm:$0xff] %vm238, %v2186
        %2189 = vrot.lane.b32.xlu0 %v2174, 124
        %v2190 = vpop.permute.xlu0 %2189
        %2192 = vst.msk [vmem:[#allocation2 + $0x70] sm:$0xff] %vm238, %v2190
        %v2193 = vld [vmem:[%s163 + $0x6] sm:$0x1]
        %v2194 = vld [vmem:[%s163 + $0x16] sm:$0x1]
        %v2195 = vld [vmem:[%s163 + $0x26] sm:$0x1]
        %v2196 = vld [vmem:[%s163 + $0x36] sm:$0x1]
        %v2197 = vld [vmem:[%s163 + $0x46] sm:$0x1]
        %v2198 = vld [vmem:[%s163 + $0x56] sm:$0x1]
        %v2199 = vld [vmem:[%s163 + $0x66] sm:$0x1]
        %v2200 = vld [vmem:[%s163 + $0x76] sm:$0x1]
        %v2209 = vrot.slane %v2194, 7
        %v2210 = vsel %vm217, %v2209, %v2193
        %v2211 = vrot.slane %v2195, 6
        %v2212 = vsel %vm220, %v2211, %v2210
        %v2213 = vrot.slane %v2196, 5
        %v2214 = vsel %vm223, %v2213, %v2212
        %v2215 = vrot.slane %v2197, 4
        %v2216 = vsel %vm226, %v2215, %v2214
        %v2217 = vrot.slane %v2198, 3
        %v2218 = vsel %vm229, %v2217, %v2216
        %v2219 = vrot.slane %v2199, 2
        %v2220 = vsel %vm232, %v2219, %v2218
        %v2221 = vrot.slane %v2200, 1
        %v2222 = vsel %vm235, %v2221, %v2220
        %2224 = vst.msk [vmem:[#allocation2 + $0x78] sm:$0xff] %vm238, %v2222
        %2225 = vrot.lane.b32.xlu0 %v2222, 127
        %v2226 = vpop.permute.xlu0 %2225
        %2228 = vst.msk [vmem:[#allocation2 + $0x80] sm:$0xff] %vm238, %v2226
        %2229 = vrot.lane.b32.xlu0 %v2222, 126
        %v2230 = vpop.permute.xlu0 %2229
        %2232 = vst.msk [vmem:[#allocation2 + $0x88] sm:$0xff] %vm238, %v2230
        %2233 = vrot.lane.b32.xlu0 %v2222, 125
        %v2234 = vpop.permute.xlu0 %2233
        %2236 = vst.msk [vmem:[#allocation2 + $0x90] sm:$0xff] %vm238, %v2234
        %2237 = vrot.lane.b32.xlu0 %v2222, 124
        %v2238 = vpop.permute.xlu0 %2237
        %2240 = vst.msk [vmem:[#allocation2 + $0x98] sm:$0xff] %vm238, %v2238
        %v2241 = vld [vmem:[%s163 + $0x7] sm:$0x1]
        %v2242 = vld [vmem:[%s163 + $0x17] sm:$0x1]
        %v2243 = vld [vmem:[%s163 + $0x27] sm:$0x1]
        %v2244 = vld [vmem:[%s163 + $0x37] sm:$0x1]
        %v2245 = vld [vmem:[%s163 + $0x47] sm:$0x1]
        %v2246 = vld [vmem:[%s163 + $0x57] sm:$0x1]
        %v2247 = vld [vmem:[%s163 + $0x67] sm:$0x1]
        %v2248 = vld [vmem:[%s163 + $0x77] sm:$0x1]
        %v2257 = vrot.slane %v2242, 7
        %v2258 = vsel %vm217, %v2257, %v2241
        %v2259 = vrot.slane %v2243, 6
        %v2260 = vsel %vm220, %v2259, %v2258
        %v2261 = vrot.slane %v2244, 5
        %v2262 = vsel %vm223, %v2261, %v2260
        %v2263 = vrot.slane %v2245, 4
        %v2264 = vsel %vm226, %v2263, %v2262
        %v2265 = vrot.slane %v2246, 3
        %v2266 = vsel %vm229, %v2265, %v2264
        %v2267 = vrot.slane %v2247, 2
        %v2268 = vsel %vm232, %v2267, %v2266
        %v2269 = vrot.slane %v2248, 1
        %v2270 = vsel %vm235, %v2269, %v2268
        %2272 = vst.msk [vmem:[#allocation2 + $0xa0] sm:$0xff] %vm238, %v2270
        %2273 = vrot.lane.b32.xlu0 %v2270, 127
        %v2274 = vpop.permute.xlu0 %2273
        %2276 = vst.msk [vmem:[#allocation2 + $0xa8] sm:$0xff] %vm238, %v2274
        %2277 = vrot.lane.b32.xlu0 %v2270, 126
        %v2278 = vpop.permute.xlu0 %2277
        %2280 = vst.msk [vmem:[#allocation2 + $0xb0] sm:$0xff] %vm238, %v2278
        %2281 = vrot.lane.b32.xlu0 %v2270, 125
        %v2282 = vpop.permute.xlu0 %2281
        %2284 = vst.msk [vmem:[#allocation2 + $0xb8] sm:$0xff] %vm238, %v2282
        %2285 = vrot.lane.b32.xlu0 %v2270, 124
        %v2286 = vpop.permute.xlu0 %2285
        %2288 = vst.msk [vmem:[#allocation2 + $0xc0] sm:$0xff] %vm238, %v2286
        %v2289 = vld [vmem:[#allocation2] sm:$0xff]
        %v2290 = vld [vmem:[#allocation2 + $0x8] sm:$0xff]
        %v2291 = vld [vmem:[#allocation2 + $0x10] sm:$0xff]
        %v2292 = vld [vmem:[#allocation2 + $0x18] sm:$0xff]
        %v2293 = vld [vmem:[#allocation2 + $0x20] sm:$0xff]
        %v2294 = vld [vmem:[#allocation2 + $0x28] sm:$0xff]
        %v2295 = vld [vmem:[#allocation2 + $0x30] sm:$0xff]
        %v2296 = vld [vmem:[#allocation2 + $0x38] sm:$0xff]
        %v2297 = vld [vmem:[#allocation2 + $0x40] sm:$0xff]
        %v2298 = vld [vmem:[#allocation2 + $0x48] sm:$0xff]
        %v2299 = vld [vmem:[#allocation2 + $0x50] sm:$0xff]
        %v2300 = vld [vmem:[#allocation2 + $0x58] sm:$0xff]
        %v2301 = vld [vmem:[#allocation2 + $0x60] sm:$0xff]
        %v2302 = vld [vmem:[#allocation2 + $0x68] sm:$0xff]
        %v2303 = vld [vmem:[#allocation2 + $0x70] sm:$0xff]
        %v2304 = vld [vmem:[#allocation2 + $0x78] sm:$0xff]
        %v2305 = vld [vmem:[#allocation2 + $0x80] sm:$0xff]
        %v2306 = vld [vmem:[#allocation2 + $0x88] sm:$0xff]
        %v2307 = vld [vmem:[#allocation2 + $0x90] sm:$0xff]
        %v2308 = vld [vmem:[#allocation2 + $0x98] sm:$0xff]
        %v2309 = vld [vmem:[#allocation2 + $0xa0] sm:$0xff]
        %v2310 = vld [vmem:[#allocation2 + $0xa8] sm:$0xff]
        %v2311 = vld [vmem:[#allocation2 + $0xb0] sm:$0xff]
        %v2312 = vld [vmem:[#allocation2 + $0xb8] sm:$0xff]
        %v2313 = vld [vmem:[#allocation2 + $0xc0] sm:$0xff]
        %v2314 = vpack.c.bf16 %v2290, %v2289
        %v2315 = vpack.c.bf16 %v2292, %v2291
        %v2316 = vpack.c.bf16 %v2294, %v2293
        %v2317 = vpack.c.bf16 %v2296, %v2295
        %v2318 = vpack.c.bf16 %v2298, %v2297
        %v2319 = vpack.c.bf16 %v2300, %v2299
        %v2320 = vpack.c.bf16 %v2302, %v2301
        %v2321 = vpack.c.bf16 %v2304, %v2303
        %v2322 = vpack.c.bf16 %v2306, %v2305
        %v2323 = vpack.c.bf16 %v2308, %v2307
        %v2324 = vpack.c.bf16 %v2310, %v2309
        %v2325 = vpack.c.bf16 %v2312, %v2311
        %v2326 = vpack.c.bf16 %v2313, %v2313
        %v2328 = vsel %vm531, %v2326, 0
        %2330 = vmatprep.subr.bf16.mxu0 0
        %2331 = vmatpush1.bf16.msra.mxu0 %v2314
        %2332 = vmatprep.subr.bf16.mxu0 0
        %2333 = vmatpush1.bf16.msra.mxu0 %v2315
        %2334 = vmatprep.subr.bf16.mxu0 0
        %2335 = vmatpush1.bf16.msra.mxu0 %v2316
        %2336 = vmatprep.subr.bf16.mxu0 0
        %2337 = vmatpush1.bf16.msra.mxu0 %v2317
        %2338 = vmatprep.subr.bf16.mxu0 0
        %2339 = vmatpush1.bf16.msra.mxu0 %v2318
        %2340 = vmatprep.subr.bf16.mxu0 0
        %2341 = vmatpush1.bf16.msra.mxu0 %v2319
        %2342 = vmatprep.subr.bf16.mxu0 0
        %2343 = vmatpush1.bf16.msra.mxu0 %v2320
        %2344 = vmatprep.subr.bf16.mxu0 0
        %2345 = vmatpush1.bf16.msra.mxu0 %v2321
        %2346 = vmatprep.subr.bf16.mxu0 0
        %2347 = vmatpush1.bf16.msra.mxu0 %v2322
        %2348 = vmatprep.subr.bf16.mxu0 0
        %2349 = vmatpush1.bf16.msra.mxu0 %v2323
        %2350 = vmatprep.subr.bf16.mxu0 0
        %2351 = vmatpush1.bf16.msra.mxu0 %v2324
        %2352 = vmatprep.subr.bf16.mxu0 0
        %2353 = vmatpush1.bf16.msra.mxu0 %v2325
        %2354 = vmatprep.subr.bf16.mxu0 0
        %2355 = vmatpush1.bf16.msra.mxu0 %v2328
        %2356 = vmatprep.subr.bf16.mxu0 0
        %2357 = vmatpush1.bf16.msra.mxu0 0
        %2358 = vmatprep.subr.bf16.mxu0 0
        %2359 = vmatpush1.bf16.msra.mxu0 0
        %2360 = vmatprep.subr.bf16.mxu0 0
        %2361 = vmatpush1.bf16.msra.mxu0 0
        %2362 = vmatprep.mubr.bf16.mxu0 %v526
        %2363 = vmatmul.mubr.bf16.gmra.mrb[0].mxu0 %v518
        %v2364 = vpop.f32.mrb[0].mxu0
        %v2365 = vadd.f32 %v489, %v2364
        %v2366 = vpop.f32.mrb[0].mxu0
        %v2367 = vpop.f32.mrb[0].mxu0
        %v2368 = vadd.f32 %v494, %v2367
        %v2369 = vpop.f32.mrb[0].mxu0
        %2370 = vmatprep.mubr.bf16.mxu0 %v529
        %2371 = vmatmul.mubr.bf16.gmra.mrb[0].mxu0 %v520
        %v2372 = vpop.f32.mrb[0].mxu0
        %v2373 = vadd.f32 %v499, %v2372
        %v2374 = vpop.f32.mrb[0].mxu0
        %v2375 = vpop.f32.mrb[0].mxu0
        %v2376 = vadd.f32 %v504, %v2375
        %v2377 = vpop.f32.mrb[0].mxu0
        %2378 = vdwg.mxu0
        %v2379 = vmax.f32 %v2365, 0.0
        %v2380 = vmax.f32 %v2368, 0.0
        %v2381 = vmax.f32 %v2373, 0.0
        %v2382 = vmax.f32 %v2376, 0.0
        %v2387 = vcombine.high %v2379, %v2379
        %v2389 = vunpack.c.l.s4 1966171168
        %v2390 = vunpack.c.0.s8 %v2389
        %v2391 = vlaneseq
        %v2392 = vshrl.u32 %v2391, 7
        %v2393 = vsub.s32 %v2390, %v2392
        %v2394 = vrot.slane %v2379, %v2393
        %v2396 = vunpack.c.l.s4 1966171168
        %v2397 = vunpack.c.0.s8 %v2396
        %v2398 = vlaneseq
        %v2399 = vshrl.u32 %v2398, 7
        %v2400 = vsub.s32 %v2397, %v2399
        %v2401 = vrot.slane %v2387, %v2400
        %v2402 = vcombine.high %v2394, %v2394
        %v2403 = vcombine.high %v2401, %v2401
        %v2405 = vunpack.c.l.s4 1966171168
        %v2406 = vunpack.c.0.s8 %v2405
        %v2407 = vlaneseq
        %v2408 = vshrl.u32 %v2407, 7
        %v2409 = vsub.s32 %v2406, %v2408
        %v2410 = vrot.slane %v2394, %v2409
        %v2412 = vunpack.c.l.s4 1966171168
        %v2413 = vunpack.c.0.s8 %v2412
        %v2414 = vlaneseq
        %v2415 = vshrl.u32 %v2414, 7
        %v2416 = vsub.s32 %v2413, %v2415
        %v2417 = vrot.slane %v2401, %v2416
        %v2419 = vunpack.c.l.s4 1966171168
        %v2420 = vunpack.c.0.s8 %v2419
        %v2421 = vlaneseq
        %v2422 = vshrl.u32 %v2421, 7
        %v2423 = vsub.s32 %v2420, %v2422
        %v2424 = vrot.slane %v2402, %v2423
        %v2426 = vunpack.c.l.s4 1966171168
        %v2427 = vunpack.c.0.s8 %v2426
        %v2428 = vlaneseq
        %v2429 = vshrl.u32 %v2428, 7
        %v2430 = vsub.s32 %v2427, %v2429
        %v2431 = vrot.slane %v2403, %v2430
        %v2432 = vcombine.high %v2410, %v2410
        %v2433 = vcombine.high %v2417, %v2417
        %v2434 = vcombine.high %v2424, %v2424
        %v2435 = vcombine.high %v2431, %v2431
        %v2436 = vcombine.high %v2380, %v2380
        %v2438 = vunpack.c.l.s4 1966171168
        %v2439 = vunpack.c.0.s8 %v2438
        %v2440 = vlaneseq
        %v2441 = vshrl.u32 %v2440, 7
        %v2442 = vsub.s32 %v2439, %v2441
        %v2443 = vrot.slane %v2380, %v2442
        %v2445 = vunpack.c.l.s4 1966171168
        %v2446 = vunpack.c.0.s8 %v2445
        %v2447 = vlaneseq
        %v2448 = vshrl.u32 %v2447, 7
        %v2449 = vsub.s32 %v2446, %v2448
        %v2450 = vrot.slane %v2436, %v2449
        %v2451 = vcombine.high %v2443, %v2443
        %v2452 = vcombine.high %v2450, %v2450
        %v2454 = vunpack.c.l.s4 1966171168
        %v2455 = vunpack.c.0.s8 %v2454
        %v2456 = vlaneseq
        %v2457 = vshrl.u32 %v2456, 7
        %v2458 = vsub.s32 %v2455, %v2457
        %v2459 = vrot.slane %v2443, %v2458
        %v2461 = vunpack.c.l.s4 1966171168
        %v2462 = vunpack.c.0.s8 %v2461
        %v2463 = vlaneseq
        %v2464 = vshrl.u32 %v2463, 7
        %v2465 = vsub.s32 %v2462, %v2464
        %v2466 = vrot.slane %v2450, %v2465
        %v2468 = vunpack.c.l.s4 1966171168
        %v2469 = vunpack.c.0.s8 %v2468
        %v2470 = vlaneseq
        %v2471 = vshrl.u32 %v2470, 7
        %v2472 = vsub.s32 %v2469, %v2471
        %v2473 = vrot.slane %v2451, %v2472
        %v2475 = vunpack.c.l.s4 1966171168
        %v2476 = vunpack.c.0.s8 %v2475
        %v2477 = vlaneseq
        %v2478 = vshrl.u32 %v2477, 7
        %v2479 = vsub.s32 %v2476, %v2478
        %v2480 = vrot.slane %v2452, %v2479
        %v2481 = vcombine.high %v2459, %v2459
        %v2482 = vcombine.high %v2466, %v2466
        %v2483 = vcombine.high %v2473, %v2473
        %v2484 = vcombine.high %v2480, %v2480
        %v2485 = vcombine.high %v2381, %v2381
        %v2487 = vunpack.c.l.s4 1966171168
        %v2488 = vunpack.c.0.s8 %v2487
        %v2489 = vlaneseq
        %v2490 = vshrl.u32 %v2489, 7
        %v2491 = vsub.s32 %v2488, %v2490
        %v2492 = vrot.slane %v2381, %v2491
        %v2494 = vunpack.c.l.s4 1966171168
        %v2495 = vunpack.c.0.s8 %v2494
        %v2496 = vlaneseq
        %v2497 = vshrl.u32 %v2496, 7
        %v2498 = vsub.s32 %v2495, %v2497
        %v2499 = vrot.slane %v2485, %v2498
        %v2500 = vcombine.high %v2492, %v2492
        %v2501 = vcombine.high %v2499, %v2499
        %v2503 = vunpack.c.l.s4 1966171168
        %v2504 = vunpack.c.0.s8 %v2503
        %v2505 = vlaneseq
        %v2506 = vshrl.u32 %v2505, 7
        %v2507 = vsub.s32 %v2504, %v2506
        %v2508 = vrot.slane %v2492, %v2507
        %v2510 = vunpack.c.l.s4 1966171168
        %v2511 = vunpack.c.0.s8 %v2510
        %v2512 = vlaneseq
        %v2513 = vshrl.u32 %v2512, 7
        %v2514 = vsub.s32 %v2511, %v2513
        %v2515 = vrot.slane %v2499, %v2514
        %v2517 = vunpack.c.l.s4 1966171168
        %v2518 = vunpack.c.0.s8 %v2517
        %v2519 = vlaneseq
        %v2520 = vshrl.u32 %v2519, 7
        %v2521 = vsub.s32 %v2518, %v2520
        %v2522 = vrot.slane %v2500, %v2521
        %v2524 = vunpack.c.l.s4 1966171168
        %v2525 = vunpack.c.0.s8 %v2524
        %v2526 = vlaneseq
        %v2527 = vshrl.u32 %v2526, 7
        %v2528 = vsub.s32 %v2525, %v2527
        %v2529 = vrot.slane %v2501, %v2528
        %v2530 = vcombine.high %v2508, %v2508
        %v2531 = vcombine.high %v2515, %v2515
        %v2532 = vcombine.high %v2522, %v2522
        %v2533 = vcombine.high %v2529, %v2529
        %v2534 = vcombine.high %v2382, %v2382
        %v2536 = vunpack.c.l.s4 1966171168
        %v2537 = vunpack.c.0.s8 %v2536
        %v2538 = vlaneseq
        %v2539 = vshrl.u32 %v2538, 7
        %v2540 = vsub.s32 %v2537, %v2539
        %v2541 = vrot.slane %v2382, %v2540
        %v2543 = vunpack.c.l.s4 1966171168
        %v2544 = vunpack.c.0.s8 %v2543
        %v2545 = vlaneseq
        %v2546 = vshrl.u32 %v2545, 7
        %v2547 = vsub.s32 %v2544, %v2546
        %v2548 = vrot.slane %v2534, %v2547
        %v2549 = vcombine.high %v2541, %v2541
        %v2550 = vcombine.high %v2548, %v2548
        %v2552 = vunpack.c.l.s4 1966171168
        %v2553 = vunpack.c.0.s8 %v2552
        %v2554 = vlaneseq
        %v2555 = vshrl.u32 %v2554, 7
        %v2556 = vsub.s32 %v2553, %v2555
        %v2557 = vrot.slane %v2541, %v2556
        %v2559 = vunpack.c.l.s4 1966171168
        %v2560 = vunpack.c.0.s8 %v2559
        %v2561 = vlaneseq
        %v2562 = vshrl.u32 %v2561, 7
        %v2563 = vsub.s32 %v2560, %v2562
        %v2564 = vrot.slane %v2548, %v2563
        %v2566 = vunpack.c.l.s4 1966171168
        %v2567 = vunpack.c.0.s8 %v2566
        %v2568 = vlaneseq
        %v2569 = vshrl.u32 %v2568, 7
        %v2570 = vsub.s32 %v2567, %v2569
        %v2571 = vrot.slane %v2549, %v2570
        %v2573 = vunpack.c.l.s4 1966171168
        %v2574 = vunpack.c.0.s8 %v2573
        %v2575 = vlaneseq
        %v2576 = vshrl.u32 %v2575, 7
        %v2577 = vsub.s32 %v2574, %v2576
        %v2578 = vrot.slane %v2550, %v2577
        %v2579 = vcombine.high %v2557, %v2557
        %v2580 = vcombine.high %v2564, %v2564
        %v2581 = vcombine.high %v2571, %v2571
        %v2582 = vcombine.high %v2578, %v2578
        %2615 = vst.msk [vmem:[%s190 + $0x3] sm:$0x1] %vm820, %v2410
        %2616 = vst.msk [vmem:[%s190 + $0x13] sm:$0x1] %vm820, %v2424
        %2617 = vst.msk [vmem:[%s190 + $0x23] sm:$0x1] %vm820, %v2432
        %2618 = vst.msk [vmem:[%s190 + $0x33] sm:$0x1] %vm820, %v2434
        %2619 = vst.msk [vmem:[%s190 + $0x43] sm:$0x1] %vm820, %v2417
        %2620 = vst.msk [vmem:[%s190 + $0x53] sm:$0x1] %vm820, %v2431
        %2621 = vst.msk [vmem:[%s190 + $0x63] sm:$0x1] %vm820, %v2433
        %2622 = vst.msk [vmem:[%s190 + $0x73] sm:$0x1] %vm820, %v2435
        %2623 = vst.msk [vmem:[%s190 + $0x83] sm:$0x1] %vm820, %v2459
        %2624 = vst.msk [vmem:[%s190 + $0x93] sm:$0x1] %vm820, %v2473
        %2625 = vst.msk [vmem:[%s190 + $0xa3] sm:$0x1] %vm820, %v2481
        %2626 = vst.msk [vmem:[%s190 + $0xb3] sm:$0x1] %vm820, %v2483
        %2627 = vst.msk [vmem:[%s190 + $0xc3] sm:$0x1] %vm820, %v2466
        %2628 = vst.msk [vmem:[%s190 + $0xd3] sm:$0x1] %vm820, %v2480
        %2629 = vst.msk [vmem:[%s190 + $0xe3] sm:$0x1] %vm820, %v2482
        %2630 = vst.msk [vmem:[%s190 + $0xf3] sm:$0x1] %vm820, %v2484
        %2631 = vst.msk [vmem:[%s190 + $0x103] sm:$0x1] %vm820, %v2508
        %2632 = vst.msk [vmem:[%s190 + $0x113] sm:$0x1] %vm820, %v2522
        %2633 = vst.msk [vmem:[%s190 + $0x123] sm:$0x1] %vm820, %v2530
        %2634 = vst.msk [vmem:[%s190 + $0x133] sm:$0x1] %vm820, %v2532
        %2635 = vst.msk [vmem:[%s190 + $0x143] sm:$0x1] %vm820, %v2515
        %2636 = vst.msk [vmem:[%s190 + $0x153] sm:$0x1] %vm820, %v2529
        %2637 = vst.msk [vmem:[%s190 + $0x163] sm:$0x1] %vm820, %v2531
        %2638 = vst.msk [vmem:[%s190 + $0x173] sm:$0x1] %vm820, %v2533
        %2639 = vst.msk [vmem:[%s190 + $0x183] sm:$0x1] %vm820, %v2557
        %2640 = vst.msk [vmem:[%s190 + $0x193] sm:$0x1] %vm820, %v2571
        %2641 = vst.msk [vmem:[%s190 + $0x1a3] sm:$0x1] %vm820, %v2579
        %2642 = vst.msk [vmem:[%s190 + $0x1b3] sm:$0x1] %vm820, %v2581
        %2643 = vst.msk [vmem:[%s190 + $0x1c3] sm:$0x1] %vm820, %v2564
        %2644 = vst.msk [vmem:[%s190 + $0x1d3] sm:$0x1] %vm820, %v2578
        %2645 = vst.msk [vmem:[%s190 + $0x1e3] sm:$0x1] %vm820, %v2580
        %2646 = vst.msk [vmem:[%s190 + $0x1f3] sm:$0x1] %vm820, %v2582
        %v2647 = vld [vmem:[%s163 + $0x4] sm:$0x1]
        %v2648 = vld [vmem:[%s163 + $0x14] sm:$0x1]
        %v2649 = vld [vmem:[%s163 + $0x24] sm:$0x1]
        %v2650 = vld [vmem:[%s163 + $0x34] sm:$0x1]
        %v2651 = vld [vmem:[%s163 + $0x44] sm:$0x1]
        %v2652 = vld [vmem:[%s163 + $0x54] sm:$0x1]
        %v2653 = vld [vmem:[%s163 + $0x64] sm:$0x1]
        %v2654 = vld [vmem:[%s163 + $0x74] sm:$0x1]
        %v2663 = vrot.slane %v2648, 7
        %v2664 = vsel %vm217, %v2663, %v2647
        %v2665 = vrot.slane %v2649, 6
        %v2666 = vsel %vm220, %v2665, %v2664
        %v2667 = vrot.slane %v2650, 5
        %v2668 = vsel %vm223, %v2667, %v2666
        %v2669 = vrot.slane %v2651, 4
        %v2670 = vsel %vm226, %v2669, %v2668
        %v2671 = vrot.slane %v2652, 3
        %v2672 = vsel %vm229, %v2671, %v2670
        %v2673 = vrot.slane %v2653, 2
        %v2674 = vsel %vm232, %v2673, %v2672
        %v2675 = vrot.slane %v2654, 1
        %v2676 = vsel %vm235, %v2675, %v2674
        %2678 = vst.msk [vmem:[#allocation2] sm:$0xff] %vm238, %v2676
        %2679 = vrot.lane.b32.xlu0 %v2676, 127
        %v2680 = vpop.permute.xlu0 %2679
        %2682 = vst.msk [vmem:[#allocation2 + $0x8] sm:$0xff] %vm238, %v2680
        %2683 = vrot.lane.b32.xlu0 %v2676, 126
        %v2684 = vpop.permute.xlu0 %2683
        %2686 = vst.msk [vmem:[#allocation2 + $0x10] sm:$0xff] %vm238, %v2684
        %2687 = vrot.lane.b32.xlu0 %v2676, 125
        %v2688 = vpop.permute.xlu0 %2687
        %2690 = vst.msk [vmem:[#allocation2 + $0x18] sm:$0xff] %vm238, %v2688
        %2691 = vrot.lane.b32.xlu0 %v2676, 124
        %v2692 = vpop.permute.xlu0 %2691
        %2694 = vst.msk [vmem:[#allocation2 + $0x20] sm:$0xff] %vm238, %v2692
        %v2695 = vld [vmem:[%s163 + $0x5] sm:$0x1]
        %v2696 = vld [vmem:[%s163 + $0x15] sm:$0x1]
        %v2697 = vld [vmem:[%s163 + $0x25] sm:$0x1]
        %v2698 = vld [vmem:[%s163 + $0x35] sm:$0x1]
        %v2699 = vld [vmem:[%s163 + $0x45] sm:$0x1]
        %v2700 = vld [vmem:[%s163 + $0x55] sm:$0x1]
        %v2701 = vld [vmem:[%s163 + $0x65] sm:$0x1]
        %v2702 = vld [vmem:[%s163 + $0x75] sm:$0x1]
        %v2711 = vrot.slane %v2696, 7
        %v2712 = vsel %vm217, %v2711, %v2695
        %v2713 = vrot.slane %v2697, 6
        %v2714 = vsel %vm220, %v2713, %v2712
        %v2715 = vrot.slane %v2698, 5
        %v2716 = vsel %vm223, %v2715, %v2714
        %v2717 = vrot.slane %v2699, 4
        %v2718 = vsel %vm226, %v2717, %v2716
        %v2719 = vrot.slane %v2700, 3
        %v2720 = vsel %vm229, %v2719, %v2718
        %v2721 = vrot.slane %v2701, 2
        %v2722 = vsel %vm232, %v2721, %v2720
        %v2723 = vrot.slane %v2702, 1
        %v2724 = vsel %vm235, %v2723, %v2722
        %2726 = vst.msk [vmem:[#allocation2 + $0x28] sm:$0xff] %vm238, %v2724
        %2727 = vrot.lane.b32.xlu0 %v2724, 127
        %v2728 = vpop.permute.xlu0 %2727
        %2730 = vst.msk [vmem:[#allocation2 + $0x30] sm:$0xff] %vm238, %v2728
        %2731 = vrot.lane.b32.xlu0 %v2724, 126
        %v2732 = vpop.permute.xlu0 %2731
        %2734 = vst.msk [vmem:[#allocation2 + $0x38] sm:$0xff] %vm238, %v2732
        %2735 = vrot.lane.b32.xlu0 %v2724, 125
        %v2736 = vpop.permute.xlu0 %2735
        %2738 = vst.msk [vmem:[#allocation2 + $0x40] sm:$0xff] %vm238, %v2736
        %2739 = vrot.lane.b32.xlu0 %v2724, 124
        %v2740 = vpop.permute.xlu0 %2739
        %2742 = vst.msk [vmem:[#allocation2 + $0x48] sm:$0xff] %vm238, %v2740
        %v2743 = vld [vmem:[%s163 + $0x6] sm:$0x1]
        %v2744 = vld [vmem:[%s163 + $0x16] sm:$0x1]
        %v2745 = vld [vmem:[%s163 + $0x26] sm:$0x1]
        %v2746 = vld [vmem:[%s163 + $0x36] sm:$0x1]
        %v2747 = vld [vmem:[%s163 + $0x46] sm:$0x1]
        %v2748 = vld [vmem:[%s163 + $0x56] sm:$0x1]
        %v2749 = vld [vmem:[%s163 + $0x66] sm:$0x1]
        %v2750 = vld [vmem:[%s163 + $0x76] sm:$0x1]
        %v2759 = vrot.slane %v2744, 7
        %v2760 = vsel %vm217, %v2759, %v2743
        %v2761 = vrot.slane %v2745, 6
        %v2762 = vsel %vm220, %v2761, %v2760
        %v2763 = vrot.slane %v2746, 5
        %v2764 = vsel %vm223, %v2763, %v2762
        %v2765 = vrot.slane %v2747, 4
        %v2766 = vsel %vm226, %v2765, %v2764
        %v2767 = vrot.slane %v2748, 3
        %v2768 = vsel %vm229, %v2767, %v2766
        %v2769 = vrot.slane %v2749, 2
        %v2770 = vsel %vm232, %v2769, %v2768
        %v2771 = vrot.slane %v2750, 1
        %v2772 = vsel %vm235, %v2771, %v2770
        %2774 = vst.msk [vmem:[#allocation2 + $0x50] sm:$0xff] %vm238, %v2772
        %2775 = vrot.lane.b32.xlu0 %v2772, 127
        %v2776 = vpop.permute.xlu0 %2775
        %2778 = vst.msk [vmem:[#allocation2 + $0x58] sm:$0xff] %vm238, %v2776
        %2779 = vrot.lane.b32.xlu0 %v2772, 126
        %v2780 = vpop.permute.xlu0 %2779
        %2782 = vst.msk [vmem:[#allocation2 + $0x60] sm:$0xff] %vm238, %v2780
        %2783 = vrot.lane.b32.xlu0 %v2772, 125
        %v2784 = vpop.permute.xlu0 %2783
        %2786 = vst.msk [vmem:[#allocation2 + $0x68] sm:$0xff] %vm238, %v2784
        %2787 = vrot.lane.b32.xlu0 %v2772, 124
        %v2788 = vpop.permute.xlu0 %2787
        %2790 = vst.msk [vmem:[#allocation2 + $0x70] sm:$0xff] %vm238, %v2788
        %v2791 = vld [vmem:[%s163 + $0x7] sm:$0x1]
        %v2792 = vld [vmem:[%s163 + $0x17] sm:$0x1]
        %v2793 = vld [vmem:[%s163 + $0x27] sm:$0x1]
        %v2794 = vld [vmem:[%s163 + $0x37] sm:$0x1]
        %v2795 = vld [vmem:[%s163 + $0x47] sm:$0x1]
        %v2796 = vld [vmem:[%s163 + $0x57] sm:$0x1]
        %v2797 = vld [vmem:[%s163 + $0x67] sm:$0x1]
        %v2798 = vld [vmem:[%s163 + $0x77] sm:$0x1]
        %v2807 = vrot.slane %v2792, 7
        %v2808 = vsel %vm217, %v2807, %v2791
        %v2809 = vrot.slane %v2793, 6
        %v2810 = vsel %vm220, %v2809, %v2808
        %v2811 = vrot.slane %v2794, 5
        %v2812 = vsel %vm223, %v2811, %v2810
        %v2813 = vrot.slane %v2795, 4
        %v2814 = vsel %vm226, %v2813, %v2812
        %v2815 = vrot.slane %v2796, 3
        %v2816 = vsel %vm229, %v2815, %v2814
        %v2817 = vrot.slane %v2797, 2
        %v2818 = vsel %vm232, %v2817, %v2816
        %v2819 = vrot.slane %v2798, 1
        %v2820 = vsel %vm235, %v2819, %v2818
        %2822 = vst.msk [vmem:[#allocation2 + $0x78] sm:$0xff] %vm238, %v2820
        %2823 = vrot.lane.b32.xlu0 %v2820, 127
        %v2824 = vpop.permute.xlu0 %2823
        %2826 = vst.msk [vmem:[#allocation2 + $0x80] sm:$0xff] %vm238, %v2824
        %2827 = vrot.lane.b32.xlu0 %v2820, 126
        %v2828 = vpop.permute.xlu0 %2827
        %2830 = vst.msk [vmem:[#allocation2 + $0x88] sm:$0xff] %vm238, %v2828
        %2831 = vrot.lane.b32.xlu0 %v2820, 125
        %v2832 = vpop.permute.xlu0 %2831
        %2834 = vst.msk [vmem:[#allocation2 + $0x90] sm:$0xff] %vm238, %v2832
        %2835 = vrot.lane.b32.xlu0 %v2820, 124
        %v2836 = vpop.permute.xlu0 %2835
        %2838 = vst.msk [vmem:[#allocation2 + $0x98] sm:$0xff] %vm238, %v2836
        %v2839 = vld [vmem:[%s163 + $0x8] sm:$0x1]
        %v2840 = vld [vmem:[%s163 + $0x18] sm:$0x1]
        %v2841 = vld [vmem:[%s163 + $0x28] sm:$0x1]
        %v2842 = vld [vmem:[%s163 + $0x38] sm:$0x1]
        %v2843 = vld [vmem:[%s163 + $0x48] sm:$0x1]
        %v2844 = vld [vmem:[%s163 + $0x58] sm:$0x1]
        %v2845 = vld [vmem:[%s163 + $0x68] sm:$0x1]
        %v2846 = vld [vmem:[%s163 + $0x78] sm:$0x1]
        %v2855 = vrot.slane %v2840, 7
        %v2856 = vsel %vm217, %v2855, %v2839
        %v2857 = vrot.slane %v2841, 6
        %v2858 = vsel %vm220, %v2857, %v2856
        %v2859 = vrot.slane %v2842, 5
        %v2860 = vsel %vm223, %v2859, %v2858
        %v2861 = vrot.slane %v2843, 4
        %v2862 = vsel %vm226, %v2861, %v2860
        %v2863 = vrot.slane %v2844, 3
        %v2864 = vsel %vm229, %v2863, %v2862
        %v2865 = vrot.slane %v2845, 2
        %v2866 = vsel %vm232, %v2865, %v2864
        %v2867 = vrot.slane %v2846, 1
        %v2868 = vsel %vm235, %v2867, %v2866
        %2870 = vst.msk [vmem:[#allocation2 + $0xa0] sm:$0xff] %vm238, %v2868
        %2871 = vrot.lane.b32.xlu0 %v2868, 127
        %v2872 = vpop.permute.xlu0 %2871
        %2874 = vst.msk [vmem:[#allocation2 + $0xa8] sm:$0xff] %vm238, %v2872
        %2875 = vrot.lane.b32.xlu0 %v2868, 126
        %v2876 = vpop.permute.xlu0 %2875
        %2878 = vst.msk [vmem:[#allocation2 + $0xb0] sm:$0xff] %vm238, %v2876
        %2879 = vrot.lane.b32.xlu0 %v2868, 125
        %v2880 = vpop.permute.xlu0 %2879
        %2882 = vst.msk [vmem:[#allocation2 + $0xb8] sm:$0xff] %vm238, %v2880
        %2883 = vrot.lane.b32.xlu0 %v2868, 124
        %v2884 = vpop.permute.xlu0 %2883
        %2886 = vst.msk [vmem:[#allocation2 + $0xc0] sm:$0xff] %vm238, %v2884
        %v2887 = vld [vmem:[#allocation2] sm:$0xff]
        %v2888 = vld [vmem:[#allocation2 + $0x8] sm:$0xff]
        %v2889 = vld [vmem:[#allocation2 + $0x10] sm:$0xff]
        %v2890 = vld [vmem:[#allocation2 + $0x18] sm:$0xff]
        %v2891 = vld [vmem:[#allocation2 + $0x20] sm:$0xff]
        %v2892 = vld [vmem:[#allocation2 + $0x28] sm:$0xff]
        %v2893 = vld [vmem:[#allocation2 + $0x30] sm:$0xff]
        %v2894 = vld [vmem:[#allocation2 + $0x38] sm:$0xff]
        %v2895 = vld [vmem:[#allocation2 + $0x40] sm:$0xff]
        %v2896 = vld [vmem:[#allocation2 + $0x48] sm:$0xff]
        %v2897 = vld [vmem:[#allocation2 + $0x50] sm:$0xff]
        %v2898 = vld [vmem:[#allocation2 + $0x58] sm:$0xff]
        %v2899 = vld [vmem:[#allocation2 + $0x60] sm:$0xff]
        %v2900 = vld [vmem:[#allocation2 + $0x68] sm:$0xff]
        %v2901 = vld [vmem:[#allocation2 + $0x70] sm:$0xff]
        %v2902 = vld [vmem:[#allocation2 + $0x78] sm:$0xff]
        %v2903 = vld [vmem:[#allocation2 + $0x80] sm:$0xff]
        %v2904 = vld [vmem:[#allocation2 + $0x88] sm:$0xff]
        %v2905 = vld [vmem:[#allocation2 + $0x90] sm:$0xff]
        %v2906 = vld [vmem:[#allocation2 + $0x98] sm:$0xff]
        %v2907 = vld [vmem:[#allocation2 + $0xa0] sm:$0xff]
        %v2908 = vld [vmem:[#allocation2 + $0xa8] sm:$0xff]
        %v2909 = vld [vmem:[#allocation2 + $0xb0] sm:$0xff]
        %v2910 = vld [vmem:[#allocation2 + $0xb8] sm:$0xff]
        %v2911 = vld [vmem:[#allocation2 + $0xc0] sm:$0xff]
        %v2912 = vpack.c.bf16 %v2888, %v2887
        %v2913 = vpack.c.bf16 %v2890, %v2889
        %v2914 = vpack.c.bf16 %v2892, %v2891
        %v2915 = vpack.c.bf16 %v2894, %v2893
        %v2916 = vpack.c.bf16 %v2896, %v2895
        %v2917 = vpack.c.bf16 %v2898, %v2897
        %v2918 = vpack.c.bf16 %v2900, %v2899
        %v2919 = vpack.c.bf16 %v2902, %v2901
        %v2920 = vpack.c.bf16 %v2904, %v2903
        %v2921 = vpack.c.bf16 %v2906, %v2905
        %v2922 = vpack.c.bf16 %v2908, %v2907
        %v2923 = vpack.c.bf16 %v2910, %v2909
        %v2924 = vpack.c.bf16 %v2911, %v2911
        %v2926 = vsel %vm531, %v2924, 0
        %2928 = vmatprep.subr.bf16.mxu0 0
        %2929 = vmatpush1.bf16.msra.mxu0 %v2912
        %2930 = vmatprep.subr.bf16.mxu0 0
        %2931 = vmatpush1.bf16.msra.mxu0 %v2913
        %2932 = vmatprep.subr.bf16.mxu0 0
        %2933 = vmatpush1.bf16.msra.mxu0 %v2914
        %2934 = vmatprep.subr.bf16.mxu0 0
        %2935 = vmatpush1.bf16.msra.mxu0 %v2915
        %2936 = vmatprep.subr.bf16.mxu0 0
        %2937 = vmatpush1.bf16.msra.mxu0 %v2916
        %2938 = vmatprep.subr.bf16.mxu0 0
        %2939 = vmatpush1.bf16.msra.mxu0 %v2917
        %2940 = vmatprep.subr.bf16.mxu0 0
        %2941 = vmatpush1.bf16.msra.mxu0 %v2918
        %2942 = vmatprep.subr.bf16.mxu0 0
        %2943 = vmatpush1.bf16.msra.mxu0 %v2919
        %2944 = vmatprep.subr.bf16.mxu0 0
        %2945 = vmatpush1.bf16.msra.mxu0 %v2920
        %2946 = vmatprep.subr.bf16.mxu0 0
        %2947 = vmatpush1.bf16.msra.mxu0 %v2921
        %2948 = vmatprep.subr.bf16.mxu0 0
        %2949 = vmatpush1.bf16.msra.mxu0 %v2922
        %2950 = vmatprep.subr.bf16.mxu0 0
        %2951 = vmatpush1.bf16.msra.mxu0 %v2923
        %2952 = vmatprep.subr.bf16.mxu0 0
        %2953 = vmatpush1.bf16.msra.mxu0 %v2926
        %2954 = vmatprep.subr.bf16.mxu0 0
        %2955 = vmatpush1.bf16.msra.mxu0 0
        %2956 = vmatprep.subr.bf16.mxu0 0
        %2957 = vmatpush1.bf16.msra.mxu0 0
        %2958 = vmatprep.subr.bf16.mxu0 0
        %2959 = vmatpush1.bf16.msra.mxu0 0
        %2960 = vmatprep.mubr.bf16.mxu0 %v526
        %2961 = vmatmul.mubr.bf16.gmra.mrb[0].mxu0 %v518
        %v2962 = vpop.f32.mrb[0].mxu0
        %v2963 = vadd.f32 %v489, %v2962
        %v2964 = vpop.f32.mrb[0].mxu0
        %v2965 = vpop.f32.mrb[0].mxu0
        %v2966 = vadd.f32 %v494, %v2965
        %v2967 = vpop.f32.mrb[0].mxu0
        %2968 = vmatprep.mubr.bf16.mxu0 %v529
        %2969 = vmatmul.mubr.bf16.gmra.mrb[0].mxu0 %v520
        %v2970 = vpop.f32.mrb[0].mxu0
        %v2971 = vadd.f32 %v499, %v2970
        %v2972 = vpop.f32.mrb[0].mxu0
        %v2973 = vpop.f32.mrb[0].mxu0
        %v2974 = vadd.f32 %v504, %v2973
        %v2975 = vpop.f32.mrb[0].mxu0
        %2976 = vdwg.mxu0
        %v2977 = vmax.f32 %v2963, 0.0
        %v2978 = vmax.f32 %v2966, 0.0
        %v2979 = vmax.f32 %v2971, 0.0
        %v2980 = vmax.f32 %v2974, 0.0
        %v2985 = vcombine.high %v2977, %v2977
        %v2987 = vunpack.c.l.s4 1966171168
        %v2988 = vunpack.c.0.s8 %v2987
        %v2989 = vlaneseq
        %v2990 = vshrl.u32 %v2989, 7
        %v2991 = vsub.s32 %v2988, %v2990
        %v2992 = vrot.slane %v2977, %v2991
        %v2994 = vunpack.c.l.s4 1966171168
        %v2995 = vunpack.c.0.s8 %v2994
        %v2996 = vlaneseq
        %v2997 = vshrl.u32 %v2996, 7
        %v2998 = vsub.s32 %v2995, %v2997
        %v2999 = vrot.slane %v2985, %v2998
        %v3000 = vcombine.high %v2992, %v2992
        %v3001 = vcombine.high %v2999, %v2999
        %v3003 = vunpack.c.l.s4 1966171168
        %v3004 = vunpack.c.0.s8 %v3003
        %v3005 = vlaneseq
        %v3006 = vshrl.u32 %v3005, 7
        %v3007 = vsub.s32 %v3004, %v3006
        %v3008 = vrot.slane %v2992, %v3007
        %v3010 = vunpack.c.l.s4 1966171168
        %v3011 = vunpack.c.0.s8 %v3010
        %v3012 = vlaneseq
        %v3013 = vshrl.u32 %v3012, 7
        %v3014 = vsub.s32 %v3011, %v3013
        %v3015 = vrot.slane %v2999, %v3014
        %v3017 = vunpack.c.l.s4 1966171168
        %v3018 = vunpack.c.0.s8 %v3017
        %v3019 = vlaneseq
        %v3020 = vshrl.u32 %v3019, 7
        %v3021 = vsub.s32 %v3018, %v3020
        %v3022 = vrot.slane %v3000, %v3021
        %v3024 = vunpack.c.l.s4 1966171168
        %v3025 = vunpack.c.0.s8 %v3024
        %v3026 = vlaneseq
        %v3027 = vshrl.u32 %v3026, 7
        %v3028 = vsub.s32 %v3025, %v3027
        %v3029 = vrot.slane %v3001, %v3028
        %v3030 = vcombine.high %v3008, %v3008
        %v3031 = vcombine.high %v3015, %v3015
        %v3032 = vcombine.high %v3022, %v3022
        %v3033 = vcombine.high %v3029, %v3029
        %v3034 = vcombine.high %v2978, %v2978
        %v3036 = vunpack.c.l.s4 1966171168
        %v3037 = vunpack.c.0.s8 %v3036
        %v3038 = vlaneseq
        %v3039 = vshrl.u32 %v3038, 7
        %v3040 = vsub.s32 %v3037, %v3039
        %v3041 = vrot.slane %v2978, %v3040
        %v3043 = vunpack.c.l.s4 1966171168
        %v3044 = vunpack.c.0.s8 %v3043
        %v3045 = vlaneseq
        %v3046 = vshrl.u32 %v3045, 7
        %v3047 = vsub.s32 %v3044, %v3046
        %v3048 = vrot.slane %v3034, %v3047
        %v3049 = vcombine.high %v3041, %v3041
        %v3050 = vcombine.high %v3048, %v3048
        %v3052 = vunpack.c.l.s4 1966171168
        %v3053 = vunpack.c.0.s8 %v3052
        %v3054 = vlaneseq
        %v3055 = vshrl.u32 %v3054, 7
        %v3056 = vsub.s32 %v3053, %v3055
        %v3057 = vrot.slane %v3041, %v3056
        %v3059 = vunpack.c.l.s4 1966171168
        %v3060 = vunpack.c.0.s8 %v3059
        %v3061 = vlaneseq
        %v3062 = vshrl.u32 %v3061, 7
        %v3063 = vsub.s32 %v3060, %v3062
        %v3064 = vrot.slane %v3048, %v3063
        %v3066 = vunpack.c.l.s4 1966171168
        %v3067 = vunpack.c.0.s8 %v3066
        %v3068 = vlaneseq
        %v3069 = vshrl.u32 %v3068, 7
        %v3070 = vsub.s32 %v3067, %v3069
        %v3071 = vrot.slane %v3049, %v3070
        %v3073 = vunpack.c.l.s4 1966171168
        %v3074 = vunpack.c.0.s8 %v3073
        %v3075 = vlaneseq
        %v3076 = vshrl.u32 %v3075, 7
        %v3077 = vsub.s32 %v3074, %v3076
        %v3078 = vrot.slane %v3050, %v3077
        %v3079 = vcombine.high %v3057, %v3057
        %v3080 = vcombine.high %v3064, %v3064
        %v3081 = vcombine.high %v3071, %v3071
        %v3082 = vcombine.high %v3078, %v3078
        %v3083 = vcombine.high %v2979, %v2979
        %v3085 = vunpack.c.l.s4 1966171168
        %v3086 = vunpack.c.0.s8 %v3085
        %v3087 = vlaneseq
        %v3088 = vshrl.u32 %v3087, 7
        %v3089 = vsub.s32 %v3086, %v3088
        %v3090 = vrot.slane %v2979, %v3089
        %v3092 = vunpack.c.l.s4 1966171168
        %v3093 = vunpack.c.0.s8 %v3092
        %v3094 = vlaneseq
        %v3095 = vshrl.u32 %v3094, 7
        %v3096 = vsub.s32 %v3093, %v3095
        %v3097 = vrot.slane %v3083, %v3096
        %v3098 = vcombine.high %v3090, %v3090
        %v3099 = vcombine.high %v3097, %v3097
        %v3101 = vunpack.c.l.s4 1966171168
        %v3102 = vunpack.c.0.s8 %v3101
        %v3103 = vlaneseq
        %v3104 = vshrl.u32 %v3103, 7
        %v3105 = vsub.s32 %v3102, %v3104
        %v3106 = vrot.slane %v3090, %v3105
        %v3108 = vunpack.c.l.s4 1966171168
        %v3109 = vunpack.c.0.s8 %v3108
        %v3110 = vlaneseq
        %v3111 = vshrl.u32 %v3110, 7
        %v3112 = vsub.s32 %v3109, %v3111
        %v3113 = vrot.slane %v3097, %v3112
        %v3115 = vunpack.c.l.s4 1966171168
        %v3116 = vunpack.c.0.s8 %v3115
        %v3117 = vlaneseq
        %v3118 = vshrl.u32 %v3117, 7
        %v3119 = vsub.s32 %v3116, %v3118
        %v3120 = vrot.slane %v3098, %v3119
        %v3122 = vunpack.c.l.s4 1966171168
        %v3123 = vunpack.c.0.s8 %v3122
        %v3124 = vlaneseq
        %v3125 = vshrl.u32 %v3124, 7
        %v3126 = vsub.s32 %v3123, %v3125
        %v3127 = vrot.slane %v3099, %v3126
        %v3128 = vcombine.high %v3106, %v3106
        %v3129 = vcombine.high %v3113, %v3113
        %v3130 = vcombine.high %v3120, %v3120
        %v3131 = vcombine.high %v3127, %v3127
        %v3132 = vcombine.high %v2980, %v2980
        %v3134 = vunpack.c.l.s4 1966171168
        %v3135 = vunpack.c.0.s8 %v3134
        %v3136 = vlaneseq
        %v3137 = vshrl.u32 %v3136, 7
        %v3138 = vsub.s32 %v3135, %v3137
        %v3139 = vrot.slane %v2980, %v3138
        %v3141 = vunpack.c.l.s4 1966171168
        %v3142 = vunpack.c.0.s8 %v3141
        %v3143 = vlaneseq
        %v3144 = vshrl.u32 %v3143, 7
        %v3145 = vsub.s32 %v3142, %v3144
        %v3146 = vrot.slane %v3132, %v3145
        %v3147 = vcombine.high %v3139, %v3139
        %v3148 = vcombine.high %v3146, %v3146
        %v3150 = vunpack.c.l.s4 1966171168
        %v3151 = vunpack.c.0.s8 %v3150
        %v3152 = vlaneseq
        %v3153 = vshrl.u32 %v3152, 7
        %v3154 = vsub.s32 %v3151, %v3153
        %v3155 = vrot.slane %v3139, %v3154
        %v3157 = vunpack.c.l.s4 1966171168
        %v3158 = vunpack.c.0.s8 %v3157
        %v3159 = vlaneseq
        %v3160 = vshrl.u32 %v3159, 7
        %v3161 = vsub.s32 %v3158, %v3160
        %v3162 = vrot.slane %v3146, %v3161
        %v3164 = vunpack.c.l.s4 1966171168
        %v3165 = vunpack.c.0.s8 %v3164
        %v3166 = vlaneseq
        %v3167 = vshrl.u32 %v3166, 7
        %v3168 = vsub.s32 %v3165, %v3167
        %v3169 = vrot.slane %v3147, %v3168
        %v3171 = vunpack.c.l.s4 1966171168
        %v3172 = vunpack.c.0.s8 %v3171
        %v3173 = vlaneseq
        %v3174 = vshrl.u32 %v3173, 7
        %v3175 = vsub.s32 %v3172, %v3174
        %v3176 = vrot.slane %v3148, %v3175
        %v3177 = vcombine.high %v3155, %v3155
        %v3178 = vcombine.high %v3162, %v3162
        %v3179 = vcombine.high %v3169, %v3169
        %v3180 = vcombine.high %v3176, %v3176
        %3213 = vst.msk [vmem:[%s190 + $0x4] sm:$0x1] %vm820, %v3008
        %3214 = vst.msk [vmem:[%s190 + $0x14] sm:$0x1] %vm820, %v3022
        %3215 = vst.msk [vmem:[%s190 + $0x24] sm:$0x1] %vm820, %v3030
        %3216 = vst.msk [vmem:[%s190 + $0x34] sm:$0x1] %vm820, %v3032
        %3217 = vst.msk [vmem:[%s190 + $0x44] sm:$0x1] %vm820, %v3015
        %3218 = vst.msk [vmem:[%s190 + $0x54] sm:$0x1] %vm820, %v3029
        %3219 = vst.msk [vmem:[%s190 + $0x64] sm:$0x1] %vm820, %v3031
        %3220 = vst.msk [vmem:[%s190 + $0x74] sm:$0x1] %vm820, %v3033
        %3221 = vst.msk [vmem:[%s190 + $0x84] sm:$0x1] %vm820, %v3057
        %3222 = vst.msk [vmem:[%s190 + $0x94] sm:$0x1] %vm820, %v3071
        %3223 = vst.msk [vmem:[%s190 + $0xa4] sm:$0x1] %vm820, %v3079
        %3224 = vst.msk [vmem:[%s190 + $0xb4] sm:$0x1] %vm820, %v3081
        %3225 = vst.msk [vmem:[%s190 + $0xc4] sm:$0x1] %vm820, %v3064
        %3226 = vst.msk [vmem:[%s190 + $0xd4] sm:$0x1] %vm820, %v3078
        %3227 = vst.msk [vmem:[%s190 + $0xe4] sm:$0x1] %vm820, %v3080
        %3228 = vst.msk [vmem:[%s190 + $0xf4] sm:$0x1] %vm820, %v3082
        %3229 = vst.msk [vmem:[%s190 + $0x104] sm:$0x1] %vm820, %v3106
        %3230 = vst.msk [vmem:[%s190 + $0x114] sm:$0x1] %vm820, %v3120
        %3231 = vst.msk [vmem:[%s190 + $0x124] sm:$0x1] %vm820, %v3128
        %3232 = vst.msk [vmem:[%s190 + $0x134] sm:$0x1] %vm820, %v3130
        %3233 = vst.msk [vmem:[%s190 + $0x144] sm:$0x1] %vm820, %v3113
        %3234 = vst.msk [vmem:[%s190 + $0x154] sm:$0x1] %vm820, %v3127
        %3235 = vst.msk [vmem:[%s190 + $0x164] sm:$0x1] %vm820, %v3129
        %3236 = vst.msk [vmem:[%s190 + $0x174] sm:$0x1] %vm820, %v3131
        %3237 = vst.msk [vmem:[%s190 + $0x184] sm:$0x1] %vm820, %v3155
        %3238 = vst.msk [vmem:[%s190 + $0x194] sm:$0x1] %vm820, %v3169
        %3239 = vst.msk [vmem:[%s190 + $0x1a4] sm:$0x1] %vm820, %v3177
        %3240 = vst.msk [vmem:[%s190 + $0x1b4] sm:$0x1] %vm820, %v3179
        %3241 = vst.msk [vmem:[%s190 + $0x1c4] sm:$0x1] %vm820, %v3162
        %3242 = vst.msk [vmem:[%s190 + $0x1d4] sm:$0x1] %vm820, %v3176
        %3243 = vst.msk [vmem:[%s190 + $0x1e4] sm:$0x1] %vm820, %v3178
        %3244 = vst.msk [vmem:[%s190 + $0x1f4] sm:$0x1] %vm820, %v3180
        %v3245 = vld [vmem:[%s163 + $0x5] sm:$0x1]
        %v3246 = vld [vmem:[%s163 + $0x15] sm:$0x1]
        %v3247 = vld [vmem:[%s163 + $0x25] sm:$0x1]
        %v3248 = vld [vmem:[%s163 + $0x35] sm:$0x1]
        %v3249 = vld [vmem:[%s163 + $0x45] sm:$0x1]
        %v3250 = vld [vmem:[%s163 + $0x55] sm:$0x1]
        %v3251 = vld [vmem:[%s163 + $0x65] sm:$0x1]
        %v3252 = vld [vmem:[%s163 + $0x75] sm:$0x1]
        %v3261 = vrot.slane %v3246, 7
        %v3262 = vsel %vm217, %v3261, %v3245
        %v3263 = vrot.slane %v3247, 6
        %v3264 = vsel %vm220, %v3263, %v3262
        %v3265 = vrot.slane %v3248, 5
        %v3266 = vsel %vm223, %v3265, %v3264
        %v3267 = vrot.slane %v3249, 4
        %v3268 = vsel %vm226, %v3267, %v3266
        %v3269 = vrot.slane %v3250, 3
        %v3270 = vsel %vm229, %v3269, %v3268
        %v3271 = vrot.slane %v3251, 2
        %v3272 = vsel %vm232, %v3271, %v3270
        %v3273 = vrot.slane %v3252, 1
        %v3274 = vsel %vm235, %v3273, %v3272
        %3276 = vst.msk [vmem:[#allocation2] sm:$0xff] %vm238, %v3274
        %3277 = vrot.lane.b32.xlu0 %v3274, 127
        %v3278 = vpop.permute.xlu0 %3277
        %3280 = vst.msk [vmem:[#allocation2 + $0x8] sm:$0xff] %vm238, %v3278
        %3281 = vrot.lane.b32.xlu0 %v3274, 126
        %v3282 = vpop.permute.xlu0 %3281
        %3284 = vst.msk [vmem:[#allocation2 + $0x10] sm:$0xff] %vm238, %v3282
        %3285 = vrot.lane.b32.xlu0 %v3274, 125
        %v3286 = vpop.permute.xlu0 %3285
        %3288 = vst.msk [vmem:[#allocation2 + $0x18] sm:$0xff] %vm238, %v3286
        %3289 = vrot.lane.b32.xlu0 %v3274, 124
        %v3290 = vpop.permute.xlu0 %3289
        %3292 = vst.msk [vmem:[#allocation2 + $0x20] sm:$0xff] %vm238, %v3290
        %v3293 = vld [vmem:[%s163 + $0x6] sm:$0x1]
        %v3294 = vld [vmem:[%s163 + $0x16] sm:$0x1]
        %v3295 = vld [vmem:[%s163 + $0x26] sm:$0x1]
        %v3296 = vld [vmem:[%s163 + $0x36] sm:$0x1]
        %v3297 = vld [vmem:[%s163 + $0x46] sm:$0x1]
        %v3298 = vld [vmem:[%s163 + $0x56] sm:$0x1]
        %v3299 = vld [vmem:[%s163 + $0x66] sm:$0x1]
        %v3300 = vld [vmem:[%s163 + $0x76] sm:$0x1]
        %v3309 = vrot.slane %v3294, 7
        %v3310 = vsel %vm217, %v3309, %v3293
        %v3311 = vrot.slane %v3295, 6
        %v3312 = vsel %vm220, %v3311, %v3310
        %v3313 = vrot.slane %v3296, 5
        %v3314 = vsel %vm223, %v3313, %v3312
        %v3315 = vrot.slane %v3297, 4
        %v3316 = vsel %vm226, %v3315, %v3314
        %v3317 = vrot.slane %v3298, 3
        %v3318 = vsel %vm229, %v3317, %v3316
        %v3319 = vrot.slane %v3299, 2
        %v3320 = vsel %vm232, %v3319, %v3318
        %v3321 = vrot.slane %v3300, 1
        %v3322 = vsel %vm235, %v3321, %v3320
        %3324 = vst.msk [vmem:[#allocation2 + $0x28] sm:$0xff] %vm238, %v3322
        %3325 = vrot.lane.b32.xlu0 %v3322, 127
        %v3326 = vpop.permute.xlu0 %3325
        %3328 = vst.msk [vmem:[#allocation2 + $0x30] sm:$0xff] %vm238, %v3326
        %3329 = vrot.lane.b32.xlu0 %v3322, 126
        %v3330 = vpop.permute.xlu0 %3329
        %3332 = vst.msk [vmem:[#allocation2 + $0x38] sm:$0xff] %vm238, %v3330
        %3333 = vrot.lane.b32.xlu0 %v3322, 125
        %v3334 = vpop.permute.xlu0 %3333
        %3336 = vst.msk [vmem:[#allocation2 + $0x40] sm:$0xff] %vm238, %v3334
        %3337 = vrot.lane.b32.xlu0 %v3322, 124
        %v3338 = vpop.permute.xlu0 %3337
        %3340 = vst.msk [vmem:[#allocation2 + $0x48] sm:$0xff] %vm238, %v3338
        %v3341 = vld [vmem:[%s163 + $0x7] sm:$0x1]
        %v3342 = vld [vmem:[%s163 + $0x17] sm:$0x1]
        %v3343 = vld [vmem:[%s163 + $0x27] sm:$0x1]
        %v3344 = vld [vmem:[%s163 + $0x37] sm:$0x1]
        %v3345 = vld [vmem:[%s163 + $0x47] sm:$0x1]
        %v3346 = vld [vmem:[%s163 + $0x57] sm:$0x1]
        %v3347 = vld [vmem:[%s163 + $0x67] sm:$0x1]
        %v3348 = vld [vmem:[%s163 + $0x77] sm:$0x1]
        %v3357 = vrot.slane %v3342, 7
        %v3358 = vsel %vm217, %v3357, %v3341
        %v3359 = vrot.slane %v3343, 6
        %v3360 = vsel %vm220, %v3359, %v3358
        %v3361 = vrot.slane %v3344, 5
        %v3362 = vsel %vm223, %v3361, %v3360
        %v3363 = vrot.slane %v3345, 4
        %v3364 = vsel %vm226, %v3363, %v3362
        %v3365 = vrot.slane %v3346, 3
        %v3366 = vsel %vm229, %v3365, %v3364
        %v3367 = vrot.slane %v3347, 2
        %v3368 = vsel %vm232, %v3367, %v3366
        %v3369 = vrot.slane %v3348, 1
        %v3370 = vsel %vm235, %v3369, %v3368
        %3372 = vst.msk [vmem:[#allocation2 + $0x50] sm:$0xff] %vm238, %v3370
        %3373 = vrot.lane.b32.xlu0 %v3370, 127
        %v3374 = vpop.permute.xlu0 %3373
        %3376 = vst.msk [vmem:[#allocation2 + $0x58] sm:$0xff] %vm238, %v3374
        %3377 = vrot.lane.b32.xlu0 %v3370, 126
        %v3378 = vpop.permute.xlu0 %3377
        %3380 = vst.msk [vmem:[#allocation2 + $0x60] sm:$0xff] %vm238, %v3378
        %3381 = vrot.lane.b32.xlu0 %v3370, 125
        %v3382 = vpop.permute.xlu0 %3381
        %3384 = vst.msk [vmem:[#allocation2 + $0x68] sm:$0xff] %vm238, %v3382
        %3385 = vrot.lane.b32.xlu0 %v3370, 124
        %v3386 = vpop.permute.xlu0 %3385
        %3388 = vst.msk [vmem:[#allocation2 + $0x70] sm:$0xff] %vm238, %v3386
        %v3389 = vld [vmem:[%s163 + $0x8] sm:$0x1]
        %v3390 = vld [vmem:[%s163 + $0x18] sm:$0x1]
        %v3391 = vld [vmem:[%s163 + $0x28] sm:$0x1]
        %v3392 = vld [vmem:[%s163 + $0x38] sm:$0x1]
        %v3393 = vld [vmem:[%s163 + $0x48] sm:$0x1]
        %v3394 = vld [vmem:[%s163 + $0x58] sm:$0x1]
        %v3395 = vld [vmem:[%s163 + $0x68] sm:$0x1]
        %v3396 = vld [vmem:[%s163 + $0x78] sm:$0x1]
        %v3405 = vrot.slane %v3390, 7
        %v3406 = vsel %vm217, %v3405, %v3389
        %v3407 = vrot.slane %v3391, 6
        %v3408 = vsel %vm220, %v3407, %v3406
        %v3409 = vrot.slane %v3392, 5
        %v3410 = vsel %vm223, %v3409, %v3408
        %v3411 = vrot.slane %v3393, 4
        %v3412 = vsel %vm226, %v3411, %v3410
        %v3413 = vrot.slane %v3394, 3
        %v3414 = vsel %vm229, %v3413, %v3412
        %v3415 = vrot.slane %v3395, 2
        %v3416 = vsel %vm232, %v3415, %v3414
        %v3417 = vrot.slane %v3396, 1
        %v3418 = vsel %vm235, %v3417, %v3416
        %3420 = vst.msk [vmem:[#allocation2 + $0x78] sm:$0xff] %vm238, %v3418
        %3421 = vrot.lane.b32.xlu0 %v3418, 127
        %v3422 = vpop.permute.xlu0 %3421
        %3424 = vst.msk [vmem:[#allocation2 + $0x80] sm:$0xff] %vm238, %v3422
        %3425 = vrot.lane.b32.xlu0 %v3418, 126
        %v3426 = vpop.permute.xlu0 %3425
        %3428 = vst.msk [vmem:[#allocation2 + $0x88] sm:$0xff] %vm238, %v3426
        %3429 = vrot.lane.b32.xlu0 %v3418, 125
        %v3430 = vpop.permute.xlu0 %3429
        %3432 = vst.msk [vmem:[#allocation2 + $0x90] sm:$0xff] %vm238, %v3430
        %3433 = vrot.lane.b32.xlu0 %v3418, 124
        %v3434 = vpop.permute.xlu0 %3433
        %3436 = vst.msk [vmem:[#allocation2 + $0x98] sm:$0xff] %vm238, %v3434
        %v3437 = vld [vmem:[%s163 + $0x9] sm:$0x1]
        %v3438 = vld [vmem:[%s163 + $0x19] sm:$0x1]
        %v3439 = vld [vmem:[%s163 + $0x29] sm:$0x1]
        %v3440 = vld [vmem:[%s163 + $0x39] sm:$0x1]
        %v3441 = vld [vmem:[%s163 + $0x49] sm:$0x1]
        %v3442 = vld [vmem:[%s163 + $0x59] sm:$0x1]
        %v3443 = vld [vmem:[%s163 + $0x69] sm:$0x1]
        %v3444 = vld [vmem:[%s163 + $0x79] sm:$0x1]
        %v3453 = vrot.slane %v3438, 7
        %v3454 = vsel %vm217, %v3453, %v3437
        %v3455 = vrot.slane %v3439, 6
        %v3456 = vsel %vm220, %v3455, %v3454
        %v3457 = vrot.slane %v3440, 5
        %v3458 = vsel %vm223, %v3457, %v3456
        %v3459 = vrot.slane %v3441, 4
        %v3460 = vsel %vm226, %v3459, %v3458
        %v3461 = vrot.slane %v3442, 3
        %v3462 = vsel %vm229, %v3461, %v3460
        %v3463 = vrot.slane %v3443, 2
        %v3464 = vsel %vm232, %v3463, %v3462
        %v3465 = vrot.slane %v3444, 1
        %v3466 = vsel %vm235, %v3465, %v3464
        %3468 = vst.msk [vmem:[#allocation2 + $0xa0] sm:$0xff] %vm238, %v3466
        %3469 = vrot.lane.b32.xlu0 %v3466, 127
        %v3470 = vpop.permute.xlu0 %3469
        %3472 = vst.msk [vmem:[#allocation2 + $0xa8] sm:$0xff] %vm238, %v3470
        %3473 = vrot.lane.b32.xlu0 %v3466, 126
        %v3474 = vpop.permute.xlu0 %3473
        %3476 = vst.msk [vmem:[#allocation2 + $0xb0] sm:$0xff] %vm238, %v3474
        %3477 = vrot.lane.b32.xlu0 %v3466, 125
        %v3478 = vpop.permute.xlu0 %3477
        %3480 = vst.msk [vmem:[#allocation2 + $0xb8] sm:$0xff] %vm238, %v3478
        %3481 = vrot.lane.b32.xlu0 %v3466, 124
        %v3482 = vpop.permute.xlu0 %3481
        %3484 = vst.msk [vmem:[#allocation2 + $0xc0] sm:$0xff] %vm238, %v3482
        %v3485 = vld [vmem:[#allocation2] sm:$0xff]
        %v3486 = vld [vmem:[#allocation2 + $0x8] sm:$0xff]
        %v3487 = vld [vmem:[#allocation2 + $0x10] sm:$0xff]
        %v3488 = vld [vmem:[#allocation2 + $0x18] sm:$0xff]
        %v3489 = vld [vmem:[#allocation2 + $0x20] sm:$0xff]
        %v3490 = vld [vmem:[#allocation2 + $0x28] sm:$0xff]
        %v3491 = vld [vmem:[#allocation2 + $0x30] sm:$0xff]
        %v3492 = vld [vmem:[#allocation2 + $0x38] sm:$0xff]
        %v3493 = vld [vmem:[#allocation2 + $0x40] sm:$0xff]
        %v3494 = vld [vmem:[#allocation2 + $0x48] sm:$0xff]
        %v3495 = vld [vmem:[#allocation2 + $0x50] sm:$0xff]
        %v3496 = vld [vmem:[#allocation2 + $0x58] sm:$0xff]
        %v3497 = vld [vmem:[#allocation2 + $0x60] sm:$0xff]
        %v3498 = vld [vmem:[#allocation2 + $0x68] sm:$0xff]
        %v3499 = vld [vmem:[#allocation2 + $0x70] sm:$0xff]
        %v3500 = vld [vmem:[#allocation2 + $0x78] sm:$0xff]
        %v3501 = vld [vmem:[#allocation2 + $0x80] sm:$0xff]
        %v3502 = vld [vmem:[#allocation2 + $0x88] sm:$0xff]
        %v3503 = vld [vmem:[#allocation2 + $0x90] sm:$0xff]
        %v3504 = vld [vmem:[#allocation2 + $0x98] sm:$0xff]
        %v3505 = vld [vmem:[#allocation2 + $0xa0] sm:$0xff]
        %v3506 = vld [vmem:[#allocation2 + $0xa8] sm:$0xff]
        %v3507 = vld [vmem:[#allocation2 + $0xb0] sm:$0xff]
        %v3508 = vld [vmem:[#allocation2 + $0xb8] sm:$0xff]
        %v3509 = vld [vmem:[#allocation2 + $0xc0] sm:$0xff]
        %v3510 = vpack.c.bf16 %v3486, %v3485
        %v3511 = vpack.c.bf16 %v3488, %v3487
        %v3512 = vpack.c.bf16 %v3490, %v3489
        %v3513 = vpack.c.bf16 %v3492, %v3491
        %v3514 = vpack.c.bf16 %v3494, %v3493
        %v3515 = vpack.c.bf16 %v3496, %v3495
        %v3516 = vpack.c.bf16 %v3498, %v3497
        %v3517 = vpack.c.bf16 %v3500, %v3499
        %v3518 = vpack.c.bf16 %v3502, %v3501
        %v3519 = vpack.c.bf16 %v3504, %v3503
        %v3520 = vpack.c.bf16 %v3506, %v3505
        %v3521 = vpack.c.bf16 %v3508, %v3507
        %v3522 = vpack.c.bf16 %v3509, %v3509
        %v3524 = vsel %vm531, %v3522, 0
        %3526 = vmatprep.subr.bf16.mxu0 0
        %3527 = vmatpush1.bf16.msra.mxu0 %v3510
        %3528 = vmatprep.subr.bf16.mxu0 0
        %3529 = vmatpush1.bf16.msra.mxu0 %v3511
        %3530 = vmatprep.subr.bf16.mxu0 0
        %3531 = vmatpush1.bf16.msra.mxu0 %v3512
        %3532 = vmatprep.subr.bf16.mxu0 0
        %3533 = vmatpush1.bf16.msra.mxu0 %v3513
        %3534 = vmatprep.subr.bf16.mxu0 0
        %3535 = vmatpush1.bf16.msra.mxu0 %v3514
        %3536 = vmatprep.subr.bf16.mxu0 0
        %3537 = vmatpush1.bf16.msra.mxu0 %v3515
        %3538 = vmatprep.subr.bf16.mxu0 0
        %3539 = vmatpush1.bf16.msra.mxu0 %v3516
        %3540 = vmatprep.subr.bf16.mxu0 0
        %3541 = vmatpush1.bf16.msra.mxu0 %v3517
        %3542 = vmatprep.subr.bf16.mxu0 0
        %3543 = vmatpush1.bf16.msra.mxu0 %v3518
        %3544 = vmatprep.subr.bf16.mxu0 0
        %3545 = vmatpush1.bf16.msra.mxu0 %v3519
        %3546 = vmatprep.subr.bf16.mxu0 0
        %3547 = vmatpush1.bf16.msra.mxu0 %v3520
        %3548 = vmatprep.subr.bf16.mxu0 0
        %3549 = vmatpush1.bf16.msra.mxu0 %v3521
        %3550 = vmatprep.subr.bf16.mxu0 0
        %3551 = vmatpush1.bf16.msra.mxu0 %v3524
        %3552 = vmatprep.subr.bf16.mxu0 0
        %3553 = vmatpush1.bf16.msra.mxu0 0
        %3554 = vmatprep.subr.bf16.mxu0 0
        %3555 = vmatpush1.bf16.msra.mxu0 0
        %3556 = vmatprep.subr.bf16.mxu0 0
        %3557 = vmatpush1.bf16.msra.mxu0 0
        %3558 = vmatprep.mubr.bf16.mxu0 %v526
        %3559 = vmatmul.mubr.bf16.gmra.mrb[0].mxu0 %v518
        %v3560 = vpop.f32.mrb[0].mxu0
        %v3561 = vadd.f32 %v489, %v3560
        %v3562 = vpop.f32.mrb[0].mxu0
        %v3563 = vpop.f32.mrb[0].mxu0
        %v3564 = vadd.f32 %v494, %v3563
        %v3565 = vpop.f32.mrb[0].mxu0
        %3566 = vmatprep.mubr.bf16.mxu0 %v529
        %3567 = vmatmul.mubr.bf16.gmra.mrb[0].mxu0 %v520
        %v3568 = vpop.f32.mrb[0].mxu0
        %v3569 = vadd.f32 %v499, %v3568
        %v3570 = vpop.f32.mrb[0].mxu0
        %v3571 = vpop.f32.mrb[0].mxu0
        %v3572 = vadd.f32 %v504, %v3571
        %v3573 = vpop.f32.mrb[0].mxu0
        %3574 = vdwg.mxu0
        %v3575 = vmax.f32 %v3561, 0.0
        %v3576 = vmax.f32 %v3564, 0.0
        %v3577 = vmax.f32 %v3569, 0.0
        %v3578 = vmax.f32 %v3572, 0.0
        %v3583 = vcombine.high %v3575, %v3575
        %v3585 = vunpack.c.l.s4 1966171168
        %v3586 = vunpack.c.0.s8 %v3585
        %v3587 = vlaneseq
        %v3588 = vshrl.u32 %v3587, 7
        %v3589 = vsub.s32 %v3586, %v3588
        %v3590 = vrot.slane %v3575, %v3589
        %v3592 = vunpack.c.l.s4 1966171168
        %v3593 = vunpack.c.0.s8 %v3592
        %v3594 = vlaneseq
        %v3595 = vshrl.u32 %v3594, 7
        %v3596 = vsub.s32 %v3593, %v3595
        %v3597 = vrot.slane %v3583, %v3596
        %v3598 = vcombine.high %v3590, %v3590
        %v3599 = vcombine.high %v3597, %v3597
        %v3601 = vunpack.c.l.s4 1966171168
        %v3602 = vunpack.c.0.s8 %v3601
        %v3603 = vlaneseq
        %v3604 = vshrl.u32 %v3603, 7
        %v3605 = vsub.s32 %v3602, %v3604
        %v3606 = vrot.slane %v3590, %v3605
        %v3608 = vunpack.c.l.s4 1966171168
        %v3609 = vunpack.c.0.s8 %v3608
        %v3610 = vlaneseq
        %v3611 = vshrl.u32 %v3610, 7
        %v3612 = vsub.s32 %v3609, %v3611
        %v3613 = vrot.slane %v3597, %v3612
        %v3615 = vunpack.c.l.s4 1966171168
        %v3616 = vunpack.c.0.s8 %v3615
        %v3617 = vlaneseq
        %v3618 = vshrl.u32 %v3617, 7
        %v3619 = vsub.s32 %v3616, %v3618
        %v3620 = vrot.slane %v3598, %v3619
        %v3622 = vunpack.c.l.s4 1966171168
        %v3623 = vunpack.c.0.s8 %v3622
        %v3624 = vlaneseq
        %v3625 = vshrl.u32 %v3624, 7
        %v3626 = vsub.s32 %v3623, %v3625
        %v3627 = vrot.slane %v3599, %v3626
        %v3628 = vcombine.high %v3606, %v3606
        %v3629 = vcombine.high %v3613, %v3613
        %v3630 = vcombine.high %v3620, %v3620
        %v3631 = vcombine.high %v3627, %v3627
        %v3632 = vcombine.high %v3576, %v3576
        %v3634 = vunpack.c.l.s4 1966171168
        %v3635 = vunpack.c.0.s8 %v3634
        %v3636 = vlaneseq
        %v3637 = vshrl.u32 %v3636, 7
        %v3638 = vsub.s32 %v3635, %v3637
        %v3639 = vrot.slane %v3576, %v3638
        %v3641 = vunpack.c.l.s4 1966171168
        %v3642 = vunpack.c.0.s8 %v3641
        %v3643 = vlaneseq
        %v3644 = vshrl.u32 %v3643, 7
        %v3645 = vsub.s32 %v3642, %v3644
        %v3646 = vrot.slane %v3632, %v3645
        %v3647 = vcombine.high %v3639, %v3639
        %v3648 = vcombine.high %v3646, %v3646
        %v3650 = vunpack.c.l.s4 1966171168
        %v3651 = vunpack.c.0.s8 %v3650
        %v3652 = vlaneseq
        %v3653 = vshrl.u32 %v3652, 7
        %v3654 = vsub.s32 %v3651, %v3653
        %v3655 = vrot.slane %v3639, %v3654
        %v3657 = vunpack.c.l.s4 1966171168
        %v3658 = vunpack.c.0.s8 %v3657
        %v3659 = vlaneseq
        %v3660 = vshrl.u32 %v3659, 7
        %v3661 = vsub.s32 %v3658, %v3660
        %v3662 = vrot.slane %v3646, %v3661
        %v3664 = vunpack.c.l.s4 1966171168
        %v3665 = vunpack.c.0.s8 %v3664
        %v3666 = vlaneseq
        %v3667 = vshrl.u32 %v3666, 7
        %v3668 = vsub.s32 %v3665, %v3667
        %v3669 = vrot.slane %v3647, %v3668
        %v3671 = vunpack.c.l.s4 1966171168
        %v3672 = vunpack.c.0.s8 %v3671
        %v3673 = vlaneseq
        %v3674 = vshrl.u32 %v3673, 7
        %v3675 = vsub.s32 %v3672, %v3674
        %v3676 = vrot.slane %v3648, %v3675
        %v3677 = vcombine.high %v3655, %v3655
        %v3678 = vcombine.high %v3662, %v3662
        %v3679 = vcombine.high %v3669, %v3669
        %v3680 = vcombine.high %v3676, %v3676
        %v3681 = vcombine.high %v3577, %v3577
        %v3683 = vunpack.c.l.s4 1966171168
        %v3684 = vunpack.c.0.s8 %v3683
        %v3685 = vlaneseq
        %v3686 = vshrl.u32 %v3685, 7
        %v3687 = vsub.s32 %v3684, %v3686
        %v3688 = vrot.slane %v3577, %v3687
        %v3690 = vunpack.c.l.s4 1966171168
        %v3691 = vunpack.c.0.s8 %v3690
        %v3692 = vlaneseq
        %v3693 = vshrl.u32 %v3692, 7
        %v3694 = vsub.s32 %v3691, %v3693
        %v3695 = vrot.slane %v3681, %v3694
        %v3696 = vcombine.high %v3688, %v3688
        %v3697 = vcombine.high %v3695, %v3695
        %v3699 = vunpack.c.l.s4 1966171168
        %v3700 = vunpack.c.0.s8 %v3699
        %v3701 = vlaneseq
        %v3702 = vshrl.u32 %v3701, 7
        %v3703 = vsub.s32 %v3700, %v3702
        %v3704 = vrot.slane %v3688, %v3703
        %v3706 = vunpack.c.l.s4 1966171168
        %v3707 = vunpack.c.0.s8 %v3706
        %v3708 = vlaneseq
        %v3709 = vshrl.u32 %v3708, 7
        %v3710 = vsub.s32 %v3707, %v3709
        %v3711 = vrot.slane %v3695, %v3710
        %v3713 = vunpack.c.l.s4 1966171168
        %v3714 = vunpack.c.0.s8 %v3713
        %v3715 = vlaneseq
        %v3716 = vshrl.u32 %v3715, 7
        %v3717 = vsub.s32 %v3714, %v3716
        %v3718 = vrot.slane %v3696, %v3717
        %v3720 = vunpack.c.l.s4 1966171168
        %v3721 = vunpack.c.0.s8 %v3720
        %v3722 = vlaneseq
        %v3723 = vshrl.u32 %v3722, 7
        %v3724 = vsub.s32 %v3721, %v3723
        %v3725 = vrot.slane %v3697, %v3724
        %v3726 = vcombine.high %v3704, %v3704
        %v3727 = vcombine.high %v3711, %v3711
        %v3728 = vcombine.high %v3718, %v3718
        %v3729 = vcombine.high %v3725, %v3725
        %v3730 = vcombine.high %v3578, %v3578
        %v3732 = vunpack.c.l.s4 1966171168
        %v3733 = vunpack.c.0.s8 %v3732
        %v3734 = vlaneseq
        %v3735 = vshrl.u32 %v3734, 7
        %v3736 = vsub.s32 %v3733, %v3735
        %v3737 = vrot.slane %v3578, %v3736
        %v3739 = vunpack.c.l.s4 1966171168
        %v3740 = vunpack.c.0.s8 %v3739
        %v3741 = vlaneseq
        %v3742 = vshrl.u32 %v3741, 7
        %v3743 = vsub.s32 %v3740, %v3742
        %v3744 = vrot.slane %v3730, %v3743
        %v3745 = vcombine.high %v3737, %v3737
        %v3746 = vcombine.high %v3744, %v3744
        %v3748 = vunpack.c.l.s4 1966171168
        %v3749 = vunpack.c.0.s8 %v3748
        %v3750 = vlaneseq
        %v3751 = vshrl.u32 %v3750, 7
        %v3752 = vsub.s32 %v3749, %v3751
        %v3753 = vrot.slane %v3737, %v3752
        %v3755 = vunpack.c.l.s4 1966171168
        %v3756 = vunpack.c.0.s8 %v3755
        %v3757 = vlaneseq
        %v3758 = vshrl.u32 %v3757, 7
        %v3759 = vsub.s32 %v3756, %v3758
        %v3760 = vrot.slane %v3744, %v3759
        %v3762 = vunpack.c.l.s4 1966171168
        %v3763 = vunpack.c.0.s8 %v3762
        %v3764 = vlaneseq
        %v3765 = vshrl.u32 %v3764, 7
        %v3766 = vsub.s32 %v3763, %v3765
        %v3767 = vrot.slane %v3745, %v3766
        %v3769 = vunpack.c.l.s4 1966171168
        %v3770 = vunpack.c.0.s8 %v3769
        %v3771 = vlaneseq
        %v3772 = vshrl.u32 %v3771, 7
        %v3773 = vsub.s32 %v3770, %v3772
        %v3774 = vrot.slane %v3746, %v3773
        %v3775 = vcombine.high %v3753, %v3753
        %v3776 = vcombine.high %v3760, %v3760
        %v3777 = vcombine.high %v3767, %v3767
        %v3778 = vcombine.high %v3774, %v3774
        %3811 = vst.msk [vmem:[%s190 + $0x5] sm:$0x1] %vm820, %v3606
        %3812 = vst.msk [vmem:[%s190 + $0x15] sm:$0x1] %vm820, %v3620
        %3813 = vst.msk [vmem:[%s190 + $0x25] sm:$0x1] %vm820, %v3628
        %3814 = vst.msk [vmem:[%s190 + $0x35] sm:$0x1] %vm820, %v3630
        %3815 = vst.msk [vmem:[%s190 + $0x45] sm:$0x1] %vm820, %v3613
        %3816 = vst.msk [vmem:[%s190 + $0x55] sm:$0x1] %vm820, %v3627
        %3817 = vst.msk [vmem:[%s190 + $0x65] sm:$0x1] %vm820, %v3629
        %3818 = vst.msk [vmem:[%s190 + $0x75] sm:$0x1] %vm820, %v3631
        %3819 = vst.msk [vmem:[%s190 + $0x85] sm:$0x1] %vm820, %v3655
        %3820 = vst.msk [vmem:[%s190 + $0x95] sm:$0x1] %vm820, %v3669
        %3821 = vst.msk [vmem:[%s190 + $0xa5] sm:$0x1] %vm820, %v3677
        %3822 = vst.msk [vmem:[%s190 + $0xb5] sm:$0x1] %vm820, %v3679
        %3823 = vst.msk [vmem:[%s190 + $0xc5] sm:$0x1] %vm820, %v3662
        %3824 = vst.msk [vmem:[%s190 + $0xd5] sm:$0x1] %vm820, %v3676
        %3825 = vst.msk [vmem:[%s190 + $0xe5] sm:$0x1] %vm820, %v3678
        %3826 = vst.msk [vmem:[%s190 + $0xf5] sm:$0x1] %vm820, %v3680
        %3827 = vst.msk [vmem:[%s190 + $0x105] sm:$0x1] %vm820, %v3704
        %3828 = vst.msk [vmem:[%s190 + $0x115] sm:$0x1] %vm820, %v3718
        %3829 = vst.msk [vmem:[%s190 + $0x125] sm:$0x1] %vm820, %v3726
        %3830 = vst.msk [vmem:[%s190 + $0x135] sm:$0x1] %vm820, %v3728
        %3831 = vst.msk [vmem:[%s190 + $0x145] sm:$0x1] %vm820, %v3711
        %3832 = vst.msk [vmem:[%s190 + $0x155] sm:$0x1] %vm820, %v3725
        %3833 = vst.msk [vmem:[%s190 + $0x165] sm:$0x1] %vm820, %v3727
        %3834 = vst.msk [vmem:[%s190 + $0x175] sm:$0x1] %vm820, %v3729
        %3835 = vst.msk [vmem:[%s190 + $0x185] sm:$0x1] %vm820, %v3753
        %3836 = vst.msk [vmem:[%s190 + $0x195] sm:$0x1] %vm820, %v3767
        %3837 = vst.msk [vmem:[%s190 + $0x1a5] sm:$0x1] %vm820, %v3775
        %3838 = vst.msk [vmem:[%s190 + $0x1b5] sm:$0x1] %vm820, %v3777
        %3839 = vst.msk [vmem:[%s190 + $0x1c5] sm:$0x1] %vm820, %v3760
        %3840 = vst.msk [vmem:[%s190 + $0x1d5] sm:$0x1] %vm820, %v3774
        %3841 = vst.msk [vmem:[%s190 + $0x1e5] sm:$0x1] %vm820, %v3776
        %3842 = vst.msk [vmem:[%s190 + $0x1f5] sm:$0x1] %vm820, %v3778
        %v3843 = vld [vmem:[%s163 + $0x6] sm:$0x1]
        %v3844 = vld [vmem:[%s163 + $0x16] sm:$0x1]
        %v3845 = vld [vmem:[%s163 + $0x26] sm:$0x1]
        %v3846 = vld [vmem:[%s163 + $0x36] sm:$0x1]
        %v3847 = vld [vmem:[%s163 + $0x46] sm:$0x1]
        %v3848 = vld [vmem:[%s163 + $0x56] sm:$0x1]
        %v3849 = vld [vmem:[%s163 + $0x66] sm:$0x1]
        %v3850 = vld [vmem:[%s163 + $0x76] sm:$0x1]
        %v3859 = vrot.slane %v3844, 7
        %v3860 = vsel %vm217, %v3859, %v3843
        %v3861 = vrot.slane %v3845, 6
        %v3862 = vsel %vm220, %v3861, %v3860
        %v3863 = vrot.slane %v3846, 5
        %v3864 = vsel %vm223, %v3863, %v3862
        %v3865 = vrot.slane %v3847, 4
        %v3866 = vsel %vm226, %v3865, %v3864
        %v3867 = vrot.slane %v3848, 3
        %v3868 = vsel %vm229, %v3867, %v3866
        %v3869 = vrot.slane %v3849, 2
        %v3870 = vsel %vm232, %v3869, %v3868
        %v3871 = vrot.slane %v3850, 1
        %v3872 = vsel %vm235, %v3871, %v3870
        %3874 = vst.msk [vmem:[#allocation2] sm:$0xff] %vm238, %v3872
        %3875 = vrot.lane.b32.xlu0 %v3872, 127
        %v3876 = vpop.permute.xlu0 %3875
        %3878 = vst.msk [vmem:[#allocation2 + $0x8] sm:$0xff] %vm238, %v3876
        %3879 = vrot.lane.b32.xlu0 %v3872, 126
        %v3880 = vpop.permute.xlu0 %3879
        %3882 = vst.msk [vmem:[#allocation2 + $0x10] sm:$0xff] %vm238, %v3880
        %3883 = vrot.lane.b32.xlu0 %v3872, 125
        %v3884 = vpop.permute.xlu0 %3883
        %3886 = vst.msk [vmem:[#allocation2 + $0x18] sm:$0xff] %vm238, %v3884
        %3887 = vrot.lane.b32.xlu0 %v3872, 124
        %v3888 = vpop.permute.xlu0 %3887
        %3890 = vst.msk [vmem:[#allocation2 + $0x20] sm:$0xff] %vm238, %v3888
        %v3891 = vld [vmem:[%s163 + $0x7] sm:$0x1]
        %v3892 = vld [vmem:[%s163 + $0x17] sm:$0x1]
        %v3893 = vld [vmem:[%s163 + $0x27] sm:$0x1]
        %v3894 = vld [vmem:[%s163 + $0x37] sm:$0x1]
        %v3895 = vld [vmem:[%s163 + $0x47] sm:$0x1]
        %v3896 = vld [vmem:[%s163 + $0x57] sm:$0x1]
        %v3897 = vld [vmem:[%s163 + $0x67] sm:$0x1]
        %v3898 = vld [vmem:[%s163 + $0x77] sm:$0x1]
        %v3907 = vrot.slane %v3892, 7
        %v3908 = vsel %vm217, %v3907, %v3891
        %v3909 = vrot.slane %v3893, 6
        %v3910 = vsel %vm220, %v3909, %v3908
        %v3911 = vrot.slane %v3894, 5
        %v3912 = vsel %vm223, %v3911, %v3910
        %v3913 = vrot.slane %v3895, 4
        %v3914 = vsel %vm226, %v3913, %v3912
        %v3915 = vrot.slane %v3896, 3
        %v3916 = vsel %vm229, %v3915, %v3914
        %v3917 = vrot.slane %v3897, 2
        %v3918 = vsel %vm232, %v3917, %v3916
        %v3919 = vrot.slane %v3898, 1
        %v3920 = vsel %vm235, %v3919, %v3918
        %3922 = vst.msk [vmem:[#allocation2 + $0x28] sm:$0xff] %vm238, %v3920
        %3923 = vrot.lane.b32.xlu0 %v3920, 127
        %v3924 = vpop.permute.xlu0 %3923
        %3926 = vst.msk [vmem:[#allocation2 + $0x30] sm:$0xff] %vm238, %v3924
        %3927 = vrot.lane.b32.xlu0 %v3920, 126
        %v3928 = vpop.permute.xlu0 %3927
        %3930 = vst.msk [vmem:[#allocation2 + $0x38] sm:$0xff] %vm238, %v3928
        %3931 = vrot.lane.b32.xlu0 %v3920, 125
        %v3932 = vpop.permute.xlu0 %3931
        %3934 = vst.msk [vmem:[#allocation2 + $0x40] sm:$0xff] %vm238, %v3932
        %3935 = vrot.lane.b32.xlu0 %v3920, 124
        %v3936 = vpop.permute.xlu0 %3935
        %3938 = vst.msk [vmem:[#allocation2 + $0x48] sm:$0xff] %vm238, %v3936
        %v3939 = vld [vmem:[%s163 + $0x8] sm:$0x1]
        %v3940 = vld [vmem:[%s163 + $0x18] sm:$0x1]
        %v3941 = vld [vmem:[%s163 + $0x28] sm:$0x1]
        %v3942 = vld [vmem:[%s163 + $0x38] sm:$0x1]
        %v3943 = vld [vmem:[%s163 + $0x48] sm:$0x1]
        %v3944 = vld [vmem:[%s163 + $0x58] sm:$0x1]
        %v3945 = vld [vmem:[%s163 + $0x68] sm:$0x1]
        %v3946 = vld [vmem:[%s163 + $0x78] sm:$0x1]
        %v3955 = vrot.slane %v3940, 7
        %v3956 = vsel %vm217, %v3955, %v3939
        %v3957 = vrot.slane %v3941, 6
        %v3958 = vsel %vm220, %v3957, %v3956
        %v3959 = vrot.slane %v3942, 5
        %v3960 = vsel %vm223, %v3959, %v3958
        %v3961 = vrot.slane %v3943, 4
        %v3962 = vsel %vm226, %v3961, %v3960
        %v3963 = vrot.slane %v3944, 3
        %v3964 = vsel %vm229, %v3963, %v3962
        %v3965 = vrot.slane %v3945, 2
        %v3966 = vsel %vm232, %v3965, %v3964
        %v3967 = vrot.slane %v3946, 1
        %v3968 = vsel %vm235, %v3967, %v3966
        %3970 = vst.msk [vmem:[#allocation2 + $0x50] sm:$0xff] %vm238, %v3968
        %3971 = vrot.lane.b32.xlu0 %v3968, 127
        %v3972 = vpop.permute.xlu0 %3971
        %3974 = vst.msk [vmem:[#allocation2 + $0x58] sm:$0xff] %vm238, %v3972
        %3975 = vrot.lane.b32.xlu0 %v3968, 126
        %v3976 = vpop.permute.xlu0 %3975
        %3978 = vst.msk [vmem:[#allocation2 + $0x60] sm:$0xff] %vm238, %v3976
        %3979 = vrot.lane.b32.xlu0 %v3968, 125
        %v3980 = vpop.permute.xlu0 %3979
        %3982 = vst.msk [vmem:[#allocation2 + $0x68] sm:$0xff] %vm238, %v3980
        %3983 = vrot.lane.b32.xlu0 %v3968, 124
        %v3984 = vpop.permute.xlu0 %3983
        %3986 = vst.msk [vmem:[#allocation2 + $0x70] sm:$0xff] %vm238, %v3984
        %v3987 = vld [vmem:[%s163 + $0x9] sm:$0x1]
        %v3988 = vld [vmem:[%s163 + $0x19] sm:$0x1]
        %v3989 = vld [vmem:[%s163 + $0x29] sm:$0x1]
        %v3990 = vld [vmem:[%s163 + $0x39] sm:$0x1]
        %v3991 = vld [vmem:[%s163 + $0x49] sm:$0x1]
        %v3992 = vld [vmem:[%s163 + $0x59] sm:$0x1]
        %v3993 = vld [vmem:[%s163 + $0x69] sm:$0x1]
        %v3994 = vld [vmem:[%s163 + $0x79] sm:$0x1]
        %v4003 = vrot.slane %v3988, 7
        %v4004 = vsel %vm217, %v4003, %v3987
        %v4005 = vrot.slane %v3989, 6
        %v4006 = vsel %vm220, %v4005, %v4004
        %v4007 = vrot.slane %v3990, 5
        %v4008 = vsel %vm223, %v4007, %v4006
        %v4009 = vrot.slane %v3991, 4
        %v4010 = vsel %vm226, %v4009, %v4008
        %v4011 = vrot.slane %v3992, 3
        %v4012 = vsel %vm229, %v4011, %v4010
        %v4013 = vrot.slane %v3993, 2
        %v4014 = vsel %vm232, %v4013, %v4012
        %v4015 = vrot.slane %v3994, 1
        %v4016 = vsel %vm235, %v4015, %v4014
        %4018 = vst.msk [vmem:[#allocation2 + $0x78] sm:$0xff] %vm238, %v4016
        %4019 = vrot.lane.b32.xlu0 %v4016, 127
        %v4020 = vpop.permute.xlu0 %4019
        %4022 = vst.msk [vmem:[#allocation2 + $0x80] sm:$0xff] %vm238, %v4020
        %4023 = vrot.lane.b32.xlu0 %v4016, 126
        %v4024 = vpop.permute.xlu0 %4023
        %4026 = vst.msk [vmem:[#allocation2 + $0x88] sm:$0xff] %vm238, %v4024
        %4027 = vrot.lane.b32.xlu0 %v4016, 125
        %v4028 = vpop.permute.xlu0 %4027
        %4030 = vst.msk [vmem:[#allocation2 + $0x90] sm:$0xff] %vm238, %v4028
        %4031 = vrot.lane.b32.xlu0 %v4016, 124
        %v4032 = vpop.permute.xlu0 %4031
        %4034 = vst.msk [vmem:[#allocation2 + $0x98] sm:$0xff] %vm238, %v4032
        %v4035 = vld [vmem:[%s163 + $0xa] sm:$0x1]
        %v4036 = vld [vmem:[%s163 + $0x1a] sm:$0x1]
        %v4037 = vld [vmem:[%s163 + $0x2a] sm:$0x1]
        %v4038 = vld [vmem:[%s163 + $0x3a] sm:$0x1]
        %v4039 = vld [vmem:[%s163 + $0x4a] sm:$0x1]
        %v4040 = vld [vmem:[%s163 + $0x5a] sm:$0x1]
        %v4041 = vld [vmem:[%s163 + $0x6a] sm:$0x1]
        %v4042 = vld [vmem:[%s163 + $0x7a] sm:$0x1]
        %v4051 = vrot.slane %v4036, 7
        %v4052 = vsel %vm217, %v4051, %v4035
        %v4053 = vrot.slane %v4037, 6
        %v4054 = vsel %vm220, %v4053, %v4052
        %v4055 = vrot.slane %v4038, 5
        %v4056 = vsel %vm223, %v4055, %v4054
        %v4057 = vrot.slane %v4039, 4
        %v4058 = vsel %vm226, %v4057, %v4056
        %v4059 = vrot.slane %v4040, 3
        %v4060 = vsel %vm229, %v4059, %v4058
        %v4061 = vrot.slane %v4041, 2
        %v4062 = vsel %vm232, %v4061, %v4060
        %v4063 = vrot.slane %v4042, 1
        %v4064 = vsel %vm235, %v4063, %v4062
        %4066 = vst.msk [vmem:[#allocation2 + $0xa0] sm:$0xff] %vm238, %v4064
        %4067 = vrot.lane.b32.xlu0 %v4064, 127
        %v4068 = vpop.permute.xlu0 %4067
        %4070 = vst.msk [vmem:[#allocation2 + $0xa8] sm:$0xff] %vm238, %v4068
        %4071 = vrot.lane.b32.xlu0 %v4064, 126
        %v4072 = vpop.permute.xlu0 %4071
        %4074 = vst.msk [vmem:[#allocation2 + $0xb0] sm:$0xff] %vm238, %v4072
        %4075 = vrot.lane.b32.xlu0 %v4064, 125
        %v4076 = vpop.permute.xlu0 %4075
        %4078 = vst.msk [vmem:[#allocation2 + $0xb8] sm:$0xff] %vm238, %v4076
        %4079 = vrot.lane.b32.xlu0 %v4064, 124
        %v4080 = vpop.permute.xlu0 %4079
        %4082 = vst.msk [vmem:[#allocation2 + $0xc0] sm:$0xff] %vm238, %v4080
        %v4083 = vld [vmem:[#allocation2] sm:$0xff]
        %v4084 = vld [vmem:[#allocation2 + $0x8] sm:$0xff]
        %v4085 = vld [vmem:[#allocation2 + $0x10] sm:$0xff]
        %v4086 = vld [vmem:[#allocation2 + $0x18] sm:$0xff]
        %v4087 = vld [vmem:[#allocation2 + $0x20] sm:$0xff]
        %v4088 = vld [vmem:[#allocation2 + $0x28] sm:$0xff]
        %v4089 = vld [vmem:[#allocation2 + $0x30] sm:$0xff]
        %v4090 = vld [vmem:[#allocation2 + $0x38] sm:$0xff]
        %v4091 = vld [vmem:[#allocation2 + $0x40] sm:$0xff]
        %v4092 = vld [vmem:[#allocation2 + $0x48] sm:$0xff]
        %v4093 = vld [vmem:[#allocation2 + $0x50] sm:$0xff]
        %v4094 = vld [vmem:[#allocation2 + $0x58] sm:$0xff]
        %v4095 = vld [vmem:[#allocation2 + $0x60] sm:$0xff]
        %v4096 = vld [vmem:[#allocation2 + $0x68] sm:$0xff]
        %v4097 = vld [vmem:[#allocation2 + $0x70] sm:$0xff]
        %v4098 = vld [vmem:[#allocation2 + $0x78] sm:$0xff]
        %v4099 = vld [vmem:[#allocation2 + $0x80] sm:$0xff]
        %v4100 = vld [vmem:[#allocation2 + $0x88] sm:$0xff]
        %v4101 = vld [vmem:[#allocation2 + $0x90] sm:$0xff]
        %v4102 = vld [vmem:[#allocation2 + $0x98] sm:$0xff]
        %v4103 = vld [vmem:[#allocation2 + $0xa0] sm:$0xff]
        %v4104 = vld [vmem:[#allocation2 + $0xa8] sm:$0xff]
        %v4105 = vld [vmem:[#allocation2 + $0xb0] sm:$0xff]
        %v4106 = vld [vmem:[#allocation2 + $0xb8] sm:$0xff]
        %v4107 = vld [vmem:[#allocation2 + $0xc0] sm:$0xff]
        %v4108 = vpack.c.bf16 %v4084, %v4083
        %v4109 = vpack.c.bf16 %v4086, %v4085
        %v4110 = vpack.c.bf16 %v4088, %v4087
        %v4111 = vpack.c.bf16 %v4090, %v4089
        %v4112 = vpack.c.bf16 %v4092, %v4091
        %v4113 = vpack.c.bf16 %v4094, %v4093
        %v4114 = vpack.c.bf16 %v4096, %v4095
        %v4115 = vpack.c.bf16 %v4098, %v4097
        %v4116 = vpack.c.bf16 %v4100, %v4099
        %v4117 = vpack.c.bf16 %v4102, %v4101
        %v4118 = vpack.c.bf16 %v4104, %v4103
        %v4119 = vpack.c.bf16 %v4106, %v4105
        %v4120 = vpack.c.bf16 %v4107, %v4107
        %v4122 = vsel %vm531, %v4120, 0
        %4124 = vmatprep.subr.bf16.mxu0 0
        %4125 = vmatpush1.bf16.msra.mxu0 %v4108
        %4126 = vmatprep.subr.bf16.mxu0 0
        %4127 = vmatpush1.bf16.msra.mxu0 %v4109
        %4128 = vmatprep.subr.bf16.mxu0 0
        %4129 = vmatpush1.bf16.msra.mxu0 %v4110
        %4130 = vmatprep.subr.bf16.mxu0 0
        %4131 = vmatpush1.bf16.msra.mxu0 %v4111
        %4132 = vmatprep.subr.bf16.mxu0 0
        %4133 = vmatpush1.bf16.msra.mxu0 %v4112
        %4134 = vmatprep.subr.bf16.mxu0 0
        %4135 = vmatpush1.bf16.msra.mxu0 %v4113
        %4136 = vmatprep.subr.bf16.mxu0 0
        %4137 = vmatpush1.bf16.msra.mxu0 %v4114
        %4138 = vmatprep.subr.bf16.mxu0 0
        %4139 = vmatpush1.bf16.msra.mxu0 %v4115
        %4140 = vmatprep.subr.bf16.mxu0 0
        %4141 = vmatpush1.bf16.msra.mxu0 %v4116
        %4142 = vmatprep.subr.bf16.mxu0 0
        %4143 = vmatpush1.bf16.msra.mxu0 %v4117
        %4144 = vmatprep.subr.bf16.mxu0 0
        %4145 = vmatpush1.bf16.msra.mxu0 %v4118
        %4146 = vmatprep.subr.bf16.mxu0 0
        %4147 = vmatpush1.bf16.msra.mxu0 %v4119
        %4148 = vmatprep.subr.bf16.mxu0 0
        %4149 = vmatpush1.bf16.msra.mxu0 %v4122
        %4150 = vmatprep.subr.bf16.mxu0 0
        %4151 = vmatpush1.bf16.msra.mxu0 0
        %4152 = vmatprep.subr.bf16.mxu0 0
        %4153 = vmatpush1.bf16.msra.mxu0 0
        %4154 = vmatprep.subr.bf16.mxu0 0
        %4155 = vmatpush1.bf16.msra.mxu0 0
        %4156 = vmatprep.mubr.bf16.mxu0 %v526
        %4157 = vmatmul.mubr.bf16.gmra.mrb[0].mxu0 %v518
        %v4158 = vpop.f32.mrb[0].mxu0
        %v4159 = vadd.f32 %v489, %v4158
        %v4160 = vpop.f32.mrb[0].mxu0
        %v4161 = vpop.f32.mrb[0].mxu0
        %v4162 = vadd.f32 %v494, %v4161
        %v4163 = vpop.f32.mrb[0].mxu0
        %4164 = vmatprep.mubr.bf16.mxu0 %v529
        %4165 = vmatmul.mubr.bf16.gmra.mrb[0].mxu0 %v520
        %v4166 = vpop.f32.mrb[0].mxu0
        %v4167 = vadd.f32 %v499, %v4166
        %v4168 = vpop.f32.mrb[0].mxu0
        %v4169 = vpop.f32.mrb[0].mxu0
        %v4170 = vadd.f32 %v504, %v4169
        %v4171 = vpop.f32.mrb[0].mxu0
        %4172 = vdwg.mxu0
        %v4173 = vmax.f32 %v4159, 0.0
        %v4174 = vmax.f32 %v4162, 0.0
        %v4175 = vmax.f32 %v4167, 0.0
        %v4176 = vmax.f32 %v4170, 0.0
        %v4181 = vcombine.high %v4173, %v4173
        %v4183 = vunpack.c.l.s4 1966171168
        %v4184 = vunpack.c.0.s8 %v4183
        %v4185 = vlaneseq
        %v4186 = vshrl.u32 %v4185, 7
        %v4187 = vsub.s32 %v4184, %v4186
        %v4188 = vrot.slane %v4173, %v4187
        %v4190 = vunpack.c.l.s4 1966171168
        %v4191 = vunpack.c.0.s8 %v4190
        %v4192 = vlaneseq
        %v4193 = vshrl.u32 %v4192, 7
        %v4194 = vsub.s32 %v4191, %v4193
        %v4195 = vrot.slane %v4181, %v4194
        %v4196 = vcombine.high %v4188, %v4188
        %v4197 = vcombine.high %v4195, %v4195
        %v4199 = vunpack.c.l.s4 1966171168
        %v4200 = vunpack.c.0.s8 %v4199
        %v4201 = vlaneseq
        %v4202 = vshrl.u32 %v4201, 7
        %v4203 = vsub.s32 %v4200, %v4202
        %v4204 = vrot.slane %v4188, %v4203
        %v4206 = vunpack.c.l.s4 1966171168
        %v4207 = vunpack.c.0.s8 %v4206
        %v4208 = vlaneseq
        %v4209 = vshrl.u32 %v4208, 7
        %v4210 = vsub.s32 %v4207, %v4209
        %v4211 = vrot.slane %v4195, %v4210
        %v4213 = vunpack.c.l.s4 1966171168
        %v4214 = vunpack.c.0.s8 %v4213
        %v4215 = vlaneseq
        %v4216 = vshrl.u32 %v4215, 7
        %v4217 = vsub.s32 %v4214, %v4216
        %v4218 = vrot.slane %v4196, %v4217
        %v4220 = vunpack.c.l.s4 1966171168
        %v4221 = vunpack.c.0.s8 %v4220
        %v4222 = vlaneseq
        %v4223 = vshrl.u32 %v4222, 7
        %v4224 = vsub.s32 %v4221, %v4223
        %v4225 = vrot.slane %v4197, %v4224
        %v4226 = vcombine.high %v4204, %v4204
        %v4227 = vcombine.high %v4211, %v4211
        %v4228 = vcombine.high %v4218, %v4218
        %v4229 = vcombine.high %v4225, %v4225
        %v4230 = vcombine.high %v4174, %v4174
        %v4232 = vunpack.c.l.s4 1966171168
        %v4233 = vunpack.c.0.s8 %v4232
        %v4234 = vlaneseq
        %v4235 = vshrl.u32 %v4234, 7
        %v4236 = vsub.s32 %v4233, %v4235
        %v4237 = vrot.slane %v4174, %v4236
        %v4239 = vunpack.c.l.s4 1966171168
        %v4240 = vunpack.c.0.s8 %v4239
        %v4241 = vlaneseq
        %v4242 = vshrl.u32 %v4241, 7
        %v4243 = vsub.s32 %v4240, %v4242
        %v4244 = vrot.slane %v4230, %v4243
        %v4245 = vcombine.high %v4237, %v4237
        %v4246 = vcombine.high %v4244, %v4244
        %v4248 = vunpack.c.l.s4 1966171168
        %v4249 = vunpack.c.0.s8 %v4248
        %v4250 = vlaneseq
        %v4251 = vshrl.u32 %v4250, 7
        %v4252 = vsub.s32 %v4249, %v4251
        %v4253 = vrot.slane %v4237, %v4252
        %v4255 = vunpack.c.l.s4 1966171168
        %v4256 = vunpack.c.0.s8 %v4255
        %v4257 = vlaneseq
        %v4258 = vshrl.u32 %v4257, 7
        %v4259 = vsub.s32 %v4256, %v4258
        %v4260 = vrot.slane %v4244, %v4259
        %v4262 = vunpack.c.l.s4 1966171168
        %v4263 = vunpack.c.0.s8 %v4262
        %v4264 = vlaneseq
        %v4265 = vshrl.u32 %v4264, 7
        %v4266 = vsub.s32 %v4263, %v4265
        %v4267 = vrot.slane %v4245, %v4266
        %v4269 = vunpack.c.l.s4 1966171168
        %v4270 = vunpack.c.0.s8 %v4269
        %v4271 = vlaneseq
        %v4272 = vshrl.u32 %v4271, 7
        %v4273 = vsub.s32 %v4270, %v4272
        %v4274 = vrot.slane %v4246, %v4273
        %v4275 = vcombine.high %v4253, %v4253
        %v4276 = vcombine.high %v4260, %v4260
        %v4277 = vcombine.high %v4267, %v4267
        %v4278 = vcombine.high %v4274, %v4274
        %v4279 = vcombine.high %v4175, %v4175
        %v4281 = vunpack.c.l.s4 1966171168
        %v4282 = vunpack.c.0.s8 %v4281
        %v4283 = vlaneseq
        %v4284 = vshrl.u32 %v4283, 7
        %v4285 = vsub.s32 %v4282, %v4284
        %v4286 = vrot.slane %v4175, %v4285
        %v4288 = vunpack.c.l.s4 1966171168
        %v4289 = vunpack.c.0.s8 %v4288
        %v4290 = vlaneseq
        %v4291 = vshrl.u32 %v4290, 7
        %v4292 = vsub.s32 %v4289, %v4291
        %v4293 = vrot.slane %v4279, %v4292
        %v4294 = vcombine.high %v4286, %v4286
        %v4295 = vcombine.high %v4293, %v4293
        %v4297 = vunpack.c.l.s4 1966171168
        %v4298 = vunpack.c.0.s8 %v4297
        %v4299 = vlaneseq
        %v4300 = vshrl.u32 %v4299, 7
        %v4301 = vsub.s32 %v4298, %v4300
        %v4302 = vrot.slane %v4286, %v4301
        %v4304 = vunpack.c.l.s4 1966171168
        %v4305 = vunpack.c.0.s8 %v4304
        %v4306 = vlaneseq
        %v4307 = vshrl.u32 %v4306, 7
        %v4308 = vsub.s32 %v4305, %v4307
        %v4309 = vrot.slane %v4293, %v4308
        %v4311 = vunpack.c.l.s4 1966171168
        %v4312 = vunpack.c.0.s8 %v4311
        %v4313 = vlaneseq
        %v4314 = vshrl.u32 %v4313, 7
        %v4315 = vsub.s32 %v4312, %v4314
        %v4316 = vrot.slane %v4294, %v4315
        %v4318 = vunpack.c.l.s4 1966171168
        %v4319 = vunpack.c.0.s8 %v4318
        %v4320 = vlaneseq
        %v4321 = vshrl.u32 %v4320, 7
        %v4322 = vsub.s32 %v4319, %v4321
        %v4323 = vrot.slane %v4295, %v4322
        %v4324 = vcombine.high %v4302, %v4302
        %v4325 = vcombine.high %v4309, %v4309
        %v4326 = vcombine.high %v4316, %v4316
        %v4327 = vcombine.high %v4323, %v4323
        %v4328 = vcombine.high %v4176, %v4176
        %v4330 = vunpack.c.l.s4 1966171168
        %v4331 = vunpack.c.0.s8 %v4330
        %v4332 = vlaneseq
        %v4333 = vshrl.u32 %v4332, 7
        %v4334 = vsub.s32 %v4331, %v4333
        %v4335 = vrot.slane %v4176, %v4334
        %v4337 = vunpack.c.l.s4 1966171168
        %v4338 = vunpack.c.0.s8 %v4337
        %v4339 = vlaneseq
        %v4340 = vshrl.u32 %v4339, 7
        %v4341 = vsub.s32 %v4338, %v4340
        %v4342 = vrot.slane %v4328, %v4341
        %v4343 = vcombine.high %v4335, %v4335
        %v4344 = vcombine.high %v4342, %v4342
        %v4346 = vunpack.c.l.s4 1966171168
        %v4347 = vunpack.c.0.s8 %v4346
        %v4348 = vlaneseq
        %v4349 = vshrl.u32 %v4348, 7
        %v4350 = vsub.s32 %v4347, %v4349
        %v4351 = vrot.slane %v4335, %v4350
        %v4353 = vunpack.c.l.s4 1966171168
        %v4354 = vunpack.c.0.s8 %v4353
        %v4355 = vlaneseq
        %v4356 = vshrl.u32 %v4355, 7
        %v4357 = vsub.s32 %v4354, %v4356
        %v4358 = vrot.slane %v4342, %v4357
        %v4360 = vunpack.c.l.s4 1966171168
        %v4361 = vunpack.c.0.s8 %v4360
        %v4362 = vlaneseq
        %v4363 = vshrl.u32 %v4362, 7
        %v4364 = vsub.s32 %v4361, %v4363
        %v4365 = vrot.slane %v4343, %v4364
        %v4367 = vunpack.c.l.s4 1966171168
        %v4368 = vunpack.c.0.s8 %v4367
        %v4369 = vlaneseq
        %v4370 = vshrl.u32 %v4369, 7
        %v4371 = vsub.s32 %v4368, %v4370
        %v4372 = vrot.slane %v4344, %v4371
        %v4373 = vcombine.high %v4351, %v4351
        %v4374 = vcombine.high %v4358, %v4358
        %v4375 = vcombine.high %v4365, %v4365
        %v4376 = vcombine.high %v4372, %v4372
        %4409 = vst.msk [vmem:[%s190 + $0x6] sm:$0x1] %vm820, %v4204
        %4410 = vst.msk [vmem:[%s190 + $0x16] sm:$0x1] %vm820, %v4218
        %4411 = vst.msk [vmem:[%s190 + $0x26] sm:$0x1] %vm820, %v4226
        %4412 = vst.msk [vmem:[%s190 + $0x36] sm:$0x1] %vm820, %v4228
        %4413 = vst.msk [vmem:[%s190 + $0x46] sm:$0x1] %vm820, %v4211
        %4414 = vst.msk [vmem:[%s190 + $0x56] sm:$0x1] %vm820, %v4225
        %4415 = vst.msk [vmem:[%s190 + $0x66] sm:$0x1] %vm820, %v4227
        %4416 = vst.msk [vmem:[%s190 + $0x76] sm:$0x1] %vm820, %v4229
        %4417 = vst.msk [vmem:[%s190 + $0x86] sm:$0x1] %vm820, %v4253
        %4418 = vst.msk [vmem:[%s190 + $0x96] sm:$0x1] %vm820, %v4267
        %4419 = vst.msk [vmem:[%s190 + $0xa6] sm:$0x1] %vm820, %v4275
        %4420 = vst.msk [vmem:[%s190 + $0xb6] sm:$0x1] %vm820, %v4277
        %4421 = vst.msk [vmem:[%s190 + $0xc6] sm:$0x1] %vm820, %v4260
        %4422 = vst.msk [vmem:[%s190 + $0xd6] sm:$0x1] %vm820, %v4274
        %4423 = vst.msk [vmem:[%s190 + $0xe6] sm:$0x1] %vm820, %v4276
        %4424 = vst.msk [vmem:[%s190 + $0xf6] sm:$0x1] %vm820, %v4278
        %4425 = vst.msk [vmem:[%s190 + $0x106] sm:$0x1] %vm820, %v4302
        %4426 = vst.msk [vmem:[%s190 + $0x116] sm:$0x1] %vm820, %v4316
        %4427 = vst.msk [vmem:[%s190 + $0x126] sm:$0x1] %vm820, %v4324
        %4428 = vst.msk [vmem:[%s190 + $0x136] sm:$0x1] %vm820, %v4326
        %4429 = vst.msk [vmem:[%s190 + $0x146] sm:$0x1] %vm820, %v4309
        %4430 = vst.msk [vmem:[%s190 + $0x156] sm:$0x1] %vm820, %v4323
        %4431 = vst.msk [vmem:[%s190 + $0x166] sm:$0x1] %vm820, %v4325
        %4432 = vst.msk [vmem:[%s190 + $0x176] sm:$0x1] %vm820, %v4327
        %4433 = vst.msk [vmem:[%s190 + $0x186] sm:$0x1] %vm820, %v4351
        %4434 = vst.msk [vmem:[%s190 + $0x196] sm:$0x1] %vm820, %v4365
        %4435 = vst.msk [vmem:[%s190 + $0x1a6] sm:$0x1] %vm820, %v4373
        %4436 = vst.msk [vmem:[%s190 + $0x1b6] sm:$0x1] %vm820, %v4375
        %4437 = vst.msk [vmem:[%s190 + $0x1c6] sm:$0x1] %vm820, %v4358
        %4438 = vst.msk [vmem:[%s190 + $0x1d6] sm:$0x1] %vm820, %v4372
        %4439 = vst.msk [vmem:[%s190 + $0x1e6] sm:$0x1] %vm820, %v4374
        %4440 = vst.msk [vmem:[%s190 + $0x1f6] sm:$0x1] %vm820, %v4376
        %v4441 = vld [vmem:[%s163 + $0x7] sm:$0x1]
        %v4442 = vld [vmem:[%s163 + $0x17] sm:$0x1]
        %v4443 = vld [vmem:[%s163 + $0x27] sm:$0x1]
        %v4444 = vld [vmem:[%s163 + $0x37] sm:$0x1]
        %v4445 = vld [vmem:[%s163 + $0x47] sm:$0x1]
        %v4446 = vld [vmem:[%s163 + $0x57] sm:$0x1]
        %v4447 = vld [vmem:[%s163 + $0x67] sm:$0x1]
        %v4448 = vld [vmem:[%s163 + $0x77] sm:$0x1]
        %v4457 = vrot.slane %v4442, 7
        %v4458 = vsel %vm217, %v4457, %v4441
        %v4459 = vrot.slane %v4443, 6
        %v4460 = vsel %vm220, %v4459, %v4458
        %v4461 = vrot.slane %v4444, 5
        %v4462 = vsel %vm223, %v4461, %v4460
        %v4463 = vrot.slane %v4445, 4
        %v4464 = vsel %vm226, %v4463, %v4462
        %v4465 = vrot.slane %v4446, 3
        %v4466 = vsel %vm229, %v4465, %v4464
        %v4467 = vrot.slane %v4447, 2
        %v4468 = vsel %vm232, %v4467, %v4466
        %v4469 = vrot.slane %v4448, 1
        %v4470 = vsel %vm235, %v4469, %v4468
        %4472 = vst.msk [vmem:[#allocation2] sm:$0xff] %vm238, %v4470
        %4473 = vrot.lane.b32.xlu0 %v4470, 127
        %v4474 = vpop.permute.xlu0 %4473
        %4476 = vst.msk [vmem:[#allocation2 + $0x8] sm:$0xff] %vm238, %v4474
        %4477 = vrot.lane.b32.xlu0 %v4470, 126
        %v4478 = vpop.permute.xlu0 %4477
        %4480 = vst.msk [vmem:[#allocation2 + $0x10] sm:$0xff] %vm238, %v4478
        %4481 = vrot.lane.b32.xlu0 %v4470, 125
        %v4482 = vpop.permute.xlu0 %4481
        %4484 = vst.msk [vmem:[#allocation2 + $0x18] sm:$0xff] %vm238, %v4482
        %4485 = vrot.lane.b32.xlu0 %v4470, 124
        %v4486 = vpop.permute.xlu0 %4485
        %4488 = vst.msk [vmem:[#allocation2 + $0x20] sm:$0xff] %vm238, %v4486
        %v4489 = vld [vmem:[%s163 + $0x8] sm:$0x1]
        %v4490 = vld [vmem:[%s163 + $0x18] sm:$0x1]
        %v4491 = vld [vmem:[%s163 + $0x28] sm:$0x1]
        %v4492 = vld [vmem:[%s163 + $0x38] sm:$0x1]
        %v4493 = vld [vmem:[%s163 + $0x48] sm:$0x1]
        %v4494 = vld [vmem:[%s163 + $0x58] sm:$0x1]
        %v4495 = vld [vmem:[%s163 + $0x68] sm:$0x1]
        %v4496 = vld [vmem:[%s163 + $0x78] sm:$0x1]
        %v4505 = vrot.slane %v4490, 7
        %v4506 = vsel %vm217, %v4505, %v4489
        %v4507 = vrot.slane %v4491, 6
        %v4508 = vsel %vm220, %v4507, %v4506
        %v4509 = vrot.slane %v4492, 5
        %v4510 = vsel %vm223, %v4509, %v4508
        %v4511 = vrot.slane %v4493, 4
        %v4512 = vsel %vm226, %v4511, %v4510
        %v4513 = vrot.slane %v4494, 3
        %v4514 = vsel %vm229, %v4513, %v4512
        %v4515 = vrot.slane %v4495, 2
        %v4516 = vsel %vm232, %v4515, %v4514
        %v4517 = vrot.slane %v4496, 1
        %v4518 = vsel %vm235, %v4517, %v4516
        %4520 = vst.msk [vmem:[#allocation2 + $0x28] sm:$0xff] %vm238, %v4518
        %4521 = vrot.lane.b32.xlu0 %v4518, 127
        %v4522 = vpop.permute.xlu0 %4521
        %4524 = vst.msk [vmem:[#allocation2 + $0x30] sm:$0xff] %vm238, %v4522
        %4525 = vrot.lane.b32.xlu0 %v4518, 126
        %v4526 = vpop.permute.xlu0 %4525
        %4528 = vst.msk [vmem:[#allocation2 + $0x38] sm:$0xff] %vm238, %v4526
        %4529 = vrot.lane.b32.xlu0 %v4518, 125
        %v4530 = vpop.permute.xlu0 %4529
        %4532 = vst.msk [vmem:[#allocation2 + $0x40] sm:$0xff] %vm238, %v4530
        %4533 = vrot.lane.b32.xlu0 %v4518, 124
        %v4534 = vpop.permute.xlu0 %4533
        %4536 = vst.msk [vmem:[#allocation2 + $0x48] sm:$0xff] %vm238, %v4534
        %v4537 = vld [vmem:[%s163 + $0x9] sm:$0x1]
        %v4538 = vld [vmem:[%s163 + $0x19] sm:$0x1]
        %v4539 = vld [vmem:[%s163 + $0x29] sm:$0x1]
        %v4540 = vld [vmem:[%s163 + $0x39] sm:$0x1]
        %v4541 = vld [vmem:[%s163 + $0x49] sm:$0x1]
        %v4542 = vld [vmem:[%s163 + $0x59] sm:$0x1]
        %v4543 = vld [vmem:[%s163 + $0x69] sm:$0x1]
        %v4544 = vld [vmem:[%s163 + $0x79] sm:$0x1]
        %v4553 = vrot.slane %v4538, 7
        %v4554 = vsel %vm217, %v4553, %v4537
        %v4555 = vrot.slane %v4539, 6
        %v4556 = vsel %vm220, %v4555, %v4554
        %v4557 = vrot.slane %v4540, 5
        %v4558 = vsel %vm223, %v4557, %v4556
        %v4559 = vrot.slane %v4541, 4
        %v4560 = vsel %vm226, %v4559, %v4558
        %v4561 = vrot.slane %v4542, 3
        %v4562 = vsel %vm229, %v4561, %v4560
        %v4563 = vrot.slane %v4543, 2
        %v4564 = vsel %vm232, %v4563, %v4562
        %v4565 = vrot.slane %v4544, 1
        %v4566 = vsel %vm235, %v4565, %v4564
        %4568 = vst.msk [vmem:[#allocation2 + $0x50] sm:$0xff] %vm238, %v4566
        %4569 = vrot.lane.b32.xlu0 %v4566, 127
        %v4570 = vpop.permute.xlu0 %4569
        %4572 = vst.msk [vmem:[#allocation2 + $0x58] sm:$0xff] %vm238, %v4570
        %4573 = vrot.lane.b32.xlu0 %v4566, 126
        %v4574 = vpop.permute.xlu0 %4573
        %4576 = vst.msk [vmem:[#allocation2 + $0x60] sm:$0xff] %vm238, %v4574
        %4577 = vrot.lane.b32.xlu0 %v4566, 125
        %v4578 = vpop.permute.xlu0 %4577
        %4580 = vst.msk [vmem:[#allocation2 + $0x68] sm:$0xff] %vm238, %v4578
        %4581 = vrot.lane.b32.xlu0 %v4566, 124
        %v4582 = vpop.permute.xlu0 %4581
        %4584 = vst.msk [vmem:[#allocation2 + $0x70] sm:$0xff] %vm238, %v4582
        %v4585 = vld [vmem:[%s163 + $0xa] sm:$0x1]
        %v4586 = vld [vmem:[%s163 + $0x1a] sm:$0x1]
        %v4587 = vld [vmem:[%s163 + $0x2a] sm:$0x1]
        %v4588 = vld [vmem:[%s163 + $0x3a] sm:$0x1]
        %v4589 = vld [vmem:[%s163 + $0x4a] sm:$0x1]
        %v4590 = vld [vmem:[%s163 + $0x5a] sm:$0x1]
        %v4591 = vld [vmem:[%s163 + $0x6a] sm:$0x1]
        %v4592 = vld [vmem:[%s163 + $0x7a] sm:$0x1]
        %v4601 = vrot.slane %v4586, 7
        %v4602 = vsel %vm217, %v4601, %v4585
        %v4603 = vrot.slane %v4587, 6
        %v4604 = vsel %vm220, %v4603, %v4602
        %v4605 = vrot.slane %v4588, 5
        %v4606 = vsel %vm223, %v4605, %v4604
        %v4607 = vrot.slane %v4589, 4
        %v4608 = vsel %vm226, %v4607, %v4606
        %v4609 = vrot.slane %v4590, 3
        %v4610 = vsel %vm229, %v4609, %v4608
        %v4611 = vrot.slane %v4591, 2
        %v4612 = vsel %vm232, %v4611, %v4610
        %v4613 = vrot.slane %v4592, 1
        %v4614 = vsel %vm235, %v4613, %v4612
        %4616 = vst.msk [vmem:[#allocation2 + $0x78] sm:$0xff] %vm238, %v4614
        %4617 = vrot.lane.b32.xlu0 %v4614, 127
        %v4618 = vpop.permute.xlu0 %4617
        %4620 = vst.msk [vmem:[#allocation2 + $0x80] sm:$0xff] %vm238, %v4618
        %4621 = vrot.lane.b32.xlu0 %v4614, 126
        %v4622 = vpop.permute.xlu0 %4621
        %4624 = vst.msk [vmem:[#allocation2 + $0x88] sm:$0xff] %vm238, %v4622
        %4625 = vrot.lane.b32.xlu0 %v4614, 125
        %v4626 = vpop.permute.xlu0 %4625
        %4628 = vst.msk [vmem:[#allocation2 + $0x90] sm:$0xff] %vm238, %v4626
        %4629 = vrot.lane.b32.xlu0 %v4614, 124
        %v4630 = vpop.permute.xlu0 %4629
        %4632 = vst.msk [vmem:[#allocation2 + $0x98] sm:$0xff] %vm238, %v4630
        %v4633 = vld [vmem:[%s163 + $0xb] sm:$0x1]
        %v4634 = vld [vmem:[%s163 + $0x1b] sm:$0x1]
        %v4635 = vld [vmem:[%s163 + $0x2b] sm:$0x1]
        %v4636 = vld [vmem:[%s163 + $0x3b] sm:$0x1]
        %v4637 = vld [vmem:[%s163 + $0x4b] sm:$0x1]
        %v4638 = vld [vmem:[%s163 + $0x5b] sm:$0x1]
        %v4639 = vld [vmem:[%s163 + $0x6b] sm:$0x1]
        %v4640 = vld [vmem:[%s163 + $0x7b] sm:$0x1]
        %v4649 = vrot.slane %v4634, 7
        %v4650 = vsel %vm217, %v4649, %v4633
        %v4651 = vrot.slane %v4635, 6
        %v4652 = vsel %vm220, %v4651, %v4650
        %v4653 = vrot.slane %v4636, 5
        %v4654 = vsel %vm223, %v4653, %v4652
        %v4655 = vrot.slane %v4637, 4
        %v4656 = vsel %vm226, %v4655, %v4654
        %v4657 = vrot.slane %v4638, 3
        %v4658 = vsel %vm229, %v4657, %v4656
        %v4659 = vrot.slane %v4639, 2
        %v4660 = vsel %vm232, %v4659, %v4658
        %v4661 = vrot.slane %v4640, 1
        %v4662 = vsel %vm235, %v4661, %v4660
        %4664 = vst.msk [vmem:[#allocation2 + $0xa0] sm:$0xff] %vm238, %v4662
        %4665 = vrot.lane.b32.xlu0 %v4662, 127
        %v4666 = vpop.permute.xlu0 %4665
        %4668 = vst.msk [vmem:[#allocation2 + $0xa8] sm:$0xff] %vm238, %v4666
        %4669 = vrot.lane.b32.xlu0 %v4662, 126
        %v4670 = vpop.permute.xlu0 %4669
        %4672 = vst.msk [vmem:[#allocation2 + $0xb0] sm:$0xff] %vm238, %v4670
        %4673 = vrot.lane.b32.xlu0 %v4662, 125
        %v4674 = vpop.permute.xlu0 %4673
        %4676 = vst.msk [vmem:[#allocation2 + $0xb8] sm:$0xff] %vm238, %v4674
        %4677 = vrot.lane.b32.xlu0 %v4662, 124
        %v4678 = vpop.permute.xlu0 %4677
        %4680 = vst.msk [vmem:[#allocation2 + $0xc0] sm:$0xff] %vm238, %v4678
        %v4681 = vld [vmem:[#allocation2] sm:$0xff]
        %v4682 = vld [vmem:[#allocation2 + $0x8] sm:$0xff]
        %v4683 = vld [vmem:[#allocation2 + $0x10] sm:$0xff]
        %v4684 = vld [vmem:[#allocation2 + $0x18] sm:$0xff]
        %v4685 = vld [vmem:[#allocation2 + $0x20] sm:$0xff]
        %v4686 = vld [vmem:[#allocation2 + $0x28] sm:$0xff]
        %v4687 = vld [vmem:[#allocation2 + $0x30] sm:$0xff]
        %v4688 = vld [vmem:[#allocation2 + $0x38] sm:$0xff]
        %v4689 = vld [vmem:[#allocation2 + $0x40] sm:$0xff]
        %v4690 = vld [vmem:[#allocation2 + $0x48] sm:$0xff]
        %v4691 = vld [vmem:[#allocation2 + $0x50] sm:$0xff]
        %v4692 = vld [vmem:[#allocation2 + $0x58] sm:$0xff]
        %v4693 = vld [vmem:[#allocation2 + $0x60] sm:$0xff]
        %v4694 = vld [vmem:[#allocation2 + $0x68] sm:$0xff]
        %v4695 = vld [vmem:[#allocation2 + $0x70] sm:$0xff]
        %v4696 = vld [vmem:[#allocation2 + $0x78] sm:$0xff]
        %v4697 = vld [vmem:[#allocation2 + $0x80] sm:$0xff]
        %v4698 = vld [vmem:[#allocation2 + $0x88] sm:$0xff]
        %v4699 = vld [vmem:[#allocation2 + $0x90] sm:$0xff]
        %v4700 = vld [vmem:[#allocation2 + $0x98] sm:$0xff]
        %v4701 = vld [vmem:[#allocation2 + $0xa0] sm:$0xff]
        %v4702 = vld [vmem:[#allocation2 + $0xa8] sm:$0xff]
        %v4703 = vld [vmem:[#allocation2 + $0xb0] sm:$0xff]
        %v4704 = vld [vmem:[#allocation2 + $0xb8] sm:$0xff]
        %v4705 = vld [vmem:[#allocation2 + $0xc0] sm:$0xff]
        %v4706 = vpack.c.bf16 %v4682, %v4681
        %v4707 = vpack.c.bf16 %v4684, %v4683
        %v4708 = vpack.c.bf16 %v4686, %v4685
        %v4709 = vpack.c.bf16 %v4688, %v4687
        %v4710 = vpack.c.bf16 %v4690, %v4689
        %v4711 = vpack.c.bf16 %v4692, %v4691
        %v4712 = vpack.c.bf16 %v4694, %v4693
        %v4713 = vpack.c.bf16 %v4696, %v4695
        %v4714 = vpack.c.bf16 %v4698, %v4697
        %v4715 = vpack.c.bf16 %v4700, %v4699
        %v4716 = vpack.c.bf16 %v4702, %v4701
        %v4717 = vpack.c.bf16 %v4704, %v4703
        %v4718 = vpack.c.bf16 %v4705, %v4705
        %v4720 = vsel %vm531, %v4718, 0
        %4722 = vmatprep.subr.bf16.mxu0 0
        %4723 = vmatpush1.bf16.msra.mxu0 %v4706
        %4724 = vmatprep.subr.bf16.mxu0 0
        %4725 = vmatpush1.bf16.msra.mxu0 %v4707
        %4726 = vmatprep.subr.bf16.mxu0 0
        %4727 = vmatpush1.bf16.msra.mxu0 %v4708
        %4728 = vmatprep.subr.bf16.mxu0 0
        %4729 = vmatpush1.bf16.msra.mxu0 %v4709
        %4730 = vmatprep.subr.bf16.mxu0 0
        %4731 = vmatpush1.bf16.msra.mxu0 %v4710
        %4732 = vmatprep.subr.bf16.mxu0 0
        %4733 = vmatpush1.bf16.msra.mxu0 %v4711
        %4734 = vmatprep.subr.bf16.mxu0 0
        %4735 = vmatpush1.bf16.msra.mxu0 %v4712
        %4736 = vmatprep.subr.bf16.mxu0 0
        %4737 = vmatpush1.bf16.msra.mxu0 %v4713
        %4738 = vmatprep.subr.bf16.mxu0 0
        %4739 = vmatpush1.bf16.msra.mxu0 %v4714
        %4740 = vmatprep.subr.bf16.mxu0 0
        %4741 = vmatpush1.bf16.msra.mxu0 %v4715
        %4742 = vmatprep.subr.bf16.mxu0 0
        %4743 = vmatpush1.bf16.msra.mxu0 %v4716
        %4744 = vmatprep.subr.bf16.mxu0 0
        %4745 = vmatpush1.bf16.msra.mxu0 %v4717
        %4746 = vmatprep.subr.bf16.mxu0 0
        %4747 = vmatpush1.bf16.msra.mxu0 %v4720
        %4748 = vmatprep.subr.bf16.mxu0 0
        %4749 = vmatpush1.bf16.msra.mxu0 0
        %4750 = vmatprep.subr.bf16.mxu0 0
        %4751 = vmatpush1.bf16.msra.mxu0 0
        %4752 = vmatprep.subr.bf16.mxu0 0
        %4753 = vmatpush1.bf16.msra.mxu0 0
        %4754 = vmatprep.mubr.bf16.mxu0 %v526
        %4755 = vmatmul.mubr.bf16.gmra.mrb[0].mxu0 %v518
        %v4756 = vpop.f32.mrb[0].mxu0
        %v4757 = vadd.f32 %v489, %v4756
        %v4758 = vpop.f32.mrb[0].mxu0
        %v4759 = vpop.f32.mrb[0].mxu0
        %v4760 = vadd.f32 %v494, %v4759
        %v4761 = vpop.f32.mrb[0].mxu0
        %4762 = vmatprep.mubr.bf16.mxu0 %v529
        %4763 = vmatmul.mubr.bf16.gmra.mrb[0].mxu0 %v520
        %v4764 = vpop.f32.mrb[0].mxu0
        %v4765 = vadd.f32 %v499, %v4764
        %v4766 = vpop.f32.mrb[0].mxu0
        %v4767 = vpop.f32.mrb[0].mxu0
        %v4768 = vadd.f32 %v504, %v4767
        %v4769 = vpop.f32.mrb[0].mxu0
        %4770 = vdwg.mxu0
        %v4771 = vmax.f32 %v4757, 0.0
        %v4772 = vmax.f32 %v4760, 0.0
        %v4773 = vmax.f32 %v4765, 0.0
        %v4774 = vmax.f32 %v4768, 0.0
        %v4779 = vcombine.high %v4771, %v4771
        %v4781 = vunpack.c.l.s4 1966171168
        %v4782 = vunpack.c.0.s8 %v4781
        %v4783 = vlaneseq
        %v4784 = vshrl.u32 %v4783, 7
        %v4785 = vsub.s32 %v4782, %v4784
        %v4786 = vrot.slane %v4771, %v4785
        %v4788 = vunpack.c.l.s4 1966171168
        %v4789 = vunpack.c.0.s8 %v4788
        %v4790 = vlaneseq
        %v4791 = vshrl.u32 %v4790, 7
        %v4792 = vsub.s32 %v4789, %v4791
        %v4793 = vrot.slane %v4779, %v4792
        %v4794 = vcombine.high %v4786, %v4786
        %v4795 = vcombine.high %v4793, %v4793
        %v4797 = vunpack.c.l.s4 1966171168
        %v4798 = vunpack.c.0.s8 %v4797
        %v4799 = vlaneseq
        %v4800 = vshrl.u32 %v4799, 7
        %v4801 = vsub.s32 %v4798, %v4800
        %v4802 = vrot.slane %v4786, %v4801
        %v4804 = vunpack.c.l.s4 1966171168
        %v4805 = vunpack.c.0.s8 %v4804
        %v4806 = vlaneseq
        %v4807 = vshrl.u32 %v4806, 7
        %v4808 = vsub.s32 %v4805, %v4807
        %v4809 = vrot.slane %v4793, %v4808
        %v4811 = vunpack.c.l.s4 1966171168
        %v4812 = vunpack.c.0.s8 %v4811
        %v4813 = vlaneseq
        %v4814 = vshrl.u32 %v4813, 7
        %v4815 = vsub.s32 %v4812, %v4814
        %v4816 = vrot.slane %v4794, %v4815
        %v4818 = vunpack.c.l.s4 1966171168
        %v4819 = vunpack.c.0.s8 %v4818
        %v4820 = vlaneseq
        %v4821 = vshrl.u32 %v4820, 7
        %v4822 = vsub.s32 %v4819, %v4821
        %v4823 = vrot.slane %v4795, %v4822
        %v4824 = vcombine.high %v4802, %v4802
        %v4825 = vcombine.high %v4809, %v4809
        %v4826 = vcombine.high %v4816, %v4816
        %v4827 = vcombine.high %v4823, %v4823
        %v4828 = vcombine.high %v4772, %v4772
        %v4830 = vunpack.c.l.s4 1966171168
        %v4831 = vunpack.c.0.s8 %v4830
        %v4832 = vlaneseq
        %v4833 = vshrl.u32 %v4832, 7
        %v4834 = vsub.s32 %v4831, %v4833
        %v4835 = vrot.slane %v4772, %v4834
        %v4837 = vunpack.c.l.s4 1966171168
        %v4838 = vunpack.c.0.s8 %v4837
        %v4839 = vlaneseq
        %v4840 = vshrl.u32 %v4839, 7
        %v4841 = vsub.s32 %v4838, %v4840
        %v4842 = vrot.slane %v4828, %v4841
        %v4843 = vcombine.high %v4835, %v4835
        %v4844 = vcombine.high %v4842, %v4842
        %v4846 = vunpack.c.l.s4 1966171168
        %v4847 = vunpack.c.0.s8 %v4846
        %v4848 = vlaneseq
        %v4849 = vshrl.u32 %v4848, 7
        %v4850 = vsub.s32 %v4847, %v4849
        %v4851 = vrot.slane %v4835, %v4850
        %v4853 = vunpack.c.l.s4 1966171168
        %v4854 = vunpack.c.0.s8 %v4853
        %v4855 = vlaneseq
        %v4856 = vshrl.u32 %v4855, 7
        %v4857 = vsub.s32 %v4854, %v4856
        %v4858 = vrot.slane %v4842, %v4857
        %v4860 = vunpack.c.l.s4 1966171168
        %v4861 = vunpack.c.0.s8 %v4860
        %v4862 = vlaneseq
        %v4863 = vshrl.u32 %v4862, 7
        %v4864 = vsub.s32 %v4861, %v4863
        %v4865 = vrot.slane %v4843, %v4864
        %v4867 = vunpack.c.l.s4 1966171168
        %v4868 = vunpack.c.0.s8 %v4867
        %v4869 = vlaneseq
        %v4870 = vshrl.u32 %v4869, 7
        %v4871 = vsub.s32 %v4868, %v4870
        %v4872 = vrot.slane %v4844, %v4871
        %v4873 = vcombine.high %v4851, %v4851
        %v4874 = vcombine.high %v4858, %v4858
        %v4875 = vcombine.high %v4865, %v4865
        %v4876 = vcombine.high %v4872, %v4872
        %v4877 = vcombine.high %v4773, %v4773
        %v4879 = vunpack.c.l.s4 1966171168
        %v4880 = vunpack.c.0.s8 %v4879
        %v4881 = vlaneseq
        %v4882 = vshrl.u32 %v4881, 7
        %v4883 = vsub.s32 %v4880, %v4882
        %v4884 = vrot.slane %v4773, %v4883
        %v4886 = vunpack.c.l.s4 1966171168
        %v4887 = vunpack.c.0.s8 %v4886
        %v4888 = vlaneseq
        %v4889 = vshrl.u32 %v4888, 7
        %v4890 = vsub.s32 %v4887, %v4889
        %v4891 = vrot.slane %v4877, %v4890
        %v4892 = vcombine.high %v4884, %v4884
        %v4893 = vcombine.high %v4891, %v4891
        %v4895 = vunpack.c.l.s4 1966171168
        %v4896 = vunpack.c.0.s8 %v4895
        %v4897 = vlaneseq
        %v4898 = vshrl.u32 %v4897, 7
        %v4899 = vsub.s32 %v4896, %v4898
        %v4900 = vrot.slane %v4884, %v4899
        %v4902 = vunpack.c.l.s4 1966171168
        %v4903 = vunpack.c.0.s8 %v4902
        %v4904 = vlaneseq
        %v4905 = vshrl.u32 %v4904, 7
        %v4906 = vsub.s32 %v4903, %v4905
        %v4907 = vrot.slane %v4891, %v4906
        %v4909 = vunpack.c.l.s4 1966171168
        %v4910 = vunpack.c.0.s8 %v4909
        %v4911 = vlaneseq
        %v4912 = vshrl.u32 %v4911, 7
        %v4913 = vsub.s32 %v4910, %v4912
        %v4914 = vrot.slane %v4892, %v4913
        %v4916 = vunpack.c.l.s4 1966171168
        %v4917 = vunpack.c.0.s8 %v4916
        %v4918 = vlaneseq
        %v4919 = vshrl.u32 %v4918, 7
        %v4920 = vsub.s32 %v4917, %v4919
        %v4921 = vrot.slane %v4893, %v4920
        %v4922 = vcombine.high %v4900, %v4900
        %v4923 = vcombine.high %v4907, %v4907
        %v4924 = vcombine.high %v4914, %v4914
        %v4925 = vcombine.high %v4921, %v4921
        %v4926 = vcombine.high %v4774, %v4774
        %v4928 = vunpack.c.l.s4 1966171168
        %v4929 = vunpack.c.0.s8 %v4928
        %v4930 = vlaneseq
        %v4931 = vshrl.u32 %v4930, 7
        %v4932 = vsub.s32 %v4929, %v4931
        %v4933 = vrot.slane %v4774, %v4932
        %v4935 = vunpack.c.l.s4 1966171168
        %v4936 = vunpack.c.0.s8 %v4935
        %v4937 = vlaneseq
        %v4938 = vshrl.u32 %v4937, 7
        %v4939 = vsub.s32 %v4936, %v4938
        %v4940 = vrot.slane %v4926, %v4939
        %v4941 = vcombine.high %v4933, %v4933
        %v4942 = vcombine.high %v4940, %v4940
        %v4944 = vunpack.c.l.s4 1966171168
        %v4945 = vunpack.c.0.s8 %v4944
        %v4946 = vlaneseq
        %v4947 = vshrl.u32 %v4946, 7
        %v4948 = vsub.s32 %v4945, %v4947
        %v4949 = vrot.slane %v4933, %v4948
        %v4951 = vunpack.c.l.s4 1966171168
        %v4952 = vunpack.c.0.s8 %v4951
        %v4953 = vlaneseq
        %v4954 = vshrl.u32 %v4953, 7
        %v4955 = vsub.s32 %v4952, %v4954
        %v4956 = vrot.slane %v4940, %v4955
        %v4958 = vunpack.c.l.s4 1966171168
        %v4959 = vunpack.c.0.s8 %v4958
        %v4960 = vlaneseq
        %v4961 = vshrl.u32 %v4960, 7
        %v4962 = vsub.s32 %v4959, %v4961
        %v4963 = vrot.slane %v4941, %v4962
        %v4965 = vunpack.c.l.s4 1966171168
        %v4966 = vunpack.c.0.s8 %v4965
        %v4967 = vlaneseq
        %v4968 = vshrl.u32 %v4967, 7
        %v4969 = vsub.s32 %v4966, %v4968
        %v4970 = vrot.slane %v4942, %v4969
        %v4971 = vcombine.high %v4949, %v4949
        %v4972 = vcombine.high %v4956, %v4956
        %v4973 = vcombine.high %v4963, %v4963
        %v4974 = vcombine.high %v4970, %v4970
        %5007 = vst.msk [vmem:[%s190 + $0x7] sm:$0x1] %vm820, %v4802
        %5008 = vst.msk [vmem:[%s190 + $0x17] sm:$0x1] %vm820, %v4816
        %5009 = vst.msk [vmem:[%s190 + $0x27] sm:$0x1] %vm820, %v4824
        %5010 = vst.msk [vmem:[%s190 + $0x37] sm:$0x1] %vm820, %v4826
        %5011 = vst.msk [vmem:[%s190 + $0x47] sm:$0x1] %vm820, %v4809
        %5012 = vst.msk [vmem:[%s190 + $0x57] sm:$0x1] %vm820, %v4823
        %5013 = vst.msk [vmem:[%s190 + $0x67] sm:$0x1] %vm820, %v4825
        %5014 = vst.msk [vmem:[%s190 + $0x77] sm:$0x1] %vm820, %v4827
        %5015 = vst.msk [vmem:[%s190 + $0x87] sm:$0x1] %vm820, %v4851
        %5016 = vst.msk [vmem:[%s190 + $0x97] sm:$0x1] %vm820, %v4865
        %5017 = vst.msk [vmem:[%s190 + $0xa7] sm:$0x1] %vm820, %v4873
        %5018 = vst.msk [vmem:[%s190 + $0xb7] sm:$0x1] %vm820, %v4875
        %5019 = vst.msk [vmem:[%s190 + $0xc7] sm:$0x1] %vm820, %v4858
        %5020 = vst.msk [vmem:[%s190 + $0xd7] sm:$0x1] %vm820, %v4872
        %5021 = vst.msk [vmem:[%s190 + $0xe7] sm:$0x1] %vm820, %v4874
        %5022 = vst.msk [vmem:[%s190 + $0xf7] sm:$0x1] %vm820, %v4876
        %5023 = vst.msk [vmem:[%s190 + $0x107] sm:$0x1] %vm820, %v4900
        %5024 = vst.msk [vmem:[%s190 + $0x117] sm:$0x1] %vm820, %v4914
        %5025 = vst.msk [vmem:[%s190 + $0x127] sm:$0x1] %vm820, %v4922
        %5026 = vst.msk [vmem:[%s190 + $0x137] sm:$0x1] %vm820, %v4924
        %5027 = vst.msk [vmem:[%s190 + $0x147] sm:$0x1] %vm820, %v4907
        %5028 = vst.msk [vmem:[%s190 + $0x157] sm:$0x1] %vm820, %v4921
        %5029 = vst.msk [vmem:[%s190 + $0x167] sm:$0x1] %vm820, %v4923
        %5030 = vst.msk [vmem:[%s190 + $0x177] sm:$0x1] %vm820, %v4925
        %5031 = vst.msk [vmem:[%s190 + $0x187] sm:$0x1] %vm820, %v4949
        %5032 = vst.msk [vmem:[%s190 + $0x197] sm:$0x1] %vm820, %v4963
        %5033 = vst.msk [vmem:[%s190 + $0x1a7] sm:$0x1] %vm820, %v4971
        %5034 = vst.msk [vmem:[%s190 + $0x1b7] sm:$0x1] %vm820, %v4973
        %5035 = vst.msk [vmem:[%s190 + $0x1c7] sm:$0x1] %vm820, %v4956
        %5036 = vst.msk [vmem:[%s190 + $0x1d7] sm:$0x1] %vm820, %v4970
        %5037 = vst.msk [vmem:[%s190 + $0x1e7] sm:$0x1] %vm820, %v4972
        %5038 = vst.msk [vmem:[%s190 + $0x1f7] sm:$0x1] %vm820, %v4974
        %v5039 = vld [vmem:[%s163 + $0x8] sm:$0x1]
        %v5040 = vld [vmem:[%s163 + $0x18] sm:$0x1]
        %v5041 = vld [vmem:[%s163 + $0x28] sm:$0x1]
        %v5042 = vld [vmem:[%s163 + $0x38] sm:$0x1]
        %v5043 = vld [vmem:[%s163 + $0x48] sm:$0x1]
        %v5044 = vld [vmem:[%s163 + $0x58] sm:$0x1]
        %v5045 = vld [vmem:[%s163 + $0x68] sm:$0x1]
        %v5046 = vld [vmem:[%s163 + $0x78] sm:$0x1]
        %v5055 = vrot.slane %v5040, 7
        %v5056 = vsel %vm217, %v5055, %v5039
        %v5057 = vrot.slane %v5041, 6
        %v5058 = vsel %vm220, %v5057, %v5056
        %v5059 = vrot.slane %v5042, 5
        %v5060 = vsel %vm223, %v5059, %v5058
        %v5061 = vrot.slane %v5043, 4
        %v5062 = vsel %vm226, %v5061, %v5060
        %v5063 = vrot.slane %v5044, 3
        %v5064 = vsel %vm229, %v5063, %v5062
        %v5065 = vrot.slane %v5045, 2
        %v5066 = vsel %vm232, %v5065, %v5064
        %v5067 = vrot.slane %v5046, 1
        %v5068 = vsel %vm235, %v5067, %v5066
        %5070 = vst.msk [vmem:[#allocation2] sm:$0xff] %vm238, %v5068
        %5071 = vrot.lane.b32.xlu0 %v5068, 127
        %v5072 = vpop.permute.xlu0 %5071
        %5074 = vst.msk [vmem:[#allocation2 + $0x8] sm:$0xff] %vm238, %v5072
        %5075 = vrot.lane.b32.xlu0 %v5068, 126
        %v5076 = vpop.permute.xlu0 %5075
        %5078 = vst.msk [vmem:[#allocation2 + $0x10] sm:$0xff] %vm238, %v5076
        %5079 = vrot.lane.b32.xlu0 %v5068, 125
        %v5080 = vpop.permute.xlu0 %5079
        %5082 = vst.msk [vmem:[#allocation2 + $0x18] sm:$0xff] %vm238, %v5080
        %5083 = vrot.lane.b32.xlu0 %v5068, 124
        %v5084 = vpop.permute.xlu0 %5083
        %5086 = vst.msk [vmem:[#allocation2 + $0x20] sm:$0xff] %vm238, %v5084
        %v5087 = vld [vmem:[%s163 + $0x9] sm:$0x1]
        %v5088 = vld [vmem:[%s163 + $0x19] sm:$0x1]
        %v5089 = vld [vmem:[%s163 + $0x29] sm:$0x1]
        %v5090 = vld [vmem:[%s163 + $0x39] sm:$0x1]
        %v5091 = vld [vmem:[%s163 + $0x49] sm:$0x1]
        %v5092 = vld [vmem:[%s163 + $0x59] sm:$0x1]
        %v5093 = vld [vmem:[%s163 + $0x69] sm:$0x1]
        %v5094 = vld [vmem:[%s163 + $0x79] sm:$0x1]
        %v5103 = vrot.slane %v5088, 7
        %v5104 = vsel %vm217, %v5103, %v5087
        %v5105 = vrot.slane %v5089, 6
        %v5106 = vsel %vm220, %v5105, %v5104
        %v5107 = vrot.slane %v5090, 5
        %v5108 = vsel %vm223, %v5107, %v5106
        %v5109 = vrot.slane %v5091, 4
        %v5110 = vsel %vm226, %v5109, %v5108
        %v5111 = vrot.slane %v5092, 3
        %v5112 = vsel %vm229, %v5111, %v5110
        %v5113 = vrot.slane %v5093, 2
        %v5114 = vsel %vm232, %v5113, %v5112
        %v5115 = vrot.slane %v5094, 1
        %v5116 = vsel %vm235, %v5115, %v5114
        %5118 = vst.msk [vmem:[#allocation2 + $0x28] sm:$0xff] %vm238, %v5116
        %5119 = vrot.lane.b32.xlu0 %v5116, 127
        %v5120 = vpop.permute.xlu0 %5119
        %5122 = vst.msk [vmem:[#allocation2 + $0x30] sm:$0xff] %vm238, %v5120
        %5123 = vrot.lane.b32.xlu0 %v5116, 126
        %v5124 = vpop.permute.xlu0 %5123
        %5126 = vst.msk [vmem:[#allocation2 + $0x38] sm:$0xff] %vm238, %v5124
        %5127 = vrot.lane.b32.xlu0 %v5116, 125
        %v5128 = vpop.permute.xlu0 %5127
        %5130 = vst.msk [vmem:[#allocation2 + $0x40] sm:$0xff] %vm238, %v5128
        %5131 = vrot.lane.b32.xlu0 %v5116, 124
        %v5132 = vpop.permute.xlu0 %5131
        %5134 = vst.msk [vmem:[#allocation2 + $0x48] sm:$0xff] %vm238, %v5132
        %v5135 = vld [vmem:[%s163 + $0xa] sm:$0x1]
        %v5136 = vld [vmem:[%s163 + $0x1a] sm:$0x1]
        %v5137 = vld [vmem:[%s163 + $0x2a] sm:$0x1]
        %v5138 = vld [vmem:[%s163 + $0x3a] sm:$0x1]
        %v5139 = vld [vmem:[%s163 + $0x4a] sm:$0x1]
        %v5140 = vld [vmem:[%s163 + $0x5a] sm:$0x1]
        %v5141 = vld [vmem:[%s163 + $0x6a] sm:$0x1]
        %v5142 = vld [vmem:[%s163 + $0x7a] sm:$0x1]
        %v5151 = vrot.slane %v5136, 7
        %v5152 = vsel %vm217, %v5151, %v5135
        %v5153 = vrot.slane %v5137, 6
        %v5154 = vsel %vm220, %v5153, %v5152
        %v5155 = vrot.slane %v5138, 5
        %v5156 = vsel %vm223, %v5155, %v5154
        %v5157 = vrot.slane %v5139, 4
        %v5158 = vsel %vm226, %v5157, %v5156
        %v5159 = vrot.slane %v5140, 3
        %v5160 = vsel %vm229, %v5159, %v5158
        %v5161 = vrot.slane %v5141, 2
        %v5162 = vsel %vm232, %v5161, %v5160
        %v5163 = vrot.slane %v5142, 1
        %v5164 = vsel %vm235, %v5163, %v5162
        %5166 = vst.msk [vmem:[#allocation2 + $0x50] sm:$0xff] %vm238, %v5164
        %5167 = vrot.lane.b32.xlu0 %v5164, 127
        %v5168 = vpop.permute.xlu0 %5167
        %5170 = vst.msk [vmem:[#allocation2 + $0x58] sm:$0xff] %vm238, %v5168
        %5171 = vrot.lane.b32.xlu0 %v5164, 126
        %v5172 = vpop.permute.xlu0 %5171
        %5174 = vst.msk [vmem:[#allocation2 + $0x60] sm:$0xff] %vm238, %v5172
        %5175 = vrot.lane.b32.xlu0 %v5164, 125
        %v5176 = vpop.permute.xlu0 %5175
        %5178 = vst.msk [vmem:[#allocation2 + $0x68] sm:$0xff] %vm238, %v5176
        %5179 = vrot.lane.b32.xlu0 %v5164, 124
        %v5180 = vpop.permute.xlu0 %5179
        %5182 = vst.msk [vmem:[#allocation2 + $0x70] sm:$0xff] %vm238, %v5180
        %v5183 = vld [vmem:[%s163 + $0xb] sm:$0x1]
        %v5184 = vld [vmem:[%s163 + $0x1b] sm:$0x1]
        %v5185 = vld [vmem:[%s163 + $0x2b] sm:$0x1]
        %v5186 = vld [vmem:[%s163 + $0x3b] sm:$0x1]
        %v5187 = vld [vmem:[%s163 + $0x4b] sm:$0x1]
        %v5188 = vld [vmem:[%s163 + $0x5b] sm:$0x1]
        %v5189 = vld [vmem:[%s163 + $0x6b] sm:$0x1]
        %v5190 = vld [vmem:[%s163 + $0x7b] sm:$0x1]
        %v5199 = vrot.slane %v5184, 7
        %v5200 = vsel %vm217, %v5199, %v5183
        %v5201 = vrot.slane %v5185, 6
        %v5202 = vsel %vm220, %v5201, %v5200
        %v5203 = vrot.slane %v5186, 5
        %v5204 = vsel %vm223, %v5203, %v5202
        %v5205 = vrot.slane %v5187, 4
        %v5206 = vsel %vm226, %v5205, %v5204
        %v5207 = vrot.slane %v5188, 3
        %v5208 = vsel %vm229, %v5207, %v5206
        %v5209 = vrot.slane %v5189, 2
        %v5210 = vsel %vm232, %v5209, %v5208
        %v5211 = vrot.slane %v5190, 1
        %v5212 = vsel %vm235, %v5211, %v5210
        %5214 = vst.msk [vmem:[#allocation2 + $0x78] sm:$0xff] %vm238, %v5212
        %5215 = vrot.lane.b32.xlu0 %v5212, 127
        %v5216 = vpop.permute.xlu0 %5215
        %5218 = vst.msk [vmem:[#allocation2 + $0x80] sm:$0xff] %vm238, %v5216
        %5219 = vrot.lane.b32.xlu0 %v5212, 126
        %v5220 = vpop.permute.xlu0 %5219
        %5222 = vst.msk [vmem:[#allocation2 + $0x88] sm:$0xff] %vm238, %v5220
        %5223 = vrot.lane.b32.xlu0 %v5212, 125
        %v5224 = vpop.permute.xlu0 %5223
        %5226 = vst.msk [vmem:[#allocation2 + $0x90] sm:$0xff] %vm238, %v5224
        %5227 = vrot.lane.b32.xlu0 %v5212, 124
        %v5228 = vpop.permute.xlu0 %5227
        %5230 = vst.msk [vmem:[#allocation2 + $0x98] sm:$0xff] %vm238, %v5228
        %v5231 = vld [vmem:[%s163 + $0xc] sm:$0x1]
        %v5232 = vld [vmem:[%s163 + $0x1c] sm:$0x1]
        %v5233 = vld [vmem:[%s163 + $0x2c] sm:$0x1]
        %v5234 = vld [vmem:[%s163 + $0x3c] sm:$0x1]
        %v5235 = vld [vmem:[%s163 + $0x4c] sm:$0x1]
        %v5236 = vld [vmem:[%s163 + $0x5c] sm:$0x1]
        %v5237 = vld [vmem:[%s163 + $0x6c] sm:$0x1]
        %v5238 = vld [vmem:[%s163 + $0x7c] sm:$0x1]
        %v5247 = vrot.slane %v5232, 7
        %v5248 = vsel %vm217, %v5247, %v5231
        %v5249 = vrot.slane %v5233, 6
        %v5250 = vsel %vm220, %v5249, %v5248
        %v5251 = vrot.slane %v5234, 5
        %v5252 = vsel %vm223, %v5251, %v5250
        %v5253 = vrot.slane %v5235, 4
        %v5254 = vsel %vm226, %v5253, %v5252
        %v5255 = vrot.slane %v5236, 3
        %v5256 = vsel %vm229, %v5255, %v5254
        %v5257 = vrot.slane %v5237, 2
        %v5258 = vsel %vm232, %v5257, %v5256
        %v5259 = vrot.slane %v5238, 1
        %v5260 = vsel %vm235, %v5259, %v5258
        %5262 = vst.msk [vmem:[#allocation2 + $0xa0] sm:$0xff] %vm238, %v5260
        %5263 = vrot.lane.b32.xlu0 %v5260, 127
        %v5264 = vpop.permute.xlu0 %5263
        %5266 = vst.msk [vmem:[#allocation2 + $0xa8] sm:$0xff] %vm238, %v5264
        %5267 = vrot.lane.b32.xlu0 %v5260, 126
        %v5268 = vpop.permute.xlu0 %5267
        %5270 = vst.msk [vmem:[#allocation2 + $0xb0] sm:$0xff] %vm238, %v5268
        %5271 = vrot.lane.b32.xlu0 %v5260, 125
        %v5272 = vpop.permute.xlu0 %5271
        %5274 = vst.msk [vmem:[#allocation2 + $0xb8] sm:$0xff] %vm238, %v5272
        %5275 = vrot.lane.b32.xlu0 %v5260, 124
        %v5276 = vpop.permute.xlu0 %5275
        %5278 = vst.msk [vmem:[#allocation2 + $0xc0] sm:$0xff] %vm238, %v5276
        %v5279 = vld [vmem:[#allocation2] sm:$0xff]
        %v5280 = vld [vmem:[#allocation2 + $0x8] sm:$0xff]
        %v5281 = vld [vmem:[#allocation2 + $0x10] sm:$0xff]
        %v5282 = vld [vmem:[#allocation2 + $0x18] sm:$0xff]
        %v5283 = vld [vmem:[#allocation2 + $0x20] sm:$0xff]
        %v5284 = vld [vmem:[#allocation2 + $0x28] sm:$0xff]
        %v5285 = vld [vmem:[#allocation2 + $0x30] sm:$0xff]
        %v5286 = vld [vmem:[#allocation2 + $0x38] sm:$0xff]
        %v5287 = vld [vmem:[#allocation2 + $0x40] sm:$0xff]
        %v5288 = vld [vmem:[#allocation2 + $0x48] sm:$0xff]
        %v5289 = vld [vmem:[#allocation2 + $0x50] sm:$0xff]
        %v5290 = vld [vmem:[#allocation2 + $0x58] sm:$0xff]
        %v5291 = vld [vmem:[#allocation2 + $0x60] sm:$0xff]
        %v5292 = vld [vmem:[#allocation2 + $0x68] sm:$0xff]
        %v5293 = vld [vmem:[#allocation2 + $0x70] sm:$0xff]
        %v5294 = vld [vmem:[#allocation2 + $0x78] sm:$0xff]
        %v5295 = vld [vmem:[#allocation2 + $0x80] sm:$0xff]
        %v5296 = vld [vmem:[#allocation2 + $0x88] sm:$0xff]
        %v5297 = vld [vmem:[#allocation2 + $0x90] sm:$0xff]
        %v5298 = vld [vmem:[#allocation2 + $0x98] sm:$0xff]
        %v5299 = vld [vmem:[#allocation2 + $0xa0] sm:$0xff]
        %v5300 = vld [vmem:[#allocation2 + $0xa8] sm:$0xff]
        %v5301 = vld [vmem:[#allocation2 + $0xb0] sm:$0xff]
        %v5302 = vld [vmem:[#allocation2 + $0xb8] sm:$0xff]
        %v5303 = vld [vmem:[#allocation2 + $0xc0] sm:$0xff]
        %v5304 = vpack.c.bf16 %v5280, %v5279
        %v5305 = vpack.c.bf16 %v5282, %v5281
        %v5306 = vpack.c.bf16 %v5284, %v5283
        %v5307 = vpack.c.bf16 %v5286, %v5285
        %v5308 = vpack.c.bf16 %v5288, %v5287
        %v5309 = vpack.c.bf16 %v5290, %v5289
        %v5310 = vpack.c.bf16 %v5292, %v5291
        %v5311 = vpack.c.bf16 %v5294, %v5293
        %v5312 = vpack.c.bf16 %v5296, %v5295
        %v5313 = vpack.c.bf16 %v5298, %v5297
        %v5314 = vpack.c.bf16 %v5300, %v5299
        %v5315 = vpack.c.bf16 %v5302, %v5301
        %v5316 = vpack.c.bf16 %v5303, %v5303
        %v5318 = vsel %vm531, %v5316, 0
        %5320 = vmatprep.subr.bf16.mxu0 0
        %5321 = vmatpush1.bf16.msra.mxu0 %v5304
        %5322 = vmatprep.subr.bf16.mxu0 0
        %5323 = vmatpush1.bf16.msra.mxu0 %v5305
        %5324 = vmatprep.subr.bf16.mxu0 0
        %5325 = vmatpush1.bf16.msra.mxu0 %v5306
        %5326 = vmatprep.subr.bf16.mxu0 0
        %5327 = vmatpush1.bf16.msra.mxu0 %v5307
        %5328 = vmatprep.subr.bf16.mxu0 0
        %5329 = vmatpush1.bf16.msra.mxu0 %v5308
        %5330 = vmatprep.subr.bf16.mxu0 0
        %5331 = vmatpush1.bf16.msra.mxu0 %v5309
        %5332 = vmatprep.subr.bf16.mxu0 0
        %5333 = vmatpush1.bf16.msra.mxu0 %v5310
        %5334 = vmatprep.subr.bf16.mxu0 0
        %5335 = vmatpush1.bf16.msra.mxu0 %v5311
        %5336 = vmatprep.subr.bf16.mxu0 0
        %5337 = vmatpush1.bf16.msra.mxu0 %v5312
        %5338 = vmatprep.subr.bf16.mxu0 0
        %5339 = vmatpush1.bf16.msra.mxu0 %v5313
        %5340 = vmatprep.subr.bf16.mxu0 0
        %5341 = vmatpush1.bf16.msra.mxu0 %v5314
        %5342 = vmatprep.subr.bf16.mxu0 0
        %5343 = vmatpush1.bf16.msra.mxu0 %v5315
        %5344 = vmatprep.subr.bf16.mxu0 0
        %5345 = vmatpush1.bf16.msra.mxu0 %v5318
        %5346 = vmatprep.subr.bf16.mxu0 0
        %5347 = vmatpush1.bf16.msra.mxu0 0
        %5348 = vmatprep.subr.bf16.mxu0 0
        %5349 = vmatpush1.bf16.msra.mxu0 0
        %5350 = vmatprep.subr.bf16.mxu0 0
        %5351 = vmatpush1.bf16.msra.mxu0 0
        %5352 = vmatprep.mubr.bf16.mxu0 %v526
        %5353 = vmatmul.mubr.bf16.gmra.mrb[0].mxu0 %v518
        %v5354 = vpop.f32.mrb[0].mxu0
        %v5355 = vadd.f32 %v489, %v5354
        %v5356 = vpop.f32.mrb[0].mxu0
        %v5357 = vpop.f32.mrb[0].mxu0
        %v5358 = vadd.f32 %v494, %v5357
        %v5359 = vpop.f32.mrb[0].mxu0
        %5360 = vmatprep.mubr.bf16.mxu0 %v529
        %5361 = vmatmul.mubr.bf16.gmra.mrb[0].mxu0 %v520
        %v5362 = vpop.f32.mrb[0].mxu0
        %v5363 = vadd.f32 %v499, %v5362
        %v5364 = vpop.f32.mrb[0].mxu0
        %v5365 = vpop.f32.mrb[0].mxu0
        %v5366 = vadd.f32 %v504, %v5365
        %v5367 = vpop.f32.mrb[0].mxu0
        %5368 = vdwg.mxu0
        %v5369 = vmax.f32 %v5355, 0.0
        %v5370 = vmax.f32 %v5358, 0.0
        %v5371 = vmax.f32 %v5363, 0.0
        %v5372 = vmax.f32 %v5366, 0.0
        %v5377 = vcombine.high %v5369, %v5369
        %v5379 = vunpack.c.l.s4 1966171168
        %v5380 = vunpack.c.0.s8 %v5379
        %v5381 = vlaneseq
        %v5382 = vshrl.u32 %v5381, 7
        %v5383 = vsub.s32 %v5380, %v5382
        %v5384 = vrot.slane %v5369, %v5383
        %v5386 = vunpack.c.l.s4 1966171168
        %v5387 = vunpack.c.0.s8 %v5386
        %v5388 = vlaneseq
        %v5389 = vshrl.u32 %v5388, 7
        %v5390 = vsub.s32 %v5387, %v5389
        %v5391 = vrot.slane %v5377, %v5390
        %v5392 = vcombine.high %v5384, %v5384
        %v5393 = vcombine.high %v5391, %v5391
        %v5395 = vunpack.c.l.s4 1966171168
        %v5396 = vunpack.c.0.s8 %v5395
        %v5397 = vlaneseq
        %v5398 = vshrl.u32 %v5397, 7
        %v5399 = vsub.s32 %v5396, %v5398
        %v5400 = vrot.slane %v5384, %v5399
        %v5402 = vunpack.c.l.s4 1966171168
        %v5403 = vunpack.c.0.s8 %v5402
        %v5404 = vlaneseq
        %v5405 = vshrl.u32 %v5404, 7
        %v5406 = vsub.s32 %v5403, %v5405
        %v5407 = vrot.slane %v5391, %v5406
        %v5409 = vunpack.c.l.s4 1966171168
        %v5410 = vunpack.c.0.s8 %v5409
        %v5411 = vlaneseq
        %v5412 = vshrl.u32 %v5411, 7
        %v5413 = vsub.s32 %v5410, %v5412
        %v5414 = vrot.slane %v5392, %v5413
        %v5416 = vunpack.c.l.s4 1966171168
        %v5417 = vunpack.c.0.s8 %v5416
        %v5418 = vlaneseq
        %v5419 = vshrl.u32 %v5418, 7
        %v5420 = vsub.s32 %v5417, %v5419
        %v5421 = vrot.slane %v5393, %v5420
        %v5422 = vcombine.high %v5400, %v5400
        %v5423 = vcombine.high %v5407, %v5407
        %v5424 = vcombine.high %v5414, %v5414
        %v5425 = vcombine.high %v5421, %v5421
        %v5426 = vcombine.high %v5370, %v5370
        %v5428 = vunpack.c.l.s4 1966171168
        %v5429 = vunpack.c.0.s8 %v5428
        %v5430 = vlaneseq
        %v5431 = vshrl.u32 %v5430, 7
        %v5432 = vsub.s32 %v5429, %v5431
        %v5433 = vrot.slane %v5370, %v5432
        %v5435 = vunpack.c.l.s4 1966171168
        %v5436 = vunpack.c.0.s8 %v5435
        %v5437 = vlaneseq
        %v5438 = vshrl.u32 %v5437, 7
        %v5439 = vsub.s32 %v5436, %v5438
        %v5440 = vrot.slane %v5426, %v5439
        %v5441 = vcombine.high %v5433, %v5433
        %v5442 = vcombine.high %v5440, %v5440
        %v5444 = vunpack.c.l.s4 1966171168
        %v5445 = vunpack.c.0.s8 %v5444
        %v5446 = vlaneseq
        %v5447 = vshrl.u32 %v5446, 7
        %v5448 = vsub.s32 %v5445, %v5447
        %v5449 = vrot.slane %v5433, %v5448
        %v5451 = vunpack.c.l.s4 1966171168
        %v5452 = vunpack.c.0.s8 %v5451
        %v5453 = vlaneseq
        %v5454 = vshrl.u32 %v5453, 7
        %v5455 = vsub.s32 %v5452, %v5454
        %v5456 = vrot.slane %v5440, %v5455
        %v5458 = vunpack.c.l.s4 1966171168
        %v5459 = vunpack.c.0.s8 %v5458
        %v5460 = vlaneseq
        %v5461 = vshrl.u32 %v5460, 7
        %v5462 = vsub.s32 %v5459, %v5461
        %v5463 = vrot.slane %v5441, %v5462
        %v5465 = vunpack.c.l.s4 1966171168
        %v5466 = vunpack.c.0.s8 %v5465
        %v5467 = vlaneseq
        %v5468 = vshrl.u32 %v5467, 7
        %v5469 = vsub.s32 %v5466, %v5468
        %v5470 = vrot.slane %v5442, %v5469
        %v5471 = vcombine.high %v5449, %v5449
        %v5472 = vcombine.high %v5456, %v5456
        %v5473 = vcombine.high %v5463, %v5463
        %v5474 = vcombine.high %v5470, %v5470
        %v5475 = vcombine.high %v5371, %v5371
        %v5477 = vunpack.c.l.s4 1966171168
        %v5478 = vunpack.c.0.s8 %v5477
        %v5479 = vlaneseq
        %v5480 = vshrl.u32 %v5479, 7
        %v5481 = vsub.s32 %v5478, %v5480
        %v5482 = vrot.slane %v5371, %v5481
        %v5484 = vunpack.c.l.s4 1966171168
        %v5485 = vunpack.c.0.s8 %v5484
        %v5486 = vlaneseq
        %v5487 = vshrl.u32 %v5486, 7
        %v5488 = vsub.s32 %v5485, %v5487
        %v5489 = vrot.slane %v5475, %v5488
        %v5490 = vcombine.high %v5482, %v5482
        %v5491 = vcombine.high %v5489, %v5489
        %v5493 = vunpack.c.l.s4 1966171168
        %v5494 = vunpack.c.0.s8 %v5493
        %v5495 = vlaneseq
        %v5496 = vshrl.u32 %v5495, 7
        %v5497 = vsub.s32 %v5494, %v5496
        %v5498 = vrot.slane %v5482, %v5497
        %v5500 = vunpack.c.l.s4 1966171168
        %v5501 = vunpack.c.0.s8 %v5500
        %v5502 = vlaneseq
        %v5503 = vshrl.u32 %v5502, 7
        %v5504 = vsub.s32 %v5501, %v5503
        %v5505 = vrot.slane %v5489, %v5504
        %v5507 = vunpack.c.l.s4 1966171168
        %v5508 = vunpack.c.0.s8 %v5507
        %v5509 = vlaneseq
        %v5510 = vshrl.u32 %v5509, 7
        %v5511 = vsub.s32 %v5508, %v5510
        %v5512 = vrot.slane %v5490, %v5511
        %v5514 = vunpack.c.l.s4 1966171168
        %v5515 = vunpack.c.0.s8 %v5514
        %v5516 = vlaneseq
        %v5517 = vshrl.u32 %v5516, 7
        %v5518 = vsub.s32 %v5515, %v5517
        %v5519 = vrot.slane %v5491, %v5518
        %v5520 = vcombine.high %v5498, %v5498
        %v5521 = vcombine.high %v5505, %v5505
        %v5522 = vcombine.high %v5512, %v5512
        %v5523 = vcombine.high %v5519, %v5519
        %v5524 = vcombine.high %v5372, %v5372
        %v5526 = vunpack.c.l.s4 1966171168
        %v5527 = vunpack.c.0.s8 %v5526
        %v5528 = vlaneseq
        %v5529 = vshrl.u32 %v5528, 7
        %v5530 = vsub.s32 %v5527, %v5529
        %v5531 = vrot.slane %v5372, %v5530
        %v5533 = vunpack.c.l.s4 1966171168
        %v5534 = vunpack.c.0.s8 %v5533
        %v5535 = vlaneseq
        %v5536 = vshrl.u32 %v5535, 7
        %v5537 = vsub.s32 %v5534, %v5536
        %v5538 = vrot.slane %v5524, %v5537
        %v5539 = vcombine.high %v5531, %v5531
        %v5540 = vcombine.high %v5538, %v5538
        %v5542 = vunpack.c.l.s4 1966171168
        %v5543 = vunpack.c.0.s8 %v5542
        %v5544 = vlaneseq
        %v5545 = vshrl.u32 %v5544, 7
        %v5546 = vsub.s32 %v5543, %v5545
        %v5547 = vrot.slane %v5531, %v5546
        %v5549 = vunpack.c.l.s4 1966171168
        %v5550 = vunpack.c.0.s8 %v5549
        %v5551 = vlaneseq
        %v5552 = vshrl.u32 %v5551, 7
        %v5553 = vsub.s32 %v5550, %v5552
        %v5554 = vrot.slane %v5538, %v5553
        %v5556 = vunpack.c.l.s4 1966171168
        %v5557 = vunpack.c.0.s8 %v5556
        %v5558 = vlaneseq
        %v5559 = vshrl.u32 %v5558, 7
        %v5560 = vsub.s32 %v5557, %v5559
        %v5561 = vrot.slane %v5539, %v5560
        %v5563 = vunpack.c.l.s4 1966171168
        %v5564 = vunpack.c.0.s8 %v5563
        %v5565 = vlaneseq
        %v5566 = vshrl.u32 %v5565, 7
        %v5567 = vsub.s32 %v5564, %v5566
        %v5568 = vrot.slane %v5540, %v5567
        %v5569 = vcombine.high %v5547, %v5547
        %v5570 = vcombine.high %v5554, %v5554
        %v5571 = vcombine.high %v5561, %v5561
        %v5572 = vcombine.high %v5568, %v5568
        %5605 = vst.msk [vmem:[%s190 + $0x8] sm:$0x1] %vm820, %v5400
        %5606 = vst.msk [vmem:[%s190 + $0x18] sm:$0x1] %vm820, %v5414
        %5607 = vst.msk [vmem:[%s190 + $0x28] sm:$0x1] %vm820, %v5422
        %5608 = vst.msk [vmem:[%s190 + $0x38] sm:$0x1] %vm820, %v5424
        %5609 = vst.msk [vmem:[%s190 + $0x48] sm:$0x1] %vm820, %v5407
        %5610 = vst.msk [vmem:[%s190 + $0x58] sm:$0x1] %vm820, %v5421
        %5611 = vst.msk [vmem:[%s190 + $0x68] sm:$0x1] %vm820, %v5423
        %5612 = vst.msk [vmem:[%s190 + $0x78] sm:$0x1] %vm820, %v5425
        %5613 = vst.msk [vmem:[%s190 + $0x88] sm:$0x1] %vm820, %v5449
        %5614 = vst.msk [vmem:[%s190 + $0x98] sm:$0x1] %vm820, %v5463
        %5615 = vst.msk [vmem:[%s190 + $0xa8] sm:$0x1] %vm820, %v5471
        %5616 = vst.msk [vmem:[%s190 + $0xb8] sm:$0x1] %vm820, %v5473
        %5617 = vst.msk [vmem:[%s190 + $0xc8] sm:$0x1] %vm820, %v5456
        %5618 = vst.msk [vmem:[%s190 + $0xd8] sm:$0x1] %vm820, %v5470
        %5619 = vst.msk [vmem:[%s190 + $0xe8] sm:$0x1] %vm820, %v5472
        %5620 = vst.msk [vmem:[%s190 + $0xf8] sm:$0x1] %vm820, %v5474
        %5621 = vst.msk [vmem:[%s190 + $0x108] sm:$0x1] %vm820, %v5498
        %5622 = vst.msk [vmem:[%s190 + $0x118] sm:$0x1] %vm820, %v5512
        %5623 = vst.msk [vmem:[%s190 + $0x128] sm:$0x1] %vm820, %v5520
        %5624 = vst.msk [vmem:[%s190 + $0x138] sm:$0x1] %vm820, %v5522
        %5625 = vst.msk [vmem:[%s190 + $0x148] sm:$0x1] %vm820, %v5505
        %5626 = vst.msk [vmem:[%s190 + $0x158] sm:$0x1] %vm820, %v5519
        %5627 = vst.msk [vmem:[%s190 + $0x168] sm:$0x1] %vm820, %v5521
        %5628 = vst.msk [vmem:[%s190 + $0x178] sm:$0x1] %vm820, %v5523
        %5629 = vst.msk [vmem:[%s190 + $0x188] sm:$0x1] %vm820, %v5547
        %5630 = vst.msk [vmem:[%s190 + $0x198] sm:$0x1] %vm820, %v5561
        %5631 = vst.msk [vmem:[%s190 + $0x1a8] sm:$0x1] %vm820, %v5569
        %5632 = vst.msk [vmem:[%s190 + $0x1b8] sm:$0x1] %vm820, %v5571
        %5633 = vst.msk [vmem:[%s190 + $0x1c8] sm:$0x1] %vm820, %v5554
        %5634 = vst.msk [vmem:[%s190 + $0x1d8] sm:$0x1] %vm820, %v5568
        %5635 = vst.msk [vmem:[%s190 + $0x1e8] sm:$0x1] %vm820, %v5570
        %5636 = vst.msk [vmem:[%s190 + $0x1f8] sm:$0x1] %vm820, %v5572
        %v5637 = vld [vmem:[%s163 + $0x9] sm:$0x1]
        %v5638 = vld [vmem:[%s163 + $0x19] sm:$0x1]
        %v5639 = vld [vmem:[%s163 + $0x29] sm:$0x1]
        %v5640 = vld [vmem:[%s163 + $0x39] sm:$0x1]
        %v5641 = vld [vmem:[%s163 + $0x49] sm:$0x1]
        %v5642 = vld [vmem:[%s163 + $0x59] sm:$0x1]
        %v5643 = vld [vmem:[%s163 + $0x69] sm:$0x1]
        %v5644 = vld [vmem:[%s163 + $0x79] sm:$0x1]
        %v5653 = vrot.slane %v5638, 7
        %v5654 = vsel %vm217, %v5653, %v5637
        %v5655 = vrot.slane %v5639, 6
        %v5656 = vsel %vm220, %v5655, %v5654
        %v5657 = vrot.slane %v5640, 5
        %v5658 = vsel %vm223, %v5657, %v5656
        %v5659 = vrot.slane %v5641, 4
        %v5660 = vsel %vm226, %v5659, %v5658
        %v5661 = vrot.slane %v5642, 3
        %v5662 = vsel %vm229, %v5661, %v5660
        %v5663 = vrot.slane %v5643, 2
        %v5664 = vsel %vm232, %v5663, %v5662
        %v5665 = vrot.slane %v5644, 1
        %v5666 = vsel %vm235, %v5665, %v5664
        %5668 = vst.msk [vmem:[#allocation2] sm:$0xff] %vm238, %v5666
        %5669 = vrot.lane.b32.xlu0 %v5666, 127
        %v5670 = vpop.permute.xlu0 %5669
        %5672 = vst.msk [vmem:[#allocation2 + $0x8] sm:$0xff] %vm238, %v5670
        %5673 = vrot.lane.b32.xlu0 %v5666, 126
        %v5674 = vpop.permute.xlu0 %5673
        %5676 = vst.msk [vmem:[#allocation2 + $0x10] sm:$0xff] %vm238, %v5674
        %5677 = vrot.lane.b32.xlu0 %v5666, 125
        %v5678 = vpop.permute.xlu0 %5677
        %5680 = vst.msk [vmem:[#allocation2 + $0x18] sm:$0xff] %vm238, %v5678
        %5681 = vrot.lane.b32.xlu0 %v5666, 124
        %v5682 = vpop.permute.xlu0 %5681
        %5684 = vst.msk [vmem:[#allocation2 + $0x20] sm:$0xff] %vm238, %v5682
        %v5685 = vld [vmem:[%s163 + $0xa] sm:$0x1]
        %v5686 = vld [vmem:[%s163 + $0x1a] sm:$0x1]
        %v5687 = vld [vmem:[%s163 + $0x2a] sm:$0x1]
        %v5688 = vld [vmem:[%s163 + $0x3a] sm:$0x1]
        %v5689 = vld [vmem:[%s163 + $0x4a] sm:$0x1]
        %v5690 = vld [vmem:[%s163 + $0x5a] sm:$0x1]
        %v5691 = vld [vmem:[%s163 + $0x6a] sm:$0x1]
        %v5692 = vld [vmem:[%s163 + $0x7a] sm:$0x1]
        %v5701 = vrot.slane %v5686, 7
        %v5702 = vsel %vm217, %v5701, %v5685
        %v5703 = vrot.slane %v5687, 6
        %v5704 = vsel %vm220, %v5703, %v5702
        %v5705 = vrot.slane %v5688, 5
        %v5706 = vsel %vm223, %v5705, %v5704
        %v5707 = vrot.slane %v5689, 4
        %v5708 = vsel %vm226, %v5707, %v5706
        %v5709 = vrot.slane %v5690, 3
        %v5710 = vsel %vm229, %v5709, %v5708
        %v5711 = vrot.slane %v5691, 2
        %v5712 = vsel %vm232, %v5711, %v5710
        %v5713 = vrot.slane %v5692, 1
        %v5714 = vsel %vm235, %v5713, %v5712
        %5716 = vst.msk [vmem:[#allocation2 + $0x28] sm:$0xff] %vm238, %v5714
        %5717 = vrot.lane.b32.xlu0 %v5714, 127
        %v5718 = vpop.permute.xlu0 %5717
        %5720 = vst.msk [vmem:[#allocation2 + $0x30] sm:$0xff] %vm238, %v5718
        %5721 = vrot.lane.b32.xlu0 %v5714, 126
        %v5722 = vpop.permute.xlu0 %5721
        %5724 = vst.msk [vmem:[#allocation2 + $0x38] sm:$0xff] %vm238, %v5722
        %5725 = vrot.lane.b32.xlu0 %v5714, 125
        %v5726 = vpop.permute.xlu0 %5725
        %5728 = vst.msk [vmem:[#allocation2 + $0x40] sm:$0xff] %vm238, %v5726
        %5729 = vrot.lane.b32.xlu0 %v5714, 124
        %v5730 = vpop.permute.xlu0 %5729
        %5732 = vst.msk [vmem:[#allocation2 + $0x48] sm:$0xff] %vm238, %v5730
        %v5733 = vld [vmem:[%s163 + $0xb] sm:$0x1]
        %v5734 = vld [vmem:[%s163 + $0x1b] sm:$0x1]
        %v5735 = vld [vmem:[%s163 + $0x2b] sm:$0x1]
        %v5736 = vld [vmem:[%s163 + $0x3b] sm:$0x1]
        %v5737 = vld [vmem:[%s163 + $0x4b] sm:$0x1]
        %v5738 = vld [vmem:[%s163 + $0x5b] sm:$0x1]
        %v5739 = vld [vmem:[%s163 + $0x6b] sm:$0x1]
        %v5740 = vld [vmem:[%s163 + $0x7b] sm:$0x1]
        %v5749 = vrot.slane %v5734, 7
        %v5750 = vsel %vm217, %v5749, %v5733
        %v5751 = vrot.slane %v5735, 6
        %v5752 = vsel %vm220, %v5751, %v5750
        %v5753 = vrot.slane %v5736, 5
        %v5754 = vsel %vm223, %v5753, %v5752
        %v5755 = vrot.slane %v5737, 4
        %v5756 = vsel %vm226, %v5755, %v5754
        %v5757 = vrot.slane %v5738, 3
        %v5758 = vsel %vm229, %v5757, %v5756
        %v5759 = vrot.slane %v5739, 2
        %v5760 = vsel %vm232, %v5759, %v5758
        %v5761 = vrot.slane %v5740, 1
        %v5762 = vsel %vm235, %v5761, %v5760
        %5764 = vst.msk [vmem:[#allocation2 + $0x50] sm:$0xff] %vm238, %v5762
        %5765 = vrot.lane.b32.xlu0 %v5762, 127
        %v5766 = vpop.permute.xlu0 %5765
        %5768 = vst.msk [vmem:[#allocation2 + $0x58] sm:$0xff] %vm238, %v5766
        %5769 = vrot.lane.b32.xlu0 %v5762, 126
        %v5770 = vpop.permute.xlu0 %5769
        %5772 = vst.msk [vmem:[#allocation2 + $0x60] sm:$0xff] %vm238, %v5770
        %5773 = vrot.lane.b32.xlu0 %v5762, 125
        %v5774 = vpop.permute.xlu0 %5773
        %5776 = vst.msk [vmem:[#allocation2 + $0x68] sm:$0xff] %vm238, %v5774
        %5777 = vrot.lane.b32.xlu0 %v5762, 124
        %v5778 = vpop.permute.xlu0 %5777
        %5780 = vst.msk [vmem:[#allocation2 + $0x70] sm:$0xff] %vm238, %v5778
        %v5781 = vld [vmem:[%s163 + $0xc] sm:$0x1]
        %v5782 = vld [vmem:[%s163 + $0x1c] sm:$0x1]
        %v5783 = vld [vmem:[%s163 + $0x2c] sm:$0x1]
        %v5784 = vld [vmem:[%s163 + $0x3c] sm:$0x1]
        %v5785 = vld [vmem:[%s163 + $0x4c] sm:$0x1]
        %v5786 = vld [vmem:[%s163 + $0x5c] sm:$0x1]
        %v5787 = vld [vmem:[%s163 + $0x6c] sm:$0x1]
        %v5788 = vld [vmem:[%s163 + $0x7c] sm:$0x1]
        %v5797 = vrot.slane %v5782, 7
        %v5798 = vsel %vm217, %v5797, %v5781
        %v5799 = vrot.slane %v5783, 6
        %v5800 = vsel %vm220, %v5799, %v5798
        %v5801 = vrot.slane %v5784, 5
        %v5802 = vsel %vm223, %v5801, %v5800
        %v5803 = vrot.slane %v5785, 4
        %v5804 = vsel %vm226, %v5803, %v5802
        %v5805 = vrot.slane %v5786, 3
        %v5806 = vsel %vm229, %v5805, %v5804
        %v5807 = vrot.slane %v5787, 2
        %v5808 = vsel %vm232, %v5807, %v5806
        %v5809 = vrot.slane %v5788, 1
        %v5810 = vsel %vm235, %v5809, %v5808
        %5812 = vst.msk [vmem:[#allocation2 + $0x78] sm:$0xff] %vm238, %v5810
        %5813 = vrot.lane.b32.xlu0 %v5810, 127
        %v5814 = vpop.permute.xlu0 %5813
        %5816 = vst.msk [vmem:[#allocation2 + $0x80] sm:$0xff] %vm238, %v5814
        %5817 = vrot.lane.b32.xlu0 %v5810, 126
        %v5818 = vpop.permute.xlu0 %5817
        %5820 = vst.msk [vmem:[#allocation2 + $0x88] sm:$0xff] %vm238, %v5818
        %5821 = vrot.lane.b32.xlu0 %v5810, 125
        %v5822 = vpop.permute.xlu0 %5821
        %5824 = vst.msk [vmem:[#allocation2 + $0x90] sm:$0xff] %vm238, %v5822
        %5825 = vrot.lane.b32.xlu0 %v5810, 124
        %v5826 = vpop.permute.xlu0 %5825
        %5828 = vst.msk [vmem:[#allocation2 + $0x98] sm:$0xff] %vm238, %v5826
        %v5829 = vld [vmem:[%s163 + $0xd] sm:$0x1]
        %v5830 = vld [vmem:[%s163 + $0x1d] sm:$0x1]
        %v5831 = vld [vmem:[%s163 + $0x2d] sm:$0x1]
        %v5832 = vld [vmem:[%s163 + $0x3d] sm:$0x1]
        %v5833 = vld [vmem:[%s163 + $0x4d] sm:$0x1]
        %v5834 = vld [vmem:[%s163 + $0x5d] sm:$0x1]
        %v5835 = vld [vmem:[%s163 + $0x6d] sm:$0x1]
        %v5836 = vld [vmem:[%s163 + $0x7d] sm:$0x1]
        %v5845 = vrot.slane %v5830, 7
        %v5846 = vsel %vm217, %v5845, %v5829
        %v5847 = vrot.slane %v5831, 6
        %v5848 = vsel %vm220, %v5847, %v5846
        %v5849 = vrot.slane %v5832, 5
        %v5850 = vsel %vm223, %v5849, %v5848
        %v5851 = vrot.slane %v5833, 4
        %v5852 = vsel %vm226, %v5851, %v5850
        %v5853 = vrot.slane %v5834, 3
        %v5854 = vsel %vm229, %v5853, %v5852
        %v5855 = vrot.slane %v5835, 2
        %v5856 = vsel %vm232, %v5855, %v5854
        %v5857 = vrot.slane %v5836, 1
        %v5858 = vsel %vm235, %v5857, %v5856
        %5860 = vst.msk [vmem:[#allocation2 + $0xa0] sm:$0xff] %vm238, %v5858
        %5861 = vrot.lane.b32.xlu0 %v5858, 127
        %v5862 = vpop.permute.xlu0 %5861
        %5864 = vst.msk [vmem:[#allocation2 + $0xa8] sm:$0xff] %vm238, %v5862
        %5865 = vrot.lane.b32.xlu0 %v5858, 126
        %v5866 = vpop.permute.xlu0 %5865
        %5868 = vst.msk [vmem:[#allocation2 + $0xb0] sm:$0xff] %vm238, %v5866
        %5869 = vrot.lane.b32.xlu0 %v5858, 125
        %v5870 = vpop.permute.xlu0 %5869
        %5872 = vst.msk [vmem:[#allocation2 + $0xb8] sm:$0xff] %vm238, %v5870
        %5873 = vrot.lane.b32.xlu0 %v5858, 124
        %v5874 = vpop.permute.xlu0 %5873
        %5876 = vst.msk [vmem:[#allocation2 + $0xc0] sm:$0xff] %vm238, %v5874
        %v5877 = vld [vmem:[#allocation2] sm:$0xff]
        %v5878 = vld [vmem:[#allocation2 + $0x8] sm:$0xff]
        %v5879 = vld [vmem:[#allocation2 + $0x10] sm:$0xff]
        %v5880 = vld [vmem:[#allocation2 + $0x18] sm:$0xff]
        %v5881 = vld [vmem:[#allocation2 + $0x20] sm:$0xff]
        %v5882 = vld [vmem:[#allocation2 + $0x28] sm:$0xff]
        %v5883 = vld [vmem:[#allocation2 + $0x30] sm:$0xff]
        %v5884 = vld [vmem:[#allocation2 + $0x38] sm:$0xff]
        %v5885 = vld [vmem:[#allocation2 + $0x40] sm:$0xff]
        %v5886 = vld [vmem:[#allocation2 + $0x48] sm:$0xff]
        %v5887 = vld [vmem:[#allocation2 + $0x50] sm:$0xff]
        %v5888 = vld [vmem:[#allocation2 + $0x58] sm:$0xff]
        %v5889 = vld [vmem:[#allocation2 + $0x60] sm:$0xff]
        %v5890 = vld [vmem:[#allocation2 + $0x68] sm:$0xff]
        %v5891 = vld [vmem:[#allocation2 + $0x70] sm:$0xff]
        %v5892 = vld [vmem:[#allocation2 + $0x78] sm:$0xff]
        %v5893 = vld [vmem:[#allocation2 + $0x80] sm:$0xff]
        %v5894 = vld [vmem:[#allocation2 + $0x88] sm:$0xff]
        %v5895 = vld [vmem:[#allocation2 + $0x90] sm:$0xff]
        %v5896 = vld [vmem:[#allocation2 + $0x98] sm:$0xff]
        %v5897 = vld [vmem:[#allocation2 + $0xa0] sm:$0xff]
        %v5898 = vld [vmem:[#allocation2 + $0xa8] sm:$0xff]
        %v5899 = vld [vmem:[#allocation2 + $0xb0] sm:$0xff]
        %v5900 = vld [vmem:[#allocation2 + $0xb8] sm:$0xff]
        %v5901 = vld [vmem:[#allocation2 + $0xc0] sm:$0xff]
        %v5902 = vpack.c.bf16 %v5878, %v5877
        %v5903 = vpack.c.bf16 %v5880, %v5879
        %v5904 = vpack.c.bf16 %v5882, %v5881
        %v5905 = vpack.c.bf16 %v5884, %v5883
        %v5906 = vpack.c.bf16 %v5886, %v5885
        %v5907 = vpack.c.bf16 %v5888, %v5887
        %v5908 = vpack.c.bf16 %v5890, %v5889
        %v5909 = vpack.c.bf16 %v5892, %v5891
        %v5910 = vpack.c.bf16 %v5894, %v5893
        %v5911 = vpack.c.bf16 %v5896, %v5895
        %v5912 = vpack.c.bf16 %v5898, %v5897
        %v5913 = vpack.c.bf16 %v5900, %v5899
        %v5914 = vpack.c.bf16 %v5901, %v5901
        %v5916 = vsel %vm531, %v5914, 0
        %5918 = vmatprep.subr.bf16.mxu0 0
        %5919 = vmatpush1.bf16.msra.mxu0 %v5902
        %5920 = vmatprep.subr.bf16.mxu0 0
        %5921 = vmatpush1.bf16.msra.mxu0 %v5903
        %5922 = vmatprep.subr.bf16.mxu0 0
        %5923 = vmatpush1.bf16.msra.mxu0 %v5904
        %5924 = vmatprep.subr.bf16.mxu0 0
        %5925 = vmatpush1.bf16.msra.mxu0 %v5905
        %5926 = vmatprep.subr.bf16.mxu0 0
        %5927 = vmatpush1.bf16.msra.mxu0 %v5906
        %5928 = vmatprep.subr.bf16.mxu0 0
        %5929 = vmatpush1.bf16.msra.mxu0 %v5907
        %5930 = vmatprep.subr.bf16.mxu0 0
        %5931 = vmatpush1.bf16.msra.mxu0 %v5908
        %5932 = vmatprep.subr.bf16.mxu0 0
        %5933 = vmatpush1.bf16.msra.mxu0 %v5909
        %5934 = vmatprep.subr.bf16.mxu0 0
        %5935 = vmatpush1.bf16.msra.mxu0 %v5910
        %5936 = vmatprep.subr.bf16.mxu0 0
        %5937 = vmatpush1.bf16.msra.mxu0 %v5911
        %5938 = vmatprep.subr.bf16.mxu0 0
        %5939 = vmatpush1.bf16.msra.mxu0 %v5912
        %5940 = vmatprep.subr.bf16.mxu0 0
        %5941 = vmatpush1.bf16.msra.mxu0 %v5913
        %5942 = vmatprep.subr.bf16.mxu0 0
        %5943 = vmatpush1.bf16.msra.mxu0 %v5916
        %5944 = vmatprep.subr.bf16.mxu0 0
        %5945 = vmatpush1.bf16.msra.mxu0 0
        %5946 = vmatprep.subr.bf16.mxu0 0
        %5947 = vmatpush1.bf16.msra.mxu0 0
        %5948 = vmatprep.subr.bf16.mxu0 0
        %5949 = vmatpush1.bf16.msra.mxu0 0
        %5950 = vmatprep.mubr.bf16.mxu0 %v526
        %5951 = vmatmul.mubr.bf16.gmra.mrb[0].mxu0 %v518
        %v5952 = vpop.f32.mrb[0].mxu0
        %v5953 = vadd.f32 %v489, %v5952
        %v5954 = vpop.f32.mrb[0].mxu0
        %v5955 = vpop.f32.mrb[0].mxu0
        %v5956 = vadd.f32 %v494, %v5955
        %v5957 = vpop.f32.mrb[0].mxu0
        %5958 = vmatprep.mubr.bf16.mxu0 %v529
        %5959 = vmatmul.mubr.bf16.gmra.mrb[0].mxu0 %v520
        %v5960 = vpop.f32.mrb[0].mxu0
        %v5961 = vadd.f32 %v499, %v5960
        %v5962 = vpop.f32.mrb[0].mxu0
        %v5963 = vpop.f32.mrb[0].mxu0
        %v5964 = vadd.f32 %v504, %v5963
        %v5965 = vpop.f32.mrb[0].mxu0
        %5966 = vdwg.mxu0
        %v5967 = vmax.f32 %v5953, 0.0
        %v5968 = vmax.f32 %v5956, 0.0
        %v5969 = vmax.f32 %v5961, 0.0
        %v5970 = vmax.f32 %v5964, 0.0
        %v5975 = vcombine.high %v5967, %v5967
        %v5977 = vunpack.c.l.s4 1966171168
        %v5978 = vunpack.c.0.s8 %v5977
        %v5979 = vlaneseq
        %v5980 = vshrl.u32 %v5979, 7
        %v5981 = vsub.s32 %v5978, %v5980
        %v5982 = vrot.slane %v5967, %v5981
        %v5984 = vunpack.c.l.s4 1966171168
        %v5985 = vunpack.c.0.s8 %v5984
        %v5986 = vlaneseq
        %v5987 = vshrl.u32 %v5986, 7
        %v5988 = vsub.s32 %v5985, %v5987
        %v5989 = vrot.slane %v5975, %v5988
        %v5990 = vcombine.high %v5982, %v5982
        %v5991 = vcombine.high %v5989, %v5989
        %v5993 = vunpack.c.l.s4 1966171168
        %v5994 = vunpack.c.0.s8 %v5993
        %v5995 = vlaneseq
        %v5996 = vshrl.u32 %v5995, 7
        %v5997 = vsub.s32 %v5994, %v5996
        %v5998 = vrot.slane %v5982, %v5997
        %v6000 = vunpack.c.l.s4 1966171168
        %v6001 = vunpack.c.0.s8 %v6000
        %v6002 = vlaneseq
        %v6003 = vshrl.u32 %v6002, 7
        %v6004 = vsub.s32 %v6001, %v6003
        %v6005 = vrot.slane %v5989, %v6004
        %v6007 = vunpack.c.l.s4 1966171168
        %v6008 = vunpack.c.0.s8 %v6007
        %v6009 = vlaneseq
        %v6010 = vshrl.u32 %v6009, 7
        %v6011 = vsub.s32 %v6008, %v6010
        %v6012 = vrot.slane %v5990, %v6011
        %v6014 = vunpack.c.l.s4 1966171168
        %v6015 = vunpack.c.0.s8 %v6014
        %v6016 = vlaneseq
        %v6017 = vshrl.u32 %v6016, 7
        %v6018 = vsub.s32 %v6015, %v6017
        %v6019 = vrot.slane %v5991, %v6018
        %v6020 = vcombine.high %v5998, %v5998
        %v6021 = vcombine.high %v6005, %v6005
        %v6022 = vcombine.high %v6012, %v6012
        %v6023 = vcombine.high %v6019, %v6019
        %v6024 = vcombine.high %v5968, %v5968
        %v6026 = vunpack.c.l.s4 1966171168
        %v6027 = vunpack.c.0.s8 %v6026
        %v6028 = vlaneseq
        %v6029 = vshrl.u32 %v6028, 7
        %v6030 = vsub.s32 %v6027, %v6029
        %v6031 = vrot.slane %v5968, %v6030
        %v6033 = vunpack.c.l.s4 1966171168
        %v6034 = vunpack.c.0.s8 %v6033
        %v6035 = vlaneseq
        %v6036 = vshrl.u32 %v6035, 7
        %v6037 = vsub.s32 %v6034, %v6036
        %v6038 = vrot.slane %v6024, %v6037
        %v6039 = vcombine.high %v6031, %v6031
        %v6040 = vcombine.high %v6038, %v6038
        %v6042 = vunpack.c.l.s4 1966171168
        %v6043 = vunpack.c.0.s8 %v6042
        %v6044 = vlaneseq
        %v6045 = vshrl.u32 %v6044, 7
        %v6046 = vsub.s32 %v6043, %v6045
        %v6047 = vrot.slane %v6031, %v6046
        %v6049 = vunpack.c.l.s4 1966171168
        %v6050 = vunpack.c.0.s8 %v6049
        %v6051 = vlaneseq
        %v6052 = vshrl.u32 %v6051, 7
        %v6053 = vsub.s32 %v6050, %v6052
        %v6054 = vrot.slane %v6038, %v6053
        %v6056 = vunpack.c.l.s4 1966171168
        %v6057 = vunpack.c.0.s8 %v6056
        %v6058 = vlaneseq
        %v6059 = vshrl.u32 %v6058, 7
        %v6060 = vsub.s32 %v6057, %v6059
        %v6061 = vrot.slane %v6039, %v6060
        %v6063 = vunpack.c.l.s4 1966171168
        %v6064 = vunpack.c.0.s8 %v6063
        %v6065 = vlaneseq
        %v6066 = vshrl.u32 %v6065, 7
        %v6067 = vsub.s32 %v6064, %v6066
        %v6068 = vrot.slane %v6040, %v6067
        %v6069 = vcombine.high %v6047, %v6047
        %v6070 = vcombine.high %v6054, %v6054
        %v6071 = vcombine.high %v6061, %v6061
        %v6072 = vcombine.high %v6068, %v6068
        %v6073 = vcombine.high %v5969, %v5969
        %v6075 = vunpack.c.l.s4 1966171168
        %v6076 = vunpack.c.0.s8 %v6075
        %v6077 = vlaneseq
        %v6078 = vshrl.u32 %v6077, 7
        %v6079 = vsub.s32 %v6076, %v6078
        %v6080 = vrot.slane %v5969, %v6079
        %v6082 = vunpack.c.l.s4 1966171168
        %v6083 = vunpack.c.0.s8 %v6082
        %v6084 = vlaneseq
        %v6085 = vshrl.u32 %v6084, 7
        %v6086 = vsub.s32 %v6083, %v6085
        %v6087 = vrot.slane %v6073, %v6086
        %v6088 = vcombine.high %v6080, %v6080
        %v6089 = vcombine.high %v6087, %v6087
        %v6091 = vunpack.c.l.s4 1966171168
        %v6092 = vunpack.c.0.s8 %v6091
        %v6093 = vlaneseq
        %v6094 = vshrl.u32 %v6093, 7
        %v6095 = vsub.s32 %v6092, %v6094
        %v6096 = vrot.slane %v6080, %v6095
        %v6098 = vunpack.c.l.s4 1966171168
        %v6099 = vunpack.c.0.s8 %v6098
        %v6100 = vlaneseq
        %v6101 = vshrl.u32 %v6100, 7
        %v6102 = vsub.s32 %v6099, %v6101
        %v6103 = vrot.slane %v6087, %v6102
        %v6105 = vunpack.c.l.s4 1966171168
        %v6106 = vunpack.c.0.s8 %v6105
        %v6107 = vlaneseq
        %v6108 = vshrl.u32 %v6107, 7
        %v6109 = vsub.s32 %v6106, %v6108
        %v6110 = vrot.slane %v6088, %v6109
        %v6112 = vunpack.c.l.s4 1966171168
        %v6113 = vunpack.c.0.s8 %v6112
        %v6114 = vlaneseq
        %v6115 = vshrl.u32 %v6114, 7
        %v6116 = vsub.s32 %v6113, %v6115
        %v6117 = vrot.slane %v6089, %v6116
        %v6118 = vcombine.high %v6096, %v6096
        %v6119 = vcombine.high %v6103, %v6103
        %v6120 = vcombine.high %v6110, %v6110
        %v6121 = vcombine.high %v6117, %v6117
        %v6122 = vcombine.high %v5970, %v5970
        %v6124 = vunpack.c.l.s4 1966171168
        %v6125 = vunpack.c.0.s8 %v6124
        %v6126 = vlaneseq
        %v6127 = vshrl.u32 %v6126, 7
        %v6128 = vsub.s32 %v6125, %v6127
        %v6129 = vrot.slane %v5970, %v6128
        %v6131 = vunpack.c.l.s4 1966171168
        %v6132 = vunpack.c.0.s8 %v6131
        %v6133 = vlaneseq
        %v6134 = vshrl.u32 %v6133, 7
        %v6135 = vsub.s32 %v6132, %v6134
        %v6136 = vrot.slane %v6122, %v6135
        %v6137 = vcombine.high %v6129, %v6129
        %v6138 = vcombine.high %v6136, %v6136
        %v6140 = vunpack.c.l.s4 1966171168
        %v6141 = vunpack.c.0.s8 %v6140
        %v6142 = vlaneseq
        %v6143 = vshrl.u32 %v6142, 7
        %v6144 = vsub.s32 %v6141, %v6143
        %v6145 = vrot.slane %v6129, %v6144
        %v6147 = vunpack.c.l.s4 1966171168
        %v6148 = vunpack.c.0.s8 %v6147
        %v6149 = vlaneseq
        %v6150 = vshrl.u32 %v6149, 7
        %v6151 = vsub.s32 %v6148, %v6150
        %v6152 = vrot.slane %v6136, %v6151
        %v6154 = vunpack.c.l.s4 1966171168
        %v6155 = vunpack.c.0.s8 %v6154
        %v6156 = vlaneseq
        %v6157 = vshrl.u32 %v6156, 7
        %v6158 = vsub.s32 %v6155, %v6157
        %v6159 = vrot.slane %v6137, %v6158
        %v6161 = vunpack.c.l.s4 1966171168
        %v6162 = vunpack.c.0.s8 %v6161
        %v6163 = vlaneseq
        %v6164 = vshrl.u32 %v6163, 7
        %v6165 = vsub.s32 %v6162, %v6164
        %v6166 = vrot.slane %v6138, %v6165
        %v6167 = vcombine.high %v6145, %v6145
        %v6168 = vcombine.high %v6152, %v6152
        %v6169 = vcombine.high %v6159, %v6159
        %v6170 = vcombine.high %v6166, %v6166
        %6203 = vst.msk [vmem:[%s190 + $0x9] sm:$0x1] %vm820, %v5998
        %6204 = vst.msk [vmem:[%s190 + $0x19] sm:$0x1] %vm820, %v6012
        %6205 = vst.msk [vmem:[%s190 + $0x29] sm:$0x1] %vm820, %v6020
        %6206 = vst.msk [vmem:[%s190 + $0x39] sm:$0x1] %vm820, %v6022
        %6207 = vst.msk [vmem:[%s190 + $0x49] sm:$0x1] %vm820, %v6005
        %6208 = vst.msk [vmem:[%s190 + $0x59] sm:$0x1] %vm820, %v6019
        %6209 = vst.msk [vmem:[%s190 + $0x69] sm:$0x1] %vm820, %v6021
        %6210 = vst.msk [vmem:[%s190 + $0x79] sm:$0x1] %vm820, %v6023
        %6211 = vst.msk [vmem:[%s190 + $0x89] sm:$0x1] %vm820, %v6047
        %6212 = vst.msk [vmem:[%s190 + $0x99] sm:$0x1] %vm820, %v6061
        %6213 = vst.msk [vmem:[%s190 + $0xa9] sm:$0x1] %vm820, %v6069
        %6214 = vst.msk [vmem:[%s190 + $0xb9] sm:$0x1] %vm820, %v6071
        %6215 = vst.msk [vmem:[%s190 + $0xc9] sm:$0x1] %vm820, %v6054
        %6216 = vst.msk [vmem:[%s190 + $0xd9] sm:$0x1] %vm820, %v6068
        %6217 = vst.msk [vmem:[%s190 + $0xe9] sm:$0x1] %vm820, %v6070
        %6218 = vst.msk [vmem:[%s190 + $0xf9] sm:$0x1] %vm820, %v6072
        %6219 = vst.msk [vmem:[%s190 + $0x109] sm:$0x1] %vm820, %v6096
        %6220 = vst.msk [vmem:[%s190 + $0x119] sm:$0x1] %vm820, %v6110
        %6221 = vst.msk [vmem:[%s190 + $0x129] sm:$0x1] %vm820, %v6118
        %6222 = vst.msk [vmem:[%s190 + $0x139] sm:$0x1] %vm820, %v6120
        %6223 = vst.msk [vmem:[%s190 + $0x149] sm:$0x1] %vm820, %v6103
        %6224 = vst.msk [vmem:[%s190 + $0x159] sm:$0x1] %vm820, %v6117
        %6225 = vst.msk [vmem:[%s190 + $0x169] sm:$0x1] %vm820, %v6119
        %6226 = vst.msk [vmem:[%s190 + $0x179] sm:$0x1] %vm820, %v6121
        %6227 = vst.msk [vmem:[%s190 + $0x189] sm:$0x1] %vm820, %v6145
        %6228 = vst.msk [vmem:[%s190 + $0x199] sm:$0x1] %vm820, %v6159
        %6229 = vst.msk [vmem:[%s190 + $0x1a9] sm:$0x1] %vm820, %v6167
        %6230 = vst.msk [vmem:[%s190 + $0x1b9] sm:$0x1] %vm820, %v6169
        %6231 = vst.msk [vmem:[%s190 + $0x1c9] sm:$0x1] %vm820, %v6152
        %6232 = vst.msk [vmem:[%s190 + $0x1d9] sm:$0x1] %vm820, %v6166
        %6233 = vst.msk [vmem:[%s190 + $0x1e9] sm:$0x1] %vm820, %v6168
        %6234 = vst.msk [vmem:[%s190 + $0x1f9] sm:$0x1] %vm820, %v6170
        %v6235 = vld [vmem:[%s163 + $0xa] sm:$0x1]
        %v6236 = vld [vmem:[%s163 + $0x1a] sm:$0x1]
        %v6237 = vld [vmem:[%s163 + $0x2a] sm:$0x1]
        %v6238 = vld [vmem:[%s163 + $0x3a] sm:$0x1]
        %v6239 = vld [vmem:[%s163 + $0x4a] sm:$0x1]
        %v6240 = vld [vmem:[%s163 + $0x5a] sm:$0x1]
        %v6241 = vld [vmem:[%s163 + $0x6a] sm:$0x1]
        %v6242 = vld [vmem:[%s163 + $0x7a] sm:$0x1]
        %v6251 = vrot.slane %v6236, 7
        %v6252 = vsel %vm217, %v6251, %v6235
        %v6253 = vrot.slane %v6237, 6
        %v6254 = vsel %vm220, %v6253, %v6252
        %v6255 = vrot.slane %v6238, 5
        %v6256 = vsel %vm223, %v6255, %v6254
        %v6257 = vrot.slane %v6239, 4
        %v6258 = vsel %vm226, %v6257, %v6256
        %v6259 = vrot.slane %v6240, 3
        %v6260 = vsel %vm229, %v6259, %v6258
        %v6261 = vrot.slane %v6241, 2
        %v6262 = vsel %vm232, %v6261, %v6260
        %v6263 = vrot.slane %v6242, 1
        %v6264 = vsel %vm235, %v6263, %v6262
        %6266 = vst.msk [vmem:[#allocation2] sm:$0xff] %vm238, %v6264
        %6267 = vrot.lane.b32.xlu0 %v6264, 127
        %v6268 = vpop.permute.xlu0 %6267
        %6270 = vst.msk [vmem:[#allocation2 + $0x8] sm:$0xff] %vm238, %v6268
        %6271 = vrot.lane.b32.xlu0 %v6264, 126
        %v6272 = vpop.permute.xlu0 %6271
        %6274 = vst.msk [vmem:[#allocation2 + $0x10] sm:$0xff] %vm238, %v6272
        %6275 = vrot.lane.b32.xlu0 %v6264, 125
        %v6276 = vpop.permute.xlu0 %6275
        %6278 = vst.msk [vmem:[#allocation2 + $0x18] sm:$0xff] %vm238, %v6276
        %6279 = vrot.lane.b32.xlu0 %v6264, 124
        %v6280 = vpop.permute.xlu0 %6279
        %6282 = vst.msk [vmem:[#allocation2 + $0x20] sm:$0xff] %vm238, %v6280
        %v6283 = vld [vmem:[%s163 + $0xb] sm:$0x1]
        %v6284 = vld [vmem:[%s163 + $0x1b] sm:$0x1]
        %v6285 = vld [vmem:[%s163 + $0x2b] sm:$0x1]
        %v6286 = vld [vmem:[%s163 + $0x3b] sm:$0x1]
        %v6287 = vld [vmem:[%s163 + $0x4b] sm:$0x1]
        %v6288 = vld [vmem:[%s163 + $0x5b] sm:$0x1]
        %v6289 = vld [vmem:[%s163 + $0x6b] sm:$0x1]
        %v6290 = vld [vmem:[%s163 + $0x7b] sm:$0x1]
        %v6299 = vrot.slane %v6284, 7
        %v6300 = vsel %vm217, %v6299, %v6283
        %v6301 = vrot.slane %v6285, 6
        %v6302 = vsel %vm220, %v6301, %v6300
        %v6303 = vrot.slane %v6286, 5
        %v6304 = vsel %vm223, %v6303, %v6302
        %v6305 = vrot.slane %v6287, 4
        %v6306 = vsel %vm226, %v6305, %v6304
        %v6307 = vrot.slane %v6288, 3
        %v6308 = vsel %vm229, %v6307, %v6306
        %v6309 = vrot.slane %v6289, 2
        %v6310 = vsel %vm232, %v6309, %v6308
        %v6311 = vrot.slane %v6290, 1
        %v6312 = vsel %vm235, %v6311, %v6310
        %6314 = vst.msk [vmem:[#allocation2 + $0x28] sm:$0xff] %vm238, %v6312
        %6315 = vrot.lane.b32.xlu0 %v6312, 127
        %v6316 = vpop.permute.xlu0 %6315
        %6318 = vst.msk [vmem:[#allocation2 + $0x30] sm:$0xff] %vm238, %v6316
        %6319 = vrot.lane.b32.xlu0 %v6312, 126
        %v6320 = vpop.permute.xlu0 %6319
        %6322 = vst.msk [vmem:[#allocation2 + $0x38] sm:$0xff] %vm238, %v6320
        %6323 = vrot.lane.b32.xlu0 %v6312, 125
        %v6324 = vpop.permute.xlu0 %6323
        %6326 = vst.msk [vmem:[#allocation2 + $0x40] sm:$0xff] %vm238, %v6324
        %6327 = vrot.lane.b32.xlu0 %v6312, 124
        %v6328 = vpop.permute.xlu0 %6327
        %6330 = vst.msk [vmem:[#allocation2 + $0x48] sm:$0xff] %vm238, %v6328
        %v6331 = vld [vmem:[%s163 + $0xc] sm:$0x1]
        %v6332 = vld [vmem:[%s163 + $0x1c] sm:$0x1]
        %v6333 = vld [vmem:[%s163 + $0x2c] sm:$0x1]
        %v6334 = vld [vmem:[%s163 + $0x3c] sm:$0x1]
        %v6335 = vld [vmem:[%s163 + $0x4c] sm:$0x1]
        %v6336 = vld [vmem:[%s163 + $0x5c] sm:$0x1]
        %v6337 = vld [vmem:[%s163 + $0x6c] sm:$0x1]
        %v6338 = vld [vmem:[%s163 + $0x7c] sm:$0x1]
        %v6347 = vrot.slane %v6332, 7
        %v6348 = vsel %vm217, %v6347, %v6331
        %v6349 = vrot.slane %v6333, 6
        %v6350 = vsel %vm220, %v6349, %v6348
        %v6351 = vrot.slane %v6334, 5
        %v6352 = vsel %vm223, %v6351, %v6350
        %v6353 = vrot.slane %v6335, 4
        %v6354 = vsel %vm226, %v6353, %v6352
        %v6355 = vrot.slane %v6336, 3
        %v6356 = vsel %vm229, %v6355, %v6354
        %v6357 = vrot.slane %v6337, 2
        %v6358 = vsel %vm232, %v6357, %v6356
        %v6359 = vrot.slane %v6338, 1
        %v6360 = vsel %vm235, %v6359, %v6358
        %6362 = vst.msk [vmem:[#allocation2 + $0x50] sm:$0xff] %vm238, %v6360
        %6363 = vrot.lane.b32.xlu0 %v6360, 127
        %v6364 = vpop.permute.xlu0 %6363
        %6366 = vst.msk [vmem:[#allocation2 + $0x58] sm:$0xff] %vm238, %v6364
        %6367 = vrot.lane.b32.xlu0 %v6360, 126
        %v6368 = vpop.permute.xlu0 %6367
        %6370 = vst.msk [vmem:[#allocation2 + $0x60] sm:$0xff] %vm238, %v6368
        %6371 = vrot.lane.b32.xlu0 %v6360, 125
        %v6372 = vpop.permute.xlu0 %6371
        %6374 = vst.msk [vmem:[#allocation2 + $0x68] sm:$0xff] %vm238, %v6372
        %6375 = vrot.lane.b32.xlu0 %v6360, 124
        %v6376 = vpop.permute.xlu0 %6375
        %6378 = vst.msk [vmem:[#allocation2 + $0x70] sm:$0xff] %vm238, %v6376
        %v6379 = vld [vmem:[%s163 + $0xd] sm:$0x1]
        %v6380 = vld [vmem:[%s163 + $0x1d] sm:$0x1]
        %v6381 = vld [vmem:[%s163 + $0x2d] sm:$0x1]
        %v6382 = vld [vmem:[%s163 + $0x3d] sm:$0x1]
        %v6383 = vld [vmem:[%s163 + $0x4d] sm:$0x1]
        %v6384 = vld [vmem:[%s163 + $0x5d] sm:$0x1]
        %v6385 = vld [vmem:[%s163 + $0x6d] sm:$0x1]
        %v6386 = vld [vmem:[%s163 + $0x7d] sm:$0x1]
        %v6395 = vrot.slane %v6380, 7
        %v6396 = vsel %vm217, %v6395, %v6379
        %v6397 = vrot.slane %v6381, 6
        %v6398 = vsel %vm220, %v6397, %v6396
        %v6399 = vrot.slane %v6382, 5
        %v6400 = vsel %vm223, %v6399, %v6398
        %v6401 = vrot.slane %v6383, 4
        %v6402 = vsel %vm226, %v6401, %v6400
        %v6403 = vrot.slane %v6384, 3
        %v6404 = vsel %vm229, %v6403, %v6402
        %v6405 = vrot.slane %v6385, 2
        %v6406 = vsel %vm232, %v6405, %v6404
        %v6407 = vrot.slane %v6386, 1
        %v6408 = vsel %vm235, %v6407, %v6406
        %6410 = vst.msk [vmem:[#allocation2 + $0x78] sm:$0xff] %vm238, %v6408
        %6411 = vrot.lane.b32.xlu0 %v6408, 127
        %v6412 = vpop.permute.xlu0 %6411
        %6414 = vst.msk [vmem:[#allocation2 + $0x80] sm:$0xff] %vm238, %v6412
        %6415 = vrot.lane.b32.xlu0 %v6408, 126
        %v6416 = vpop.permute.xlu0 %6415
        %6418 = vst.msk [vmem:[#allocation2 + $0x88] sm:$0xff] %vm238, %v6416
        %6419 = vrot.lane.b32.xlu0 %v6408, 125
        %v6420 = vpop.permute.xlu0 %6419
        %6422 = vst.msk [vmem:[#allocation2 + $0x90] sm:$0xff] %vm238, %v6420
        %6423 = vrot.lane.b32.xlu0 %v6408, 124
        %v6424 = vpop.permute.xlu0 %6423
        %6426 = vst.msk [vmem:[#allocation2 + $0x98] sm:$0xff] %vm238, %v6424
        %v6427 = vld [vmem:[%s163 + $0xe] sm:$0x1]
        %v6428 = vld [vmem:[%s163 + $0x1e] sm:$0x1]
        %v6429 = vld [vmem:[%s163 + $0x2e] sm:$0x1]
        %v6430 = vld [vmem:[%s163 + $0x3e] sm:$0x1]
        %v6431 = vld [vmem:[%s163 + $0x4e] sm:$0x1]
        %v6432 = vld [vmem:[%s163 + $0x5e] sm:$0x1]
        %v6433 = vld [vmem:[%s163 + $0x6e] sm:$0x1]
        %v6434 = vld [vmem:[%s163 + $0x7e] sm:$0x1]
        %v6443 = vrot.slane %v6428, 7
        %v6444 = vsel %vm217, %v6443, %v6427
        %v6445 = vrot.slane %v6429, 6
        %v6446 = vsel %vm220, %v6445, %v6444
        %v6447 = vrot.slane %v6430, 5
        %v6448 = vsel %vm223, %v6447, %v6446
        %v6449 = vrot.slane %v6431, 4
        %v6450 = vsel %vm226, %v6449, %v6448
        %v6451 = vrot.slane %v6432, 3
        %v6452 = vsel %vm229, %v6451, %v6450
        %v6453 = vrot.slane %v6433, 2
        %v6454 = vsel %vm232, %v6453, %v6452
        %v6455 = vrot.slane %v6434, 1
        %v6456 = vsel %vm235, %v6455, %v6454
        %6458 = vst.msk [vmem:[#allocation2 + $0xa0] sm:$0xff] %vm238, %v6456
        %6459 = vrot.lane.b32.xlu0 %v6456, 127
        %v6460 = vpop.permute.xlu0 %6459
        %6462 = vst.msk [vmem:[#allocation2 + $0xa8] sm:$0xff] %vm238, %v6460
        %6463 = vrot.lane.b32.xlu0 %v6456, 126
        %v6464 = vpop.permute.xlu0 %6463
        %6466 = vst.msk [vmem:[#allocation2 + $0xb0] sm:$0xff] %vm238, %v6464
        %6467 = vrot.lane.b32.xlu0 %v6456, 125
        %v6468 = vpop.permute.xlu0 %6467
        %6470 = vst.msk [vmem:[#allocation2 + $0xb8] sm:$0xff] %vm238, %v6468
        %6471 = vrot.lane.b32.xlu0 %v6456, 124
        %v6472 = vpop.permute.xlu0 %6471
        %6474 = vst.msk [vmem:[#allocation2 + $0xc0] sm:$0xff] %vm238, %v6472
        %v6475 = vld [vmem:[#allocation2] sm:$0xff]
        %v6476 = vld [vmem:[#allocation2 + $0x8] sm:$0xff]
        %v6477 = vld [vmem:[#allocation2 + $0x10] sm:$0xff]
        %v6478 = vld [vmem:[#allocation2 + $0x18] sm:$0xff]
        %v6479 = vld [vmem:[#allocation2 + $0x20] sm:$0xff]
        %v6480 = vld [vmem:[#allocation2 + $0x28] sm:$0xff]
        %v6481 = vld [vmem:[#allocation2 + $0x30] sm:$0xff]
        %v6482 = vld [vmem:[#allocation2 + $0x38] sm:$0xff]
        %v6483 = vld [vmem:[#allocation2 + $0x40] sm:$0xff]
        %v6484 = vld [vmem:[#allocation2 + $0x48] sm:$0xff]
        %v6485 = vld [vmem:[#allocation2 + $0x50] sm:$0xff]
        %v6486 = vld [vmem:[#allocation2 + $0x58] sm:$0xff]
        %v6487 = vld [vmem:[#allocation2 + $0x60] sm:$0xff]
        %v6488 = vld [vmem:[#allocation2 + $0x68] sm:$0xff]
        %v6489 = vld [vmem:[#allocation2 + $0x70] sm:$0xff]
        %v6490 = vld [vmem:[#allocation2 + $0x78] sm:$0xff]
        %v6491 = vld [vmem:[#allocation2 + $0x80] sm:$0xff]
        %v6492 = vld [vmem:[#allocation2 + $0x88] sm:$0xff]
        %v6493 = vld [vmem:[#allocation2 + $0x90] sm:$0xff]
        %v6494 = vld [vmem:[#allocation2 + $0x98] sm:$0xff]
        %v6495 = vld [vmem:[#allocation2 + $0xa0] sm:$0xff]
        %v6496 = vld [vmem:[#allocation2 + $0xa8] sm:$0xff]
        %v6497 = vld [vmem:[#allocation2 + $0xb0] sm:$0xff]
        %v6498 = vld [vmem:[#allocation2 + $0xb8] sm:$0xff]
        %v6499 = vld [vmem:[#allocation2 + $0xc0] sm:$0xff]
        %v6500 = vpack.c.bf16 %v6476, %v6475
        %v6501 = vpack.c.bf16 %v6478, %v6477
        %v6502 = vpack.c.bf16 %v6480, %v6479
        %v6503 = vpack.c.bf16 %v6482, %v6481
        %v6504 = vpack.c.bf16 %v6484, %v6483
        %v6505 = vpack.c.bf16 %v6486, %v6485
        %v6506 = vpack.c.bf16 %v6488, %v6487
        %v6507 = vpack.c.bf16 %v6490, %v6489
        %v6508 = vpack.c.bf16 %v6492, %v6491
        %v6509 = vpack.c.bf16 %v6494, %v6493
        %v6510 = vpack.c.bf16 %v6496, %v6495
        %v6511 = vpack.c.bf16 %v6498, %v6497
        %v6512 = vpack.c.bf16 %v6499, %v6499
        %v6514 = vsel %vm531, %v6512, 0
        %6516 = vmatprep.subr.bf16.mxu0 0
        %6517 = vmatpush1.bf16.msra.mxu0 %v6500
        %6518 = vmatprep.subr.bf16.mxu0 0
        %6519 = vmatpush1.bf16.msra.mxu0 %v6501
        %6520 = vmatprep.subr.bf16.mxu0 0
        %6521 = vmatpush1.bf16.msra.mxu0 %v6502
        %6522 = vmatprep.subr.bf16.mxu0 0
        %6523 = vmatpush1.bf16.msra.mxu0 %v6503
        %6524 = vmatprep.subr.bf16.mxu0 0
        %6525 = vmatpush1.bf16.msra.mxu0 %v6504
        %6526 = vmatprep.subr.bf16.mxu0 0
        %6527 = vmatpush1.bf16.msra.mxu0 %v6505
        %6528 = vmatprep.subr.bf16.mxu0 0
        %6529 = vmatpush1.bf16.msra.mxu0 %v6506
        %6530 = vmatprep.subr.bf16.mxu0 0
        %6531 = vmatpush1.bf16.msra.mxu0 %v6507
        %6532 = vmatprep.subr.bf16.mxu0 0
        %6533 = vmatpush1.bf16.msra.mxu0 %v6508
        %6534 = vmatprep.subr.bf16.mxu0 0
        %6535 = vmatpush1.bf16.msra.mxu0 %v6509
        %6536 = vmatprep.subr.bf16.mxu0 0
        %6537 = vmatpush1.bf16.msra.mxu0 %v6510
        %6538 = vmatprep.subr.bf16.mxu0 0
        %6539 = vmatpush1.bf16.msra.mxu0 %v6511
        %6540 = vmatprep.subr.bf16.mxu0 0
        %6541 = vmatpush1.bf16.msra.mxu0 %v6514
        %6542 = vmatprep.subr.bf16.mxu0 0
        %6543 = vmatpush1.bf16.msra.mxu0 0
        %6544 = vmatprep.subr.bf16.mxu0 0
        %6545 = vmatpush1.bf16.msra.mxu0 0
        %6546 = vmatprep.subr.bf16.mxu0 0
        %6547 = vmatpush1.bf16.msra.mxu0 0
        %6548 = vmatprep.mubr.bf16.mxu0 %v526
        %6549 = vmatmul.mubr.bf16.gmra.mrb[0].mxu0 %v518
        %v6550 = vpop.f32.mrb[0].mxu0
        %v6551 = vadd.f32 %v489, %v6550
        %v6552 = vpop.f32.mrb[0].mxu0
        %v6553 = vpop.f32.mrb[0].mxu0
        %v6554 = vadd.f32 %v494, %v6553
        %v6555 = vpop.f32.mrb[0].mxu0
        %6556 = vmatprep.mubr.bf16.mxu0 %v529
        %6557 = vmatmul.mubr.bf16.gmra.mrb[0].mxu0 %v520
        %v6558 = vpop.f32.mrb[0].mxu0
        %v6559 = vadd.f32 %v499, %v6558
        %v6560 = vpop.f32.mrb[0].mxu0
        %v6561 = vpop.f32.mrb[0].mxu0
        %v6562 = vadd.f32 %v504, %v6561
        %v6563 = vpop.f32.mrb[0].mxu0
        %6564 = vdwg.mxu0
        %v6565 = vmax.f32 %v6551, 0.0
        %v6566 = vmax.f32 %v6554, 0.0
        %v6567 = vmax.f32 %v6559, 0.0
        %v6568 = vmax.f32 %v6562, 0.0
        %v6573 = vcombine.high %v6565, %v6565
        %v6575 = vunpack.c.l.s4 1966171168
        %v6576 = vunpack.c.0.s8 %v6575
        %v6577 = vlaneseq
        %v6578 = vshrl.u32 %v6577, 7
        %v6579 = vsub.s32 %v6576, %v6578
        %v6580 = vrot.slane %v6565, %v6579
        %v6582 = vunpack.c.l.s4 1966171168
        %v6583 = vunpack.c.0.s8 %v6582
        %v6584 = vlaneseq
        %v6585 = vshrl.u32 %v6584, 7
        %v6586 = vsub.s32 %v6583, %v6585
        %v6587 = vrot.slane %v6573, %v6586
        %v6588 = vcombine.high %v6580, %v6580
        %v6589 = vcombine.high %v6587, %v6587
        %v6591 = vunpack.c.l.s4 1966171168
        %v6592 = vunpack.c.0.s8 %v6591
        %v6593 = vlaneseq
        %v6594 = vshrl.u32 %v6593, 7
        %v6595 = vsub.s32 %v6592, %v6594
        %v6596 = vrot.slane %v6580, %v6595
        %v6598 = vunpack.c.l.s4 1966171168
        %v6599 = vunpack.c.0.s8 %v6598
        %v6600 = vlaneseq
        %v6601 = vshrl.u32 %v6600, 7
        %v6602 = vsub.s32 %v6599, %v6601
        %v6603 = vrot.slane %v6587, %v6602
        %v6605 = vunpack.c.l.s4 1966171168
        %v6606 = vunpack.c.0.s8 %v6605
        %v6607 = vlaneseq
        %v6608 = vshrl.u32 %v6607, 7
        %v6609 = vsub.s32 %v6606, %v6608
        %v6610 = vrot.slane %v6588, %v6609
        %v6612 = vunpack.c.l.s4 1966171168
        %v6613 = vunpack.c.0.s8 %v6612
        %v6614 = vlaneseq
        %v6615 = vshrl.u32 %v6614, 7
        %v6616 = vsub.s32 %v6613, %v6615
        %v6617 = vrot.slane %v6589, %v6616
        %v6618 = vcombine.high %v6596, %v6596
        %v6619 = vcombine.high %v6603, %v6603
        %v6620 = vcombine.high %v6610, %v6610
        %v6621 = vcombine.high %v6617, %v6617
        %v6622 = vcombine.high %v6566, %v6566
        %v6624 = vunpack.c.l.s4 1966171168
        %v6625 = vunpack.c.0.s8 %v6624
        %v6626 = vlaneseq
        %v6627 = vshrl.u32 %v6626, 7
        %v6628 = vsub.s32 %v6625, %v6627
        %v6629 = vrot.slane %v6566, %v6628
        %v6631 = vunpack.c.l.s4 1966171168
        %v6632 = vunpack.c.0.s8 %v6631
        %v6633 = vlaneseq
        %v6634 = vshrl.u32 %v6633, 7
        %v6635 = vsub.s32 %v6632, %v6634
        %v6636 = vrot.slane %v6622, %v6635
        %v6637 = vcombine.high %v6629, %v6629
        %v6638 = vcombine.high %v6636, %v6636
        %v6640 = vunpack.c.l.s4 1966171168
        %v6641 = vunpack.c.0.s8 %v6640
        %v6642 = vlaneseq
        %v6643 = vshrl.u32 %v6642, 7
        %v6644 = vsub.s32 %v6641, %v6643
        %v6645 = vrot.slane %v6629, %v6644
        %v6647 = vunpack.c.l.s4 1966171168
        %v6648 = vunpack.c.0.s8 %v6647
        %v6649 = vlaneseq
        %v6650 = vshrl.u32 %v6649, 7
        %v6651 = vsub.s32 %v6648, %v6650
        %v6652 = vrot.slane %v6636, %v6651
        %v6654 = vunpack.c.l.s4 1966171168
        %v6655 = vunpack.c.0.s8 %v6654
        %v6656 = vlaneseq
        %v6657 = vshrl.u32 %v6656, 7
        %v6658 = vsub.s32 %v6655, %v6657
        %v6659 = vrot.slane %v6637, %v6658
        %v6661 = vunpack.c.l.s4 1966171168
        %v6662 = vunpack.c.0.s8 %v6661
        %v6663 = vlaneseq
        %v6664 = vshrl.u32 %v6663, 7
        %v6665 = vsub.s32 %v6662, %v6664
        %v6666 = vrot.slane %v6638, %v6665
        %v6667 = vcombine.high %v6645, %v6645
        %v6668 = vcombine.high %v6652, %v6652
        %v6669 = vcombine.high %v6659, %v6659
        %v6670 = vcombine.high %v6666, %v6666
        %v6671 = vcombine.high %v6567, %v6567
        %v6673 = vunpack.c.l.s4 1966171168
        %v6674 = vunpack.c.0.s8 %v6673
        %v6675 = vlaneseq
        %v6676 = vshrl.u32 %v6675, 7
        %v6677 = vsub.s32 %v6674, %v6676
        %v6678 = vrot.slane %v6567, %v6677
        %v6680 = vunpack.c.l.s4 1966171168
        %v6681 = vunpack.c.0.s8 %v6680
        %v6682 = vlaneseq
        %v6683 = vshrl.u32 %v6682, 7
        %v6684 = vsub.s32 %v6681, %v6683
        %v6685 = vrot.slane %v6671, %v6684
        %v6686 = vcombine.high %v6678, %v6678
        %v6687 = vcombine.high %v6685, %v6685
        %v6689 = vunpack.c.l.s4 1966171168
        %v6690 = vunpack.c.0.s8 %v6689
        %v6691 = vlaneseq
        %v6692 = vshrl.u32 %v6691, 7
        %v6693 = vsub.s32 %v6690, %v6692
        %v6694 = vrot.slane %v6678, %v6693
        %v6696 = vunpack.c.l.s4 1966171168
        %v6697 = vunpack.c.0.s8 %v6696
        %v6698 = vlaneseq
        %v6699 = vshrl.u32 %v6698, 7
        %v6700 = vsub.s32 %v6697, %v6699
        %v6701 = vrot.slane %v6685, %v6700
        %v6703 = vunpack.c.l.s4 1966171168
        %v6704 = vunpack.c.0.s8 %v6703
        %v6705 = vlaneseq
        %v6706 = vshrl.u32 %v6705, 7
        %v6707 = vsub.s32 %v6704, %v6706
        %v6708 = vrot.slane %v6686, %v6707
        %v6710 = vunpack.c.l.s4 1966171168
        %v6711 = vunpack.c.0.s8 %v6710
        %v6712 = vlaneseq
        %v6713 = vshrl.u32 %v6712, 7
        %v6714 = vsub.s32 %v6711, %v6713
        %v6715 = vrot.slane %v6687, %v6714
        %v6716 = vcombine.high %v6694, %v6694
        %v6717 = vcombine.high %v6701, %v6701
        %v6718 = vcombine.high %v6708, %v6708
        %v6719 = vcombine.high %v6715, %v6715
        %v6720 = vcombine.high %v6568, %v6568
        %v6722 = vunpack.c.l.s4 1966171168
        %v6723 = vunpack.c.0.s8 %v6722
        %v6724 = vlaneseq
        %v6725 = vshrl.u32 %v6724, 7
        %v6726 = vsub.s32 %v6723, %v6725
        %v6727 = vrot.slane %v6568, %v6726
        %v6729 = vunpack.c.l.s4 1966171168
        %v6730 = vunpack.c.0.s8 %v6729
        %v6731 = vlaneseq
        %v6732 = vshrl.u32 %v6731, 7
        %v6733 = vsub.s32 %v6730, %v6732
        %v6734 = vrot.slane %v6720, %v6733
        %v6735 = vcombine.high %v6727, %v6727
        %v6736 = vcombine.high %v6734, %v6734
        %v6738 = vunpack.c.l.s4 1966171168
        %v6739 = vunpack.c.0.s8 %v6738
        %v6740 = vlaneseq
        %v6741 = vshrl.u32 %v6740, 7
        %v6742 = vsub.s32 %v6739, %v6741
        %v6743 = vrot.slane %v6727, %v6742
        %v6745 = vunpack.c.l.s4 1966171168
        %v6746 = vunpack.c.0.s8 %v6745
        %v6747 = vlaneseq
        %v6748 = vshrl.u32 %v6747, 7
        %v6749 = vsub.s32 %v6746, %v6748
        %v6750 = vrot.slane %v6734, %v6749
        %v6752 = vunpack.c.l.s4 1966171168
        %v6753 = vunpack.c.0.s8 %v6752
        %v6754 = vlaneseq
        %v6755 = vshrl.u32 %v6754, 7
        %v6756 = vsub.s32 %v6753, %v6755
        %v6757 = vrot.slane %v6735, %v6756
        %v6759 = vunpack.c.l.s4 1966171168
        %v6760 = vunpack.c.0.s8 %v6759
        %v6761 = vlaneseq
        %v6762 = vshrl.u32 %v6761, 7
        %v6763 = vsub.s32 %v6760, %v6762
        %v6764 = vrot.slane %v6736, %v6763
        %v6765 = vcombine.high %v6743, %v6743
        %v6766 = vcombine.high %v6750, %v6750
        %v6767 = vcombine.high %v6757, %v6757
        %v6768 = vcombine.high %v6764, %v6764
        %6801 = vst.msk [vmem:[%s190 + $0xa] sm:$0x1] %vm820, %v6596
        %6802 = vst.msk [vmem:[%s190 + $0x1a] sm:$0x1] %vm820, %v6610
        %6803 = vst.msk [vmem:[%s190 + $0x2a] sm:$0x1] %vm820, %v6618
        %6804 = vst.msk [vmem:[%s190 + $0x3a] sm:$0x1] %vm820, %v6620
        %6805 = vst.msk [vmem:[%s190 + $0x4a] sm:$0x1] %vm820, %v6603
        %6806 = vst.msk [vmem:[%s190 + $0x5a] sm:$0x1] %vm820, %v6617
        %6807 = vst.msk [vmem:[%s190 + $0x6a] sm:$0x1] %vm820, %v6619
        %6808 = vst.msk [vmem:[%s190 + $0x7a] sm:$0x1] %vm820, %v6621
        %6809 = vst.msk [vmem:[%s190 + $0x8a] sm:$0x1] %vm820, %v6645
        %6810 = vst.msk [vmem:[%s190 + $0x9a] sm:$0x1] %vm820, %v6659
        %6811 = vst.msk [vmem:[%s190 + $0xaa] sm:$0x1] %vm820, %v6667
        %6812 = vst.msk [vmem:[%s190 + $0xba] sm:$0x1] %vm820, %v6669
        %6813 = vst.msk [vmem:[%s190 + $0xca] sm:$0x1] %vm820, %v6652
        %6814 = vst.msk [vmem:[%s190 + $0xda] sm:$0x1] %vm820, %v6666
        %6815 = vst.msk [vmem:[%s190 + $0xea] sm:$0x1] %vm820, %v6668
        %6816 = vst.msk [vmem:[%s190 + $0xfa] sm:$0x1] %vm820, %v6670
        %6817 = vst.msk [vmem:[%s190 + $0x10a] sm:$0x1] %vm820, %v6694
        %6818 = vst.msk [vmem:[%s190 + $0x11a] sm:$0x1] %vm820, %v6708
        %6819 = vst.msk [vmem:[%s190 + $0x12a] sm:$0x1] %vm820, %v6716
        %6820 = vst.msk [vmem:[%s190 + $0x13a] sm:$0x1] %vm820, %v6718
        %6821 = vst.msk [vmem:[%s190 + $0x14a] sm:$0x1] %vm820, %v6701
        %6822 = vst.msk [vmem:[%s190 + $0x15a] sm:$0x1] %vm820, %v6715
        %6823 = vst.msk [vmem:[%s190 + $0x16a] sm:$0x1] %vm820, %v6717
        %6824 = vst.msk [vmem:[%s190 + $0x17a] sm:$0x1] %vm820, %v6719
        %6825 = vst.msk [vmem:[%s190 + $0x18a] sm:$0x1] %vm820, %v6743
        %6826 = vst.msk [vmem:[%s190 + $0x19a] sm:$0x1] %vm820, %v6757
        %6827 = vst.msk [vmem:[%s190 + $0x1aa] sm:$0x1] %vm820, %v6765
        %6828 = vst.msk [vmem:[%s190 + $0x1ba] sm:$0x1] %vm820, %v6767
        %6829 = vst.msk [vmem:[%s190 + $0x1ca] sm:$0x1] %vm820, %v6750
        %6830 = vst.msk [vmem:[%s190 + $0x1da] sm:$0x1] %vm820, %v6764
        %6831 = vst.msk [vmem:[%s190 + $0x1ea] sm:$0x1] %vm820, %v6766
        %6832 = vst.msk [vmem:[%s190 + $0x1fa] sm:$0x1] %vm820, %v6768
        %v6833 = vld [vmem:[%s163 + $0xb] sm:$0x1]
        %v6834 = vld [vmem:[%s163 + $0x1b] sm:$0x1]
        %v6835 = vld [vmem:[%s163 + $0x2b] sm:$0x1]
        %v6836 = vld [vmem:[%s163 + $0x3b] sm:$0x1]
        %v6837 = vld [vmem:[%s163 + $0x4b] sm:$0x1]
        %v6838 = vld [vmem:[%s163 + $0x5b] sm:$0x1]
        %v6839 = vld [vmem:[%s163 + $0x6b] sm:$0x1]
        %v6840 = vld [vmem:[%s163 + $0x7b] sm:$0x1]
        %v6849 = vrot.slane %v6834, 7
        %v6850 = vsel %vm217, %v6849, %v6833
        %v6851 = vrot.slane %v6835, 6
        %v6852 = vsel %vm220, %v6851, %v6850
        %v6853 = vrot.slane %v6836, 5
        %v6854 = vsel %vm223, %v6853, %v6852
        %v6855 = vrot.slane %v6837, 4
        %v6856 = vsel %vm226, %v6855, %v6854
        %v6857 = vrot.slane %v6838, 3
        %v6858 = vsel %vm229, %v6857, %v6856
        %v6859 = vrot.slane %v6839, 2
        %v6860 = vsel %vm232, %v6859, %v6858
        %v6861 = vrot.slane %v6840, 1
        %v6862 = vsel %vm235, %v6861, %v6860
        %6864 = vst.msk [vmem:[#allocation2] sm:$0xff] %vm238, %v6862
        %6865 = vrot.lane.b32.xlu0 %v6862, 127
        %v6866 = vpop.permute.xlu0 %6865
        %6868 = vst.msk [vmem:[#allocation2 + $0x8] sm:$0xff] %vm238, %v6866
        %6869 = vrot.lane.b32.xlu0 %v6862, 126
        %v6870 = vpop.permute.xlu0 %6869
        %6872 = vst.msk [vmem:[#allocation2 + $0x10] sm:$0xff] %vm238, %v6870
        %6873 = vrot.lane.b32.xlu0 %v6862, 125
        %v6874 = vpop.permute.xlu0 %6873
        %6876 = vst.msk [vmem:[#allocation2 + $0x18] sm:$0xff] %vm238, %v6874
        %6877 = vrot.lane.b32.xlu0 %v6862, 124
        %v6878 = vpop.permute.xlu0 %6877
        %6880 = vst.msk [vmem:[#allocation2 + $0x20] sm:$0xff] %vm238, %v6878
        %v6881 = vld [vmem:[%s163 + $0xc] sm:$0x1]
        %v6882 = vld [vmem:[%s163 + $0x1c] sm:$0x1]
        %v6883 = vld [vmem:[%s163 + $0x2c] sm:$0x1]
        %v6884 = vld [vmem:[%s163 + $0x3c] sm:$0x1]
        %v6885 = vld [vmem:[%s163 + $0x4c] sm:$0x1]
        %v6886 = vld [vmem:[%s163 + $0x5c] sm:$0x1]
        %v6887 = vld [vmem:[%s163 + $0x6c] sm:$0x1]
        %v6888 = vld [vmem:[%s163 + $0x7c] sm:$0x1]
        %v6897 = vrot.slane %v6882, 7
        %v6898 = vsel %vm217, %v6897, %v6881
        %v6899 = vrot.slane %v6883, 6
        %v6900 = vsel %vm220, %v6899, %v6898
        %v6901 = vrot.slane %v6884, 5
        %v6902 = vsel %vm223, %v6901, %v6900
        %v6903 = vrot.slane %v6885, 4
        %v6904 = vsel %vm226, %v6903, %v6902
        %v6905 = vrot.slane %v6886, 3
        %v6906 = vsel %vm229, %v6905, %v6904
        %v6907 = vrot.slane %v6887, 2
        %v6908 = vsel %vm232, %v6907, %v6906
        %v6909 = vrot.slane %v6888, 1
        %v6910 = vsel %vm235, %v6909, %v6908
        %6912 = vst.msk [vmem:[#allocation2 + $0x28] sm:$0xff] %vm238, %v6910
        %6913 = vrot.lane.b32.xlu0 %v6910, 127
        %v6914 = vpop.permute.xlu0 %6913
        %6916 = vst.msk [vmem:[#allocation2 + $0x30] sm:$0xff] %vm238, %v6914
        %6917 = vrot.lane.b32.xlu0 %v6910, 126
        %v6918 = vpop.permute.xlu0 %6917
        %6920 = vst.msk [vmem:[#allocation2 + $0x38] sm:$0xff] %vm238, %v6918
        %6921 = vrot.lane.b32.xlu0 %v6910, 125
        %v6922 = vpop.permute.xlu0 %6921
        %6924 = vst.msk [vmem:[#allocation2 + $0x40] sm:$0xff] %vm238, %v6922
        %6925 = vrot.lane.b32.xlu0 %v6910, 124
        %v6926 = vpop.permute.xlu0 %6925
        %6928 = vst.msk [vmem:[#allocation2 + $0x48] sm:$0xff] %vm238, %v6926
        %v6929 = vld [vmem:[%s163 + $0xd] sm:$0x1]
        %v6930 = vld [vmem:[%s163 + $0x1d] sm:$0x1]
        %v6931 = vld [vmem:[%s163 + $0x2d] sm:$0x1]
        %v6932 = vld [vmem:[%s163 + $0x3d] sm:$0x1]
        %v6933 = vld [vmem:[%s163 + $0x4d] sm:$0x1]
        %v6934 = vld [vmem:[%s163 + $0x5d] sm:$0x1]
        %v6935 = vld [vmem:[%s163 + $0x6d] sm:$0x1]
        %v6936 = vld [vmem:[%s163 + $0x7d] sm:$0x1]
        %v6945 = vrot.slane %v6930, 7
        %v6946 = vsel %vm217, %v6945, %v6929
        %v6947 = vrot.slane %v6931, 6
        %v6948 = vsel %vm220, %v6947, %v6946
        %v6949 = vrot.slane %v6932, 5
        %v6950 = vsel %vm223, %v6949, %v6948
        %v6951 = vrot.slane %v6933, 4
        %v6952 = vsel %vm226, %v6951, %v6950
        %v6953 = vrot.slane %v6934, 3
        %v6954 = vsel %vm229, %v6953, %v6952
        %v6955 = vrot.slane %v6935, 2
        %v6956 = vsel %vm232, %v6955, %v6954
        %v6957 = vrot.slane %v6936, 1
        %v6958 = vsel %vm235, %v6957, %v6956
        %6960 = vst.msk [vmem:[#allocation2 + $0x50] sm:$0xff] %vm238, %v6958
        %6961 = vrot.lane.b32.xlu0 %v6958, 127
        %v6962 = vpop.permute.xlu0 %6961
        %6964 = vst.msk [vmem:[#allocation2 + $0x58] sm:$0xff] %vm238, %v6962
        %6965 = vrot.lane.b32.xlu0 %v6958, 126
        %v6966 = vpop.permute.xlu0 %6965
        %6968 = vst.msk [vmem:[#allocation2 + $0x60] sm:$0xff] %vm238, %v6966
        %6969 = vrot.lane.b32.xlu0 %v6958, 125
        %v6970 = vpop.permute.xlu0 %6969
        %6972 = vst.msk [vmem:[#allocation2 + $0x68] sm:$0xff] %vm238, %v6970
        %6973 = vrot.lane.b32.xlu0 %v6958, 124
        %v6974 = vpop.permute.xlu0 %6973
        %6976 = vst.msk [vmem:[#allocation2 + $0x70] sm:$0xff] %vm238, %v6974
        %v6977 = vld [vmem:[%s163 + $0xe] sm:$0x1]
        %v6978 = vld [vmem:[%s163 + $0x1e] sm:$0x1]
        %v6979 = vld [vmem:[%s163 + $0x2e] sm:$0x1]
        %v6980 = vld [vmem:[%s163 + $0x3e] sm:$0x1]
        %v6981 = vld [vmem:[%s163 + $0x4e] sm:$0x1]
        %v6982 = vld [vmem:[%s163 + $0x5e] sm:$0x1]
        %v6983 = vld [vmem:[%s163 + $0x6e] sm:$0x1]
        %v6984 = vld [vmem:[%s163 + $0x7e] sm:$0x1]
        %v6993 = vrot.slane %v6978, 7
        %v6994 = vsel %vm217, %v6993, %v6977
        %v6995 = vrot.slane %v6979, 6
        %v6996 = vsel %vm220, %v6995, %v6994
        %v6997 = vrot.slane %v6980, 5
        %v6998 = vsel %vm223, %v6997, %v6996
        %v6999 = vrot.slane %v6981, 4
        %v7000 = vsel %vm226, %v6999, %v6998
        %v7001 = vrot.slane %v6982, 3
        %v7002 = vsel %vm229, %v7001, %v7000
        %v7003 = vrot.slane %v6983, 2
        %v7004 = vsel %vm232, %v7003, %v7002
        %v7005 = vrot.slane %v6984, 1
        %v7006 = vsel %vm235, %v7005, %v7004
        %7008 = vst.msk [vmem:[#allocation2 + $0x78] sm:$0xff] %vm238, %v7006
        %7009 = vrot.lane.b32.xlu0 %v7006, 127
        %v7010 = vpop.permute.xlu0 %7009
        %7012 = vst.msk [vmem:[#allocation2 + $0x80] sm:$0xff] %vm238, %v7010
        %7013 = vrot.lane.b32.xlu0 %v7006, 126
        %v7014 = vpop.permute.xlu0 %7013
        %7016 = vst.msk [vmem:[#allocation2 + $0x88] sm:$0xff] %vm238, %v7014
        %7017 = vrot.lane.b32.xlu0 %v7006, 125
        %v7018 = vpop.permute.xlu0 %7017
        %7020 = vst.msk [vmem:[#allocation2 + $0x90] sm:$0xff] %vm238, %v7018
        %7021 = vrot.lane.b32.xlu0 %v7006, 124
        %v7022 = vpop.permute.xlu0 %7021
        %7024 = vst.msk [vmem:[#allocation2 + $0x98] sm:$0xff] %vm238, %v7022
        %v7025 = vld [vmem:[%s163 + $0xf] sm:$0x1]
        %v7026 = vld [vmem:[%s163 + $0x1f] sm:$0x1]
        %v7027 = vld [vmem:[%s163 + $0x2f] sm:$0x1]
        %v7028 = vld [vmem:[%s163 + $0x3f] sm:$0x1]
        %v7029 = vld [vmem:[%s163 + $0x4f] sm:$0x1]
        %v7030 = vld [vmem:[%s163 + $0x5f] sm:$0x1]
        %v7031 = vld [vmem:[%s163 + $0x6f] sm:$0x1]
        %v7032 = vld [vmem:[%s163 + $0x7f] sm:$0x1]
        %v7041 = vrot.slane %v7026, 7
        %v7042 = vsel %vm217, %v7041, %v7025
        %v7043 = vrot.slane %v7027, 6
        %v7044 = vsel %vm220, %v7043, %v7042
        %v7045 = vrot.slane %v7028, 5
        %v7046 = vsel %vm223, %v7045, %v7044
        %v7047 = vrot.slane %v7029, 4
        %v7048 = vsel %vm226, %v7047, %v7046
        %v7049 = vrot.slane %v7030, 3
        %v7050 = vsel %vm229, %v7049, %v7048
        %v7051 = vrot.slane %v7031, 2
        %v7052 = vsel %vm232, %v7051, %v7050
        %v7053 = vrot.slane %v7032, 1
        %v7054 = vsel %vm235, %v7053, %v7052
        %7056 = vst.msk [vmem:[#allocation2 + $0xa0] sm:$0xff] %vm238, %v7054
        %7057 = vrot.lane.b32.xlu0 %v7054, 127
        %v7058 = vpop.permute.xlu0 %7057
        %7060 = vst.msk [vmem:[#allocation2 + $0xa8] sm:$0xff] %vm238, %v7058
        %7061 = vrot.lane.b32.xlu0 %v7054, 126
        %v7062 = vpop.permute.xlu0 %7061
        %7064 = vst.msk [vmem:[#allocation2 + $0xb0] sm:$0xff] %vm238, %v7062
        %7065 = vrot.lane.b32.xlu0 %v7054, 125
        %v7066 = vpop.permute.xlu0 %7065
        %7068 = vst.msk [vmem:[#allocation2 + $0xb8] sm:$0xff] %vm238, %v7066
        %7069 = vrot.lane.b32.xlu0 %v7054, 124
        %v7070 = vpop.permute.xlu0 %7069
        %7072 = vst.msk [vmem:[#allocation2 + $0xc0] sm:$0xff] %vm238, %v7070
        %v7073 = vld [vmem:[#allocation2] sm:$0xff]
        %v7074 = vld [vmem:[#allocation2 + $0x8] sm:$0xff]
        %v7075 = vld [vmem:[#allocation2 + $0x10] sm:$0xff]
        %v7076 = vld [vmem:[#allocation2 + $0x18] sm:$0xff]
        %v7077 = vld [vmem:[#allocation2 + $0x20] sm:$0xff]
        %v7078 = vld [vmem:[#allocation2 + $0x28] sm:$0xff]
        %v7079 = vld [vmem:[#allocation2 + $0x30] sm:$0xff]
        %v7080 = vld [vmem:[#allocation2 + $0x38] sm:$0xff]
        %v7081 = vld [vmem:[#allocation2 + $0x40] sm:$0xff]
        %v7082 = vld [vmem:[#allocation2 + $0x48] sm:$0xff]
        %v7083 = vld [vmem:[#allocation2 + $0x50] sm:$0xff]
        %v7084 = vld [vmem:[#allocation2 + $0x58] sm:$0xff]
        %v7085 = vld [vmem:[#allocation2 + $0x60] sm:$0xff]
        %v7086 = vld [vmem:[#allocation2 + $0x68] sm:$0xff]
        %v7087 = vld [vmem:[#allocation2 + $0x70] sm:$0xff]
        %v7088 = vld [vmem:[#allocation2 + $0x78] sm:$0xff]
        %v7089 = vld [vmem:[#allocation2 + $0x80] sm:$0xff]
        %v7090 = vld [vmem:[#allocation2 + $0x88] sm:$0xff]
        %v7091 = vld [vmem:[#allocation2 + $0x90] sm:$0xff]
        %v7092 = vld [vmem:[#allocation2 + $0x98] sm:$0xff]
        %v7093 = vld [vmem:[#allocation2 + $0xa0] sm:$0xff]
        %v7094 = vld [vmem:[#allocation2 + $0xa8] sm:$0xff]
        %v7095 = vld [vmem:[#allocation2 + $0xb0] sm:$0xff]
        %v7096 = vld [vmem:[#allocation2 + $0xb8] sm:$0xff]
        %v7097 = vld [vmem:[#allocation2 + $0xc0] sm:$0xff]
        %v7098 = vpack.c.bf16 %v7074, %v7073
        %v7099 = vpack.c.bf16 %v7076, %v7075
        %v7100 = vpack.c.bf16 %v7078, %v7077
        %v7101 = vpack.c.bf16 %v7080, %v7079
        %v7102 = vpack.c.bf16 %v7082, %v7081
        %v7103 = vpack.c.bf16 %v7084, %v7083
        %v7104 = vpack.c.bf16 %v7086, %v7085
        %v7105 = vpack.c.bf16 %v7088, %v7087
        %v7106 = vpack.c.bf16 %v7090, %v7089
        %v7107 = vpack.c.bf16 %v7092, %v7091
        %v7108 = vpack.c.bf16 %v7094, %v7093
        %v7109 = vpack.c.bf16 %v7096, %v7095
        %v7110 = vpack.c.bf16 %v7097, %v7097
        %v7112 = vsel %vm531, %v7110, 0
        %7114 = vmatprep.subr.bf16.mxu0 0
        %7115 = vmatpush1.bf16.msra.mxu0 %v7098
        %7116 = vmatprep.subr.bf16.mxu0 0
        %7117 = vmatpush1.bf16.msra.mxu0 %v7099
        %7118 = vmatprep.subr.bf16.mxu0 0
        %7119 = vmatpush1.bf16.msra.mxu0 %v7100
        %7120 = vmatprep.subr.bf16.mxu0 0
        %7121 = vmatpush1.bf16.msra.mxu0 %v7101
        %7122 = vmatprep.subr.bf16.mxu0 0
        %7123 = vmatpush1.bf16.msra.mxu0 %v7102
        %7124 = vmatprep.subr.bf16.mxu0 0
        %7125 = vmatpush1.bf16.msra.mxu0 %v7103
        %7126 = vmatprep.subr.bf16.mxu0 0
        %7127 = vmatpush1.bf16.msra.mxu0 %v7104
        %7128 = vmatprep.subr.bf16.mxu0 0
        %7129 = vmatpush1.bf16.msra.mxu0 %v7105
        %7130 = vmatprep.subr.bf16.mxu0 0
        %7131 = vmatpush1.bf16.msra.mxu0 %v7106
        %7132 = vmatprep.subr.bf16.mxu0 0
        %7133 = vmatpush1.bf16.msra.mxu0 %v7107
        %7134 = vmatprep.subr.bf16.mxu0 0
        %7135 = vmatpush1.bf16.msra.mxu0 %v7108
        %7136 = vmatprep.subr.bf16.mxu0 0
        %7137 = vmatpush1.bf16.msra.mxu0 %v7109
        %7138 = vmatprep.subr.bf16.mxu0 0
        %7139 = vmatpush1.bf16.msra.mxu0 %v7112
        %7140 = vmatprep.subr.bf16.mxu0 0
        %7141 = vmatpush1.bf16.msra.mxu0 0
        %7142 = vmatprep.subr.bf16.mxu0 0
        %7143 = vmatpush1.bf16.msra.mxu0 0
        %7144 = vmatprep.subr.bf16.mxu0 0
        %7145 = vmatpush1.bf16.msra.mxu0 0
        %7146 = vmatprep.mubr.bf16.mxu0 %v526
        %7147 = vmatmul.mubr.bf16.gmra.mrb[0].mxu0 %v518
        %v7148 = vpop.f32.mrb[0].mxu0
        %v7149 = vadd.f32 %v489, %v7148
        %v7150 = vpop.f32.mrb[0].mxu0
        %v7151 = vpop.f32.mrb[0].mxu0
        %v7152 = vadd.f32 %v494, %v7151
        %v7153 = vpop.f32.mrb[0].mxu0
        %7154 = vmatprep.mubr.bf16.mxu0 %v529
        %7155 = vmatmul.mubr.bf16.gmra.mrb[0].mxu0 %v520
        %v7156 = vpop.f32.mrb[0].mxu0
        %v7157 = vadd.f32 %v499, %v7156
        %v7158 = vpop.f32.mrb[0].mxu0
        %v7159 = vpop.f32.mrb[0].mxu0
        %v7160 = vadd.f32 %v504, %v7159
        %v7161 = vpop.f32.mrb[0].mxu0
        %7162 = vdwg.mxu0
        %v7163 = vmax.f32 %v7149, 0.0
        %v7164 = vmax.f32 %v7152, 0.0
        %v7165 = vmax.f32 %v7157, 0.0
        %v7166 = vmax.f32 %v7160, 0.0
        %v7171 = vcombine.high %v7163, %v7163
        %v7173 = vunpack.c.l.s4 1966171168
        %v7174 = vunpack.c.0.s8 %v7173
        %v7175 = vlaneseq
        %v7176 = vshrl.u32 %v7175, 7
        %v7177 = vsub.s32 %v7174, %v7176
        %v7178 = vrot.slane %v7163, %v7177
        %v7180 = vunpack.c.l.s4 1966171168
        %v7181 = vunpack.c.0.s8 %v7180
        %v7182 = vlaneseq
        %v7183 = vshrl.u32 %v7182, 7
        %v7184 = vsub.s32 %v7181, %v7183
        %v7185 = vrot.slane %v7171, %v7184
        %v7186 = vcombine.high %v7178, %v7178
        %v7187 = vcombine.high %v7185, %v7185
        %v7189 = vunpack.c.l.s4 1966171168
        %v7190 = vunpack.c.0.s8 %v7189
        %v7191 = vlaneseq
        %v7192 = vshrl.u32 %v7191, 7
        %v7193 = vsub.s32 %v7190, %v7192
        %v7194 = vrot.slane %v7178, %v7193
        %v7196 = vunpack.c.l.s4 1966171168
        %v7197 = vunpack.c.0.s8 %v7196
        %v7198 = vlaneseq
        %v7199 = vshrl.u32 %v7198, 7
        %v7200 = vsub.s32 %v7197, %v7199
        %v7201 = vrot.slane %v7185, %v7200
        %v7203 = vunpack.c.l.s4 1966171168
        %v7204 = vunpack.c.0.s8 %v7203
        %v7205 = vlaneseq
        %v7206 = vshrl.u32 %v7205, 7
        %v7207 = vsub.s32 %v7204, %v7206
        %v7208 = vrot.slane %v7186, %v7207
        %v7210 = vunpack.c.l.s4 1966171168
        %v7211 = vunpack.c.0.s8 %v7210
        %v7212 = vlaneseq
        %v7213 = vshrl.u32 %v7212, 7
        %v7214 = vsub.s32 %v7211, %v7213
        %v7215 = vrot.slane %v7187, %v7214
        %v7216 = vcombine.high %v7194, %v7194
        %v7217 = vcombine.high %v7201, %v7201
        %v7218 = vcombine.high %v7208, %v7208
        %v7219 = vcombine.high %v7215, %v7215
        %v7220 = vcombine.high %v7164, %v7164
        %v7222 = vunpack.c.l.s4 1966171168
        %v7223 = vunpack.c.0.s8 %v7222
        %v7224 = vlaneseq
        %v7225 = vshrl.u32 %v7224, 7
        %v7226 = vsub.s32 %v7223, %v7225
        %v7227 = vrot.slane %v7164, %v7226
        %v7229 = vunpack.c.l.s4 1966171168
        %v7230 = vunpack.c.0.s8 %v7229
        %v7231 = vlaneseq
        %v7232 = vshrl.u32 %v7231, 7
        %v7233 = vsub.s32 %v7230, %v7232
        %v7234 = vrot.slane %v7220, %v7233
        %v7235 = vcombine.high %v7227, %v7227
        %v7236 = vcombine.high %v7234, %v7234
        %v7238 = vunpack.c.l.s4 1966171168
        %v7239 = vunpack.c.0.s8 %v7238
        %v7240 = vlaneseq
        %v7241 = vshrl.u32 %v7240, 7
        %v7242 = vsub.s32 %v7239, %v7241
        %v7243 = vrot.slane %v7227, %v7242
        %v7245 = vunpack.c.l.s4 1966171168
        %v7246 = vunpack.c.0.s8 %v7245
        %v7247 = vlaneseq
        %v7248 = vshrl.u32 %v7247, 7
        %v7249 = vsub.s32 %v7246, %v7248
        %v7250 = vrot.slane %v7234, %v7249
        %v7252 = vunpack.c.l.s4 1966171168
        %v7253 = vunpack.c.0.s8 %v7252
        %v7254 = vlaneseq
        %v7255 = vshrl.u32 %v7254, 7
        %v7256 = vsub.s32 %v7253, %v7255
        %v7257 = vrot.slane %v7235, %v7256
        %v7259 = vunpack.c.l.s4 1966171168
        %v7260 = vunpack.c.0.s8 %v7259
        %v7261 = vlaneseq
        %v7262 = vshrl.u32 %v7261, 7
        %v7263 = vsub.s32 %v7260, %v7262
        %v7264 = vrot.slane %v7236, %v7263
        %v7265 = vcombine.high %v7243, %v7243
        %v7266 = vcombine.high %v7250, %v7250
        %v7267 = vcombine.high %v7257, %v7257
        %v7268 = vcombine.high %v7264, %v7264
        %v7269 = vcombine.high %v7165, %v7165
        %v7271 = vunpack.c.l.s4 1966171168
        %v7272 = vunpack.c.0.s8 %v7271
        %v7273 = vlaneseq
        %v7274 = vshrl.u32 %v7273, 7
        %v7275 = vsub.s32 %v7272, %v7274
        %v7276 = vrot.slane %v7165, %v7275
        %v7278 = vunpack.c.l.s4 1966171168
        %v7279 = vunpack.c.0.s8 %v7278
        %v7280 = vlaneseq
        %v7281 = vshrl.u32 %v7280, 7
        %v7282 = vsub.s32 %v7279, %v7281
        %v7283 = vrot.slane %v7269, %v7282
        %v7284 = vcombine.high %v7276, %v7276
        %v7285 = vcombine.high %v7283, %v7283
        %v7287 = vunpack.c.l.s4 1966171168
        %v7288 = vunpack.c.0.s8 %v7287
        %v7289 = vlaneseq
        %v7290 = vshrl.u32 %v7289, 7
        %v7291 = vsub.s32 %v7288, %v7290
        %v7292 = vrot.slane %v7276, %v7291
        %v7294 = vunpack.c.l.s4 1966171168
        %v7295 = vunpack.c.0.s8 %v7294
        %v7296 = vlaneseq
        %v7297 = vshrl.u32 %v7296, 7
        %v7298 = vsub.s32 %v7295, %v7297
        %v7299 = vrot.slane %v7283, %v7298
        %v7301 = vunpack.c.l.s4 1966171168
        %v7302 = vunpack.c.0.s8 %v7301
        %v7303 = vlaneseq
        %v7304 = vshrl.u32 %v7303, 7
        %v7305 = vsub.s32 %v7302, %v7304
        %v7306 = vrot.slane %v7284, %v7305
        %v7308 = vunpack.c.l.s4 1966171168
        %v7309 = vunpack.c.0.s8 %v7308
        %v7310 = vlaneseq
        %v7311 = vshrl.u32 %v7310, 7
        %v7312 = vsub.s32 %v7309, %v7311
        %v7313 = vrot.slane %v7285, %v7312
        %v7314 = vcombine.high %v7292, %v7292
        %v7315 = vcombine.high %v7299, %v7299
        %v7316 = vcombine.high %v7306, %v7306
        %v7317 = vcombine.high %v7313, %v7313
        %v7318 = vcombine.high %v7166, %v7166
        %v7320 = vunpack.c.l.s4 1966171168
        %v7321 = vunpack.c.0.s8 %v7320
        %v7322 = vlaneseq
        %v7323 = vshrl.u32 %v7322, 7
        %v7324 = vsub.s32 %v7321, %v7323
        %v7325 = vrot.slane %v7166, %v7324
        %v7327 = vunpack.c.l.s4 1966171168
        %v7328 = vunpack.c.0.s8 %v7327
        %v7329 = vlaneseq
        %v7330 = vshrl.u32 %v7329, 7
        %v7331 = vsub.s32 %v7328, %v7330
        %v7332 = vrot.slane %v7318, %v7331
        %v7333 = vcombine.high %v7325, %v7325
        %v7334 = vcombine.high %v7332, %v7332
        %v7336 = vunpack.c.l.s4 1966171168
        %v7337 = vunpack.c.0.s8 %v7336
        %v7338 = vlaneseq
        %v7339 = vshrl.u32 %v7338, 7
        %v7340 = vsub.s32 %v7337, %v7339
        %v7341 = vrot.slane %v7325, %v7340
        %v7343 = vunpack.c.l.s4 1966171168
        %v7344 = vunpack.c.0.s8 %v7343
        %v7345 = vlaneseq
        %v7346 = vshrl.u32 %v7345, 7
        %v7347 = vsub.s32 %v7344, %v7346
        %v7348 = vrot.slane %v7332, %v7347
        %v7350 = vunpack.c.l.s4 1966171168
        %v7351 = vunpack.c.0.s8 %v7350
        %v7352 = vlaneseq
        %v7353 = vshrl.u32 %v7352, 7
        %v7354 = vsub.s32 %v7351, %v7353
        %v7355 = vrot.slane %v7333, %v7354
        %v7357 = vunpack.c.l.s4 1966171168
        %v7358 = vunpack.c.0.s8 %v7357
        %v7359 = vlaneseq
        %v7360 = vshrl.u32 %v7359, 7
        %v7361 = vsub.s32 %v7358, %v7360
        %v7362 = vrot.slane %v7334, %v7361
        %v7363 = vcombine.high %v7341, %v7341
        %v7364 = vcombine.high %v7348, %v7348
        %v7365 = vcombine.high %v7355, %v7355
        %v7366 = vcombine.high %v7362, %v7362
        %7399 = vst.msk [vmem:[%s190 + $0xb] sm:$0x1] %vm820, %v7194
        %7400 = vst.msk [vmem:[%s190 + $0x1b] sm:$0x1] %vm820, %v7208
        %7401 = vst.msk [vmem:[%s190 + $0x2b] sm:$0x1] %vm820, %v7216
        %7402 = vst.msk [vmem:[%s190 + $0x3b] sm:$0x1] %vm820, %v7218
        %7403 = vst.msk [vmem:[%s190 + $0x4b] sm:$0x1] %vm820, %v7201
        %7404 = vst.msk [vmem:[%s190 + $0x5b] sm:$0x1] %vm820, %v7215
        %7405 = vst.msk [vmem:[%s190 + $0x6b] sm:$0x1] %vm820, %v7217
        %7406 = vst.msk [vmem:[%s190 + $0x7b] sm:$0x1] %vm820, %v7219
        %7407 = vst.msk [vmem:[%s190 + $0x8b] sm:$0x1] %vm820, %v7243
        %7408 = vst.msk [vmem:[%s190 + $0x9b] sm:$0x1] %vm820, %v7257
        %7409 = vst.msk [vmem:[%s190 + $0xab] sm:$0x1] %vm820, %v7265
        %7410 = vst.msk [vmem:[%s190 + $0xbb] sm:$0x1] %vm820, %v7267
        %7411 = vst.msk [vmem:[%s190 + $0xcb] sm:$0x1] %vm820, %v7250
        %7412 = vst.msk [vmem:[%s190 + $0xdb] sm:$0x1] %vm820, %v7264
        %7413 = vst.msk [vmem:[%s190 + $0xeb] sm:$0x1] %vm820, %v7266
        %7414 = vst.msk [vmem:[%s190 + $0xfb] sm:$0x1] %vm820, %v7268
        %7415 = vst.msk [vmem:[%s190 + $0x10b] sm:$0x1] %vm820, %v7292
        %7416 = vst.msk [vmem:[%s190 + $0x11b] sm:$0x1] %vm820, %v7306
        %7417 = vst.msk [vmem:[%s190 + $0x12b] sm:$0x1] %vm820, %v7314
        %7418 = vst.msk [vmem:[%s190 + $0x13b] sm:$0x1] %vm820, %v7316
        %7419 = vst.msk [vmem:[%s190 + $0x14b] sm:$0x1] %vm820, %v7299
        %7420 = vst.msk [vmem:[%s190 + $0x15b] sm:$0x1] %vm820, %v7313
        %7421 = vst.msk [vmem:[%s190 + $0x16b] sm:$0x1] %vm820, %v7315
        %7422 = vst.msk [vmem:[%s190 + $0x17b] sm:$0x1] %vm820, %v7317
        %7423 = vst.msk [vmem:[%s190 + $0x18b] sm:$0x1] %vm820, %v7341
        %7424 = vst.msk [vmem:[%s190 + $0x19b] sm:$0x1] %vm820, %v7355
        %7425 = vst.msk [vmem:[%s190 + $0x1ab] sm:$0x1] %vm820, %v7363
        %7426 = vst.msk [vmem:[%s190 + $0x1bb] sm:$0x1] %vm820, %v7365
        %7427 = vst.msk [vmem:[%s190 + $0x1cb] sm:$0x1] %vm820, %v7348
        %7428 = vst.msk [vmem:[%s190 + $0x1db] sm:$0x1] %vm820, %v7362
        %7429 = vst.msk [vmem:[%s190 + $0x1eb] sm:$0x1] %vm820, %v7364
        %7430 = vst.msk [vmem:[%s190 + $0x1fb] sm:$0x1] %vm820, %v7366
        %p7431 = scmp.lt.s32.totalorder %s17, 1
        %s7432 = scalar_select %p7431, %s17, 1
        %s7433 = smul.addr %s7432, 64
        %s7434 = smul.addr %s7433, 8
        %s7435 = scalar_lea.vmem %s3, %s7434
        // Predicated region
        $region37: #{tpu_custom_call.1} parent=31 // pred_check
          %p7436 = pneg %p103
        $region38: #{tpu_custom_call.1} parent=31 // pred_check_branch
          %7438 = sbr.rel (%p7436) target = $region40
        $region39: #{tpu_custom_call.1} parent=31 // pred_region
          _
        $region40: #{tpu_custom_call.1} parent=31 // pred_fallthru
          _
      $region32: #{tpu_custom_call.1} parent=5 // pred_fallthru
        _
      %p7439 = scmp.le.s32.totalorder 2, %s12
      // Predicated region
      $region41: #{tpu_custom_call.1} parent=5 // pred_check
        %p7440 = pneg %p7439
      $region42: #{tpu_custom_call.1} parent=5 // pred_check_branch
        %7442 = sbr.rel (%p7440) target = $region44
      $region43: #{tpu_custom_call.1} parent=5 // pred_region
        %s7443 = ssub.s32 %s12, 2
        // Predicated region
        $region45: #{tpu_custom_call.1} parent=43 // pred_check
          %p7444 = pneg %p109
        $region46: #{tpu_custom_call.1} parent=43 // pred_check_branch
          %7446 = sbr.rel (%p7444) target = $region48
        $region47: #{tpu_custom_call.1} parent=43 // pred_region
          %p7447 = scmp.lt.s32.totalorder %s18, 1
          %s7448 = scalar_select %p7447, %s18, 1
          %s7449 = smul.addr %s7448, 64
          %s7450 = smul.addr %s7449, 8
          %s7451 = scalar_lea.vmem %s3, %s7450
        $region48: #{tpu_custom_call.1} parent=43 // pred_fallthru
          _
      $region44: #{tpu_custom_call.1} parent=5 // pred_fallthru
        _
    $region6: #{tpu_custom_call.1} parent=1 // loop_footer
      %s16 = sadd.s32 1, %s12
    $region7: #{tpu_custom_call.1} parent=1 // loop_footer_branch
      %11 = sbr.rel target = $region3
    $region8: #{tpu_custom_call.1} parent=1 // loop_exit
      _
    %7452 = vsyncpa [#allocation4], 1
    %s7453 = scalar_lea.sflag [#allocation4], 1
    %7454 = vsyncpa %s7453, 1

</llo_original>
